<compile_context>
chip_gen: v5e
topology: v5e:2x2
jax: 0.10.0
libtpu: 0.0.40
codegen_flags: <defaults>
</compile_context>

<pallas_src>
import functools
import math

import jax
import jax.numpy as jnp
from jax.experimental import pallas as pl
from jax.experimental.pallas import tpu as pltpu

# ----------------------------- hyper-parameters ----------------------------
N_VOCAB = 40
OUT_CH = 16           # out_channels
HID = 32              # hidden_channels
FILT = 64             # filter_channels (FFN)
FILT_DP = 64          # filter_channels_dp (DurationPredictor)
N_HEADS = 2
N_LAYERS = 2
KSIZE = 3             # kernel_size (odd -> 'same' padding)
P_DROPOUT = 0.1       # dropout is identity at inference
WIN = 4               # window_size (relative attention)
DH = HID // N_HEADS   # per-head channels

_LAYER_REFS = 18      # refs per transformer layer passed to the kernel


# ------------------------------ fused kernel -------------------------------
def _encoder_kernel(*refs, n_layers, n_heads, d_head):
    """One grid step == one batch element; everything stays in VMEM."""
    it = iter(refs)
    nxt = lambda: next(it)

    # ---- shared inputs -----------------------------------------------------
    x_ref, xm_ref, am_ref = nxt(), nxt(), nxt()
    tile_ref, grp_ref, expm_ref, hsum_ref = nxt(), nxt(), nxt(), nxt()
    sm_ref, sp_ref = nxt(), nxt()
    # ---- per-layer weights -------------------------------------------------
    layer_refs = [tuple(nxt() for _ in range(_LAYER_REFS)) for _ in range(n_layers)]
    # ---- heads + duration predictor ----------------------------------------
    pmsw_ref, pmsb_ref = nxt(), nxt()
    dpw1_ref, dpb1_ref, dpg1_ref, dpbe1_ref = nxt(), nxt(), nxt(), nxt()
    dpw2_ref, dpb2_ref, dpg2_ref, dpbe2_ref = nxt(), nxt(), nxt(), nxt()
    dppw_ref, dppb_ref = nxt(), nxt()
    # ---- outputs -----------------------------------------------------------
    oms_ref, ologw_ref = nxt(), nxt()

    x = x_ref[0]                      # [T, C]
    xm = xm_ref[0]                    # [T, 1]
    mb = am_ref[0]                    # [T, T] attention mask (1.0 / 0.0)
    tile_m = tile_ref[...]            # [Dh, T*Dh]   q -> q tiled T times
    grp_m = grp_ref[...]              # [T*Dh, T]    sum over Dh groups
    exp_m = expm_ref[...]             # [T, T*Dh]    p -> p repeated Dh times
    hsum_m = hsum_ref[...]            # [T*Dh, Dh]   sum over T groups
    s_m = sm_ref[...]                 # [T, T] shift (row i <- i-1)
    s_p = sp_ref[...]                 # [T, T] shift (row i <- i+1)
    scale = 1.0 / math.sqrt(d_head)

    def mm(a, b):
        return jnp.dot(a, b, preferred_element_type=jnp.float32)

    def conv3(v, w_ref, bias):
        # 'same' K=3 Conv1d: y[t] = x[t-1]@w0 + x[t]@w1 + x[t+1]@w2 + b
        t0 = mm(v, w_ref[0])
        t1 = mm(v, w_ref[1])
        t2 = mm(v, w_ref[2])
        return t1 + mm(s_m, t0) + mm(s_p, t2) + bias

    def lnorm(v, g, bta):             # GlowTTS channel LayerNorm, eps=1e-4
        mu = jnp.mean(v, axis=-1, keepdims=True)
        var = jnp.mean(jnp.square(v - mu), axis=-1, keepdims=True)
        return (v - mu) * jax.lax.rsqrt(var + 1e-4) * g + bta

    # ------------------------- transformer layers ---------------------------
    for lr in layer_refs:
        (wq_r, wk_r, wv_r, bq_r, bk_r, bv_r, wo_r, bo_r, relk_r, relv_r,
         g1_r, be1_r, w1_r, b1_r, w2_r, b2_r, g2_r, be2_r) = lr

        x = x * xm
        relk = relk_r[...]            # [T, T*Dh]  rel_k[j-i+T-1] laid out per (i, j)
        relv = relv_r[...]            # [T, T*Dh]
        y = bo_r[...]                 # [1, C] -> accumulates the output projection

        for h in range(n_heads):      # static unroll (n_heads = 2)
            q = mm(x, wq_r[h]) + bq_r[h]          # [T, Dh]
            k = mm(x, wk_r[h]) + bk_r[h]
            v = mm(x, wv_r[h]) + bv_r[h]
            s = jax.lax.dot_general(q, k, (((1,), (1,)), ((), ())),
                                    preferred_element_type=jnp.float32) * scale
            # relative-position key logits: sum_d q[i,d] * rel_k[j-i][d]
            s = s + mm(mm(q, tile_m) * relk, grp_m) * scale
            s = jnp.where(mb < 0.5, jnp.float32(-1e4), s)     # masked_fill(-1e4)
            e = jnp.exp(s - jnp.max(s, axis=-1, keepdims=True))
            p = e / jnp.sum(e, axis=-1, keepdims=True)
            # p @ v  +  relative-position value contribution
            o = mm(p, v) + mm(mm(p, exp_m) * relv, hsum_m)    # [T, Dh]
            # output projection, head-sliced weights -> accumulate directly
            y = y + mm(o, wo_r[h])
        # TODO(synk): nn.Dropout treated as identity (inference / eval mode)
        x = lnorm(x + y, g1_r[...], be1_r[...])

        # FeedForwardNetwork
        hmid = jnp.maximum(conv3(x * xm, w1_r, b1_r[...]), 0.0)
        y = conv3(hmid * xm, w2_r, b2_r[...]) * xm
        x = lnorm(x + y, g2_r[...], be2_r[...])

    # --------------------------- output heads -------------------------------
    x = x * xm
    oms_ref[0] = (mm(x, pmsw_ref[...]) + pmsb_ref[...]) * xm   # [T, 2*OUT] = m | logs

    # DurationPredictor
    hd = jnp.maximum(conv3(x, dpw1_ref, dpb1_ref[...]), 0.0)   # x already masked
    hd = lnorm(hd, dpg1_ref[...], dpbe1_ref[...])
    hd = jnp.maximum(conv3(hd * xm, dpw2_ref, dpb2_ref[...]), 0.0)
    hd = lnorm(hd, dpg2_ref[...], dpbe2_ref[...])
    ologw_ref[0] = (mm(hd * xm, dppw_ref[...]) + dppb_ref[...]) * xm


# ---------------------- host-side relative-position prep -------------------
def _get_relative_embeddings(rel_emb, length, window_size):
    pad_length = max(length - (window_size + 1), 0)
    slice_start = max((window_size + 1) - length, 0)
    slice_end = slice_start + 2 * length - 1
    if pad_length > 0:
        rel_emb = jnp.pad(rel_emb, ((0, 0), (pad_length, pad_length), (0, 0)))
    return rel_emb[:, slice_start:slice_end]


def _rel_abs_2d(rel_emb, length, window_size):
    """[1, 2W+1, Dh] -> dense [T, T*Dh] with row i, lane-block j = rel[j-i]."""
    rel_full = _get_relative_embeddings(rel_emb, length, window_size)[0]  # [2T-1, Dh]
    idx = jnp.arange(length)[None, :] - jnp.arange(length)[:, None] + (length - 1)
    d_head = rel_full.shape[-1]
    return rel_full[idx].reshape(length, length * d_head)


# ----------------------------- weight packing -------------------------------
def pack_params(params, T):
    C, H, Dh = HID, N_HEADS, DH
    f32 = jnp.float32
    pk = {
        'emb': params['emb'],
        'tile_m': jnp.tile(jnp.eye(Dh, dtype=f32), (1, T)),            # [Dh, T*Dh]
        'grp_m': jnp.repeat(jnp.eye(T, dtype=f32), Dh, axis=0),        # [T*Dh, T]
        's_minus': jnp.eye(T, k=-1, dtype=f32),                        # row i <- i-1
        's_plus': jnp.eye(T, k=1, dtype=f32),                          # row i <- i+1
    }
    pk['exp_m'] = pk['grp_m'].T                                        # [T, T*Dh]
    pk['hsum_m'] = pk['tile_m'].T                                      # [T*Dh, Dh]

    layers = []
    for lp in params['layers']:
        layers.append({
            # per-head packed projection weights: [H, C, Dh] / [H, Dh, C]
            'wq': lp['wq'].reshape(C, H, Dh).transpose(1, 0, 2),
            'wk': lp['wk'].reshape(C, H, Dh).transpose(1, 0, 2),
            'wv': lp['wv'].reshape(C, H, Dh).transpose(1, 0, 2),
            'bq': lp['bq'].reshape(H, 1, Dh),
            'bk': lp['bk'].reshape(H, 1, Dh),
            'bv': lp['bv'].reshape(H, 1, Dh),
            'wo': lp['wo'].reshape(H, Dh, C),
            'bo': lp['bo'].reshape(1, C),
            'relk': _rel_abs_2d(lp['rel_k'], T, WIN),
            'relv': _rel_abs_2d(lp['rel_v'], T, WIN),
            'g1': lp['g1'].reshape(1, C), 'be1': lp['be1'].reshape(1, C),
            'w1': jnp.transpose(lp['ffn_w1'], (2, 1, 0)),              # [K, C, F]
            'b1': lp['ffn_b1'].reshape(1, FILT),
            'w2': jnp.transpose(lp['ffn_w2'], (2, 1, 0)),              # [K, F, C]
            'b2': lp['ffn_b2'].reshape(1, C),
            'g2': lp['g2'].reshape(1, C), 'be2': lp['be2'].reshape(1, C),
        })
    pk['layers'] = layers

    # proj_m and proj_s merged into one lane-denser matmul
    pk['proj_ms_w'] = jnp.concatenate([params['proj_m_w'], params['proj_s_w']], axis=1)
    pk['proj_ms_b'] = jnp.concatenate(
        [params['proj_m_b'], params['proj_s_b']]).reshape(1, 2 * OUT_CH)

    dp = params['dp']
    pk['dp'] = {
        'w1': jnp.transpose(dp['w1'], (2, 1, 0)), 'b1': dp['b1'].reshape(1, FILT_DP),
        'g1': dp['g1'].reshape(1, FILT_DP), 'be1': dp['be1'].reshape(1, FILT_DP),
        'w2': jnp.transpose(dp['w2'], (2, 1, 0)), 'b2': dp['b2'].reshape(1, FILT_DP),
        'g2': dp['g2'].reshape(1, FILT_DP), 'be2': dp['be2'].reshape(1, FILT_DP),
        'pw': dp['proj_w'], 'pb': dp['proj_b'].reshape(1, 1),
    }
    return pk


# --------------------------------- forward ----------------------------------
def text_encoder_forward(packed, text, text_lengths):
    B, T = text.shape
    C, H, Dh = HID, N_HEADS, DH

    # embedding lookup (host-side gather) + masks
    x0 = packed['emb'][text] * math.sqrt(C)                            # [B, T, C]
    mask = (jnp.arange(T)[None, :] < text_lengths[:, None]).astype(jnp.float32)
    xmask = mask[:, :, None]                                           # [B, T, 1]
    attn_mask = mask[:, :, None] * mask[:, None, :]                    # [B, T, T]

    arrays, specs = [], []

    def add_bcast(a):        # same block every grid step (weights / constants)
        arrays.append(a)
        specs.append(pl.BlockSpec(a.shape, lambda b, _nd=a.ndim: (0,) * _nd))

    def add_batched(a):      # one batch element per grid step
        arrays.append(a)
        specs.append(pl.BlockSpec((1,) + a.shape[1:],
                                  lambda b, _nd=a.ndim: (b,) + (0,) * (_nd - 1)))

    add_batched(x0); add_batched(xmask); add_batched(attn_mask)
    for nm in ('tile_m', 'grp_m', 'exp_m', 'hsum_m', 's_minus', 's_plus'):
        add_bcast(packed[nm])
    for ly in packed['layers']:
        for nm in ('wq', 'wk', 'wv', 'bq', 'bk', 'bv', 'wo', 'bo', 'relk', 'relv',
                   'g1', 'be1', 'w1', 'b1', 'w2', 'b2', 'g2', 'be2'):
            add_bcast(ly[nm])
    add_bcast(packed['proj_ms_w']); add_bcast(packed['proj_ms_b'])
    for nm in ('w1', 'b1', 'g1', 'be1', 'w2', 'b2', 'g2', 'be2', 'pw', 'pb'):
        add_bcast(packed['dp'][nm])

    kern = functools.partial(_encoder_kernel, n_layers=len(packed['layers']),
                             n_heads=H, d_head=Dh)
    out_ms, out_logw = pl.pallas_call(
        kern,
        out_shape=(jax.ShapeDtypeStruct((B, T, 2 * OUT_CH), jnp.float32),
                   jax.ShapeDtypeStruct((B, T, 1), jnp.float32)),
        grid=(B,),
        in_specs=specs,
        out_specs=(pl.BlockSpec((1, T, 2 * OUT_CH), lambda b: (b, 0, 0)),
                   pl.BlockSpec((1, T, 1), lambda b: (b, 0, 0))),
        compiler_params=pltpu.CompilerParams(dimension_semantics=("parallel",)),
    )(*arrays)

    # back to PyTorch channels-first [B, C, T] layout
    x_m = out_ms[:, :, :OUT_CH].transpose(0, 2, 1)
    x_logs = out_ms[:, :, OUT_CH:].transpose(0, 2, 1)
    logw = out_logw.transpose(0, 2, 1)
    x_mask_out = mask[:, None, :]
    return x_m, x_logs, logw, x_mask_out


# -------------------------- deterministic parameters -----------------------
def init_params(key):
    keys = iter(jax.random.split(key, 256))

    def rnd(shape, scale):
        return jax.random.normal(next(keys), shape, jnp.float32) * scale

    # NOTE: 1x1-conv weights are stored directly as [Cin, Cout] matrices
    # (equivalent to PyTorch's [Cout, Cin, 1] squeezed + transposed).
    params = {
        'emb': rnd((N_VOCAB, HID), HID ** -0.5),
        'layers': [],
        'proj_m_w': rnd((HID, OUT_CH), 0.1), 'proj_m_b': rnd((OUT_CH,), 0.02),
        'proj_s_w': rnd((HID, OUT_CH), 0.1), 'proj_s_b': rnd((OUT_CH,), 0.02),
        'dp': {
            'w1': rnd((FILT_DP, HID, KSIZE), 0.1), 'b1': rnd((FILT_DP,), 0.02),
            'g1': jnp.ones((FILT_DP,), jnp.float32), 'be1': jnp.zeros((FILT_DP,), jnp.float32),
            'w2': rnd((FILT_DP, FILT_DP, KSIZE), 0.1), 'b2': rnd((FILT_DP,), 0.02),
            'g2': jnp.ones((FILT_DP,), jnp.float32), 'be2': jnp.zeros((FILT_DP,), jnp.float32),
            'proj_w': rnd((FILT_DP, 1), 0.1), 'proj_b': rnd((1,), 0.02),
        },
    }
    for _ in range(N_LAYERS):
        params['layers'].append({
            'wq': rnd((HID, HID), HID ** -0.5), 'bq': rnd((HID,), 0.02),
            'wk': rnd((HID, HID), HID ** -0.5), 'bk': rnd((HID,), 0.02),
            'wv': rnd((HID, HID), HID ** -0.5), 'bv': rnd((HID,), 0.02),
            'wo': rnd((HID, HID), HID ** -0.5), 'bo': rnd((HID,), 0.02),
            'rel_k': rnd((1, 2 * WIN + 1, DH), DH ** -0.5),
            'rel_v': rnd((1, 2 * WIN + 1, DH), DH ** -0.5),
            'g1': jnp.ones((HID,), jnp.float32), 'be1': jnp.zeros((HID,), jnp.float32),
            'ffn_w1': rnd((FILT, HID, KSIZE), 0.1), 'ffn_b1': rnd((FILT,), 0.02),
            'ffn_w2': rnd((HID, FILT, KSIZE), 0.1), 'ffn_b2': rnd((HID,), 0.02),
            'g2': jnp.ones((HID,), jnp.float32), 'be2': jnp.zeros((HID,), jnp.float32),
        })
    return params


# ----------------------------------- main -----------------------------------
if __name__ == "__main__":
    key = jax.random.PRNGKey(0)
    pkey, tkey = jax.random.split(key)
    params = init_params(pkey)

    B, T = 2, 16
    text = jax.random.randint(tkey, (B, T), 0, N_VOCAB, dtype=jnp.int32)
    text_lengths = jnp.array([16, 11], dtype=jnp.int32)

    packed = pack_params(params, T)          # one-time host-side weight packing
    fwd = jax.jit(lambda t, tl: text_encoder_forward(packed, t, tl))
    x_m, x_logs, logw, x_mask = fwd(text, text_lengths)
    jax.block_until_ready((x_m, x_logs, logw, x_mask))

    assert x_m.shape == (B, OUT_CH, T)
    assert x_logs.shape == (B, OUT_CH, T)
    assert logw.shape == (B, 1, T)
    assert x_mask.shape == (B, 1, T)
    assert bool(jnp.all(jnp.isfinite(x_m))) and bool(jnp.all(jnp.isfinite(logw)))
    print("KERNEL_OK")
</pallas_src>

<mosaic_0001>
module attributes {stable_mosaic.version = 11 : i64} {
  func.func @_encoder_kernel(%arg0: i32, %arg1: memref<1x16x32xf32, #tpu.memory_space<vmem>>, %arg2: memref<1x16x1xf32, #tpu.memory_space<vmem>>, %arg3: memref<1x16x16xf32, #tpu.memory_space<vmem>>, %arg4: memref<16x256xf32, #tpu.memory_space<vmem>>, %arg5: memref<256x16xf32, #tpu.memory_space<vmem>>, %arg6: memref<16x256xf32, #tpu.memory_space<vmem>>, %arg7: memref<256x16xf32, #tpu.memory_space<vmem>>, %arg8: memref<16x16xf32, #tpu.memory_space<vmem>>, %arg9: memref<16x16xf32, #tpu.memory_space<vmem>>, %arg10: memref<2x32x16xf32, #tpu.memory_space<vmem>>, %arg11: memref<2x32x16xf32, #tpu.memory_space<vmem>>, %arg12: memref<2x32x16xf32, #tpu.memory_space<vmem>>, %arg13: memref<2x1x16xf32, #tpu.memory_space<vmem>>, %arg14: memref<2x1x16xf32, #tpu.memory_space<vmem>>, %arg15: memref<2x1x16xf32, #tpu.memory_space<vmem>>, %arg16: memref<2x16x32xf32, #tpu.memory_space<vmem>>, %arg17: memref<1x32xf32, #tpu.memory_space<vmem>>, %arg18: memref<16x256xf32, #tpu.memory_space<vmem>>, %arg19: memref<16x256xf32, #tpu.memory_space<vmem>>, %arg20: memref<1x32xf32, #tpu.memory_space<vmem>>, %arg21: memref<1x32xf32, #tpu.memory_space<vmem>>, %arg22: memref<3x32x64xf32, #tpu.memory_space<vmem>>, %arg23: memref<1x64xf32, #tpu.memory_space<vmem>>, %arg24: memref<3x64x32xf32, #tpu.memory_space<vmem>>, %arg25: memref<1x32xf32, #tpu.memory_space<vmem>>, %arg26: memref<1x32xf32, #tpu.memory_space<vmem>>, %arg27: memref<1x32xf32, #tpu.memory_space<vmem>>, %arg28: memref<2x32x16xf32, #tpu.memory_space<vmem>>, %arg29: memref<2x32x16xf32, #tpu.memory_space<vmem>>, %arg30: memref<2x32x16xf32, #tpu.memory_space<vmem>>, %arg31: memref<2x1x16xf32, #tpu.memory_space<vmem>>, %arg32: memref<2x1x16xf32, #tpu.memory_space<vmem>>, %arg33: memref<2x1x16xf32, #tpu.memory_space<vmem>>, %arg34: memref<2x16x32xf32, #tpu.memory_space<vmem>>, %arg35: memref<1x32xf32, #tpu.memory_space<vmem>>, %arg36: memref<16x256xf32, #tpu.memory_space<vmem>>, %arg37: memref<16x256xf32, #tpu.memory_space<vmem>>, %arg38: memref<1x32xf32, #tpu.memory_space<vmem>>, %arg39: memref<1x32xf32, #tpu.memory_space<vmem>>, %arg40: memref<3x32x64xf32, #tpu.memory_space<vmem>>, %arg41: memref<1x64xf32, #tpu.memory_space<vmem>>, %arg42: memref<3x64x32xf32, #tpu.memory_space<vmem>>, %arg43: memref<1x32xf32, #tpu.memory_space<vmem>>, %arg44: memref<1x32xf32, #tpu.memory_space<vmem>>, %arg45: memref<1x32xf32, #tpu.memory_space<vmem>>, %arg46: memref<32x32xf32, #tpu.memory_space<vmem>>, %arg47: memref<1x32xf32, #tpu.memory_space<vmem>>, %arg48: memref<3x32x64xf32, #tpu.memory_space<vmem>>, %arg49: memref<1x64xf32, #tpu.memory_space<vmem>>, %arg50: memref<1x64xf32, #tpu.memory_space<vmem>>, %arg51: memref<1x64xf32, #tpu.memory_space<vmem>>, %arg52: memref<3x64x64xf32, #tpu.memory_space<vmem>>, %arg53: memref<1x64xf32, #tpu.memory_space<vmem>>, %arg54: memref<1x64xf32, #tpu.memory_space<vmem>>, %arg55: memref<1x64xf32, #tpu.memory_space<vmem>>, %arg56: memref<64x1xf32, #tpu.memory_space<vmem>>, %arg57: memref<1x1xf32, #tpu.memory_space<vmem>>, %arg58: memref<1x16x32xf32, #tpu.memory_space<vmem>>, %arg59: memref<1x16x1xf32, #tpu.memory_space<vmem>>) attributes {dimension_semantics = [#tpu.dimension_semantics<parallel>], iteration_bounds = array<i64: 2>, scalar_prefetch = 0 : i64, scratch_operands = 0 : i64, tpu.core_type = #tpu.core_type<tc>, window_params = [{transform_indices = @transform_0, window_bounds = array<i64: 1, 16, 32>}, {transform_indices = @transform_1, window_bounds = array<i64: 1, 16, 1>}, {transform_indices = @transform_2, window_bounds = array<i64: 1, 16, 16>}, {pipeline_mode = #tpu.pipeline_mode<synchronous>, transform_indices = @transform_3, window_bounds = array<i64: 16, 256>}, {pipeline_mode = #tpu.pipeline_mode<synchronous>, transform_indices = @transform_4, window_bounds = array<i64: 256, 16>}, {pipeline_mode = #tpu.pipeline_mode<synchronous>, transform_indices = @transform_5, window_bounds = array<i64: 16, 256>}, {pipeline_mode = #tpu.pipeline_mode<synchronous>, transform_indices = @transform_6, window_bounds = array<i64: 256, 16>}, {pipeline_mode = #tpu.pipeline_mode<synchronous>, transform_indices = @transform_7, window_bounds = array<i64: 16, 16>}, {pipeline_mode = #tpu.pipeline_mode<synchronous>, transform_indices = @transform_8, window_bounds = array<i64: 16, 16>}, {pipeline_mode = #tpu.pipeline_mode<synchronous>, transform_indices = @transform_9, window_bounds = array<i64: 2, 32, 16>}, {pipeline_mode = #tpu.pipeline_mode<synchronous>, transform_indices = @transform_10, window_bounds = array<i64: 2, 32, 16>}, {pipeline_mode = #tpu.pipeline_mode<synchronous>, transform_indices = @transform_11, window_bounds = array<i64: 2, 32, 16>}, {pipeline_mode = #tpu.pipeline_mode<synchronous>, transform_indices = @transform_12, window_bounds = array<i64: 2, 1, 16>}, {pipeline_mode = #tpu.pipeline_mode<synchronous>, transform_indices = @transform_13, window_bounds = array<i64: 2, 1, 16>}, {pipeline_mode = #tpu.pipeline_mode<synchronous>, transform_indices = @transform_14, window_bounds = array<i64: 2, 1, 16>}, {pipeline_mode = #tpu.pipeline_mode<synchronous>, transform_indices = @transform_15, window_bounds = array<i64: 2, 16, 32>}, {pipeline_mode = #tpu.pipeline_mode<synchronous>, transform_indices = @transform_16, window_bounds = array<i64: 1, 32>}, {pipeline_mode = #tpu.pipeline_mode<synchronous>, transform_indices = @transform_17, window_bounds = array<i64: 16, 256>}, {pipeline_mode = #tpu.pipeline_mode<synchronous>, transform_indices = @transform_18, window_bounds = array<i64: 16, 256>}, {pipeline_mode = #tpu.pipeline_mode<synchronous>, transform_indices = @transform_19, window_bounds = array<i64: 1, 32>}, {pipeline_mode = #tpu.pipeline_mode<synchronous>, transform_indices = @transform_20, window_bounds = array<i64: 1, 32>}, {pipeline_mode = #tpu.pipeline_mode<synchronous>, transform_indices = @transform_21, window_bounds = array<i64: 3, 32, 64>}, {pipeline_mode = #tpu.pipeline_mode<synchronous>, transform_indices = @transform_22, window_bounds = array<i64: 1, 64>}, {pipeline_mode = #tpu.pipeline_mode<synchronous>, transform_indices = @transform_23, window_bounds = array<i64: 3, 64, 32>}, {pipeline_mode = #tpu.pipeline_mode<synchronous>, transform_indices = @transform_24, window_bounds = array<i64: 1, 32>}, {pipeline_mode = #tpu.pipeline_mode<synchronous>, transform_indices = @transform_25, window_bounds = array<i64: 1, 32>}, {pipeline_mode = #tpu.pipeline_mode<synchronous>, transform_indices = @transform_26, window_bounds = array<i64: 1, 32>}, {pipeline_mode = #tpu.pipeline_mode<synchronous>, transform_indices = @transform_27, window_bounds = array<i64: 2, 32, 16>}, {pipeline_mode = #tpu.pipeline_mode<synchronous>, transform_indices = @transform_28, window_bounds = array<i64: 2, 32, 16>}, {pipeline_mode = #tpu.pipeline_mode<synchronous>, transform_indices = @transform_29, window_bounds = array<i64: 2, 32, 16>}, {pipeline_mode = #tpu.pipeline_mode<synchronous>, transform_indices = @transform_30, window_bounds = array<i64: 2, 1, 16>}, {pipeline_mode = #tpu.pipeline_mode<synchronous>, transform_indices = @transform_31, window_bounds = array<i64: 2, 1, 16>}, {pipeline_mode = #tpu.pipeline_mode<synchronous>, transform_indices = @transform_32, window_bounds = array<i64: 2, 1, 16>}, {pipeline_mode = #tpu.pipeline_mode<synchronous>, transform_indices = @transform_33, window_bounds = array<i64: 2, 16, 32>}, {pipeline_mode = #tpu.pipeline_mode<synchronous>, transform_indices = @transform_34, window_bounds = array<i64: 1, 32>}, {pipeline_mode = #tpu.pipeline_mode<synchronous>, transform_indices = @transform_35, window_bounds = array<i64: 16, 256>}, {pipeline_mode = #tpu.pipeline_mode<synchronous>, transform_indices = @transform_36, window_bounds = array<i64: 16, 256>}, {pipeline_mode = #tpu.pipeline_mode<synchronous>, transform_indices = @transform_37, window_bounds = array<i64: 1, 32>}, {pipeline_mode = #tpu.pipeline_mode<synchronous>, transform_indices = @transform_38, window_bounds = array<i64: 1, 32>}, {pipeline_mode = #tpu.pipeline_mode<synchronous>, transform_indices = @transform_39, window_bounds = array<i64: 3, 32, 64>}, {pipeline_mode = #tpu.pipeline_mode<synchronous>, transform_indices = @transform_40, window_bounds = array<i64: 1, 64>}, {pipeline_mode = #tpu.pipeline_mode<synchronous>, transform_indices = @transform_41, window_bounds = array<i64: 3, 64, 32>}, {pipeline_mode = #tpu.pipeline_mode<synchronous>, transform_indices = @transform_42, window_bounds = array<i64: 1, 32>}, {pipeline_mode = #tpu.pipeline_mode<synchronous>, transform_indices = @transform_43, window_bounds = array<i64: 1, 32>}, {pipeline_mode = #tpu.pipeline_mode<synchronous>, transform_indices = @transform_44, window_bounds = array<i64: 1, 32>}, {pipeline_mode = #tpu.pipeline_mode<synchronous>, transform_indices = @transform_45, window_bounds = array<i64: 32, 32>}, {pipeline_mode = #tpu.pipeline_mode<synchronous>, transform_indices = @transform_46, window_bounds = array<i64: 1, 32>}, {pipeline_mode = #tpu.pipeline_mode<synchronous>, transform_indices = @transform_47, window_bounds = array<i64: 3, 32, 64>}, {pipeline_mode = #tpu.pipeline_mode<synchronous>, transform_indices = @transform_48, window_bounds = array<i64: 1, 64>}, {pipeline_mode = #tpu.pipeline_mode<synchronous>, transform_indices = @transform_49, window_bounds = array<i64: 1, 64>}, {pipeline_mode = #tpu.pipeline_mode<synchronous>, transform_indices = @transform_50, window_bounds = array<i64: 1, 64>}, {pipeline_mode = #tpu.pipeline_mode<synchronous>, transform_indices = @transform_51, window_bounds = array<i64: 3, 64, 64>}, {pipeline_mode = #tpu.pipeline_mode<synchronous>, transform_indices = @transform_52, window_bounds = array<i64: 1, 64>}, {pipeline_mode = #tpu.pipeline_mode<synchronous>, transform_indices = @transform_53, window_bounds = array<i64: 1, 64>}, {pipeline_mode = #tpu.pipeline_mode<synchronous>, transform_indices = @transform_54, window_bounds = array<i64: 1, 64>}, {pipeline_mode = #tpu.pipeline_mode<synchronous>, transform_indices = @transform_55, window_bounds = array<i64: 64, 1>}, {pipeline_mode = #tpu.pipeline_mode<synchronous>, transform_indices = @transform_56, window_bounds = array<i64: 1, 1>}, {transform_indices = @transform_57, window_bounds = array<i64: 1, 16, 32>}, {transform_indices = @transform_58, window_bounds = array<i64: 1, 16, 1>}]} {
    %c0 = arith.constant 0 : index
    %c0_0 = arith.constant 0 : index
    %c0_1 = arith.constant 0 : index
    %0 = vector.load %arg1[%c0, %c0_0, %c0_1] : memref<1x16x32xf32, #tpu.memory_space<vmem>>, vector<1x16x32xf32>
    %1 = vector.shape_cast %0 : vector<1x16x32xf32> to vector<16x32xf32>
    %c0_2 = arith.constant 0 : index
    %c0_3 = arith.constant 0 : index
    %c0_4 = arith.constant 0 : index
    %2 = vector.load %arg2[%c0_2, %c0_3, %c0_4] : memref<1x16x1xf32, #tpu.memory_space<vmem>>, vector<1x16x1xf32>
    %3 = vector.shape_cast %2 : vector<1x16x1xf32> to vector<16x1xf32>
    %c0_5 = arith.constant 0 : index
    %c0_6 = arith.constant 0 : index
    %c0_7 = arith.constant 0 : index
    %4 = vector.load %arg3[%c0_5, %c0_6, %c0_7] : memref<1x16x16xf32, #tpu.memory_space<vmem>>, vector<1x16x16xf32>
    %5 = vector.shape_cast %4 : vector<1x16x16xf32> to vector<16x16xf32>
    %c0_8 = arith.constant 0 : index
    %c0_9 = arith.constant 0 : index
    %6 = vector.load %arg4[%c0_8, %c0_9] : memref<16x256xf32, #tpu.memory_space<vmem>>, vector<16x256xf32>
    %c0_10 = arith.constant 0 : index
    %c0_11 = arith.constant 0 : index
    %7 = vector.load %arg5[%c0_10, %c0_11] : memref<256x16xf32, #tpu.memory_space<vmem>>, vector<256x16xf32>
    %c0_12 = arith.constant 0 : index
    %c0_13 = arith.constant 0 : index
    %8 = vector.load %arg6[%c0_12, %c0_13] : memref<16x256xf32, #tpu.memory_space<vmem>>, vector<16x256xf32>
    %c0_14 = arith.constant 0 : index
    %c0_15 = arith.constant 0 : index
    %9 = vector.load %arg7[%c0_14, %c0_15] : memref<256x16xf32, #tpu.memory_space<vmem>>, vector<256x16xf32>
    %c0_16 = arith.constant 0 : index
    %c0_17 = arith.constant 0 : index
    %10 = vector.load %arg8[%c0_16, %c0_17] : memref<16x16xf32, #tpu.memory_space<vmem>>, vector<16x16xf32>
    %c0_18 = arith.constant 0 : index
    %c0_19 = arith.constant 0 : index
    %11 = vector.load %arg9[%c0_18, %c0_19] : memref<16x16xf32, #tpu.memory_space<vmem>>, vector<16x16xf32>
    %12 = vector.broadcast %3 : vector<16x1xf32> to vector<16x32xf32>
    %13 = arith.mulf %1, %12 : vector<16x32xf32>
    %c0_20 = arith.constant 0 : index
    %c0_21 = arith.constant 0 : index
    %14 = vector.load %arg18[%c0_20, %c0_21] : memref<16x256xf32, #tpu.memory_space<vmem>>, vector<16x256xf32>
    %c0_22 = arith.constant 0 : index
    %c0_23 = arith.constant 0 : index
    %15 = vector.load %arg19[%c0_22, %c0_23] : memref<16x256xf32, #tpu.memory_space<vmem>>, vector<16x256xf32>
    %c0_24 = arith.constant 0 : index
    %c0_25 = arith.constant 0 : index
    %16 = vector.load %arg17[%c0_24, %c0_25] : memref<1x32xf32, #tpu.memory_space<vmem>>, vector<1x32xf32>
    %c0_26 = arith.constant 0 : index
    %c0_27 = arith.constant 0 : index
    %c0_28 = arith.constant 0 : index
    %17 = vector.load %arg10[%c0_26, %c0_27, %c0_28] : memref<2x32x16xf32, #tpu.memory_space<vmem>>, vector<1x32x16xf32>
    %18 = vector.shape_cast %17 : vector<1x32x16xf32> to vector<32x16xf32>
    %cst = arith.constant dense<0.000000e+00> : vector<16x16xf32>
    %19 = tpu.matmul %13, %18, %cst {dimension_numbers = #tpu.dot_dimension_numbers<[1], [0], [0], [1], [0, 0, 1, 1], [], []>} : vector<16x32xf32>, vector<32x16xf32>, vector<16x16xf32> -> vector<16x16xf32>
    %c0_29 = arith.constant 0 : index
    %c0_30 = arith.constant 0 : index
    %c0_31 = arith.constant 0 : index
    %20 = vector.load %arg13[%c0_29, %c0_30, %c0_31] : memref<2x1x16xf32, #tpu.memory_space<vmem>>, vector<1x1x16xf32>
    %21 = vector.shape_cast %20 : vector<1x1x16xf32> to vector<1x16xf32>
    %22 = vector.broadcast %21 : vector<1x16xf32> to vector<16x16xf32>
    %23 = arith.addf %19, %22 : vector<16x16xf32>
    %c0_32 = arith.constant 0 : index
    %c0_33 = arith.constant 0 : index
    %c0_34 = arith.constant 0 : index
    %24 = vector.load %arg11[%c0_32, %c0_33, %c0_34] : memref<2x32x16xf32, #tpu.memory_space<vmem>>, vector<1x32x16xf32>
    %25 = vector.shape_cast %24 : vector<1x32x16xf32> to vector<32x16xf32>
    %cst_35 = arith.constant dense<0.000000e+00> : vector<16x16xf32>
    %26 = tpu.matmul %13, %25, %cst_35 {dimension_numbers = #tpu.dot_dimension_numbers<[1], [0], [0], [1], [0, 0, 1, 1], [], []>} : vector<16x32xf32>, vector<32x16xf32>, vector<16x16xf32> -> vector<16x16xf32>
    %c0_36 = arith.constant 0 : index
    %c0_37 = arith.constant 0 : index
    %c0_38 = arith.constant 0 : index
    %27 = vector.load %arg14[%c0_36, %c0_37, %c0_38] : memref<2x1x16xf32, #tpu.memory_space<vmem>>, vector<1x1x16xf32>
    %28 = vector.shape_cast %27 : vector<1x1x16xf32> to vector<1x16xf32>
    %29 = vector.broadcast %28 : vector<1x16xf32> to vector<16x16xf32>
    %30 = arith.addf %26, %29 : vector<16x16xf32>
    %c0_39 = arith.constant 0 : index
    %c0_40 = arith.constant 0 : index
    %c0_41 = arith.constant 0 : index
    %31 = vector.load %arg12[%c0_39, %c0_40, %c0_41] : memref<2x32x16xf32, #tpu.memory_space<vmem>>, vector<1x32x16xf32>
    %32 = vector.shape_cast %31 : vector<1x32x16xf32> to vector<32x16xf32>
    %cst_42 = arith.constant dense<0.000000e+00> : vector<16x16xf32>
    %33 = tpu.matmul %13, %32, %cst_42 {dimension_numbers = #tpu.dot_dimension_numbers<[1], [0], [0], [1], [0, 0, 1, 1], [], []>} : vector<16x32xf32>, vector<32x16xf32>, vector<16x16xf32> -> vector<16x16xf32>
    %c0_43 = arith.constant 0 : index
    %c0_44 = arith.constant 0 : index
    %c0_45 = arith.constant 0 : index
    %34 = vector.load %arg15[%c0_43, %c0_44, %c0_45] : memref<2x1x16xf32, #tpu.memory_space<vmem>>, vector<1x1x16xf32>
    %35 = vector.shape_cast %34 : vector<1x1x16xf32> to vector<1x16xf32>
    %36 = vector.broadcast %35 : vector<1x16xf32> to vector<16x16xf32>
    %37 = arith.addf %33, %36 : vector<16x16xf32>
    %cst_46 = arith.constant dense<0.000000e+00> : vector<16x16xf32>
    %38 = tpu.matmul %23, %30, %cst_46 {dimension_numbers = #tpu.dot_dimension_numbers<[1], [1], [0], [0], [0, 0, 1, 0], [], []>} : vector<16x16xf32>, vector<16x16xf32>, vector<16x16xf32> -> vector<16x16xf32>
    %cst_47 = arith.constant 2.500000e-01 : f32
    %39 = vector.broadcast %cst_47 : f32 to vector<16x16xf32>
    %40 = arith.mulf %38, %39 : vector<16x16xf32>
    %cst_48 = arith.constant dense<0.000000e+00> : vector<16x256xf32>
    %41 = tpu.matmul %23, %6, %cst_48 {dimension_numbers = #tpu.dot_dimension_numbers<[1], [0], [0], [1], [0, 0, 1, 1], [], []>} : vector<16x16xf32>, vector<16x256xf32>, vector<16x256xf32> -> vector<16x256xf32>
    %42 = arith.mulf %41, %14 : vector<16x256xf32>
    %cst_49 = arith.constant dense<0.000000e+00> : vector<16x16xf32>
    %43 = tpu.matmul %42, %7, %cst_49 {dimension_numbers = #tpu.dot_dimension_numbers<[1], [0], [0], [1], [0, 0, 1, 1], [], []>} : vector<16x256xf32>, vector<256x16xf32>, vector<16x16xf32> -> vector<16x16xf32>
    %cst_50 = arith.constant 2.500000e-01 : f32
    %44 = vector.broadcast %cst_50 : f32 to vector<16x16xf32>
    %45 = arith.mulf %43, %44 : vector<16x16xf32>
    %46 = arith.addf %40, %45 : vector<16x16xf32>
    %cst_51 = arith.constant 5.000000e-01 : f32
    %47 = vector.broadcast %cst_51 : f32 to vector<16x16xf32>
    %48 = arith.cmpf olt, %5, %47 : vector<16x16xf32>
    %cst_52 = arith.constant -1.000000e+04 : f32
    %49 = vector.broadcast %cst_52 : f32 to vector<16x16xf32>
    %50 = arith.select %48, %49, %46 : vector<16x16xi1>, vector<16x16xf32>
    %cst_53 = arith.constant dense<0xFF800000> : vector<16xf32>
    %51 = vector.multi_reduction <maximumf>, %50, %cst_53 [1] : vector<16x16xf32> to vector<16xf32>
    %52 = vector.shape_cast %51 : vector<16xf32> to vector<16x1xf32>
    %53 = vector.broadcast %52 : vector<16x1xf32> to vector<16x16xf32>
    %54 = arith.subf %50, %53 : vector<16x16xf32>
    %55 = math.exp %54 : vector<16x16xf32>
    %cst_54 = arith.constant dense<0.000000e+00> : vector<16xf32>
    %56 = vector.multi_reduction <add>, %55, %cst_54 [1] : vector<16x16xf32> to vector<16xf32>
    %57 = vector.shape_cast %56 : vector<16xf32> to vector<16x1xf32>
    %58 = vector.broadcast %57 : vector<16x1xf32> to vector<16x16xf32>
    %59 = arith.divf %55, %58 : vector<16x16xf32>
    %cst_55 = arith.constant dense<0.000000e+00> : vector<16x16xf32>
    %60 = tpu.matmul %59, %37, %cst_55 {dimension_numbers = #tpu.dot_dimension_numbers<[1], [0], [0], [1], [0, 0, 1, 1], [], []>} : vector<16x16xf32>, vector<16x16xf32>, vector<16x16xf32> -> vector<16x16xf32>
    %cst_56 = arith.constant dense<0.000000e+00> : vector<16x256xf32>
    %61 = tpu.matmul %59, %8, %cst_56 {dimension_numbers = #tpu.dot_dimension_numbers<[1], [0], [0], [1], [0, 0, 1, 1], [], []>} : vector<16x16xf32>, vector<16x256xf32>, vector<16x256xf32> -> vector<16x256xf32>
    %62 = arith.mulf %61, %15 : vector<16x256xf32>
    %cst_57 = arith.constant dense<0.000000e+00> : vector<16x16xf32>
    %63 = tpu.matmul %62, %9, %cst_57 {dimension_numbers = #tpu.dot_dimension_numbers<[1], [0], [0], [1], [0, 0, 1, 1], [], []>} : vector<16x256xf32>, vector<256x16xf32>, vector<16x16xf32> -> vector<16x16xf32>
    %64 = arith.addf %60, %63 : vector<16x16xf32>
    %c0_58 = arith.constant 0 : index
    %c0_59 = arith.constant 0 : index
    %c0_60 = arith.constant 0 : index
    %65 = vector.load %arg16[%c0_58, %c0_59, %c0_60] : memref<2x16x32xf32, #tpu.memory_space<vmem>>, vector<1x16x32xf32>
    %66 = vector.shape_cast %65 : vector<1x16x32xf32> to vector<16x32xf32>
    %cst_61 = arith.constant dense<0.000000e+00> : vector<16x32xf32>
    %67 = tpu.matmul %64, %66, %cst_61 {dimension_numbers = #tpu.dot_dimension_numbers<[1], [0], [0], [1], [0, 0, 1, 1], [], []>} : vector<16x16xf32>, vector<16x32xf32>, vector<16x32xf32> -> vector<16x32xf32>
    %68 = vector.broadcast %16 : vector<1x32xf32> to vector<16x32xf32>
    %69 = arith.addf %68, %67 : vector<16x32xf32>
    %c1 = arith.constant 1 : index
    %c0_62 = arith.constant 0 : index
    %c0_63 = arith.constant 0 : index
    %70 = vector.load %arg10[%c1, %c0_62, %c0_63] : memref<2x32x16xf32, #tpu.memory_space<vmem>>, vector<1x32x16xf32>
    %71 = vector.shape_cast %70 : vector<1x32x16xf32> to vector<32x16xf32>
    %cst_64 = arith.constant dense<0.000000e+00> : vector<16x16xf32>
    %72 = tpu.matmul %13, %71, %cst_64 {dimension_numbers = #tpu.dot_dimension_numbers<[1], [0], [0], [1], [0, 0, 1, 1], [], []>} : vector<16x32xf32>, vector<32x16xf32>, vector<16x16xf32> -> vector<16x16xf32>
    %c1_65 = arith.constant 1 : index
    %c0_66 = arith.constant 0 : index
    %c0_67 = arith.constant 0 : index
    %73 = vector.load %arg13[%c1_65, %c0_66, %c0_67] : memref<2x1x16xf32, #tpu.memory_space<vmem>>, vector<1x1x16xf32>
    %74 = vector.shape_cast %73 : vector<1x1x16xf32> to vector<1x16xf32>
    %75 = vector.broadcast %74 : vector<1x16xf32> to vector<16x16xf32>
    %76 = arith.addf %72, %75 : vector<16x16xf32>
    %c1_68 = arith.constant 1 : index
    %c0_69 = arith.constant 0 : index
    %c0_70 = arith.constant 0 : index
    %77 = vector.load %arg11[%c1_68, %c0_69, %c0_70] : memref<2x32x16xf32, #tpu.memory_space<vmem>>, vector<1x32x16xf32>
    %78 = vector.shape_cast %77 : vector<1x32x16xf32> to vector<32x16xf32>
    %cst_71 = arith.constant dense<0.000000e+00> : vector<16x16xf32>
    %79 = tpu.matmul %13, %78, %cst_71 {dimension_numbers = #tpu.dot_dimension_numbers<[1], [0], [0], [1], [0, 0, 1, 1], [], []>} : vector<16x32xf32>, vector<32x16xf32>, vector<16x16xf32> -> vector<16x16xf32>
    %c1_72 = arith.constant 1 : index
    %c0_73 = arith.constant 0 : index
    %c0_74 = arith.constant 0 : index
    %80 = vector.load %arg14[%c1_72, %c0_73, %c0_74] : memref<2x1x16xf32, #tpu.memory_space<vmem>>, vector<1x1x16xf32>
    %81 = vector.shape_cast %80 : vector<1x1x16xf32> to vector<1x16xf32>
    %82 = vector.broadcast %81 : vector<1x16xf32> to vector<16x16xf32>
    %83 = arith.addf %79, %82 : vector<16x16xf32>
    %c1_75 = arith.constant 1 : index
    %c0_76 = arith.constant 0 : index
    %c0_77 = arith.constant 0 : index
    %84 = vector.load %arg12[%c1_75, %c0_76, %c0_77] : memref<2x32x16xf32, #tpu.memory_space<vmem>>, vector<1x32x16xf32>
    %85 = vector.shape_cast %84 : vector<1x32x16xf32> to vector<32x16xf32>
    %cst_78 = arith.constant dense<0.000000e+00> : vector<16x16xf32>
    %86 = tpu.matmul %13, %85, %cst_78 {dimension_numbers = #tpu.dot_dimension_numbers<[1], [0], [0], [1], [0, 0, 1, 1], [], []>} : vector<16x32xf32>, vector<32x16xf32>, vector<16x16xf32> -> vector<16x16xf32>
    %c1_79 = arith.constant 1 : index
    %c0_80 = arith.constant 0 : index
    %c0_81 = arith.constant 0 : index
    %87 = vector.load %arg15[%c1_79, %c0_80, %c0_81] : memref<2x1x16xf32, #tpu.memory_space<vmem>>, vector<1x1x16xf32>
    %88 = vector.shape_cast %87 : vector<1x1x16xf32> to vector<1x16xf32>
    %89 = vector.broadcast %88 : vector<1x16xf32> to vector<16x16xf32>
    %90 = arith.addf %86, %89 : vector<16x16xf32>
    %cst_82 = arith.constant dense<0.000000e+00> : vector<16x16xf32>
    %91 = tpu.matmul %76, %83, %cst_82 {dimension_numbers = #tpu.dot_dimension_numbers<[1], [1], [0], [0], [0, 0, 1, 0], [], []>} : vector<16x16xf32>, vector<16x16xf32>, vector<16x16xf32> -> vector<16x16xf32>
    %cst_83 = arith.constant 2.500000e-01 : f32
    %92 = vector.broadcast %cst_83 : f32 to vector<16x16xf32>
    %93 = arith.mulf %91, %92 : vector<16x16xf32>
    %cst_84 = arith.constant dense<0.000000e+00> : vector<16x256xf32>
    %94 = tpu.matmul %76, %6, %cst_84 {dimension_numbers = #tpu.dot_dimension_numbers<[1], [0], [0], [1], [0, 0, 1, 1], [], []>} : vector<16x16xf32>, vector<16x256xf32>, vector<16x256xf32> -> vector<16x256xf32>
    %95 = arith.mulf %94, %14 : vector<16x256xf32>
    %cst_85 = arith.constant dense<0.000000e+00> : vector<16x16xf32>
    %96 = tpu.matmul %95, %7, %cst_85 {dimension_numbers = #tpu.dot_dimension_numbers<[1], [0], [0], [1], [0, 0, 1, 1], [], []>} : vector<16x256xf32>, vector<256x16xf32>, vector<16x16xf32> -> vector<16x16xf32>
    %cst_86 = arith.constant 2.500000e-01 : f32
    %97 = vector.broadcast %cst_86 : f32 to vector<16x16xf32>
    %98 = arith.mulf %96, %97 : vector<16x16xf32>
    %99 = arith.addf %93, %98 : vector<16x16xf32>
    %cst_87 = arith.constant 5.000000e-01 : f32
    %100 = vector.broadcast %cst_87 : f32 to vector<16x16xf32>
    %101 = arith.cmpf olt, %5, %100 : vector<16x16xf32>
    %cst_88 = arith.constant -1.000000e+04 : f32
    %102 = vector.broadcast %cst_88 : f32 to vector<16x16xf32>
    %103 = arith.select %101, %102, %99 : vector<16x16xi1>, vector<16x16xf32>
    %cst_89 = arith.constant dense<0xFF800000> : vector<16xf32>
    %104 = vector.multi_reduction <maximumf>, %103, %cst_89 [1] : vector<16x16xf32> to vector<16xf32>
    %105 = vector.shape_cast %104 : vector<16xf32> to vector<16x1xf32>
    %106 = vector.broadcast %105 : vector<16x1xf32> to vector<16x16xf32>
    %107 = arith.subf %103, %106 : vector<16x16xf32>
    %108 = math.exp %107 : vector<16x16xf32>
    %cst_90 = arith.constant dense<0.000000e+00> : vector<16xf32>
    %109 = vector.multi_reduction <add>, %108, %cst_90 [1] : vector<16x16xf32> to vector<16xf32>
    %110 = vector.shape_cast %109 : vector<16xf32> to vector<16x1xf32>
    %111 = vector.broadcast %110 : vector<16x1xf32> to vector<16x16xf32>
    %112 = arith.divf %108, %111 : vector<16x16xf32>
    %cst_91 = arith.constant dense<0.000000e+00> : vector<16x16xf32>
    %113 = tpu.matmul %112, %90, %cst_91 {dimension_numbers = #tpu.dot_dimension_numbers<[1], [0], [0], [1], [0, 0, 1, 1], [], []>} : vector<16x16xf32>, vector<16x16xf32>, vector<16x16xf32> -> vector<16x16xf32>
    %cst_92 = arith.constant dense<0.000000e+00> : vector<16x256xf32>
    %114 = tpu.matmul %112, %8, %cst_92 {dimension_numbers = #tpu.dot_dimension_numbers<[1], [0], [0], [1], [0, 0, 1, 1], [], []>} : vector<16x16xf32>, vector<16x256xf32>, vector<16x256xf32> -> vector<16x256xf32>
    %115 = arith.mulf %114, %15 : vector<16x256xf32>
    %cst_93 = arith.constant dense<0.000000e+00> : vector<16x16xf32>
    %116 = tpu.matmul %115, %9, %cst_93 {dimension_numbers = #tpu.dot_dimension_numbers<[1], [0], [0], [1], [0, 0, 1, 1], [], []>} : vector<16x256xf32>, vector<256x16xf32>, vector<16x16xf32> -> vector<16x16xf32>
    %117 = arith.addf %113, %116 : vector<16x16xf32>
    %c1_94 = arith.constant 1 : index
    %c0_95 = arith.constant 0 : index
    %c0_96 = arith.constant 0 : index
    %118 = vector.load %arg16[%c1_94, %c0_95, %c0_96] : memref<2x16x32xf32, #tpu.memory_space<vmem>>, vector<1x16x32xf32>
    %119 = vector.shape_cast %118 : vector<1x16x32xf32> to vector<16x32xf32>
    %cst_97 = arith.constant dense<0.000000e+00> : vector<16x32xf32>
    %120 = tpu.matmul %117, %119, %cst_97 {dimension_numbers = #tpu.dot_dimension_numbers<[1], [0], [0], [1], [0, 0, 1, 1], [], []>} : vector<16x16xf32>, vector<16x32xf32>, vector<16x32xf32> -> vector<16x32xf32>
    %121 = arith.addf %69, %120 : vector<16x32xf32>
    %122 = arith.addf %13, %121 : vector<16x32xf32>
    %c0_98 = arith.constant 0 : index
    %c0_99 = arith.constant 0 : index
    %123 = vector.load %arg20[%c0_98, %c0_99] : memref<1x32xf32, #tpu.memory_space<vmem>>, vector<1x32xf32>
    %c0_100 = arith.constant 0 : index
    %c0_101 = arith.constant 0 : index
    %124 = vector.load %arg21[%c0_100, %c0_101] : memref<1x32xf32, #tpu.memory_space<vmem>>, vector<1x32xf32>
    %cst_102 = arith.constant dense<0.000000e+00> : vector<16xf32>
    %125 = vector.multi_reduction <add>, %122, %cst_102 [1] : vector<16x32xf32> to vector<16xf32>
    %126 = vector.shape_cast %125 : vector<16xf32> to vector<16x1xf32>
    %cst_103 = arith.constant 3.200000e+01 : f32
    %127 = vector.broadcast %cst_103 : f32 to vector<16x1xf32>
    %128 = arith.divf %126, %127 : vector<16x1xf32>
    %129 = vector.broadcast %128 : vector<16x1xf32> to vector<16x32xf32>
    %130 = arith.subf %122, %129 : vector<16x32xf32>
    %131 = arith.mulf %130, %130 : vector<16x32xf32>
    %cst_104 = arith.constant dense<0.000000e+00> : vector<16xf32>
    %132 = vector.multi_reduction <add>, %131, %cst_104 [1] : vector<16x32xf32> to vector<16xf32>
    %133 = vector.shape_cast %132 : vector<16xf32> to vector<16x1xf32>
    %cst_105 = arith.constant 3.200000e+01 : f32
    %134 = vector.broadcast %cst_105 : f32 to vector<16x1xf32>
    %135 = arith.divf %133, %134 : vector<16x1xf32>
    %136 = vector.broadcast %128 : vector<16x1xf32> to vector<16x32xf32>
    %137 = arith.subf %122, %136 : vector<16x32xf32>
    %cst_106 = arith.constant 9.99999974E-5 : f32
    %138 = vector.broadcast %cst_106 : f32 to vector<16x1xf32>
    %139 = arith.addf %135, %138 : vector<16x1xf32>
    %140 = math.rsqrt %139 : vector<16x1xf32>
    %141 = vector.broadcast %140 : vector<16x1xf32> to vector<16x32xf32>
    %142 = arith.mulf %137, %141 : vector<16x32xf32>
    %143 = vector.broadcast %123 : vector<1x32xf32> to vector<16x32xf32>
    %144 = arith.mulf %142, %143 : vector<16x32xf32>
    %145 = vector.broadcast %124 : vector<1x32xf32> to vector<16x32xf32>
    %146 = arith.addf %144, %145 : vector<16x32xf32>
    %147 = vector.broadcast %3 : vector<16x1xf32> to vector<16x32xf32>
    %148 = arith.mulf %146, %147 : vector<16x32xf32>
    %c0_107 = arith.constant 0 : index
    %c0_108 = arith.constant 0 : index
    %149 = vector.load %arg23[%c0_107, %c0_108] : memref<1x64xf32, #tpu.memory_space<vmem>>, vector<1x64xf32>
    %c0_109 = arith.constant 0 : index
    %c0_110 = arith.constant 0 : index
    %c0_111 = arith.constant 0 : index
    %150 = vector.load %arg22[%c0_109, %c0_110, %c0_111] : memref<3x32x64xf32, #tpu.memory_space<vmem>>, vector<1x32x64xf32>
    %151 = vector.shape_cast %150 : vector<1x32x64xf32> to vector<32x64xf32>
    %cst_112 = arith.constant dense<0.000000e+00> : vector<16x64xf32>
    %152 = tpu.matmul %148, %151, %cst_112 {dimension_numbers = #tpu.dot_dimension_numbers<[1], [0], [0], [1], [0, 0, 1, 1], [], []>} : vector<16x32xf32>, vector<32x64xf32>, vector<16x64xf32> -> vector<16x64xf32>
    %c1_113 = arith.constant 1 : index
    %c0_114 = arith.constant 0 : index
    %c0_115 = arith.constant 0 : index
    %153 = vector.load %arg22[%c1_113, %c0_114, %c0_115] : memref<3x32x64xf32, #tpu.memory_space<vmem>>, vector<1x32x64xf32>
    %154 = vector.shape_cast %153 : vector<1x32x64xf32> to vector<32x64xf32>
    %cst_116 = arith.constant dense<0.000000e+00> : vector<16x64xf32>
    %155 = tpu.matmul %148, %154, %cst_116 {dimension_numbers = #tpu.dot_dimension_numbers<[1], [0], [0], [1], [0, 0, 1, 1], [], []>} : vector<16x32xf32>, vector<32x64xf32>, vector<16x64xf32> -> vector<16x64xf32>
    %c2 = arith.constant 2 : index
    %c0_117 = arith.constant 0 : index
    %c0_118 = arith.constant 0 : index
    %156 = vector.load %arg22[%c2, %c0_117, %c0_118] : memref<3x32x64xf32, #tpu.memory_space<vmem>>, vector<1x32x64xf32>
    %157 = vector.shape_cast %156 : vector<1x32x64xf32> to vector<32x64xf32>
    %cst_119 = arith.constant dense<0.000000e+00> : vector<16x64xf32>
    %158 = tpu.matmul %148, %157, %cst_119 {dimension_numbers = #tpu.dot_dimension_numbers<[1], [0], [0], [1], [0, 0, 1, 1], [], []>} : vector<16x32xf32>, vector<32x64xf32>, vector<16x64xf32> -> vector<16x64xf32>
    %cst_120 = arith.constant dense<0.000000e+00> : vector<16x64xf32>
    %159 = tpu.matmul %10, %152, %cst_120 {dimension_numbers = #tpu.dot_dimension_numbers<[1], [0], [0], [1], [0, 0, 1, 1], [], []>} : vector<16x16xf32>, vector<16x64xf32>, vector<16x64xf32> -> vector<16x64xf32>
    %160 = arith.addf %155, %159 : vector<16x64xf32>
    %cst_121 = arith.constant dense<0.000000e+00> : vector<16x64xf32>
    %161 = tpu.matmul %11, %158, %cst_121 {dimension_numbers = #tpu.dot_dimension_numbers<[1], [0], [0], [1], [0, 0, 1, 1], [], []>} : vector<16x16xf32>, vector<16x64xf32>, vector<16x64xf32> -> vector<16x64xf32>
    %162 = arith.addf %160, %161 : vector<16x64xf32>
    %163 = vector.broadcast %149 : vector<1x64xf32> to vector<16x64xf32>
    %164 = arith.addf %162, %163 : vector<16x64xf32>
    %cst_122 = arith.constant 0.000000e+00 : f32
    %165 = vector.broadcast %cst_122 : f32 to vector<16x64xf32>
    %166 = arith.maximumf %164, %165 : vector<16x64xf32>
    %167 = vector.broadcast %3 : vector<16x1xf32> to vector<16x64xf32>
    %168 = arith.mulf %166, %167 : vector<16x64xf32>
    %c0_123 = arith.constant 0 : index
    %c0_124 = arith.constant 0 : index
    %169 = vector.load %arg25[%c0_123, %c0_124] : memref<1x32xf32, #tpu.memory_space<vmem>>, vector<1x32xf32>
    %c0_125 = arith.constant 0 : index
    %c0_126 = arith.constant 0 : index
    %c0_127 = arith.constant 0 : index
    %170 = vector.load %arg24[%c0_125, %c0_126, %c0_127] : memref<3x64x32xf32, #tpu.memory_space<vmem>>, vector<1x64x32xf32>
    %171 = vector.shape_cast %170 : vector<1x64x32xf32> to vector<64x32xf32>
    %cst_128 = arith.constant dense<0.000000e+00> : vector<16x32xf32>
    %172 = tpu.matmul %168, %171, %cst_128 {dimension_numbers = #tpu.dot_dimension_numbers<[1], [0], [0], [1], [0, 0, 1, 1], [], []>} : vector<16x64xf32>, vector<64x32xf32>, vector<16x32xf32> -> vector<16x32xf32>
    %c1_129 = arith.constant 1 : index
    %c0_130 = arith.constant 0 : index
    %c0_131 = arith.constant 0 : index
    %173 = vector.load %arg24[%c1_129, %c0_130, %c0_131] : memref<3x64x32xf32, #tpu.memory_space<vmem>>, vector<1x64x32xf32>
    %174 = vector.shape_cast %173 : vector<1x64x32xf32> to vector<64x32xf32>
    %cst_132 = arith.constant dense<0.000000e+00> : vector<16x32xf32>
    %175 = tpu.matmul %168, %174, %cst_132 {dimension_numbers = #tpu.dot_dimension_numbers<[1], [0], [0], [1], [0, 0, 1, 1], [], []>} : vector<16x64xf32>, vector<64x32xf32>, vector<16x32xf32> -> vector<16x32xf32>
    %c2_133 = arith.constant 2 : index
    %c0_134 = arith.constant 0 : index
    %c0_135 = arith.constant 0 : index
    %176 = vector.load %arg24[%c2_133, %c0_134, %c0_135] : memref<3x64x32xf32, #tpu.memory_space<vmem>>, vector<1x64x32xf32>
    %177 = vector.shape_cast %176 : vector<1x64x32xf32> to vector<64x32xf32>
    %cst_136 = arith.constant dense<0.000000e+00> : vector<16x32xf32>
    %178 = tpu.matmul %168, %177, %cst_136 {dimension_numbers = #tpu.dot_dimension_numbers<[1], [0], [0], [1], [0, 0, 1, 1], [], []>} : vector<16x64xf32>, vector<64x32xf32>, vector<16x32xf32> -> vector<16x32xf32>
    %cst_137 = arith.constant dense<0.000000e+00> : vector<16x32xf32>
    %179 = tpu.matmul %10, %172, %cst_137 {dimension_numbers = #tpu.dot_dimension_numbers<[1], [0], [0], [1], [0, 0, 1, 1], [], []>} : vector<16x16xf32>, vector<16x32xf32>, vector<16x32xf32> -> vector<16x32xf32>
    %180 = arith.addf %175, %179 : vector<16x32xf32>
    %cst_138 = arith.constant dense<0.000000e+00> : vector<16x32xf32>
    %181 = tpu.matmul %11, %178, %cst_138 {dimension_numbers = #tpu.dot_dimension_numbers<[1], [0], [0], [1], [0, 0, 1, 1], [], []>} : vector<16x16xf32>, vector<16x32xf32>, vector<16x32xf32> -> vector<16x32xf32>
    %182 = arith.addf %180, %181 : vector<16x32xf32>
    %183 = vector.broadcast %169 : vector<1x32xf32> to vector<16x32xf32>
    %184 = arith.addf %182, %183 : vector<16x32xf32>
    %185 = vector.broadcast %3 : vector<16x1xf32> to vector<16x32xf32>
    %186 = arith.mulf %184, %185 : vector<16x32xf32>
    %187 = arith.addf %146, %186 : vector<16x32xf32>
    %c0_139 = arith.constant 0 : index
    %c0_140 = arith.constant 0 : index
    %188 = vector.load %arg26[%c0_139, %c0_140] : memref<1x32xf32, #tpu.memory_space<vmem>>, vector<1x32xf32>
    %c0_141 = arith.constant 0 : index
    %c0_142 = arith.constant 0 : index
    %189 = vector.load %arg27[%c0_141, %c0_142] : memref<1x32xf32, #tpu.memory_space<vmem>>, vector<1x32xf32>
    %cst_143 = arith.constant dense<0.000000e+00> : vector<16xf32>
    %190 = vector.multi_reduction <add>, %187, %cst_143 [1] : vector<16x32xf32> to vector<16xf32>
    %191 = vector.shape_cast %190 : vector<16xf32> to vector<16x1xf32>
    %cst_144 = arith.constant 3.200000e+01 : f32
    %192 = vector.broadcast %cst_144 : f32 to vector<16x1xf32>
    %193 = arith.divf %191, %192 : vector<16x1xf32>
    %194 = vector.broadcast %193 : vector<16x1xf32> to vector<16x32xf32>
    %195 = arith.subf %187, %194 : vector<16x32xf32>
    %196 = arith.mulf %195, %195 : vector<16x32xf32>
    %cst_145 = arith.constant dense<0.000000e+00> : vector<16xf32>
    %197 = vector.multi_reduction <add>, %196, %cst_145 [1] : vector<16x32xf32> to vector<16xf32>
    %198 = vector.shape_cast %197 : vector<16xf32> to vector<16x1xf32>
    %cst_146 = arith.constant 3.200000e+01 : f32
    %199 = vector.broadcast %cst_146 : f32 to vector<16x1xf32>
    %200 = arith.divf %198, %199 : vector<16x1xf32>
    %201 = vector.broadcast %193 : vector<16x1xf32> to vector<16x32xf32>
    %202 = arith.subf %187, %201 : vector<16x32xf32>
    %cst_147 = arith.constant 9.99999974E-5 : f32
    %203 = vector.broadcast %cst_147 : f32 to vector<16x1xf32>
    %204 = arith.addf %200, %203 : vector<16x1xf32>
    %205 = math.rsqrt %204 : vector<16x1xf32>
    %206 = vector.broadcast %205 : vector<16x1xf32> to vector<16x32xf32>
    %207 = arith.mulf %202, %206 : vector<16x32xf32>
    %208 = vector.broadcast %188 : vector<1x32xf32> to vector<16x32xf32>
    %209 = arith.mulf %207, %208 : vector<16x32xf32>
    %210 = vector.broadcast %189 : vector<1x32xf32> to vector<16x32xf32>
    %211 = arith.addf %209, %210 : vector<16x32xf32>
    %212 = vector.broadcast %3 : vector<16x1xf32> to vector<16x32xf32>
    %213 = arith.mulf %211, %212 : vector<16x32xf32>
    %c0_148 = arith.constant 0 : index
    %c0_149 = arith.constant 0 : index
    %214 = vector.load %arg36[%c0_148, %c0_149] : memref<16x256xf32, #tpu.memory_space<vmem>>, vector<16x256xf32>
    %c0_150 = arith.constant 0 : index
    %c0_151 = arith.constant 0 : index
    %215 = vector.load %arg37[%c0_150, %c0_151] : memref<16x256xf32, #tpu.memory_space<vmem>>, vector<16x256xf32>
    %c0_152 = arith.constant 0 : index
    %c0_153 = arith.constant 0 : index
    %216 = vector.load %arg35[%c0_152, %c0_153] : memref<1x32xf32, #tpu.memory_space<vmem>>, vector<1x32xf32>
    %c0_154 = arith.constant 0 : index
    %c0_155 = arith.constant 0 : index
    %c0_156 = arith.constant 0 : index
    %217 = vector.load %arg28[%c0_154, %c0_155, %c0_156] : memref<2x32x16xf32, #tpu.memory_space<vmem>>, vector<1x32x16xf32>
    %218 = vector.shape_cast %217 : vector<1x32x16xf32> to vector<32x16xf32>
    %cst_157 = arith.constant dense<0.000000e+00> : vector<16x16xf32>
    %219 = tpu.matmul %213, %218, %cst_157 {dimension_numbers = #tpu.dot_dimension_numbers<[1], [0], [0], [1], [0, 0, 1, 1], [], []>} : vector<16x32xf32>, vector<32x16xf32>, vector<16x16xf32> -> vector<16x16xf32>
    %c0_158 = arith.constant 0 : index
    %c0_159 = arith.constant 0 : index
    %c0_160 = arith.constant 0 : index
    %220 = vector.load %arg31[%c0_158, %c0_159, %c0_160] : memref<2x1x16xf32, #tpu.memory_space<vmem>>, vector<1x1x16xf32>
    %221 = vector.shape_cast %220 : vector<1x1x16xf32> to vector<1x16xf32>
    %222 = vector.broadcast %221 : vector<1x16xf32> to vector<16x16xf32>
    %223 = arith.addf %219, %222 : vector<16x16xf32>
    %c0_161 = arith.constant 0 : index
    %c0_162 = arith.constant 0 : index
    %c0_163 = arith.constant 0 : index
    %224 = vector.load %arg29[%c0_161, %c0_162, %c0_163] : memref<2x32x16xf32, #tpu.memory_space<vmem>>, vector<1x32x16xf32>
    %225 = vector.shape_cast %224 : vector<1x32x16xf32> to vector<32x16xf32>
    %cst_164 = arith.constant dense<0.000000e+00> : vector<16x16xf32>
    %226 = tpu.matmul %213, %225, %cst_164 {dimension_numbers = #tpu.dot_dimension_numbers<[1], [0], [0], [1], [0, 0, 1, 1], [], []>} : vector<16x32xf32>, vector<32x16xf32>, vector<16x16xf32> -> vector<16x16xf32>
    %c0_165 = arith.constant 0 : index
    %c0_166 = arith.constant 0 : index
    %c0_167 = arith.constant 0 : index
    %227 = vector.load %arg32[%c0_165, %c0_166, %c0_167] : memref<2x1x16xf32, #tpu.memory_space<vmem>>, vector<1x1x16xf32>
    %228 = vector.shape_cast %227 : vector<1x1x16xf32> to vector<1x16xf32>
    %229 = vector.broadcast %228 : vector<1x16xf32> to vector<16x16xf32>
    %230 = arith.addf %226, %229 : vector<16x16xf32>
    %c0_168 = arith.constant 0 : index
    %c0_169 = arith.constant 0 : index
    %c0_170 = arith.constant 0 : index
    %231 = vector.load %arg30[%c0_168, %c0_169, %c0_170] : memref<2x32x16xf32, #tpu.memory_space<vmem>>, vector<1x32x16xf32>
    %232 = vector.shape_cast %231 : vector<1x32x16xf32> to vector<32x16xf32>
    %cst_171 = arith.constant dense<0.000000e+00> : vector<16x16xf32>
    %233 = tpu.matmul %213, %232, %cst_171 {dimension_numbers = #tpu.dot_dimension_numbers<[1], [0], [0], [1], [0, 0, 1, 1], [], []>} : vector<16x32xf32>, vector<32x16xf32>, vector<16x16xf32> -> vector<16x16xf32>
    %c0_172 = arith.constant 0 : index
    %c0_173 = arith.constant 0 : index
    %c0_174 = arith.constant 0 : index
    %234 = vector.load %arg33[%c0_172, %c0_173, %c0_174] : memref<2x1x16xf32, #tpu.memory_space<vmem>>, vector<1x1x16xf32>
    %235 = vector.shape_cast %234 : vector<1x1x16xf32> to vector<1x16xf32>
    %236 = vector.broadcast %235 : vector<1x16xf32> to vector<16x16xf32>
    %237 = arith.addf %233, %236 : vector<16x16xf32>
    %cst_175 = arith.constant dense<0.000000e+00> : vector<16x16xf32>
    %238 = tpu.matmul %223, %230, %cst_175 {dimension_numbers = #tpu.dot_dimension_numbers<[1], [1], [0], [0], [0, 0, 1, 0], [], []>} : vector<16x16xf32>, vector<16x16xf32>, vector<16x16xf32> -> vector<16x16xf32>
    %cst_176 = arith.constant 2.500000e-01 : f32
    %239 = vector.broadcast %cst_176 : f32 to vector<16x16xf32>
    %240 = arith.mulf %238, %239 : vector<16x16xf32>
    %cst_177 = arith.constant dense<0.000000e+00> : vector<16x256xf32>
    %241 = tpu.matmul %223, %6, %cst_177 {dimension_numbers = #tpu.dot_dimension_numbers<[1], [0], [0], [1], [0, 0, 1, 1], [], []>} : vector<16x16xf32>, vector<16x256xf32>, vector<16x256xf32> -> vector<16x256xf32>
    %242 = arith.mulf %241, %214 : vector<16x256xf32>
    %cst_178 = arith.constant dense<0.000000e+00> : vector<16x16xf32>
    %243 = tpu.matmul %242, %7, %cst_178 {dimension_numbers = #tpu.dot_dimension_numbers<[1], [0], [0], [1], [0, 0, 1, 1], [], []>} : vector<16x256xf32>, vector<256x16xf32>, vector<16x16xf32> -> vector<16x16xf32>
    %cst_179 = arith.constant 2.500000e-01 : f32
    %244 = vector.broadcast %cst_179 : f32 to vector<16x16xf32>
    %245 = arith.mulf %243, %244 : vector<16x16xf32>
    %246 = arith.addf %240, %245 : vector<16x16xf32>
    %cst_180 = arith.constant 5.000000e-01 : f32
    %247 = vector.broadcast %cst_180 : f32 to vector<16x16xf32>
    %248 = arith.cmpf olt, %5, %247 : vector<16x16xf32>
    %cst_181 = arith.constant -1.000000e+04 : f32
    %249 = vector.broadcast %cst_181 : f32 to vector<16x16xf32>
    %250 = arith.select %248, %249, %246 : vector<16x16xi1>, vector<16x16xf32>
    %cst_182 = arith.constant dense<0xFF800000> : vector<16xf32>
    %251 = vector.multi_reduction <maximumf>, %250, %cst_182 [1] : vector<16x16xf32> to vector<16xf32>
    %252 = vector.shape_cast %251 : vector<16xf32> to vector<16x1xf32>
    %253 = vector.broadcast %252 : vector<16x1xf32> to vector<16x16xf32>
    %254 = arith.subf %250, %253 : vector<16x16xf32>
    %255 = math.exp %254 : vector<16x16xf32>
    %cst_183 = arith.constant dense<0.000000e+00> : vector<16xf32>
    %256 = vector.multi_reduction <add>, %255, %cst_183 [1] : vector<16x16xf32> to vector<16xf32>
    %257 = vector.shape_cast %256 : vector<16xf32> to vector<16x1xf32>
    %258 = vector.broadcast %257 : vector<16x1xf32> to vector<16x16xf32>
    %259 = arith.divf %255, %258 : vector<16x16xf32>
    %cst_184 = arith.constant dense<0.000000e+00> : vector<16x16xf32>
    %260 = tpu.matmul %259, %237, %cst_184 {dimension_numbers = #tpu.dot_dimension_numbers<[1], [0], [0], [1], [0, 0, 1, 1], [], []>} : vector<16x16xf32>, vector<16x16xf32>, vector<16x16xf32> -> vector<16x16xf32>
    %cst_185 = arith.constant dense<0.000000e+00> : vector<16x256xf32>
    %261 = tpu.matmul %259, %8, %cst_185 {dimension_numbers = #tpu.dot_dimension_numbers<[1], [0], [0], [1], [0, 0, 1, 1], [], []>} : vector<16x16xf32>, vector<16x256xf32>, vector<16x256xf32> -> vector<16x256xf32>
    %262 = arith.mulf %261, %215 : vector<16x256xf32>
    %cst_186 = arith.constant dense<0.000000e+00> : vector<16x16xf32>
    %263 = tpu.matmul %262, %9, %cst_186 {dimension_numbers = #tpu.dot_dimension_numbers<[1], [0], [0], [1], [0, 0, 1, 1], [], []>} : vector<16x256xf32>, vector<256x16xf32>, vector<16x16xf32> -> vector<16x16xf32>
    %264 = arith.addf %260, %263 : vector<16x16xf32>
    %c0_187 = arith.constant 0 : index
    %c0_188 = arith.constant 0 : index
    %c0_189 = arith.constant 0 : index
    %265 = vector.load %arg34[%c0_187, %c0_188, %c0_189] : memref<2x16x32xf32, #tpu.memory_space<vmem>>, vector<1x16x32xf32>
    %266 = vector.shape_cast %265 : vector<1x16x32xf32> to vector<16x32xf32>
    %cst_190 = arith.constant dense<0.000000e+00> : vector<16x32xf32>
    %267 = tpu.matmul %264, %266, %cst_190 {dimension_numbers = #tpu.dot_dimension_numbers<[1], [0], [0], [1], [0, 0, 1, 1], [], []>} : vector<16x16xf32>, vector<16x32xf32>, vector<16x32xf32> -> vector<16x32xf32>
    %268 = vector.broadcast %216 : vector<1x32xf32> to vector<16x32xf32>
    %269 = arith.addf %268, %267 : vector<16x32xf32>
    %c1_191 = arith.constant 1 : index
    %c0_192 = arith.constant 0 : index
    %c0_193 = arith.constant 0 : index
    %270 = vector.load %arg28[%c1_191, %c0_192, %c0_193] : memref<2x32x16xf32, #tpu.memory_space<vmem>>, vector<1x32x16xf32>
    %271 = vector.shape_cast %270 : vector<1x32x16xf32> to vector<32x16xf32>
    %cst_194 = arith.constant dense<0.000000e+00> : vector<16x16xf32>
    %272 = tpu.matmul %213, %271, %cst_194 {dimension_numbers = #tpu.dot_dimension_numbers<[1], [0], [0], [1], [0, 0, 1, 1], [], []>} : vector<16x32xf32>, vector<32x16xf32>, vector<16x16xf32> -> vector<16x16xf32>
    %c1_195 = arith.constant 1 : index
    %c0_196 = arith.constant 0 : index
    %c0_197 = arith.constant 0 : index
    %273 = vector.load %arg31[%c1_195, %c0_196, %c0_197] : memref<2x1x16xf32, #tpu.memory_space<vmem>>, vector<1x1x16xf32>
    %274 = vector.shape_cast %273 : vector<1x1x16xf32> to vector<1x16xf32>
    %275 = vector.broadcast %274 : vector<1x16xf32> to vector<16x16xf32>
    %276 = arith.addf %272, %275 : vector<16x16xf32>
    %c1_198 = arith.constant 1 : index
    %c0_199 = arith.constant 0 : index
    %c0_200 = arith.constant 0 : index
    %277 = vector.load %arg29[%c1_198, %c0_199, %c0_200] : memref<2x32x16xf32, #tpu.memory_space<vmem>>, vector<1x32x16xf32>
    %278 = vector.shape_cast %277 : vector<1x32x16xf32> to vector<32x16xf32>
    %cst_201 = arith.constant dense<0.000000e+00> : vector<16x16xf32>
    %279 = tpu.matmul %213, %278, %cst_201 {dimension_numbers = #tpu.dot_dimension_numbers<[1], [0], [0], [1], [0, 0, 1, 1], [], []>} : vector<16x32xf32>, vector<32x16xf32>, vector<16x16xf32> -> vector<16x16xf32>
    %c1_202 = arith.constant 1 : index
    %c0_203 = arith.constant 0 : index
    %c0_204 = arith.constant 0 : index
    %280 = vector.load %arg32[%c1_202, %c0_203, %c0_204] : memref<2x1x16xf32, #tpu.memory_space<vmem>>, vector<1x1x16xf32>
    %281 = vector.shape_cast %280 : vector<1x1x16xf32> to vector<1x16xf32>
    %282 = vector.broadcast %281 : vector<1x16xf32> to vector<16x16xf32>
    %283 = arith.addf %279, %282 : vector<16x16xf32>
    %c1_205 = arith.constant 1 : index
    %c0_206 = arith.constant 0 : index
    %c0_207 = arith.constant 0 : index
    %284 = vector.load %arg30[%c1_205, %c0_206, %c0_207] : memref<2x32x16xf32, #tpu.memory_space<vmem>>, vector<1x32x16xf32>
    %285 = vector.shape_cast %284 : vector<1x32x16xf32> to vector<32x16xf32>
    %cst_208 = arith.constant dense<0.000000e+00> : vector<16x16xf32>
    %286 = tpu.matmul %213, %285, %cst_208 {dimension_numbers = #tpu.dot_dimension_numbers<[1], [0], [0], [1], [0, 0, 1, 1], [], []>} : vector<16x32xf32>, vector<32x16xf32>, vector<16x16xf32> -> vector<16x16xf32>
    %c1_209 = arith.constant 1 : index
    %c0_210 = arith.constant 0 : index
    %c0_211 = arith.constant 0 : index
    %287 = vector.load %arg33[%c1_209, %c0_210, %c0_211] : memref<2x1x16xf32, #tpu.memory_space<vmem>>, vector<1x1x16xf32>
    %288 = vector.shape_cast %287 : vector<1x1x16xf32> to vector<1x16xf32>
    %289 = vector.broadcast %288 : vector<1x16xf32> to vector<16x16xf32>
    %290 = arith.addf %286, %289 : vector<16x16xf32>
    %cst_212 = arith.constant dense<0.000000e+00> : vector<16x16xf32>
    %291 = tpu.matmul %276, %283, %cst_212 {dimension_numbers = #tpu.dot_dimension_numbers<[1], [1], [0], [0], [0, 0, 1, 0], [], []>} : vector<16x16xf32>, vector<16x16xf32>, vector<16x16xf32> -> vector<16x16xf32>
    %cst_213 = arith.constant 2.500000e-01 : f32
    %292 = vector.broadcast %cst_213 : f32 to vector<16x16xf32>
    %293 = arith.mulf %291, %292 : vector<16x16xf32>
    %cst_214 = arith.constant dense<0.000000e+00> : vector<16x256xf32>
    %294 = tpu.matmul %276, %6, %cst_214 {dimension_numbers = #tpu.dot_dimension_numbers<[1], [0], [0], [1], [0, 0, 1, 1], [], []>} : vector<16x16xf32>, vector<16x256xf32>, vector<16x256xf32> -> vector<16x256xf32>
    %295 = arith.mulf %294, %214 : vector<16x256xf32>
    %cst_215 = arith.constant dense<0.000000e+00> : vector<16x16xf32>
    %296 = tpu.matmul %295, %7, %cst_215 {dimension_numbers = #tpu.dot_dimension_numbers<[1], [0], [0], [1], [0, 0, 1, 1], [], []>} : vector<16x256xf32>, vector<256x16xf32>, vector<16x16xf32> -> vector<16x16xf32>
    %cst_216 = arith.constant 2.500000e-01 : f32
    %297 = vector.broadcast %cst_216 : f32 to vector<16x16xf32>
    %298 = arith.mulf %296, %297 : vector<16x16xf32>
    %299 = arith.addf %293, %298 : vector<16x16xf32>
    %cst_217 = arith.constant 5.000000e-01 : f32
    %300 = vector.broadcast %cst_217 : f32 to vector<16x16xf32>
    %301 = arith.cmpf olt, %5, %300 : vector<16x16xf32>
    %cst_218 = arith.constant -1.000000e+04 : f32
    %302 = vector.broadcast %cst_218 : f32 to vector<16x16xf32>
    %303 = arith.select %301, %302, %299 : vector<16x16xi1>, vector<16x16xf32>
    %cst_219 = arith.constant dense<0xFF800000> : vector<16xf32>
    %304 = vector.multi_reduction <maximumf>, %303, %cst_219 [1] : vector<16x16xf32> to vector<16xf32>
    %305 = vector.shape_cast %304 : vector<16xf32> to vector<16x1xf32>
    %306 = vector.broadcast %305 : vector<16x1xf32> to vector<16x16xf32>
    %307 = arith.subf %303, %306 : vector<16x16xf32>
    %308 = math.exp %307 : vector<16x16xf32>
    %cst_220 = arith.constant dense<0.000000e+00> : vector<16xf32>
    %309 = vector.multi_reduction <add>, %308, %cst_220 [1] : vector<16x16xf32> to vector<16xf32>
    %310 = vector.shape_cast %309 : vector<16xf32> to vector<16x1xf32>
    %311 = vector.broadcast %310 : vector<16x1xf32> to vector<16x16xf32>
    %312 = arith.divf %308, %311 : vector<16x16xf32>
    %cst_221 = arith.constant dense<0.000000e+00> : vector<16x16xf32>
    %313 = tpu.matmul %312, %290, %cst_221 {dimension_numbers = #tpu.dot_dimension_numbers<[1], [0], [0], [1], [0, 0, 1, 1], [], []>} : vector<16x16xf32>, vector<16x16xf32>, vector<16x16xf32> -> vector<16x16xf32>
    %cst_222 = arith.constant dense<0.000000e+00> : vector<16x256xf32>
    %314 = tpu.matmul %312, %8, %cst_222 {dimension_numbers = #tpu.dot_dimension_numbers<[1], [0], [0], [1], [0, 0, 1, 1], [], []>} : vector<16x16xf32>, vector<16x256xf32>, vector<16x256xf32> -> vector<16x256xf32>
    %315 = arith.mulf %314, %215 : vector<16x256xf32>
    %cst_223 = arith.constant dense<0.000000e+00> : vector<16x16xf32>
    %316 = tpu.matmul %315, %9, %cst_223 {dimension_numbers = #tpu.dot_dimension_numbers<[1], [0], [0], [1], [0, 0, 1, 1], [], []>} : vector<16x256xf32>, vector<256x16xf32>, vector<16x16xf32> -> vector<16x16xf32>
    %317 = arith.addf %313, %316 : vector<16x16xf32>
    %c1_224 = arith.constant 1 : index
    %c0_225 = arith.constant 0 : index
    %c0_226 = arith.constant 0 : index
    %318 = vector.load %arg34[%c1_224, %c0_225, %c0_226] : memref<2x16x32xf32, #tpu.memory_space<vmem>>, vector<1x16x32xf32>
    %319 = vector.shape_cast %318 : vector<1x16x32xf32> to vector<16x32xf32>
    %cst_227 = arith.constant dense<0.000000e+00> : vector<16x32xf32>
    %320 = tpu.matmul %317, %319, %cst_227 {dimension_numbers = #tpu.dot_dimension_numbers<[1], [0], [0], [1], [0, 0, 1, 1], [], []>} : vector<16x16xf32>, vector<16x32xf32>, vector<16x32xf32> -> vector<16x32xf32>
    %321 = arith.addf %269, %320 : vector<16x32xf32>
    %322 = arith.addf %213, %321 : vector<16x32xf32>
    %c0_228 = arith.constant 0 : index
    %c0_229 = arith.constant 0 : index
    %323 = vector.load %arg38[%c0_228, %c0_229] : memref<1x32xf32, #tpu.memory_space<vmem>>, vector<1x32xf32>
    %c0_230 = arith.constant 0 : index
    %c0_231 = arith.constant 0 : index
    %324 = vector.load %arg39[%c0_230, %c0_231] : memref<1x32xf32, #tpu.memory_space<vmem>>, vector<1x32xf32>
    %cst_232 = arith.constant dense<0.000000e+00> : vector<16xf32>
    %325 = vector.multi_reduction <add>, %322, %cst_232 [1] : vector<16x32xf32> to vector<16xf32>
    %326 = vector.shape_cast %325 : vector<16xf32> to vector<16x1xf32>
    %cst_233 = arith.constant 3.200000e+01 : f32
    %327 = vector.broadcast %cst_233 : f32 to vector<16x1xf32>
    %328 = arith.divf %326, %327 : vector<16x1xf32>
    %329 = vector.broadcast %328 : vector<16x1xf32> to vector<16x32xf32>
    %330 = arith.subf %322, %329 : vector<16x32xf32>
    %331 = arith.mulf %330, %330 : vector<16x32xf32>
    %cst_234 = arith.constant dense<0.000000e+00> : vector<16xf32>
    %332 = vector.multi_reduction <add>, %331, %cst_234 [1] : vector<16x32xf32> to vector<16xf32>
    %333 = vector.shape_cast %332 : vector<16xf32> to vector<16x1xf32>
    %cst_235 = arith.constant 3.200000e+01 : f32
    %334 = vector.broadcast %cst_235 : f32 to vector<16x1xf32>
    %335 = arith.divf %333, %334 : vector<16x1xf32>
    %336 = vector.broadcast %328 : vector<16x1xf32> to vector<16x32xf32>
    %337 = arith.subf %322, %336 : vector<16x32xf32>
    %cst_236 = arith.constant 9.99999974E-5 : f32
    %338 = vector.broadcast %cst_236 : f32 to vector<16x1xf32>
    %339 = arith.addf %335, %338 : vector<16x1xf32>
    %340 = math.rsqrt %339 : vector<16x1xf32>
    %341 = vector.broadcast %340 : vector<16x1xf32> to vector<16x32xf32>
    %342 = arith.mulf %337, %341 : vector<16x32xf32>
    %343 = vector.broadcast %323 : vector<1x32xf32> to vector<16x32xf32>
    %344 = arith.mulf %342, %343 : vector<16x32xf32>
    %345 = vector.broadcast %324 : vector<1x32xf32> to vector<16x32xf32>
    %346 = arith.addf %344, %345 : vector<16x32xf32>
    %347 = vector.broadcast %3 : vector<16x1xf32> to vector<16x32xf32>
    %348 = arith.mulf %346, %347 : vector<16x32xf32>
    %c0_237 = arith.constant 0 : index
    %c0_238 = arith.constant 0 : index
    %349 = vector.load %arg41[%c0_237, %c0_238] : memref<1x64xf32, #tpu.memory_space<vmem>>, vector<1x64xf32>
    %c0_239 = arith.constant 0 : index
    %c0_240 = arith.constant 0 : index
    %c0_241 = arith.constant 0 : index
    %350 = vector.load %arg40[%c0_239, %c0_240, %c0_241] : memref<3x32x64xf32, #tpu.memory_space<vmem>>, vector<1x32x64xf32>
    %351 = vector.shape_cast %350 : vector<1x32x64xf32> to vector<32x64xf32>
    %cst_242 = arith.constant dense<0.000000e+00> : vector<16x64xf32>
    %352 = tpu.matmul %348, %351, %cst_242 {dimension_numbers = #tpu.dot_dimension_numbers<[1], [0], [0], [1], [0, 0, 1, 1], [], []>} : vector<16x32xf32>, vector<32x64xf32>, vector<16x64xf32> -> vector<16x64xf32>
    %c1_243 = arith.constant 1 : index
    %c0_244 = arith.constant 0 : index
    %c0_245 = arith.constant 0 : index
    %353 = vector.load %arg40[%c1_243, %c0_244, %c0_245] : memref<3x32x64xf32, #tpu.memory_space<vmem>>, vector<1x32x64xf32>
    %354 = vector.shape_cast %353 : vector<1x32x64xf32> to vector<32x64xf32>
    %cst_246 = arith.constant dense<0.000000e+00> : vector<16x64xf32>
    %355 = tpu.matmul %348, %354, %cst_246 {dimension_numbers = #tpu.dot_dimension_numbers<[1], [0], [0], [1], [0, 0, 1, 1], [], []>} : vector<16x32xf32>, vector<32x64xf32>, vector<16x64xf32> -> vector<16x64xf32>
    %c2_247 = arith.constant 2 : index
    %c0_248 = arith.constant 0 : index
    %c0_249 = arith.constant 0 : index
    %356 = vector.load %arg40[%c2_247, %c0_248, %c0_249] : memref<3x32x64xf32, #tpu.memory_space<vmem>>, vector<1x32x64xf32>
    %357 = vector.shape_cast %356 : vector<1x32x64xf32> to vector<32x64xf32>
    %cst_250 = arith.constant dense<0.000000e+00> : vector<16x64xf32>
    %358 = tpu.matmul %348, %357, %cst_250 {dimension_numbers = #tpu.dot_dimension_numbers<[1], [0], [0], [1], [0, 0, 1, 1], [], []>} : vector<16x32xf32>, vector<32x64xf32>, vector<16x64xf32> -> vector<16x64xf32>
    %cst_251 = arith.constant dense<0.000000e+00> : vector<16x64xf32>
    %359 = tpu.matmul %10, %352, %cst_251 {dimension_numbers = #tpu.dot_dimension_numbers<[1], [0], [0], [1], [0, 0, 1, 1], [], []>} : vector<16x16xf32>, vector<16x64xf32>, vector<16x64xf32> -> vector<16x64xf32>
    %360 = arith.addf %355, %359 : vector<16x64xf32>
    %cst_252 = arith.constant dense<0.000000e+00> : vector<16x64xf32>
    %361 = tpu.matmul %11, %358, %cst_252 {dimension_numbers = #tpu.dot_dimension_numbers<[1], [0], [0], [1], [0, 0, 1, 1], [], []>} : vector<16x16xf32>, vector<16x64xf32>, vector<16x64xf32> -> vector<16x64xf32>
    %362 = arith.addf %360, %361 : vector<16x64xf32>
    %363 = vector.broadcast %349 : vector<1x64xf32> to vector<16x64xf32>
    %364 = arith.addf %362, %363 : vector<16x64xf32>
    %cst_253 = arith.constant 0.000000e+00 : f32
    %365 = vector.broadcast %cst_253 : f32 to vector<16x64xf32>
    %366 = arith.maximumf %364, %365 : vector<16x64xf32>
    %367 = vector.broadcast %3 : vector<16x1xf32> to vector<16x64xf32>
    %368 = arith.mulf %366, %367 : vector<16x64xf32>
    %c0_254 = arith.constant 0 : index
    %c0_255 = arith.constant 0 : index
    %369 = vector.load %arg43[%c0_254, %c0_255] : memref<1x32xf32, #tpu.memory_space<vmem>>, vector<1x32xf32>
    %c0_256 = arith.constant 0 : index
    %c0_257 = arith.constant 0 : index
    %c0_258 = arith.constant 0 : index
    %370 = vector.load %arg42[%c0_256, %c0_257, %c0_258] : memref<3x64x32xf32, #tpu.memory_space<vmem>>, vector<1x64x32xf32>
    %371 = vector.shape_cast %370 : vector<1x64x32xf32> to vector<64x32xf32>
    %cst_259 = arith.constant dense<0.000000e+00> : vector<16x32xf32>
    %372 = tpu.matmul %368, %371, %cst_259 {dimension_numbers = #tpu.dot_dimension_numbers<[1], [0], [0], [1], [0, 0, 1, 1], [], []>} : vector<16x64xf32>, vector<64x32xf32>, vector<16x32xf32> -> vector<16x32xf32>
    %c1_260 = arith.constant 1 : index
    %c0_261 = arith.constant 0 : index
    %c0_262 = arith.constant 0 : index
    %373 = vector.load %arg42[%c1_260, %c0_261, %c0_262] : memref<3x64x32xf32, #tpu.memory_space<vmem>>, vector<1x64x32xf32>
    %374 = vector.shape_cast %373 : vector<1x64x32xf32> to vector<64x32xf32>
    %cst_263 = arith.constant dense<0.000000e+00> : vector<16x32xf32>
    %375 = tpu.matmul %368, %374, %cst_263 {dimension_numbers = #tpu.dot_dimension_numbers<[1], [0], [0], [1], [0, 0, 1, 1], [], []>} : vector<16x64xf32>, vector<64x32xf32>, vector<16x32xf32> -> vector<16x32xf32>
    %c2_264 = arith.constant 2 : index
    %c0_265 = arith.constant 0 : index
    %c0_266 = arith.constant 0 : index
    %376 = vector.load %arg42[%c2_264, %c0_265, %c0_266] : memref<3x64x32xf32, #tpu.memory_space<vmem>>, vector<1x64x32xf32>
    %377 = vector.shape_cast %376 : vector<1x64x32xf32> to vector<64x32xf32>
    %cst_267 = arith.constant dense<0.000000e+00> : vector<16x32xf32>
    %378 = tpu.matmul %368, %377, %cst_267 {dimension_numbers = #tpu.dot_dimension_numbers<[1], [0], [0], [1], [0, 0, 1, 1], [], []>} : vector<16x64xf32>, vector<64x32xf32>, vector<16x32xf32> -> vector<16x32xf32>
    %cst_268 = arith.constant dense<0.000000e+00> : vector<16x32xf32>
    %379 = tpu.matmul %10, %372, %cst_268 {dimension_numbers = #tpu.dot_dimension_numbers<[1], [0], [0], [1], [0, 0, 1, 1], [], []>} : vector<16x16xf32>, vector<16x32xf32>, vector<16x32xf32> -> vector<16x32xf32>
    %380 = arith.addf %375, %379 : vector<16x32xf32>
    %cst_269 = arith.constant dense<0.000000e+00> : vector<16x32xf32>
    %381 = tpu.matmul %11, %378, %cst_269 {dimension_numbers = #tpu.dot_dimension_numbers<[1], [0], [0], [1], [0, 0, 1, 1], [], []>} : vector<16x16xf32>, vector<16x32xf32>, vector<16x32xf32> -> vector<16x32xf32>
    %382 = arith.addf %380, %381 : vector<16x32xf32>
    %383 = vector.broadcast %369 : vector<1x32xf32> to vector<16x32xf32>
    %384 = arith.addf %382, %383 : vector<16x32xf32>
    %385 = vector.broadcast %3 : vector<16x1xf32> to vector<16x32xf32>
    %386 = arith.mulf %384, %385 : vector<16x32xf32>
    %387 = arith.addf %346, %386 : vector<16x32xf32>
    %c0_270 = arith.constant 0 : index
    %c0_271 = arith.constant 0 : index
    %388 = vector.load %arg44[%c0_270, %c0_271] : memref<1x32xf32, #tpu.memory_space<vmem>>, vector<1x32xf32>
    %c0_272 = arith.constant 0 : index
    %c0_273 = arith.constant 0 : index
    %389 = vector.load %arg45[%c0_272, %c0_273] : memref<1x32xf32, #tpu.memory_space<vmem>>, vector<1x32xf32>
    %cst_274 = arith.constant dense<0.000000e+00> : vector<16xf32>
    %390 = vector.multi_reduction <add>, %387, %cst_274 [1] : vector<16x32xf32> to vector<16xf32>
    %391 = vector.shape_cast %390 : vector<16xf32> to vector<16x1xf32>
    %cst_275 = arith.constant 3.200000e+01 : f32
    %392 = vector.broadcast %cst_275 : f32 to vector<16x1xf32>
    %393 = arith.divf %391, %392 : vector<16x1xf32>
    %394 = vector.broadcast %393 : vector<16x1xf32> to vector<16x32xf32>
    %395 = arith.subf %387, %394 : vector<16x32xf32>
    %396 = arith.mulf %395, %395 : vector<16x32xf32>
    %cst_276 = arith.constant dense<0.000000e+00> : vector<16xf32>
    %397 = vector.multi_reduction <add>, %396, %cst_276 [1] : vector<16x32xf32> to vector<16xf32>
    %398 = vector.shape_cast %397 : vector<16xf32> to vector<16x1xf32>
    %cst_277 = arith.constant 3.200000e+01 : f32
    %399 = vector.broadcast %cst_277 : f32 to vector<16x1xf32>
    %400 = arith.divf %398, %399 : vector<16x1xf32>
    %401 = vector.broadcast %393 : vector<16x1xf32> to vector<16x32xf32>
    %402 = arith.subf %387, %401 : vector<16x32xf32>
    %cst_278 = arith.constant 9.99999974E-5 : f32
    %403 = vector.broadcast %cst_278 : f32 to vector<16x1xf32>
    %404 = arith.addf %400, %403 : vector<16x1xf32>
    %405 = math.rsqrt %404 : vector<16x1xf32>
    %406 = vector.broadcast %405 : vector<16x1xf32> to vector<16x32xf32>
    %407 = arith.mulf %402, %406 : vector<16x32xf32>
    %408 = vector.broadcast %388 : vector<1x32xf32> to vector<16x32xf32>
    %409 = arith.mulf %407, %408 : vector<16x32xf32>
    %410 = vector.broadcast %389 : vector<1x32xf32> to vector<16x32xf32>
    %411 = arith.addf %409, %410 : vector<16x32xf32>
    %412 = vector.broadcast %3 : vector<16x1xf32> to vector<16x32xf32>
    %413 = arith.mulf %411, %412 : vector<16x32xf32>
    %c0_279 = arith.constant 0 : index
    %c0_280 = arith.constant 0 : index
    %414 = vector.load %arg46[%c0_279, %c0_280] : memref<32x32xf32, #tpu.memory_space<vmem>>, vector<32x32xf32>
    %cst_281 = arith.constant dense<0.000000e+00> : vector<16x32xf32>
    %415 = tpu.matmul %413, %414, %cst_281 {dimension_numbers = #tpu.dot_dimension_numbers<[1], [0], [0], [1], [0, 0, 1, 1], [], []>} : vector<16x32xf32>, vector<32x32xf32>, vector<16x32xf32> -> vector<16x32xf32>
    %c0_282 = arith.constant 0 : index
    %c0_283 = arith.constant 0 : index
    %416 = vector.load %arg47[%c0_282, %c0_283] : memref<1x32xf32, #tpu.memory_space<vmem>>, vector<1x32xf32>
    %417 = vector.broadcast %416 : vector<1x32xf32> to vector<16x32xf32>
    %418 = arith.addf %415, %417 : vector<16x32xf32>
    %419 = vector.broadcast %3 : vector<16x1xf32> to vector<16x32xf32>
    %420 = arith.mulf %418, %419 : vector<16x32xf32>
    %c0_284 = arith.constant 0 : index
    %c0_285 = arith.constant 0 : index
    %c0_286 = arith.constant 0 : index
    %421 = vector.load %arg58[%c0_284, %c0_285, %c0_286] : memref<1x16x32xf32, #tpu.memory_space<vmem>>, vector<1x16x32xf32>
    %422 = vector.shape_cast %421 : vector<1x16x32xf32> to vector<16x32xf32>
    %423 = vector.shape_cast %420 : vector<16x32xf32> to vector<1x16x32xf32>
    tpu.vector_store %arg58[%c0_284, %c0_285, %c0_286], %423 {strides = array<i32>} : memref<1x16x32xf32, #tpu.memory_space<vmem>>, vector<1x16x32xf32>,
    %c0_287 = arith.constant 0 : index
    %c0_288 = arith.constant 0 : index
    %424 = vector.load %arg49[%c0_287, %c0_288] : memref<1x64xf32, #tpu.memory_space<vmem>>, vector<1x64xf32>
    %c0_289 = arith.constant 0 : index
    %c0_290 = arith.constant 0 : index
    %c0_291 = arith.constant 0 : index
    %425 = vector.load %arg48[%c0_289, %c0_290, %c0_291] : memref<3x32x64xf32, #tpu.memory_space<vmem>>, vector<1x32x64xf32>
    %426 = vector.shape_cast %425 : vector<1x32x64xf32> to vector<32x64xf32>
    %cst_292 = arith.constant dense<0.000000e+00> : vector<16x64xf32>
    %427 = tpu.matmul %413, %426, %cst_292 {dimension_numbers = #tpu.dot_dimension_numbers<[1], [0], [0], [1], [0, 0, 1, 1], [], []>} : vector<16x32xf32>, vector<32x64xf32>, vector<16x64xf32> -> vector<16x64xf32>
    %c1_293 = arith.constant 1 : index
    %c0_294 = arith.constant 0 : index
    %c0_295 = arith.constant 0 : index
    %428 = vector.load %arg48[%c1_293, %c0_294, %c0_295] : memref<3x32x64xf32, #tpu.memory_space<vmem>>, vector<1x32x64xf32>
    %429 = vector.shape_cast %428 : vector<1x32x64xf32> to vector<32x64xf32>
    %cst_296 = arith.constant dense<0.000000e+00> : vector<16x64xf32>
    %430 = tpu.matmul %413, %429, %cst_296 {dimension_numbers = #tpu.dot_dimension_numbers<[1], [0], [0], [1], [0, 0, 1, 1], [], []>} : vector<16x32xf32>, vector<32x64xf32>, vector<16x64xf32> -> vector<16x64xf32>
    %c2_297 = arith.constant 2 : index
    %c0_298 = arith.constant 0 : index
    %c0_299 = arith.constant 0 : index
    %431 = vector.load %arg48[%c2_297, %c0_298, %c0_299] : memref<3x32x64xf32, #tpu.memory_space<vmem>>, vector<1x32x64xf32>
    %432 = vector.shape_cast %431 : vector<1x32x64xf32> to vector<32x64xf32>
    %cst_300 = arith.constant dense<0.000000e+00> : vector<16x64xf32>
    %433 = tpu.matmul %413, %432, %cst_300 {dimension_numbers = #tpu.dot_dimension_numbers<[1], [0], [0], [1], [0, 0, 1, 1], [], []>} : vector<16x32xf32>, vector<32x64xf32>, vector<16x64xf32> -> vector<16x64xf32>
    %cst_301 = arith.constant dense<0.000000e+00> : vector<16x64xf32>
    %434 = tpu.matmul %10, %427, %cst_301 {dimension_numbers = #tpu.dot_dimension_numbers<[1], [0], [0], [1], [0, 0, 1, 1], [], []>} : vector<16x16xf32>, vector<16x64xf32>, vector<16x64xf32> -> vector<16x64xf32>
    %435 = arith.addf %430, %434 : vector<16x64xf32>
    %cst_302 = arith.constant dense<0.000000e+00> : vector<16x64xf32>
    %436 = tpu.matmul %11, %433, %cst_302 {dimension_numbers = #tpu.dot_dimension_numbers<[1], [0], [0], [1], [0, 0, 1, 1], [], []>} : vector<16x16xf32>, vector<16x64xf32>, vector<16x64xf32> -> vector<16x64xf32>
    %437 = arith.addf %435, %436 : vector<16x64xf32>
    %438 = vector.broadcast %424 : vector<1x64xf32> to vector<16x64xf32>
    %439 = arith.addf %437, %438 : vector<16x64xf32>
    %cst_303 = arith.constant 0.000000e+00 : f32
    %440 = vector.broadcast %cst_303 : f32 to vector<16x64xf32>
    %441 = arith.maximumf %439, %440 : vector<16x64xf32>
    %c0_304 = arith.constant 0 : index
    %c0_305 = arith.constant 0 : index
    %442 = vector.load %arg50[%c0_304, %c0_305] : memref<1x64xf32, #tpu.memory_space<vmem>>, vector<1x64xf32>
    %c0_306 = arith.constant 0 : index
    %c0_307 = arith.constant 0 : index
    %443 = vector.load %arg51[%c0_306, %c0_307] : memref<1x64xf32, #tpu.memory_space<vmem>>, vector<1x64xf32>
    %cst_308 = arith.constant dense<0.000000e+00> : vector<16xf32>
    %444 = vector.multi_reduction <add>, %441, %cst_308 [1] : vector<16x64xf32> to vector<16xf32>
    %445 = vector.shape_cast %444 : vector<16xf32> to vector<16x1xf32>
    %cst_309 = arith.constant 6.400000e+01 : f32
    %446 = vector.broadcast %cst_309 : f32 to vector<16x1xf32>
    %447 = arith.divf %445, %446 : vector<16x1xf32>
    %448 = vector.broadcast %447 : vector<16x1xf32> to vector<16x64xf32>
    %449 = arith.subf %441, %448 : vector<16x64xf32>
    %450 = arith.mulf %449, %449 : vector<16x64xf32>
    %cst_310 = arith.constant dense<0.000000e+00> : vector<16xf32>
    %451 = vector.multi_reduction <add>, %450, %cst_310 [1] : vector<16x64xf32> to vector<16xf32>
    %452 = vector.shape_cast %451 : vector<16xf32> to vector<16x1xf32>
    %cst_311 = arith.constant 6.400000e+01 : f32
    %453 = vector.broadcast %cst_311 : f32 to vector<16x1xf32>
    %454 = arith.divf %452, %453 : vector<16x1xf32>
    %455 = vector.broadcast %447 : vector<16x1xf32> to vector<16x64xf32>
    %456 = arith.subf %441, %455 : vector<16x64xf32>
    %cst_312 = arith.constant 9.99999974E-5 : f32
    %457 = vector.broadcast %cst_312 : f32 to vector<16x1xf32>
    %458 = arith.addf %454, %457 : vector<16x1xf32>
    %459 = math.rsqrt %458 : vector<16x1xf32>
    %460 = vector.broadcast %459 : vector<16x1xf32> to vector<16x64xf32>
    %461 = arith.mulf %456, %460 : vector<16x64xf32>
    %462 = vector.broadcast %442 : vector<1x64xf32> to vector<16x64xf32>
    %463 = arith.mulf %461, %462 : vector<16x64xf32>
    %464 = vector.broadcast %443 : vector<1x64xf32> to vector<16x64xf32>
    %465 = arith.addf %463, %464 : vector<16x64xf32>
    %466 = vector.broadcast %3 : vector<16x1xf32> to vector<16x64xf32>
    %467 = arith.mulf %465, %466 : vector<16x64xf32>
    %c0_313 = arith.constant 0 : index
    %c0_314 = arith.constant 0 : index
    %468 = vector.load %arg53[%c0_313, %c0_314] : memref<1x64xf32, #tpu.memory_space<vmem>>, vector<1x64xf32>
    %c0_315 = arith.constant 0 : index
    %c0_316 = arith.constant 0 : index
    %c0_317 = arith.constant 0 : index
    %469 = vector.load %arg52[%c0_315, %c0_316, %c0_317] : memref<3x64x64xf32, #tpu.memory_space<vmem>>, vector<1x64x64xf32>
    %470 = vector.shape_cast %469 : vector<1x64x64xf32> to vector<64x64xf32>
    %cst_318 = arith.constant dense<0.000000e+00> : vector<16x64xf32>
    %471 = tpu.matmul %467, %470, %cst_318 {dimension_numbers = #tpu.dot_dimension_numbers<[1], [0], [0], [1], [0, 0, 1, 1], [], []>} : vector<16x64xf32>, vector<64x64xf32>, vector<16x64xf32> -> vector<16x64xf32>
    %c1_319 = arith.constant 1 : index
    %c0_320 = arith.constant 0 : index
    %c0_321 = arith.constant 0 : index
    %472 = vector.load %arg52[%c1_319, %c0_320, %c0_321] : memref<3x64x64xf32, #tpu.memory_space<vmem>>, vector<1x64x64xf32>
    %473 = vector.shape_cast %472 : vector<1x64x64xf32> to vector<64x64xf32>
    %cst_322 = arith.constant dense<0.000000e+00> : vector<16x64xf32>
    %474 = tpu.matmul %467, %473, %cst_322 {dimension_numbers = #tpu.dot_dimension_numbers<[1], [0], [0], [1], [0, 0, 1, 1], [], []>} : vector<16x64xf32>, vector<64x64xf32>, vector<16x64xf32> -> vector<16x64xf32>
    %c2_323 = arith.constant 2 : index
    %c0_324 = arith.constant 0 : index
    %c0_325 = arith.constant 0 : index
    %475 = vector.load %arg52[%c2_323, %c0_324, %c0_325] : memref<3x64x64xf32, #tpu.memory_space<vmem>>, vector<1x64x64xf32>
    %476 = vector.shape_cast %475 : vector<1x64x64xf32> to vector<64x64xf32>
    %cst_326 = arith.constant dense<0.000000e+00> : vector<16x64xf32>
    %477 = tpu.matmul %467, %476, %cst_326 {dimension_numbers = #tpu.dot_dimension_numbers<[1], [0], [0], [1], [0, 0, 1, 1], [], []>} : vector<16x64xf32>, vector<64x64xf32>, vector<16x64xf32> -> vector<16x64xf32>
    %cst_327 = arith.constant dense<0.000000e+00> : vector<16x64xf32>
    %478 = tpu.matmul %10, %471, %cst_327 {dimension_numbers = #tpu.dot_dimension_numbers<[1], [0], [0], [1], [0, 0, 1, 1], [], []>} : vector<16x16xf32>, vector<16x64xf32>, vector<16x64xf32> -> vector<16x64xf32>
    %479 = arith.addf %474, %478 : vector<16x64xf32>
    %cst_328 = arith.constant dense<0.000000e+00> : vector<16x64xf32>
    %480 = tpu.matmul %11, %477, %cst_328 {dimension_numbers = #tpu.dot_dimension_numbers<[1], [0], [0], [1], [0, 0, 1, 1], [], []>} : vector<16x16xf32>, vector<16x64xf32>, vector<16x64xf32> -> vector<16x64xf32>
    %481 = arith.addf %479, %480 : vector<16x64xf32>
    %482 = vector.broadcast %468 : vector<1x64xf32> to vector<16x64xf32>
    %483 = arith.addf %481, %482 : vector<16x64xf32>
    %cst_329 = arith.constant 0.000000e+00 : f32
    %484 = vector.broadcast %cst_329 : f32 to vector<16x64xf32>
    %485 = arith.maximumf %483, %484 : vector<16x64xf32>
    %c0_330 = arith.constant 0 : index
    %c0_331 = arith.constant 0 : index
    %486 = vector.load %arg54[%c0_330, %c0_331] : memref<1x64xf32, #tpu.memory_space<vmem>>, vector<1x64xf32>
    %c0_332 = arith.constant 0 : index
    %c0_333 = arith.constant 0 : index
    %487 = vector.load %arg55[%c0_332, %c0_333] : memref<1x64xf32, #tpu.memory_space<vmem>>, vector<1x64xf32>
    %cst_334 = arith.constant dense<0.000000e+00> : vector<16xf32>
    %488 = vector.multi_reduction <add>, %485, %cst_334 [1] : vector<16x64xf32> to vector<16xf32>
    %489 = vector.shape_cast %488 : vector<16xf32> to vector<16x1xf32>
    %cst_335 = arith.constant 6.400000e+01 : f32
    %490 = vector.broadcast %cst_335 : f32 to vector<16x1xf32>
    %491 = arith.divf %489, %490 : vector<16x1xf32>
    %492 = vector.broadcast %491 : vector<16x1xf32> to vector<16x64xf32>
    %493 = arith.subf %485, %492 : vector<16x64xf32>
    %494 = arith.mulf %493, %493 : vector<16x64xf32>
    %cst_336 = arith.constant dense<0.000000e+00> : vector<16xf32>
    %495 = vector.multi_reduction <add>, %494, %cst_336 [1] : vector<16x64xf32> to vector<16xf32>
    %496 = vector.shape_cast %495 : vector<16xf32> to vector<16x1xf32>
    %cst_337 = arith.constant 6.400000e+01 : f32
    %497 = vector.broadcast %cst_337 : f32 to vector<16x1xf32>
    %498 = arith.divf %496, %497 : vector<16x1xf32>
    %499 = vector.broadcast %491 : vector<16x1xf32> to vector<16x64xf32>
    %500 = arith.subf %485, %499 : vector<16x64xf32>
    %cst_338 = arith.constant 9.99999974E-5 : f32
    %501 = vector.broadcast %cst_338 : f32 to vector<16x1xf32>
    %502 = arith.addf %498, %501 : vector<16x1xf32>
    %503 = math.rsqrt %502 : vector<16x1xf32>
    %504 = vector.broadcast %503 : vector<16x1xf32> to vector<16x64xf32>
    %505 = arith.mulf %500, %504 : vector<16x64xf32>
    %506 = vector.broadcast %486 : vector<1x64xf32> to vector<16x64xf32>
    %507 = arith.mulf %505, %506 : vector<16x64xf32>
    %508 = vector.broadcast %487 : vector<1x64xf32> to vector<16x64xf32>
    %509 = arith.addf %507, %508 : vector<16x64xf32>
    %510 = vector.broadcast %3 : vector<16x1xf32> to vector<16x64xf32>
    %511 = arith.mulf %509, %510 : vector<16x64xf32>
    %c0_339 = arith.constant 0 : index
    %c0_340 = arith.constant 0 : index
    %512 = vector.load %arg56[%c0_339, %c0_340] : memref<64x1xf32, #tpu.memory_space<vmem>>, vector<64x1xf32>
    %cst_341 = arith.constant dense<0.000000e+00> : vector<16x1xf32>
    %513 = tpu.matmul %511, %512, %cst_341 {dimension_numbers = #tpu.dot_dimension_numbers<[1], [0], [0], [1], [0, 0, 1, 1], [], []>} : vector<16x64xf32>, vector<64x1xf32>, vector<16x1xf32> -> vector<16x1xf32>
    %c0_342 = arith.constant 0 : index
    %c0_343 = arith.constant 0 : index
    %514 = vector.load %arg57[%c0_342, %c0_343] : memref<1x1xf32, #tpu.memory_space<vmem>>, vector<1x1xf32>
    %515 = vector.broadcast %514 : vector<1x1xf32> to vector<16x1xf32>
    %516 = arith.addf %513, %515 : vector<16x1xf32>
    %517 = arith.mulf %516, %3 : vector<16x1xf32>
    %c0_344 = arith.constant 0 : index
    %c0_345 = arith.constant 0 : index
    %c0_346 = arith.constant 0 : index
    %518 = vector.load %arg59[%c0_344, %c0_345, %c0_346] : memref<1x16x1xf32, #tpu.memory_space<vmem>>, vector<1x16x1xf32>
    %519 = vector.shape_cast %518 : vector<1x16x1xf32> to vector<16x1xf32>
    %520 = vector.shape_cast %517 : vector<16x1xf32> to vector<1x16x1xf32>
    tpu.vector_store %arg59[%c0_344, %c0_345, %c0_346], %520 {strides = array<i32>} : memref<1x16x1xf32, #tpu.memory_space<vmem>>, vector<1x16x1xf32>,
    return
  }
  func.func @transform_0(%arg0: i32) -> (i32, i32, i32) {
    %c0_i32 = arith.constant 0 : i32
    %c0_i32_0 = arith.constant 0 : i32
    %c0_i32_1 = arith.constant 0 : i32
    return %arg0, %c0_i32, %c0_i32_0 : i32, i32, i32
  }
  func.func @transform_1(%arg0: i32) -> (i32, i32, i32) {
    %c0_i32 = arith.constant 0 : i32
    %c0_i32_0 = arith.constant 0 : i32
    %c0_i32_1 = arith.constant 0 : i32
    return %arg0, %c0_i32, %c0_i32_0 : i32, i32, i32
  }
  func.func @transform_2(%arg0: i32) -> (i32, i32, i32) {
    %c0_i32 = arith.constant 0 : i32
    %c0_i32_0 = arith.constant 0 : i32
    %c0_i32_1 = arith.constant 0 : i32
    return %arg0, %c0_i32, %c0_i32_0 : i32, i32, i32
  }
  func.func @transform_3(%arg0: i32) -> (i32, i32) {
    %c0_i32 = arith.constant 0 : i32
    %c0_i32_0 = arith.constant 0 : i32
    %c0_i32_1 = arith.constant 0 : i32
    return %c0_i32, %c0_i32_0 : i32, i32
  }
  func.func @transform_4(%arg0: i32) -> (i32, i32) {
    %c0_i32 = arith.constant 0 : i32
    %c0_i32_0 = arith.constant 0 : i32
    %c0_i32_1 = arith.constant 0 : i32
    return %c0_i32, %c0_i32_0 : i32, i32
  }
  func.func @transform_5(%arg0: i32) -> (i32, i32) {
    %c0_i32 = arith.constant 0 : i32
    %c0_i32_0 = arith.constant 0 : i32
    %c0_i32_1 = arith.constant 0 : i32
    return %c0_i32, %c0_i32_0 : i32, i32
  }
  func.func @transform_6(%arg0: i32) -> (i32, i32) {
    %c0_i32 = arith.constant 0 : i32
    %c0_i32_0 = arith.constant 0 : i32
    %c0_i32_1 = arith.constant 0 : i32
    return %c0_i32, %c0_i32_0 : i32, i32
  }
  func.func @transform_7(%arg0: i32) -> (i32, i32) {
    %c0_i32 = arith.constant 0 : i32
    %c0_i32_0 = arith.constant 0 : i32
    %c0_i32_1 = arith.constant 0 : i32
    return %c0_i32, %c0_i32_0 : i32, i32
  }
  func.func @transform_8(%arg0: i32) -> (i32, i32) {
    %c0_i32 = arith.constant 0 : i32
    %c0_i32_0 = arith.constant 0 : i32
    %c0_i32_1 = arith.constant 0 : i32
    return %c0_i32, %c0_i32_0 : i32, i32
  }
  func.func @transform_9(%arg0: i32) -> (i32, i32, i32) {
    %c0_i32 = arith.constant 0 : i32
    %c0_i32_0 = arith.constant 0 : i32
    %c0_i32_1 = arith.constant 0 : i32
    %c0_i32_2 = arith.constant 0 : i32
    return %c0_i32, %c0_i32_0, %c0_i32_1 : i32, i32, i32
  }
  func.func @transform_10(%arg0: i32) -> (i32, i32, i32) {
    %c0_i32 = arith.constant 0 : i32
    %c0_i32_0 = arith.constant 0 : i32
    %c0_i32_1 = arith.constant 0 : i32
    %c0_i32_2 = arith.constant 0 : i32
    return %c0_i32, %c0_i32_0, %c0_i32_1 : i32, i32, i32
  }
  func.func @transform_11(%arg0: i32) -> (i32, i32, i32) {
    %c0_i32 = arith.constant 0 : i32
    %c0_i32_0 = arith.constant 0 : i32
    %c0_i32_1 = arith.constant 0 : i32
    %c0_i32_2 = arith.constant 0 : i32
    return %c0_i32, %c0_i32_0, %c0_i32_1 : i32, i32, i32
  }
  func.func @transform_12(%arg0: i32) -> (i32, i32, i32) {
    %c0_i32 = arith.constant 0 : i32
    %c0_i32_0 = arith.constant 0 : i32
    %c0_i32_1 = arith.constant 0 : i32
    %c0_i32_2 = arith.constant 0 : i32
    return %c0_i32, %c0_i32_0, %c0_i32_1 : i32, i32, i32
  }
  func.func @transform_13(%arg0: i32) -> (i32, i32, i32) {
    %c0_i32 = arith.constant 0 : i32
    %c0_i32_0 = arith.constant 0 : i32
    %c0_i32_1 = arith.constant 0 : i32
    %c0_i32_2 = arith.constant 0 : i32
    return %c0_i32, %c0_i32_0, %c0_i32_1 : i32, i32, i32
  }
  func.func @transform_14(%arg0: i32) -> (i32, i32, i32) {
    %c0_i32 = arith.constant 0 : i32
    %c0_i32_0 = arith.constant 0 : i32
    %c0_i32_1 = arith.constant 0 : i32
    %c0_i32_2 = arith.constant 0 : i32
    return %c0_i32, %c0_i32_0, %c0_i32_1 : i32, i32, i32
  }
  func.func @transform_15(%arg0: i32) -> (i32, i32, i32) {
    %c0_i32 = arith.constant 0 : i32
    %c0_i32_0 = arith.constant 0 : i32
    %c0_i32_1 = arith.constant 0 : i32
    %c0_i32_2 = arith.constant 0 : i32
    return %c0_i32, %c0_i32_0, %c0_i32_1 : i32, i32, i32
  }
  func.func @transform_16(%arg0: i32) -> (i32, i32) {
    %c0_i32 = arith.constant 0 : i32
    %c0_i32_0 = arith.constant 0 : i32
    %c0_i32_1 = arith.constant 0 : i32
    return %c0_i32, %c0_i32_0 : i32, i32
  }
  func.func @transform_17(%arg0: i32) -> (i32, i32) {
    %c0_i32 = arith.constant 0 : i32
    %c0_i32_0 = arith.constant 0 : i32
    %c0_i32_1 = arith.constant 0 : i32
    return %c0_i32, %c0_i32_0 : i32, i32
  }
  func.func @transform_18(%arg0: i32) -> (i32, i32) {
    %c0_i32 = arith.constant 0 : i32
    %c0_i32_0 = arith.constant 0 : i32
    %c0_i32_1 = arith.constant 0 : i32
    return %c0_i32, %c0_i32_0 : i32, i32
  }
  func.func @transform_19(%arg0: i32) -> (i32, i32) {
    %c0_i32 = arith.constant 0 : i32
    %c0_i32_0 = arith.constant 0 : i32
    %c0_i32_1 = arith.constant 0 : i32
    return %c0_i32, %c0_i32_0 : i32, i32
  }
  func.func @transform_20(%arg0: i32) -> (i32, i32) {
    %c0_i32 = arith.constant 0 : i32
    %c0_i32_0 = arith.constant 0 : i32
    %c0_i32_1 = arith.constant 0 : i32
    return %c0_i32, %c0_i32_0 : i32, i32
  }
  func.func @transform_21(%arg0: i32) -> (i32, i32, i32) {
    %c0_i32 = arith.constant 0 : i32
    %c0_i32_0 = arith.constant 0 : i32
    %c0_i32_1 = arith.constant 0 : i32
    %c0_i32_2 = arith.constant 0 : i32
    return %c0_i32, %c0_i32_0, %c0_i32_1 : i32, i32, i32
  }
  func.func @transform_22(%arg0: i32) -> (i32, i32) {
    %c0_i32 = arith.constant 0 : i32
    %c0_i32_0 = arith.constant 0 : i32
    %c0_i32_1 = arith.constant 0 : i32
    return %c0_i32, %c0_i32_0 : i32, i32
  }
  func.func @transform_23(%arg0: i32) -> (i32, i32, i32) {
    %c0_i32 = arith.constant 0 : i32
    %c0_i32_0 = arith.constant 0 : i32
    %c0_i32_1 = arith.constant 0 : i32
    %c0_i32_2 = arith.constant 0 : i32
    return %c0_i32, %c0_i32_0, %c0_i32_1 : i32, i32, i32
  }
  func.func @transform_24(%arg0: i32) -> (i32, i32) {
    %c0_i32 = arith.constant 0 : i32
    %c0_i32_0 = arith.constant 0 : i32
    %c0_i32_1 = arith.constant 0 : i32
    return %c0_i32, %c0_i32_0 : i32, i32
  }
  func.func @transform_25(%arg0: i32) -> (i32, i32) {
    %c0_i32 = arith.constant 0 : i32
    %c0_i32_0 = arith.constant 0 : i32
    %c0_i32_1 = arith.constant 0 : i32
    return %c0_i32, %c0_i32_0 : i32, i32
  }
  func.func @transform_26(%arg0: i32) -> (i32, i32) {
    %c0_i32 = arith.constant 0 : i32
    %c0_i32_0 = arith.constant 0 : i32
    %c0_i32_1 = arith.constant 0 : i32
    return %c0_i32, %c0_i32_0 : i32, i32
  }
  func.func @transform_27(%arg0: i32) -> (i32, i32, i32) {
    %c0_i32 = arith.constant 0 : i32
    %c0_i32_0 = arith.constant 0 : i32
    %c0_i32_1 = arith.constant 0 : i32
    %c0_i32_2 = arith.constant 0 : i32
    return %c0_i32, %c0_i32_0, %c0_i32_1 : i32, i32, i32
  }
  func.func @transform_28(%arg0: i32) -> (i32, i32, i32) {
    %c0_i32 = arith.constant 0 : i32
    %c0_i32_0 = arith.constant 0 : i32
    %c0_i32_1 = arith.constant 0 : i32
    %c0_i32_2 = arith.constant 0 : i32
    return %c0_i32, %c0_i32_0, %c0_i32_1 : i32, i32, i32
  }
  func.func @transform_29(%arg0: i32) -> (i32, i32, i32) {
    %c0_i32 = arith.constant 0 : i32
    %c0_i32_0 = arith.constant 0 : i32
    %c0_i32_1 = arith.constant 0 : i32
    %c0_i32_2 = arith.constant 0 : i32
    return %c0_i32, %c0_i32_0, %c0_i32_1 : i32, i32, i32
  }
  func.func @transform_30(%arg0: i32) -> (i32, i32, i32) {
    %c0_i32 = arith.constant 0 : i32
    %c0_i32_0 = arith.constant 0 : i32
    %c0_i32_1 = arith.constant 0 : i32
    %c0_i32_2 = arith.constant 0 : i32
    return %c0_i32, %c0_i32_0, %c0_i32_1 : i32, i32, i32
  }
  func.func @transform_31(%arg0: i32) -> (i32, i32, i32) {
    %c0_i32 = arith.constant 0 : i32
    %c0_i32_0 = arith.constant 0 : i32
    %c0_i32_1 = arith.constant 0 : i32
    %c0_i32_2 = arith.constant 0 : i32
    return %c0_i32, %c0_i32_0, %c0_i32_1 : i32, i32, i32
  }
  func.func @transform_32(%arg0: i32) -> (i32, i32, i32) {
    %c0_i32 = arith.constant 0 : i32
    %c0_i32_0 = arith.constant 0 : i32
    %c0_i32_1 = arith.constant 0 : i32
    %c0_i32_2 = arith.constant 0 : i32
    return %c0_i32, %c0_i32_0, %c0_i32_1 : i32, i32, i32
  }
  func.func @transform_33(%arg0: i32) -> (i32, i32, i32) {
    %c0_i32 = arith.constant 0 : i32
    %c0_i32_0 = arith.constant 0 : i32
    %c0_i32_1 = arith.constant 0 : i32
    %c0_i32_2 = arith.constant 0 : i32
    return %c0_i32, %c0_i32_0, %c0_i32_1 : i32, i32, i32
  }
  func.func @transform_34(%arg0: i32) -> (i32, i32) {
    %c0_i32 = arith.constant 0 : i32
    %c0_i32_0 = arith.constant 0 : i32
    %c0_i32_1 = arith.constant 0 : i32
    return %c0_i32, %c0_i32_0 : i32, i32
  }
  func.func @transform_35(%arg0: i32) -> (i32, i32) {
    %c0_i32 = arith.constant 0 : i32
    %c0_i32_0 = arith.constant 0 : i32
    %c0_i32_1 = arith.constant 0 : i32
    return %c0_i32, %c0_i32_0 : i32, i32
  }
  func.func @transform_36(%arg0: i32) -> (i32, i32) {
    %c0_i32 = arith.constant 0 : i32
    %c0_i32_0 = arith.constant 0 : i32
    %c0_i32_1 = arith.constant 0 : i32
    return %c0_i32, %c0_i32_0 : i32, i32
  }
  func.func @transform_37(%arg0: i32) -> (i32, i32) {
    %c0_i32 = arith.constant 0 : i32
    %c0_i32_0 = arith.constant 0 : i32
    %c0_i32_1 = arith.constant 0 : i32
    return %c0_i32, %c0_i32_0 : i32, i32
  }
  func.func @transform_38(%arg0: i32) -> (i32, i32) {
    %c0_i32 = arith.constant 0 : i32
    %c0_i32_0 = arith.constant 0 : i32
    %c0_i32_1 = arith.constant 0 : i32
    return %c0_i32, %c0_i32_0 : i32, i32
  }
  func.func @transform_39(%arg0: i32) -> (i32, i32, i32) {
    %c0_i32 = arith.constant 0 : i32
    %c0_i32_0 = arith.constant 0 : i32
    %c0_i32_1 = arith.constant 0 : i32
    %c0_i32_2 = arith.constant 0 : i32
    return %c0_i32, %c0_i32_0, %c0_i32_1 : i32, i32, i32
  }
  func.func @transform_40(%arg0: i32) -> (i32, i32) {
    %c0_i32 = arith.constant 0 : i32
    %c0_i32_0 = arith.constant 0 : i32
    %c0_i32_1 = arith.constant 0 : i32
    return %c0_i32, %c0_i32_0 : i32, i32
  }
  func.func @transform_41(%arg0: i32) -> (i32, i32, i32) {
    %c0_i32 = arith.constant 0 : i32
    %c0_i32_0 = arith.constant 0 : i32
    %c0_i32_1 = arith.constant 0 : i32
    %c0_i32_2 = arith.constant 0 : i32
    return %c0_i32, %c0_i32_0, %c0_i32_1 : i32, i32, i32
  }
  func.func @transform_42(%arg0: i32) -> (i32, i32) {
    %c0_i32 = arith.constant 0 : i32
    %c0_i32_0 = arith.constant 0 : i32
    %c0_i32_1 = arith.constant 0 : i32
    return %c0_i32, %c0_i32_0 : i32, i32
  }
  func.func @transform_43(%arg0: i32) -> (i32, i32) {
    %c0_i32 = arith.constant 0 : i32
    %c0_i32_0 = arith.constant 0 : i32
    %c0_i32_1 = arith.constant 0 : i32
    return %c0_i32, %c0_i32_0 : i32, i32
  }
  func.func @transform_44(%arg0: i32) -> (i32, i32) {
    %c0_i32 = arith.constant 0 : i32
    %c0_i32_0 = arith.constant 0 : i32
    %c0_i32_1 = arith.constant 0 : i32
    return %c0_i32, %c0_i32_0 : i32, i32
  }
  func.func @transform_45(%arg0: i32) -> (i32, i32) {
    %c0_i32 = arith.constant 0 : i32
    %c0_i32_0 = arith.constant 0 : i32
    %c0_i32_1 = arith.constant 0 : i32
    return %c0_i32, %c0_i32_0 : i32, i32
  }
  func.func @transform_46(%arg0: i32) -> (i32, i32) {
    %c0_i32 = arith.constant 0 : i32
    %c0_i32_0 = arith.constant 0 : i32
    %c0_i32_1 = arith.constant 0 : i32
    return %c0_i32, %c0_i32_0 : i32, i32
  }
  func.func @transform_47(%arg0: i32) -> (i32, i32, i32) {
    %c0_i32 = arith.constant 0 : i32
    %c0_i32_0 = arith.constant 0 : i32
    %c0_i32_1 = arith.constant 0 : i32
    %c0_i32_2 = arith.constant 0 : i32
    return %c0_i32, %c0_i32_0, %c0_i32_1 : i32, i32, i32
  }
  func.func @transform_48(%arg0: i32) -> (i32, i32) {
    %c0_i32 = arith.constant 0 : i32
    %c0_i32_0 = arith.constant 0 : i32
    %c0_i32_1 = arith.constant 0 : i32
    return %c0_i32, %c0_i32_0 : i32, i32
  }
  func.func @transform_49(%arg0: i32) -> (i32, i32) {
    %c0_i32 = arith.constant 0 : i32
    %c0_i32_0 = arith.constant 0 : i32
    %c0_i32_1 = arith.constant 0 : i32
    return %c0_i32, %c0_i32_0 : i32, i32
  }
  func.func @transform_50(%arg0: i32) -> (i32, i32) {
    %c0_i32 = arith.constant 0 : i32
    %c0_i32_0 = arith.constant 0 : i32
    %c0_i32_1 = arith.constant 0 : i32
    return %c0_i32, %c0_i32_0 : i32, i32
  }
  func.func @transform_51(%arg0: i32) -> (i32, i32, i32) {
    %c0_i32 = arith.constant 0 : i32
    %c0_i32_0 = arith.constant 0 : i32
    %c0_i32_1 = arith.constant 0 : i32
    %c0_i32_2 = arith.constant 0 : i32
    return %c0_i32, %c0_i32_0, %c0_i32_1 : i32, i32, i32
  }
  func.func @transform_52(%arg0: i32) -> (i32, i32) {
    %c0_i32 = arith.constant 0 : i32
    %c0_i32_0 = arith.constant 0 : i32
    %c0_i32_1 = arith.constant 0 : i32
    return %c0_i32, %c0_i32_0 : i32, i32
  }
  func.func @transform_53(%arg0: i32) -> (i32, i32) {
    %c0_i32 = arith.constant 0 : i32
    %c0_i32_0 = arith.constant 0 : i32
    %c0_i32_1 = arith.constant 0 : i32
    return %c0_i32, %c0_i32_0 : i32, i32
  }
  func.func @transform_54(%arg0: i32) -> (i32, i32) {
    %c0_i32 = arith.constant 0 : i32
    %c0_i32_0 = arith.constant 0 : i32
    %c0_i32_1 = arith.constant 0 : i32
    return %c0_i32, %c0_i32_0 : i32, i32
  }
  func.func @transform_55(%arg0: i32) -> (i32, i32) {
    %c0_i32 = arith.constant 0 : i32
    %c0_i32_0 = arith.constant 0 : i32
    %c0_i32_1 = arith.constant 0 : i32
    return %c0_i32, %c0_i32_0 : i32, i32
  }
  func.func @transform_56(%arg0: i32) -> (i32, i32) {
    %c0_i32 = arith.constant 0 : i32
    %c0_i32_0 = arith.constant 0 : i32
    %c0_i32_1 = arith.constant 0 : i32
    return %c0_i32, %c0_i32_0 : i32, i32
  }
  func.func @transform_57(%arg0: i32) -> (i32, i32, i32) {
    %c0_i32 = arith.constant 0 : i32
    %c0_i32_0 = arith.constant 0 : i32
    %c0_i32_1 = arith.constant 0 : i32
    return %arg0, %c0_i32, %c0_i32_0 : i32, i32, i32
  }
  func.func @transform_58(%arg0: i32) -> (i32, i32, i32) {
    %c0_i32 = arith.constant 0 : i32
    %c0_i32_0 = arith.constant 0 : i32
    %c0_i32_1 = arith.constant 0 : i32
    return %arg0, %c0_i32, %c0_i32_0 : i32, i32, i32
  }
}

</mosaic_0001>

<llo_original>
// kernel: _lambda_.1
$region0: #{_lambda_.1}
  #allocation0 [shape = 'u32[]', space=smem, size = 0x4, offset = 0x4, fixed_abs, tag = 'smem constant byte address 0x4 - core index']
  #allocation1 [shape = 'u32[72,128]{1,0:T(1,128)}', space=vmem, size = 0x9000, scoped, tag = 'internal scratch']
  #allocation2 [shape = 'f32[1,1]{1,0:T(1,128)S(1)}', space=vmem, size = 0x200, scoped, tag = 'scoped memory for _lambda_.1']
  %s0 = inlined_call_operand.smem [shape: u32[59], index: -1, kind: input, shape index: {}]
  %s1 = sld [smem:[%s0]]
  %s2 = scalar_lea.smem %s0, 1
  %s3 = sld [smem:[%s2]]
  %s4 = scalar_lea.smem %s0, 2
  %s5 = sld [smem:[%s4]]
  %s6 = scalar_lea.smem %s0, 3
  %s7 = sld [smem:[%s6]]
  %s8 = scalar_lea.smem %s0, 4
  %s9 = sld [smem:[%s8]]
  %s10 = scalar_lea.smem %s0, 5
  %s11 = sld [smem:[%s10]]
  %s12 = scalar_lea.smem %s0, 6
  %s13 = sld [smem:[%s12]]
  %s14 = scalar_lea.smem %s0, 7
  %s15 = sld [smem:[%s14]]
  %s16 = scalar_lea.smem %s0, 8
  %s17 = sld [smem:[%s16]]
  %s18 = scalar_lea.smem %s0, 9
  %s19 = sld [smem:[%s18]]
  %s20 = scalar_lea.smem %s0, 10
  %s21 = sld [smem:[%s20]]
  %s22 = scalar_lea.smem %s0, 11
  %s23 = sld [smem:[%s22]]
  %s24 = scalar_lea.smem %s0, 12
  %s25 = sld [smem:[%s24]]
  %s26 = scalar_lea.smem %s0, 13
  %s27 = sld [smem:[%s26]]
  %s28 = scalar_lea.smem %s0, 14
  %s29 = sld [smem:[%s28]]
  %s30 = scalar_lea.smem %s0, 15
  %s31 = sld [smem:[%s30]]
  %s32 = scalar_lea.smem %s0, 16
  %s33 = sld [smem:[%s32]]
  %s34 = scalar_lea.smem %s0, 17
  %s35 = sld [smem:[%s34]]
  %s36 = scalar_lea.smem %s0, 18
  %s37 = sld [smem:[%s36]]
  %s38 = scalar_lea.smem %s0, 19
  %s39 = sld [smem:[%s38]]
  %s40 = scalar_lea.smem %s0, 20
  %s41 = sld [smem:[%s40]]
  %s42 = scalar_lea.smem %s0, 21
  %s43 = sld [smem:[%s42]]
  %s44 = scalar_lea.smem %s0, 22
  %s45 = sld [smem:[%s44]]
  %s46 = scalar_lea.smem %s0, 23
  %s47 = sld [smem:[%s46]]
  %s48 = scalar_lea.smem %s0, 24
  %s49 = sld [smem:[%s48]]
  %s50 = scalar_lea.smem %s0, 25
  %s51 = sld [smem:[%s50]]
  %s52 = scalar_lea.smem %s0, 26
  %s53 = sld [smem:[%s52]]
  %s54 = scalar_lea.smem %s0, 27
  %s55 = sld [smem:[%s54]]
  %s56 = scalar_lea.smem %s0, 28
  %s57 = sld [smem:[%s56]]
  %s58 = scalar_lea.smem %s0, 29
  %s59 = sld [smem:[%s58]]
  %s60 = scalar_lea.smem %s0, 30
  %s61 = sld [smem:[%s60]]
  %s62 = scalar_lea.smem %s0, 31
  %s63 = sld [smem:[%s62]]
  %s64 = scalar_lea.smem %s0, 32
  %s65 = sld [smem:[%s64]]
  %s66 = scalar_lea.smem %s0, 33
  %s67 = sld [smem:[%s66]]
  %s68 = scalar_lea.smem %s0, 34
  %s69 = sld [smem:[%s68]]
  %s70 = scalar_lea.smem %s0, 35
  %s71 = sld [smem:[%s70]]
  %s72 = scalar_lea.smem %s0, 36
  %s73 = sld [smem:[%s72]]
  %s74 = scalar_lea.smem %s0, 37
  %s75 = sld [smem:[%s74]]
  %s76 = scalar_lea.smem %s0, 38
  %s77 = sld [smem:[%s76]]
  %s78 = scalar_lea.smem %s0, 39
  %s79 = sld [smem:[%s78]]
  %s80 = scalar_lea.smem %s0, 40
  %s81 = sld [smem:[%s80]]
  %s82 = scalar_lea.smem %s0, 41
  %s83 = sld [smem:[%s82]]
  %s84 = scalar_lea.smem %s0, 42
  %s85 = sld [smem:[%s84]]
  %s86 = scalar_lea.smem %s0, 43
  %s87 = sld [smem:[%s86]]
  %s88 = scalar_lea.smem %s0, 44
  %s89 = sld [smem:[%s88]]
  %s90 = scalar_lea.smem %s0, 45
  %s91 = sld [smem:[%s90]]
  %s92 = scalar_lea.smem %s0, 46
  %s93 = sld [smem:[%s92]]
  %s94 = scalar_lea.smem %s0, 47
  %s95 = sld [smem:[%s94]]
  %s96 = scalar_lea.smem %s0, 48
  %s97 = sld [smem:[%s96]]
  %s98 = scalar_lea.smem %s0, 49
  %s99 = sld [smem:[%s98]]
  %s100 = scalar_lea.smem %s0, 50
  %s101 = sld [smem:[%s100]]
  %s102 = scalar_lea.smem %s0, 51
  %s103 = sld [smem:[%s102]]
  %s104 = scalar_lea.smem %s0, 52
  %s105 = sld [smem:[%s104]]
  %s106 = scalar_lea.smem %s0, 53
  %s107 = sld [smem:[%s106]]
  %s108 = scalar_lea.smem %s0, 54
  %s109 = sld [smem:[%s108]]
  %s110 = scalar_lea.smem %s0, 55
  %s111 = sld [smem:[%s110]]
  %s112 = scalar_lea.smem %s0, 56
  %s113 = sld [smem:[%s112]]
  %s114 = scalar_lea.smem %s0, 57
  %s115 = sld [smem:[%s114]]
  %s116 = scalar_lea.smem %s0, 58
  %s117 = sld [smem:[%s116]]
  %118 = xla_tuple %s115, %s117
  %s119 = sld [smem:[#allocation0]]
  $region405: #{_lambda_.1} parent=0
    _
  %s121 = ssub.s32 1, %s119
  %s122 = scalar_select 0, %s121, %s119
  %v123 = vstv %s113
  %124 = vst [vmem:[#allocation2] sm:$0x1] %v123
  $region1: #{_lambda_.1} parent=0
    #allocation3 [shape = 'u8[16384]{0}', space=vmem, size = 0x4000, scoped, tag = 'input window, operand 3, single buffered']
    #allocation4 [shape = 's32[2]{0}', space=sflag, size = 0x8, scoped, tag = 'scoped memory for _lambda_.1']
    #allocation5 [shape = 'u8[16384]{0}', space=vmem, size = 0x4000, scoped, tag = 'input window, operand 5, single buffered']
    #allocation6 [shape = 's32[1]{0}', space=sflag, size = 0x4, scoped, tag = 'scoped memory for _lambda_.1']
    #allocation7 [shape = 'u8[131072]{0}', space=vmem, size = 0x20000, scoped, tag = 'input window, operand 6, single buffered']
    #allocation8 [shape = 'u8[8192]{0}', space=vmem, size = 0x2000, scoped, tag = 'input window, operand 7, single buffered']
    #allocation9 [shape = 's32[1]{0}', space=sflag, size = 0x4, scoped, tag = 'scoped memory for _lambda_.1']
    #allocation10 [shape = 'u8[8192]{0}', space=vmem, size = 0x2000, scoped, tag = 'input window, operand 8, single buffered']
    #allocation11 [shape = 'u8[32768]{0}', space=vmem, size = 0x8000, scoped, tag = 'input window, operand 9, single buffered']
    #allocation12 [shape = 's32[1]{0}', space=sflag, size = 0x4, scoped, tag = 'scoped memory for _lambda_.1']
    #allocation13 [shape = 'u8[32768]{0}', space=vmem, size = 0x8000, scoped, tag = 'input window, operand 10, single buffered']
    #allocation14 [shape = 'u8[32768]{0}', space=vmem, size = 0x8000, scoped, tag = 'input window, operand 11, single buffered']
    #allocation15 [shape = 's32[1]{0}', space=sflag, size = 0x4, scoped, tag = 'scoped memory for _lambda_.1']
    #allocation16 [shape = 'u8[16384]{0}', space=vmem, size = 0x4000, scoped, tag = 'input window, operand 15, single buffered']
    #allocation17 [shape = 'u8[16384]{0}', space=vmem, size = 0x4000, scoped, tag = 'input window, operand 17, single buffered']
    #allocation18 [shape = 's32[1]{0}', space=sflag, size = 0x4, scoped, tag = 'scoped memory for _lambda_.1']
    #allocation19 [shape = 'u8[16384]{0}', space=vmem, size = 0x4000, scoped, tag = 'input window, operand 18, single buffered']
    #allocation20 [shape = 'u8[512]{0}', space=vmem, size = 0x400, scoped, tag = 'input window, operand 22, single buffered']
    #allocation21 [shape = 's32[1]{0}', space=sflag, size = 0x4, scoped, tag = 'scoped memory for _lambda_.1']
    #allocation22 [shape = 'u8[98304]{0}', space=vmem, size = 0x18000, scoped, tag = 'input window, operand 23, single buffered']
    #allocation23 [shape = 'u8[512]{0}', space=vmem, size = 0x400, scoped, tag = 'input window, operand 24, single buffered']
    #allocation24 [shape = 's32[1]{0}', space=sflag, size = 0x4, scoped, tag = 'scoped memory for _lambda_.1']
    #allocation25 [shape = 'u8[32768]{0}', space=vmem, size = 0x8000, scoped, tag = 'input window, operand 27, single buffered']
    #allocation26 [shape = 'u8[32768]{0}', space=vmem, size = 0x8000, scoped, tag = 'input window, operand 28, single buffered']
    #allocation27 [shape = 's32[1]{0}', space=sflag, size = 0x4, scoped, tag = 'scoped memory for _lambda_.1']
    #allocation28 [shape = 'u8[32768]{0}', space=vmem, size = 0x8000, scoped, tag = 'input window, operand 29, single buffered']
    #allocation29 [shape = 'u8[1024]{0}', space=vmem, size = 0x400, scoped, tag = 'input window, operand 30, single buffered']
    #allocation30 [shape = 's32[1]{0}', space=sflag, size = 0x4, scoped, tag = 'scoped memory for _lambda_.1']
    #allocation31 [shape = 'u8[1024]{0}', space=vmem, size = 0x400, scoped, tag = 'input window, operand 31, single buffered']
    #allocation32 [shape = 'u8[1024]{0}', space=vmem, size = 0x400, scoped, tag = 'input window, operand 32, single buffered']
    #allocation33 [shape = 's32[1]{0}', space=sflag, size = 0x4, scoped, tag = 'scoped memory for _lambda_.1']
    #allocation34 [shape = 'u8[16384]{0}', space=vmem, size = 0x4000, scoped, tag = 'input window, operand 33, single buffered']
    #allocation35 [shape = 'u8[512]{0}', space=vmem, size = 0x400, scoped, tag = 'input window, operand 34, single buffered']
    #allocation36 [shape = 's32[1]{0}', space=sflag, size = 0x4, scoped, tag = 'scoped memory for _lambda_.1']
    #allocation37 [shape = 'u8[16384]{0}', space=vmem, size = 0x4000, scoped, tag = 'input window, operand 35, single buffered']
    #allocation38 [shape = 'u8[16384]{0}', space=vmem, size = 0x4000, scoped, tag = 'input window, operand 36, single buffered']
    #allocation39 [shape = 's32[1]{0}', space=sflag, size = 0x4, scoped, tag = 'scoped memory for _lambda_.1']
    #allocation40 [shape = 'u8[512]{0}', space=vmem, size = 0x400, scoped, tag = 'input window, operand 40, single buffered']
    #allocation41 [shape = 'u8[98304]{0}', space=vmem, size = 0x18000, scoped, tag = 'input window, operand 41, single buffered']
    #allocation42 [shape = 's32[1]{0}', space=sflag, size = 0x4, scoped, tag = 'scoped memory for _lambda_.1']
    #allocation43 [shape = 'u8[512]{0}', space=vmem, size = 0x400, scoped, tag = 'input window, operand 42, single buffered']
    #allocation44 [shape = 'u8[16384]{0}', space=vmem, size = 0x4000, scoped, tag = 'input window, operand 45, single buffered']
    #allocation45 [shape = 's32[1]{0}', space=sflag, size = 0x4, scoped, tag = 'scoped memory for _lambda_.1']
    #allocation46 [shape = 'u8[512]{0}', space=vmem, size = 0x400, scoped, tag = 'input window, operand 46, single buffered']
    #allocation47 [shape = 'u8[49152]{0}', space=vmem, size = 0xc000, scoped, tag = 'input window, operand 47, single buffered']
    #allocation48 [shape = 's32[1]{0}', space=sflag, size = 0x4, scoped, tag = 'scoped memory for _lambda_.1']
    #allocation49 [shape = 'u8[512]{0}', space=vmem, size = 0x400, scoped, tag = 'input window, operand 48, single buffered']
    #allocation50 [shape = 'u8[98304]{0}', space=vmem, size = 0x18000, scoped, tag = 'input window, operand 51, single buffered']
    #allocation51 [shape = 's32[1]{0}', space=sflag, size = 0x4, scoped, tag = 'scoped memory for _lambda_.1']
    #allocation52 [shape = 'u8[512]{0}', space=vmem, size = 0x400, scoped, tag = 'input window, operand 52, single buffered']
    #allocation53 [shape = 'u8[32768]{0}', space=vmem, size = 0x8000, scoped, tag = 'input window, operand 55, single buffered']
    #allocation54 [shape = 's32[1]{0}', space=sflag, size = 0x4, scoped, tag = 'scoped memory for _lambda_.1']
    %125 = vsyncpa [#allocation4], 0
    %126 = vsyncpa [#allocation6], 0
    %127 = vsyncpa [#allocation9], 0
    %128 = vsyncpa [#allocation12], 0
    %129 = vsyncpa [#allocation15], 0
    %130 = vsyncpa [#allocation18], 0
    %131 = vsyncpa [#allocation21], 0
    %132 = vsyncpa [#allocation24], 0
    %133 = vsyncpa [#allocation27], 0
    %134 = vsyncpa [#allocation30], 0
    %135 = vsyncpa [#allocation33], 0
    %136 = vsyncpa [#allocation36], 0
    %137 = vsyncpa [#allocation39], 0
    %138 = vsyncpa [#allocation42], 0
    %139 = vsyncpa [#allocation45], 0
    %140 = vsyncpa [#allocation48], 0
    %141 = vsyncpa [#allocation51], 0
    %142 = vsyncpa [#allocation54], 0
    loop: start=0, step=1, limit=4
    $region2: #{_lambda_.1} parent=1 // loop_pre_header
      _
    $region3: #{_lambda_.1} parent=1 // loop_header
      %s144 = sphi 0, %s148
      %p145 = scmp.ge.s32.totalorder %s144, 4
      %s154 = sphi 0, %s156
      %s157 = sphi 0, %s154
      %s158 = sphi 0, %s157
      %s174 = sphi 0, %s158
      %s180 = sphi 0, %s182
      %s183 = sphi 0, %s180
      %s184 = sphi 0, %s183
      %s200 = sphi 0, %s184
      %s206 = sphi 0, %s208
      %s209 = sphi 0, %s206
      %s210 = sphi 0, %s209
      %s226 = sphi 0, %s210
      %s230 = sphi 0, %s230
      %s232 = sphi 0, %s230
      %s233 = sphi 0, %s232
      %s247 = sphi 0, %s233
      %s251 = sphi 0, %s251
      %s253 = sphi 0, %s251
      %s254 = sphi 0, %s253
      %s268 = sphi 0, %s254
      %s272 = sphi 0, %s272
      %s274 = sphi 0, %s272
      %s275 = sphi 0, %s274
      %s289 = sphi 0, %s275
      %s293 = sphi 0, %s293
      %s295 = sphi 0, %s293
      %s296 = sphi 0, %s295
      %s310 = sphi 0, %s296
      %s314 = sphi 0, %s314
      %s316 = sphi 0, %s314
      %s317 = sphi 0, %s316
      %s331 = sphi 0, %s317
      %s335 = sphi 0, %s335
      %s337 = sphi 0, %s335
      %s338 = sphi 0, %s337
      %s352 = sphi 0, %s338
      %s356 = sphi 0, %s356
      %s358 = sphi 0, %s356
      %s359 = sphi 0, %s358
      %s373 = sphi 0, %s359
      %s377 = sphi 0, %s377
      %s379 = sphi 0, %s377
      %s380 = sphi 0, %s379
      %s394 = sphi 0, %s380
      %s398 = sphi 0, %s398
      %s400 = sphi 0, %s398
      %s401 = sphi 0, %s400
      %s415 = sphi 0, %s401
      %s419 = sphi 0, %s419
      %s421 = sphi 0, %s419
      %s422 = sphi 0, %s421
      %s436 = sphi 0, %s422
      %s440 = sphi 0, %s440
      %s442 = sphi 0, %s440
      %s443 = sphi 0, %s442
      %s457 = sphi 0, %s443
      %s461 = sphi 0, %s461
      %s463 = sphi 0, %s461
      %s464 = sphi 0, %s463
      %s478 = sphi 0, %s464
      %s482 = sphi 0, %s482
      %s484 = sphi 0, %s482
      %s485 = sphi 0, %s484
      %s499 = sphi 0, %s485
      %s503 = sphi 0, %s503
      %s505 = sphi 0, %s503
      %s506 = sphi 0, %s505
      %s520 = sphi 0, %s506
      %s524 = sphi 0, %s524
      %s526 = sphi 0, %s524
      %s527 = sphi 0, %s526
      %s541 = sphi 0, %s527
      %s545 = sphi 0, %s545
      %s547 = sphi 0, %s545
      %s548 = sphi 0, %s547
      %s562 = sphi 0, %s548
      %s566 = sphi 0, %s566
      %s568 = sphi 0, %s566
      %s569 = sphi 0, %s568
      %s583 = sphi 0, %s569
      %s587 = sphi 0, %s587
      %s589 = sphi 0, %s587
      %s590 = sphi 0, %s589
      %s604 = sphi 0, %s590
      %s608 = sphi 0, %s608
      %s610 = sphi 0, %s608
      %s611 = sphi 0, %s610
      %s625 = sphi 0, %s611
      %s629 = sphi 0, %s629
      %s631 = sphi 0, %s629
      %s632 = sphi 0, %s631
      %s646 = sphi 0, %s632
      %s650 = sphi 0, %s650
      %s652 = sphi 0, %s650
      %s653 = sphi 0, %s652
      %s667 = sphi 0, %s653
      %s671 = sphi 0, %s671
      %s673 = sphi 0, %s671
      %s674 = sphi 0, %s673
      %s688 = sphi 0, %s674
      %s692 = sphi 0, %s692
      %s694 = sphi 0, %s692
      %s695 = sphi 0, %s694
      %s709 = sphi 0, %s695
      %s713 = sphi 0, %s713
      %s715 = sphi 0, %s713
      %s716 = sphi 0, %s715
      %s730 = sphi 0, %s716
      %s734 = sphi 0, %s734
      %s736 = sphi 0, %s734
      %s737 = sphi 0, %s736
      %s751 = sphi 0, %s737
      %s755 = sphi 0, %s755
      %s757 = sphi 0, %s755
      %s758 = sphi 0, %s757
      %s772 = sphi 0, %s758
      %s776 = sphi 0, %s776
      %s778 = sphi 0, %s776
      %s779 = sphi 0, %s778
      %s793 = sphi 0, %s779
      %s797 = sphi 0, %s797
      %s799 = sphi 0, %s797
      %s800 = sphi 0, %s799
      %s814 = sphi 0, %s800
      %s818 = sphi 0, %s818
      %s820 = sphi 0, %s818
      %s821 = sphi 0, %s820
      %s835 = sphi 0, %s821
      %s839 = sphi 0, %s839
      %s841 = sphi 0, %s839
      %s842 = sphi 0, %s841
      %s856 = sphi 0, %s842
      %s860 = sphi 0, %s860
      %s862 = sphi 0, %s860
      %s863 = sphi 0, %s862
      %s877 = sphi 0, %s863
      %s881 = sphi 0, %s881
      %s883 = sphi 0, %s881
      %s884 = sphi 0, %s883
      %s898 = sphi 0, %s884
      %s902 = sphi 0, %s902
      %s904 = sphi 0, %s902
      %s905 = sphi 0, %s904
      %s919 = sphi 0, %s905
      %s923 = sphi 0, %s923
      %s925 = sphi 0, %s923
      %s926 = sphi 0, %s925
      %s940 = sphi 0, %s926
      %s944 = sphi 0, %s944
      %s946 = sphi 0, %s944
      %s947 = sphi 0, %s946
      %s961 = sphi 0, %s947
      %s965 = sphi 0, %s965
      %s967 = sphi 0, %s965
      %s968 = sphi 0, %s967
      %s982 = sphi 0, %s968
      %s986 = sphi 0, %s986
      %s988 = sphi 0, %s986
      %s989 = sphi 0, %s988
      %s1003 = sphi 0, %s989
      %s1007 = sphi 0, %s1007
      %s1009 = sphi 0, %s1007
      %s1010 = sphi 0, %s1009
      %s1024 = sphi 0, %s1010
      %s1028 = sphi 0, %s1028
      %s1030 = sphi 0, %s1028
      %s1031 = sphi 0, %s1030
      %s1045 = sphi 0, %s1031
      %s1049 = sphi 0, %s1049
      %s1051 = sphi 0, %s1049
      %s1052 = sphi 0, %s1051
      %s1066 = sphi 0, %s1052
      %s1070 = sphi 0, %s1070
      %s1072 = sphi 0, %s1070
      %s1073 = sphi 0, %s1072
      %s1087 = sphi 0, %s1073
      %s1091 = sphi 0, %s1091
      %s1093 = sphi 0, %s1091
      %s1094 = sphi 0, %s1093
      %s1108 = sphi 0, %s1094
      %s1112 = sphi 0, %s1112
      %s1114 = sphi 0, %s1112
      %s1115 = sphi 0, %s1114
      %s1129 = sphi 0, %s1115
      %s1133 = sphi 0, %s1133
      %s1135 = sphi 0, %s1133
      %s1136 = sphi 0, %s1135
      %s1150 = sphi 0, %s1136
      %s1154 = sphi 0, %s1154
      %s1156 = sphi 0, %s1154
      %s1157 = sphi 0, %s1156
      %s1171 = sphi 0, %s1157
      %s1175 = sphi 0, %s1175
      %s1177 = sphi 0, %s1175
      %s1178 = sphi 0, %s1177
      %s1192 = sphi 0, %s1178
      %s1196 = sphi 0, %s1196
      %s1198 = sphi 0, %s1196
      %s1199 = sphi 0, %s1198
      %s1213 = sphi 0, %s1199
      %s1217 = sphi 0, %s1217
      %s1219 = sphi 0, %s1217
      %s1220 = sphi 0, %s1219
      %s1234 = sphi 0, %s1220
      %s1238 = sphi 0, %s1238
      %s1240 = sphi 0, %s1238
      %s1241 = sphi 0, %s1240
      %s1255 = sphi 0, %s1241
      %s1259 = sphi 0, %s1259
      %s1261 = sphi 0, %s1259
      %s1262 = sphi 0, %s1261
      %s1276 = sphi 0, %s1262
      %s1280 = sphi 0, %s1280
      %s1282 = sphi 0, %s1280
      %s1283 = sphi 0, %s1282
      %s1297 = sphi 0, %s1283
      %s1301 = sphi 0, %s1301
      %s1303 = sphi 0, %s1301
      %s1304 = sphi 0, %s1303
      %s1318 = sphi 0, %s1304
      %s1322 = sphi 0, %s1322
      %s1324 = sphi 0, %s1322
      %s1325 = sphi 0, %s1324
      %s1339 = sphi 0, %s1325
      %s1343 = sphi 0, %s1343
      %s1345 = sphi 0, %s1343
      %s1346 = sphi 0, %s1345
      %s1360 = sphi 0, %s1346
      %s1366 = sphi 0, %s1368
      %s1369 = sphi 0, %s1366
      %s1370 = sphi 0, %s1369
      %s1386 = sphi 0, %s1370
      %s1392 = sphi 0, %s1394
      %s1395 = sphi 0, %s1392
      %s1396 = sphi 0, %s1395
      %s1412 = sphi 0, %s1396
    $region4: #{_lambda_.1} parent=1 // loop_header_branch
      %147 = sbr.rel (%p145) target = $region8
    $region5: #{_lambda_.1} parent=1 // loop_body
      %s149 = ssub.s32 %s144, 1
      %s150 = ssub.s32 %s144, 2
      %s151 = sadd.s32 %s144, 1
      %s152 = ssub.s32 %s144, %s151
      %p153 = scmp.eq.s32.totalorder %s152, 0
      %s155 = sadd.s32 %s154, 1
      %s156 = scalar_select %p153, %s154, %s155
      %p159 = pneg %p153
      %p160 = scmp.eq.s32.totalorder %s144, 1
      %p161 = por %p159, %p160
      %p162 = scmp.ne.s32.totalorder %s154, %s157
      %p163 = scmp.eq.s32.totalorder %s144, 0
      %p164 = por %p162, %p163
      %p165 = scmp.ne.s32.totalorder %s154, %s157
      %p166 = scmp.eq.s32.totalorder %s149, 1
      %p167 = por %p165, %p166
      %p168 = scmp.ne.s32.totalorder %s157, %s158
      %p169 = scmp.eq.s32.totalorder %s149, 0
      %p170 = por %p168, %p169
      %p171 = scmp.ne.s32.totalorder %s157, %s158
      %p172 = scmp.eq.s32.totalorder %s150, 1
      %p173 = por %p171, %p172
      %p175 = scmp.ne.s32.totalorder %s158, %s174
      %p176 = scmp.eq.s32.totalorder %s150, 0
      %p177 = por %p175, %p176
      %s178 = ssub.s32 %s144, %s151
      %p179 = scmp.eq.s32.totalorder %s178, 0
      %s181 = sadd.s32 %s180, 1
      %s182 = scalar_select %p179, %s180, %s181
      %p185 = pneg %p179
      %p186 = scmp.eq.s32.totalorder %s144, 1
      %p187 = por %p185, %p186
      %p188 = scmp.ne.s32.totalorder %s180, %s183
      %p189 = scmp.eq.s32.totalorder %s144, 0
      %p190 = por %p188, %p189
      %p191 = scmp.ne.s32.totalorder %s180, %s183
      %p192 = scmp.eq.s32.totalorder %s149, 1
      %p193 = por %p191, %p192
      %p194 = scmp.ne.s32.totalorder %s183, %s184
      %p195 = scmp.eq.s32.totalorder %s149, 0
      %p196 = por %p194, %p195
      %p197 = scmp.ne.s32.totalorder %s183, %s184
      %p198 = scmp.eq.s32.totalorder %s150, 1
      %p199 = por %p197, %p198
      %p201 = scmp.ne.s32.totalorder %s184, %s200
      %p202 = scmp.eq.s32.totalorder %s150, 0
      %p203 = por %p201, %p202
      %s204 = ssub.s32 %s144, %s151
      %p205 = scmp.eq.s32.totalorder %s204, 0
      %s207 = sadd.s32 %s206, 1
      %s208 = scalar_select %p205, %s206, %s207
      %p211 = pneg %p205
      %p212 = scmp.eq.s32.totalorder %s144, 1
      %p213 = por %p211, %p212
      %p214 = scmp.ne.s32.totalorder %s206, %s209
      %p215 = scmp.eq.s32.totalorder %s144, 0
      %p216 = por %p214, %p215
      %p217 = scmp.ne.s32.totalorder %s206, %s209
      %p218 = scmp.eq.s32.totalorder %s149, 1
      %p219 = por %p217, %p218
      %p220 = scmp.ne.s32.totalorder %s209, %s210
      %p221 = scmp.eq.s32.totalorder %s149, 0
      %p222 = por %p220, %p221
      %p223 = scmp.ne.s32.totalorder %s209, %s210
      %p224 = scmp.eq.s32.totalorder %s150, 1
      %p225 = por %p223, %p224
      %p227 = scmp.ne.s32.totalorder %s210, %s226
      %p228 = scmp.eq.s32.totalorder %s150, 0
      %p229 = por %p227, %p228
      %s231 = sadd.s32 %s230, 1
      %p234 = scmp.eq.s32.totalorder %s144, 1
      %p235 = scmp.ne.s32.totalorder %s230, %s232
      %p236 = scmp.eq.s32.totalorder %s144, 0
      %p237 = por %p235, %p236
      %p238 = scmp.ne.s32.totalorder %s230, %s232
      %p239 = scmp.eq.s32.totalorder %s149, 1
      %p240 = por %p238, %p239
      %p241 = scmp.ne.s32.totalorder %s232, %s233
      %p242 = scmp.eq.s32.totalorder %s149, 0
      %p243 = por %p241, %p242
      %p244 = scmp.ne.s32.totalorder %s232, %s233
      %p245 = scmp.eq.s32.totalorder %s150, 1
      %p246 = por %p244, %p245
      %p248 = scmp.ne.s32.totalorder %s233, %s247
      %p249 = scmp.eq.s32.totalorder %s150, 0
      %p250 = por %p248, %p249
      %s252 = sadd.s32 %s251, 1
      %p255 = scmp.eq.s32.totalorder %s144, 1
      %p256 = scmp.ne.s32.totalorder %s251, %s253
      %p257 = scmp.eq.s32.totalorder %s144, 0
      %p258 = por %p256, %p257
      %p259 = scmp.ne.s32.totalorder %s251, %s253
      %p260 = scmp.eq.s32.totalorder %s149, 1
      %p261 = por %p259, %p260
      %p262 = scmp.ne.s32.totalorder %s253, %s254
      %p263 = scmp.eq.s32.totalorder %s149, 0
      %p264 = por %p262, %p263
      %p265 = scmp.ne.s32.totalorder %s253, %s254
      %p266 = scmp.eq.s32.totalorder %s150, 1
      %p267 = por %p265, %p266
      %p269 = scmp.ne.s32.totalorder %s254, %s268
      %p270 = scmp.eq.s32.totalorder %s150, 0
      %p271 = por %p269, %p270
      %s273 = sadd.s32 %s272, 1
      %p276 = scmp.eq.s32.totalorder %s144, 1
      %p277 = scmp.ne.s32.totalorder %s272, %s274
      %p278 = scmp.eq.s32.totalorder %s144, 0
      %p279 = por %p277, %p278
      %p280 = scmp.ne.s32.totalorder %s272, %s274
      %p281 = scmp.eq.s32.totalorder %s149, 1
      %p282 = por %p280, %p281
      %p283 = scmp.ne.s32.totalorder %s274, %s275
      %p284 = scmp.eq.s32.totalorder %s149, 0
      %p285 = por %p283, %p284
      %p286 = scmp.ne.s32.totalorder %s274, %s275
      %p287 = scmp.eq.s32.totalorder %s150, 1
      %p288 = por %p286, %p287
      %p290 = scmp.ne.s32.totalorder %s275, %s289
      %p291 = scmp.eq.s32.totalorder %s150, 0
      %p292 = por %p290, %p291
      %s294 = sadd.s32 %s293, 1
      %p297 = scmp.eq.s32.totalorder %s144, 1
      %p298 = scmp.ne.s32.totalorder %s293, %s295
      %p299 = scmp.eq.s32.totalorder %s144, 0
      %p300 = por %p298, %p299
      %p301 = scmp.ne.s32.totalorder %s293, %s295
      %p302 = scmp.eq.s32.totalorder %s149, 1
      %p303 = por %p301, %p302
      %p304 = scmp.ne.s32.totalorder %s295, %s296
      %p305 = scmp.eq.s32.totalorder %s149, 0
      %p306 = por %p304, %p305
      %p307 = scmp.ne.s32.totalorder %s295, %s296
      %p308 = scmp.eq.s32.totalorder %s150, 1
      %p309 = por %p307, %p308
      %p311 = scmp.ne.s32.totalorder %s296, %s310
      %p312 = scmp.eq.s32.totalorder %s150, 0
      %p313 = por %p311, %p312
      %s315 = sadd.s32 %s314, 1
      %p318 = scmp.eq.s32.totalorder %s144, 1
      %p319 = scmp.ne.s32.totalorder %s314, %s316
      %p320 = scmp.eq.s32.totalorder %s144, 0
      %p321 = por %p319, %p320
      %p322 = scmp.ne.s32.totalorder %s314, %s316
      %p323 = scmp.eq.s32.totalorder %s149, 1
      %p324 = por %p322, %p323
      %p325 = scmp.ne.s32.totalorder %s316, %s317
      %p326 = scmp.eq.s32.totalorder %s149, 0
      %p327 = por %p325, %p326
      %p328 = scmp.ne.s32.totalorder %s316, %s317
      %p329 = scmp.eq.s32.totalorder %s150, 1
      %p330 = por %p328, %p329
      %p332 = scmp.ne.s32.totalorder %s317, %s331
      %p333 = scmp.eq.s32.totalorder %s150, 0
      %p334 = por %p332, %p333
      %s336 = sadd.s32 %s335, 1
      %p339 = scmp.eq.s32.totalorder %s144, 1
      %p340 = scmp.ne.s32.totalorder %s335, %s337
      %p341 = scmp.eq.s32.totalorder %s144, 0
      %p342 = por %p340, %p341
      %p343 = scmp.ne.s32.totalorder %s335, %s337
      %p344 = scmp.eq.s32.totalorder %s149, 1
      %p345 = por %p343, %p344
      %p346 = scmp.ne.s32.totalorder %s337, %s338
      %p347 = scmp.eq.s32.totalorder %s149, 0
      %p348 = por %p346, %p347
      %p349 = scmp.ne.s32.totalorder %s337, %s338
      %p350 = scmp.eq.s32.totalorder %s150, 1
      %p351 = por %p349, %p350
      %p353 = scmp.ne.s32.totalorder %s338, %s352
      %p354 = scmp.eq.s32.totalorder %s150, 0
      %p355 = por %p353, %p354
      %s357 = sadd.s32 %s356, 1
      %p360 = scmp.eq.s32.totalorder %s144, 1
      %p361 = scmp.ne.s32.totalorder %s356, %s358
      %p362 = scmp.eq.s32.totalorder %s144, 0
      %p363 = por %p361, %p362
      %p364 = scmp.ne.s32.totalorder %s356, %s358
      %p365 = scmp.eq.s32.totalorder %s149, 1
      %p366 = por %p364, %p365
      %p367 = scmp.ne.s32.totalorder %s358, %s359
      %p368 = scmp.eq.s32.totalorder %s149, 0
      %p369 = por %p367, %p368
      %p370 = scmp.ne.s32.totalorder %s358, %s359
      %p371 = scmp.eq.s32.totalorder %s150, 1
      %p372 = por %p370, %p371
      %p374 = scmp.ne.s32.totalorder %s359, %s373
      %p375 = scmp.eq.s32.totalorder %s150, 0
      %p376 = por %p374, %p375
      %s378 = sadd.s32 %s377, 1
      %p381 = scmp.eq.s32.totalorder %s144, 1
      %p382 = scmp.ne.s32.totalorder %s377, %s379
      %p383 = scmp.eq.s32.totalorder %s144, 0
      %p384 = por %p382, %p383
      %p385 = scmp.ne.s32.totalorder %s377, %s379
      %p386 = scmp.eq.s32.totalorder %s149, 1
      %p387 = por %p385, %p386
      %p388 = scmp.ne.s32.totalorder %s379, %s380
      %p389 = scmp.eq.s32.totalorder %s149, 0
      %p390 = por %p388, %p389
      %p391 = scmp.ne.s32.totalorder %s379, %s380
      %p392 = scmp.eq.s32.totalorder %s150, 1
      %p393 = por %p391, %p392
      %p395 = scmp.ne.s32.totalorder %s380, %s394
      %p396 = scmp.eq.s32.totalorder %s150, 0
      %p397 = por %p395, %p396
      %s399 = sadd.s32 %s398, 1
      %p402 = scmp.eq.s32.totalorder %s144, 1
      %p403 = scmp.ne.s32.totalorder %s398, %s400
      %p404 = scmp.eq.s32.totalorder %s144, 0
      %p405 = por %p403, %p404
      %p406 = scmp.ne.s32.totalorder %s398, %s400
      %p407 = scmp.eq.s32.totalorder %s149, 1
      %p408 = por %p406, %p407
      %p409 = scmp.ne.s32.totalorder %s400, %s401
      %p410 = scmp.eq.s32.totalorder %s149, 0
      %p411 = por %p409, %p410
      %p412 = scmp.ne.s32.totalorder %s400, %s401
      %p413 = scmp.eq.s32.totalorder %s150, 1
      %p414 = por %p412, %p413
      %p416 = scmp.ne.s32.totalorder %s401, %s415
      %p417 = scmp.eq.s32.totalorder %s150, 0
      %p418 = por %p416, %p417
      %s420 = sadd.s32 %s419, 1
      %p423 = scmp.eq.s32.totalorder %s144, 1
      %p424 = scmp.ne.s32.totalorder %s419, %s421
      %p425 = scmp.eq.s32.totalorder %s144, 0
      %p426 = por %p424, %p425
      %p427 = scmp.ne.s32.totalorder %s419, %s421
      %p428 = scmp.eq.s32.totalorder %s149, 1
      %p429 = por %p427, %p428
      %p430 = scmp.ne.s32.totalorder %s421, %s422
      %p431 = scmp.eq.s32.totalorder %s149, 0
      %p432 = por %p430, %p431
      %p433 = scmp.ne.s32.totalorder %s421, %s422
      %p434 = scmp.eq.s32.totalorder %s150, 1
      %p435 = por %p433, %p434
      %p437 = scmp.ne.s32.totalorder %s422, %s436
      %p438 = scmp.eq.s32.totalorder %s150, 0
      %p439 = por %p437, %p438
      %s441 = sadd.s32 %s440, 1
      %p444 = scmp.eq.s32.totalorder %s144, 1
      %p445 = scmp.ne.s32.totalorder %s440, %s442
      %p446 = scmp.eq.s32.totalorder %s144, 0
      %p447 = por %p445, %p446
      %p448 = scmp.ne.s32.totalorder %s440, %s442
      %p449 = scmp.eq.s32.totalorder %s149, 1
      %p450 = por %p448, %p449
      %p451 = scmp.ne.s32.totalorder %s442, %s443
      %p452 = scmp.eq.s32.totalorder %s149, 0
      %p453 = por %p451, %p452
      %p454 = scmp.ne.s32.totalorder %s442, %s443
      %p455 = scmp.eq.s32.totalorder %s150, 1
      %p456 = por %p454, %p455
      %p458 = scmp.ne.s32.totalorder %s443, %s457
      %p459 = scmp.eq.s32.totalorder %s150, 0
      %p460 = por %p458, %p459
      %s462 = sadd.s32 %s461, 1
      %p465 = scmp.eq.s32.totalorder %s144, 1
      %p466 = scmp.ne.s32.totalorder %s461, %s463
      %p467 = scmp.eq.s32.totalorder %s144, 0
      %p468 = por %p466, %p467
      %p469 = scmp.ne.s32.totalorder %s461, %s463
      %p470 = scmp.eq.s32.totalorder %s149, 1
      %p471 = por %p469, %p470
      %p472 = scmp.ne.s32.totalorder %s463, %s464
      %p473 = scmp.eq.s32.totalorder %s149, 0
      %p474 = por %p472, %p473
      %p475 = scmp.ne.s32.totalorder %s463, %s464
      %p476 = scmp.eq.s32.totalorder %s150, 1
      %p477 = por %p475, %p476
      %p479 = scmp.ne.s32.totalorder %s464, %s478
      %p480 = scmp.eq.s32.totalorder %s150, 0
      %p481 = por %p479, %p480
      %s483 = sadd.s32 %s482, 1
      %p486 = scmp.eq.s32.totalorder %s144, 1
      %p487 = scmp.ne.s32.totalorder %s482, %s484
      %p488 = scmp.eq.s32.totalorder %s144, 0
      %p489 = por %p487, %p488
      %p490 = scmp.ne.s32.totalorder %s482, %s484
      %p491 = scmp.eq.s32.totalorder %s149, 1
      %p492 = por %p490, %p491
      %p493 = scmp.ne.s32.totalorder %s484, %s485
      %p494 = scmp.eq.s32.totalorder %s149, 0
      %p495 = por %p493, %p494
      %p496 = scmp.ne.s32.totalorder %s484, %s485
      %p497 = scmp.eq.s32.totalorder %s150, 1
      %p498 = por %p496, %p497
      %p500 = scmp.ne.s32.totalorder %s485, %s499
      %p501 = scmp.eq.s32.totalorder %s150, 0
      %p502 = por %p500, %p501
      %s504 = sadd.s32 %s503, 1
      %p507 = scmp.eq.s32.totalorder %s144, 1
      %p508 = scmp.ne.s32.totalorder %s503, %s505
      %p509 = scmp.eq.s32.totalorder %s144, 0
      %p510 = por %p508, %p509
      %p511 = scmp.ne.s32.totalorder %s503, %s505
      %p512 = scmp.eq.s32.totalorder %s149, 1
      %p513 = por %p511, %p512
      %p514 = scmp.ne.s32.totalorder %s505, %s506
      %p515 = scmp.eq.s32.totalorder %s149, 0
      %p516 = por %p514, %p515
      %p517 = scmp.ne.s32.totalorder %s505, %s506
      %p518 = scmp.eq.s32.totalorder %s150, 1
      %p519 = por %p517, %p518
      %p521 = scmp.ne.s32.totalorder %s506, %s520
      %p522 = scmp.eq.s32.totalorder %s150, 0
      %p523 = por %p521, %p522
      %s525 = sadd.s32 %s524, 1
      %p528 = scmp.eq.s32.totalorder %s144, 1
      %p529 = scmp.ne.s32.totalorder %s524, %s526
      %p530 = scmp.eq.s32.totalorder %s144, 0
      %p531 = por %p529, %p530
      %p532 = scmp.ne.s32.totalorder %s524, %s526
      %p533 = scmp.eq.s32.totalorder %s149, 1
      %p534 = por %p532, %p533
      %p535 = scmp.ne.s32.totalorder %s526, %s527
      %p536 = scmp.eq.s32.totalorder %s149, 0
      %p537 = por %p535, %p536
      %p538 = scmp.ne.s32.totalorder %s526, %s527
      %p539 = scmp.eq.s32.totalorder %s150, 1
      %p540 = por %p538, %p539
      %p542 = scmp.ne.s32.totalorder %s527, %s541
      %p543 = scmp.eq.s32.totalorder %s150, 0
      %p544 = por %p542, %p543
      %s546 = sadd.s32 %s545, 1
      %p549 = scmp.eq.s32.totalorder %s144, 1
      %p550 = scmp.ne.s32.totalorder %s545, %s547
      %p551 = scmp.eq.s32.totalorder %s144, 0
      %p552 = por %p550, %p551
      %p553 = scmp.ne.s32.totalorder %s545, %s547
      %p554 = scmp.eq.s32.totalorder %s149, 1
      %p555 = por %p553, %p554
      %p556 = scmp.ne.s32.totalorder %s547, %s548
      %p557 = scmp.eq.s32.totalorder %s149, 0
      %p558 = por %p556, %p557
      %p559 = scmp.ne.s32.totalorder %s547, %s548
      %p560 = scmp.eq.s32.totalorder %s150, 1
      %p561 = por %p559, %p560
      %p563 = scmp.ne.s32.totalorder %s548, %s562
      %p564 = scmp.eq.s32.totalorder %s150, 0
      %p565 = por %p563, %p564
      %s567 = sadd.s32 %s566, 1
      %p570 = scmp.eq.s32.totalorder %s144, 1
      %p571 = scmp.ne.s32.totalorder %s566, %s568
      %p572 = scmp.eq.s32.totalorder %s144, 0
      %p573 = por %p571, %p572
      %p574 = scmp.ne.s32.totalorder %s566, %s568
      %p575 = scmp.eq.s32.totalorder %s149, 1
      %p576 = por %p574, %p575
      %p577 = scmp.ne.s32.totalorder %s568, %s569
      %p578 = scmp.eq.s32.totalorder %s149, 0
      %p579 = por %p577, %p578
      %p580 = scmp.ne.s32.totalorder %s568, %s569
      %p581 = scmp.eq.s32.totalorder %s150, 1
      %p582 = por %p580, %p581
      %p584 = scmp.ne.s32.totalorder %s569, %s583
      %p585 = scmp.eq.s32.totalorder %s150, 0
      %p586 = por %p584, %p585
      %s588 = sadd.s32 %s587, 1
      %p591 = scmp.eq.s32.totalorder %s144, 1
      %p592 = scmp.ne.s32.totalorder %s587, %s589
      %p593 = scmp.eq.s32.totalorder %s144, 0
      %p594 = por %p592, %p593
      %p595 = scmp.ne.s32.totalorder %s587, %s589
      %p596 = scmp.eq.s32.totalorder %s149, 1
      %p597 = por %p595, %p596
      %p598 = scmp.ne.s32.totalorder %s589, %s590
      %p599 = scmp.eq.s32.totalorder %s149, 0
      %p600 = por %p598, %p599
      %p601 = scmp.ne.s32.totalorder %s589, %s590
      %p602 = scmp.eq.s32.totalorder %s150, 1
      %p603 = por %p601, %p602
      %p605 = scmp.ne.s32.totalorder %s590, %s604
      %p606 = scmp.eq.s32.totalorder %s150, 0
      %p607 = por %p605, %p606
      %s609 = sadd.s32 %s608, 1
      %p612 = scmp.eq.s32.totalorder %s144, 1
      %p613 = scmp.ne.s32.totalorder %s608, %s610
      %p614 = scmp.eq.s32.totalorder %s144, 0
      %p615 = por %p613, %p614
      %p616 = scmp.ne.s32.totalorder %s608, %s610
      %p617 = scmp.eq.s32.totalorder %s149, 1
      %p618 = por %p616, %p617
      %p619 = scmp.ne.s32.totalorder %s610, %s611
      %p620 = scmp.eq.s32.totalorder %s149, 0
      %p621 = por %p619, %p620
      %p622 = scmp.ne.s32.totalorder %s610, %s611
      %p623 = scmp.eq.s32.totalorder %s150, 1
      %p624 = por %p622, %p623
      %p626 = scmp.ne.s32.totalorder %s611, %s625
      %p627 = scmp.eq.s32.totalorder %s150, 0
      %p628 = por %p626, %p627
      %s630 = sadd.s32 %s629, 1
      %p633 = scmp.eq.s32.totalorder %s144, 1
      %p634 = scmp.ne.s32.totalorder %s629, %s631
      %p635 = scmp.eq.s32.totalorder %s144, 0
      %p636 = por %p634, %p635
      %p637 = scmp.ne.s32.totalorder %s629, %s631
      %p638 = scmp.eq.s32.totalorder %s149, 1
      %p639 = por %p637, %p638
      %p640 = scmp.ne.s32.totalorder %s631, %s632
      %p641 = scmp.eq.s32.totalorder %s149, 0
      %p642 = por %p640, %p641
      %p643 = scmp.ne.s32.totalorder %s631, %s632
      %p644 = scmp.eq.s32.totalorder %s150, 1
      %p645 = por %p643, %p644
      %p647 = scmp.ne.s32.totalorder %s632, %s646
      %p648 = scmp.eq.s32.totalorder %s150, 0
      %p649 = por %p647, %p648
      %s651 = sadd.s32 %s650, 1
      %p654 = scmp.eq.s32.totalorder %s144, 1
      %p655 = scmp.ne.s32.totalorder %s650, %s652
      %p656 = scmp.eq.s32.totalorder %s144, 0
      %p657 = por %p655, %p656
      %p658 = scmp.ne.s32.totalorder %s650, %s652
      %p659 = scmp.eq.s32.totalorder %s149, 1
      %p660 = por %p658, %p659
      %p661 = scmp.ne.s32.totalorder %s652, %s653
      %p662 = scmp.eq.s32.totalorder %s149, 0
      %p663 = por %p661, %p662
      %p664 = scmp.ne.s32.totalorder %s652, %s653
      %p665 = scmp.eq.s32.totalorder %s150, 1
      %p666 = por %p664, %p665
      %p668 = scmp.ne.s32.totalorder %s653, %s667
      %p669 = scmp.eq.s32.totalorder %s150, 0
      %p670 = por %p668, %p669
      %s672 = sadd.s32 %s671, 1
      %p675 = scmp.eq.s32.totalorder %s144, 1
      %p676 = scmp.ne.s32.totalorder %s671, %s673
      %p677 = scmp.eq.s32.totalorder %s144, 0
      %p678 = por %p676, %p677
      %p679 = scmp.ne.s32.totalorder %s671, %s673
      %p680 = scmp.eq.s32.totalorder %s149, 1
      %p681 = por %p679, %p680
      %p682 = scmp.ne.s32.totalorder %s673, %s674
      %p683 = scmp.eq.s32.totalorder %s149, 0
      %p684 = por %p682, %p683
      %p685 = scmp.ne.s32.totalorder %s673, %s674
      %p686 = scmp.eq.s32.totalorder %s150, 1
      %p687 = por %p685, %p686
      %p689 = scmp.ne.s32.totalorder %s674, %s688
      %p690 = scmp.eq.s32.totalorder %s150, 0
      %p691 = por %p689, %p690
      %s693 = sadd.s32 %s692, 1
      %p696 = scmp.eq.s32.totalorder %s144, 1
      %p697 = scmp.ne.s32.totalorder %s692, %s694
      %p698 = scmp.eq.s32.totalorder %s144, 0
      %p699 = por %p697, %p698
      %p700 = scmp.ne.s32.totalorder %s692, %s694
      %p701 = scmp.eq.s32.totalorder %s149, 1
      %p702 = por %p700, %p701
      %p703 = scmp.ne.s32.totalorder %s694, %s695
      %p704 = scmp.eq.s32.totalorder %s149, 0
      %p705 = por %p703, %p704
      %p706 = scmp.ne.s32.totalorder %s694, %s695
      %p707 = scmp.eq.s32.totalorder %s150, 1
      %p708 = por %p706, %p707
      %p710 = scmp.ne.s32.totalorder %s695, %s709
      %p711 = scmp.eq.s32.totalorder %s150, 0
      %p712 = por %p710, %p711
      %s714 = sadd.s32 %s713, 1
      %p717 = scmp.eq.s32.totalorder %s144, 1
      %p718 = scmp.ne.s32.totalorder %s713, %s715
      %p719 = scmp.eq.s32.totalorder %s144, 0
      %p720 = por %p718, %p719
      %p721 = scmp.ne.s32.totalorder %s713, %s715
      %p722 = scmp.eq.s32.totalorder %s149, 1
      %p723 = por %p721, %p722
      %p724 = scmp.ne.s32.totalorder %s715, %s716
      %p725 = scmp.eq.s32.totalorder %s149, 0
      %p726 = por %p724, %p725
      %p727 = scmp.ne.s32.totalorder %s715, %s716
      %p728 = scmp.eq.s32.totalorder %s150, 1
      %p729 = por %p727, %p728
      %p731 = scmp.ne.s32.totalorder %s716, %s730
      %p732 = scmp.eq.s32.totalorder %s150, 0
      %p733 = por %p731, %p732
      %s735 = sadd.s32 %s734, 1
      %p738 = scmp.eq.s32.totalorder %s144, 1
      %p739 = scmp.ne.s32.totalorder %s734, %s736
      %p740 = scmp.eq.s32.totalorder %s144, 0
      %p741 = por %p739, %p740
      %p742 = scmp.ne.s32.totalorder %s734, %s736
      %p743 = scmp.eq.s32.totalorder %s149, 1
      %p744 = por %p742, %p743
      %p745 = scmp.ne.s32.totalorder %s736, %s737
      %p746 = scmp.eq.s32.totalorder %s149, 0
      %p747 = por %p745, %p746
      %p748 = scmp.ne.s32.totalorder %s736, %s737
      %p749 = scmp.eq.s32.totalorder %s150, 1
      %p750 = por %p748, %p749
      %p752 = scmp.ne.s32.totalorder %s737, %s751
      %p753 = scmp.eq.s32.totalorder %s150, 0
      %p754 = por %p752, %p753
      %s756 = sadd.s32 %s755, 1
      %p759 = scmp.eq.s32.totalorder %s144, 1
      %p760 = scmp.ne.s32.totalorder %s755, %s757
      %p761 = scmp.eq.s32.totalorder %s144, 0
      %p762 = por %p760, %p761
      %p763 = scmp.ne.s32.totalorder %s755, %s757
      %p764 = scmp.eq.s32.totalorder %s149, 1
      %p765 = por %p763, %p764
      %p766 = scmp.ne.s32.totalorder %s757, %s758
      %p767 = scmp.eq.s32.totalorder %s149, 0
      %p768 = por %p766, %p767
      %p769 = scmp.ne.s32.totalorder %s757, %s758
      %p770 = scmp.eq.s32.totalorder %s150, 1
      %p771 = por %p769, %p770
      %p773 = scmp.ne.s32.totalorder %s758, %s772
      %p774 = scmp.eq.s32.totalorder %s150, 0
      %p775 = por %p773, %p774
      %s777 = sadd.s32 %s776, 1
      %p780 = scmp.eq.s32.totalorder %s144, 1
      %p781 = scmp.ne.s32.totalorder %s776, %s778
      %p782 = scmp.eq.s32.totalorder %s144, 0
      %p783 = por %p781, %p782
      %p784 = scmp.ne.s32.totalorder %s776, %s778
      %p785 = scmp.eq.s32.totalorder %s149, 1
      %p786 = por %p784, %p785
      %p787 = scmp.ne.s32.totalorder %s778, %s779
      %p788 = scmp.eq.s32.totalorder %s149, 0
      %p789 = por %p787, %p788
      %p790 = scmp.ne.s32.totalorder %s778, %s779
      %p791 = scmp.eq.s32.totalorder %s150, 1
      %p792 = por %p790, %p791
      %p794 = scmp.ne.s32.totalorder %s779, %s793
      %p795 = scmp.eq.s32.totalorder %s150, 0
      %p796 = por %p794, %p795
      %s798 = sadd.s32 %s797, 1
      %p801 = scmp.eq.s32.totalorder %s144, 1
      %p802 = scmp.ne.s32.totalorder %s797, %s799
      %p803 = scmp.eq.s32.totalorder %s144, 0
      %p804 = por %p802, %p803
      %p805 = scmp.ne.s32.totalorder %s797, %s799
      %p806 = scmp.eq.s32.totalorder %s149, 1
      %p807 = por %p805, %p806
      %p808 = scmp.ne.s32.totalorder %s799, %s800
      %p809 = scmp.eq.s32.totalorder %s149, 0
      %p810 = por %p808, %p809
      %p811 = scmp.ne.s32.totalorder %s799, %s800
      %p812 = scmp.eq.s32.totalorder %s150, 1
      %p813 = por %p811, %p812
      %p815 = scmp.ne.s32.totalorder %s800, %s814
      %p816 = scmp.eq.s32.totalorder %s150, 0
      %p817 = por %p815, %p816
      %s819 = sadd.s32 %s818, 1
      %p822 = scmp.eq.s32.totalorder %s144, 1
      %p823 = scmp.ne.s32.totalorder %s818, %s820
      %p824 = scmp.eq.s32.totalorder %s144, 0
      %p825 = por %p823, %p824
      %p826 = scmp.ne.s32.totalorder %s818, %s820
      %p827 = scmp.eq.s32.totalorder %s149, 1
      %p828 = por %p826, %p827
      %p829 = scmp.ne.s32.totalorder %s820, %s821
      %p830 = scmp.eq.s32.totalorder %s149, 0
      %p831 = por %p829, %p830
      %p832 = scmp.ne.s32.totalorder %s820, %s821
      %p833 = scmp.eq.s32.totalorder %s150, 1
      %p834 = por %p832, %p833
      %p836 = scmp.ne.s32.totalorder %s821, %s835
      %p837 = scmp.eq.s32.totalorder %s150, 0
      %p838 = por %p836, %p837
      %s840 = sadd.s32 %s839, 1
      %p843 = scmp.eq.s32.totalorder %s144, 1
      %p844 = scmp.ne.s32.totalorder %s839, %s841
      %p845 = scmp.eq.s32.totalorder %s144, 0
      %p846 = por %p844, %p845
      %p847 = scmp.ne.s32.totalorder %s839, %s841
      %p848 = scmp.eq.s32.totalorder %s149, 1
      %p849 = por %p847, %p848
      %p850 = scmp.ne.s32.totalorder %s841, %s842
      %p851 = scmp.eq.s32.totalorder %s149, 0
      %p852 = por %p850, %p851
      %p853 = scmp.ne.s32.totalorder %s841, %s842
      %p854 = scmp.eq.s32.totalorder %s150, 1
      %p855 = por %p853, %p854
      %p857 = scmp.ne.s32.totalorder %s842, %s856
      %p858 = scmp.eq.s32.totalorder %s150, 0
      %p859 = por %p857, %p858
      %s861 = sadd.s32 %s860, 1
      %p864 = scmp.eq.s32.totalorder %s144, 1
      %p865 = scmp.ne.s32.totalorder %s860, %s862
      %p866 = scmp.eq.s32.totalorder %s144, 0
      %p867 = por %p865, %p866
      %p868 = scmp.ne.s32.totalorder %s860, %s862
      %p869 = scmp.eq.s32.totalorder %s149, 1
      %p870 = por %p868, %p869
      %p871 = scmp.ne.s32.totalorder %s862, %s863
      %p872 = scmp.eq.s32.totalorder %s149, 0
      %p873 = por %p871, %p872
      %p874 = scmp.ne.s32.totalorder %s862, %s863
      %p875 = scmp.eq.s32.totalorder %s150, 1
      %p876 = por %p874, %p875
      %p878 = scmp.ne.s32.totalorder %s863, %s877
      %p879 = scmp.eq.s32.totalorder %s150, 0
      %p880 = por %p878, %p879
      %s882 = sadd.s32 %s881, 1
      %p885 = scmp.eq.s32.totalorder %s144, 1
      %p886 = scmp.ne.s32.totalorder %s881, %s883
      %p887 = scmp.eq.s32.totalorder %s144, 0
      %p888 = por %p886, %p887
      %p889 = scmp.ne.s32.totalorder %s881, %s883
      %p890 = scmp.eq.s32.totalorder %s149, 1
      %p891 = por %p889, %p890
      %p892 = scmp.ne.s32.totalorder %s883, %s884
      %p893 = scmp.eq.s32.totalorder %s149, 0
      %p894 = por %p892, %p893
      %p895 = scmp.ne.s32.totalorder %s883, %s884
      %p896 = scmp.eq.s32.totalorder %s150, 1
      %p897 = por %p895, %p896
      %p899 = scmp.ne.s32.totalorder %s884, %s898
      %p900 = scmp.eq.s32.totalorder %s150, 0
      %p901 = por %p899, %p900
      %s903 = sadd.s32 %s902, 1
      %p906 = scmp.eq.s32.totalorder %s144, 1
      %p907 = scmp.ne.s32.totalorder %s902, %s904
      %p908 = scmp.eq.s32.totalorder %s144, 0
      %p909 = por %p907, %p908
      %p910 = scmp.ne.s32.totalorder %s902, %s904
      %p911 = scmp.eq.s32.totalorder %s149, 1
      %p912 = por %p910, %p911
      %p913 = scmp.ne.s32.totalorder %s904, %s905
      %p914 = scmp.eq.s32.totalorder %s149, 0
      %p915 = por %p913, %p914
      %p916 = scmp.ne.s32.totalorder %s904, %s905
      %p917 = scmp.eq.s32.totalorder %s150, 1
      %p918 = por %p916, %p917
      %p920 = scmp.ne.s32.totalorder %s905, %s919
      %p921 = scmp.eq.s32.totalorder %s150, 0
      %p922 = por %p920, %p921
      %s924 = sadd.s32 %s923, 1
      %p927 = scmp.eq.s32.totalorder %s144, 1
      %p928 = scmp.ne.s32.totalorder %s923, %s925
      %p929 = scmp.eq.s32.totalorder %s144, 0
      %p930 = por %p928, %p929
      %p931 = scmp.ne.s32.totalorder %s923, %s925
      %p932 = scmp.eq.s32.totalorder %s149, 1
      %p933 = por %p931, %p932
      %p934 = scmp.ne.s32.totalorder %s925, %s926
      %p935 = scmp.eq.s32.totalorder %s149, 0
      %p936 = por %p934, %p935
      %p937 = scmp.ne.s32.totalorder %s925, %s926
      %p938 = scmp.eq.s32.totalorder %s150, 1
      %p939 = por %p937, %p938
      %p941 = scmp.ne.s32.totalorder %s926, %s940
      %p942 = scmp.eq.s32.totalorder %s150, 0
      %p943 = por %p941, %p942
      %s945 = sadd.s32 %s944, 1
      %p948 = scmp.eq.s32.totalorder %s144, 1
      %p949 = scmp.ne.s32.totalorder %s944, %s946
      %p950 = scmp.eq.s32.totalorder %s144, 0
      %p951 = por %p949, %p950
      %p952 = scmp.ne.s32.totalorder %s944, %s946
      %p953 = scmp.eq.s32.totalorder %s149, 1
      %p954 = por %p952, %p953
      %p955 = scmp.ne.s32.totalorder %s946, %s947
      %p956 = scmp.eq.s32.totalorder %s149, 0
      %p957 = por %p955, %p956
      %p958 = scmp.ne.s32.totalorder %s946, %s947
      %p959 = scmp.eq.s32.totalorder %s150, 1
      %p960 = por %p958, %p959
      %p962 = scmp.ne.s32.totalorder %s947, %s961
      %p963 = scmp.eq.s32.totalorder %s150, 0
      %p964 = por %p962, %p963
      %s966 = sadd.s32 %s965, 1
      %p969 = scmp.eq.s32.totalorder %s144, 1
      %p970 = scmp.ne.s32.totalorder %s965, %s967
      %p971 = scmp.eq.s32.totalorder %s144, 0
      %p972 = por %p970, %p971
      %p973 = scmp.ne.s32.totalorder %s965, %s967
      %p974 = scmp.eq.s32.totalorder %s149, 1
      %p975 = por %p973, %p974
      %p976 = scmp.ne.s32.totalorder %s967, %s968
      %p977 = scmp.eq.s32.totalorder %s149, 0
      %p978 = por %p976, %p977
      %p979 = scmp.ne.s32.totalorder %s967, %s968
      %p980 = scmp.eq.s32.totalorder %s150, 1
      %p981 = por %p979, %p980
      %p983 = scmp.ne.s32.totalorder %s968, %s982
      %p984 = scmp.eq.s32.totalorder %s150, 0
      %p985 = por %p983, %p984
      %s987 = sadd.s32 %s986, 1
      %p990 = scmp.eq.s32.totalorder %s144, 1
      %p991 = scmp.ne.s32.totalorder %s986, %s988
      %p992 = scmp.eq.s32.totalorder %s144, 0
      %p993 = por %p991, %p992
      %p994 = scmp.ne.s32.totalorder %s986, %s988
      %p995 = scmp.eq.s32.totalorder %s149, 1
      %p996 = por %p994, %p995
      %p997 = scmp.ne.s32.totalorder %s988, %s989
      %p998 = scmp.eq.s32.totalorder %s149, 0
      %p999 = por %p997, %p998
      %p1000 = scmp.ne.s32.totalorder %s988, %s989
      %p1001 = scmp.eq.s32.totalorder %s150, 1
      %p1002 = por %p1000, %p1001
      %p1004 = scmp.ne.s32.totalorder %s989, %s1003
      %p1005 = scmp.eq.s32.totalorder %s150, 0
      %p1006 = por %p1004, %p1005
      %s1008 = sadd.s32 %s1007, 1
      %p1011 = scmp.eq.s32.totalorder %s144, 1
      %p1012 = scmp.ne.s32.totalorder %s1007, %s1009
      %p1013 = scmp.eq.s32.totalorder %s144, 0
      %p1014 = por %p1012, %p1013
      %p1015 = scmp.ne.s32.totalorder %s1007, %s1009
      %p1016 = scmp.eq.s32.totalorder %s149, 1
      %p1017 = por %p1015, %p1016
      %p1018 = scmp.ne.s32.totalorder %s1009, %s1010
      %p1019 = scmp.eq.s32.totalorder %s149, 0
      %p1020 = por %p1018, %p1019
      %p1021 = scmp.ne.s32.totalorder %s1009, %s1010
      %p1022 = scmp.eq.s32.totalorder %s150, 1
      %p1023 = por %p1021, %p1022
      %p1025 = scmp.ne.s32.totalorder %s1010, %s1024
      %p1026 = scmp.eq.s32.totalorder %s150, 0
      %p1027 = por %p1025, %p1026
      %s1029 = sadd.s32 %s1028, 1
      %p1032 = scmp.eq.s32.totalorder %s144, 1
      %p1033 = scmp.ne.s32.totalorder %s1028, %s1030
      %p1034 = scmp.eq.s32.totalorder %s144, 0
      %p1035 = por %p1033, %p1034
      %p1036 = scmp.ne.s32.totalorder %s1028, %s1030
      %p1037 = scmp.eq.s32.totalorder %s149, 1
      %p1038 = por %p1036, %p1037
      %p1039 = scmp.ne.s32.totalorder %s1030, %s1031
      %p1040 = scmp.eq.s32.totalorder %s149, 0
      %p1041 = por %p1039, %p1040
      %p1042 = scmp.ne.s32.totalorder %s1030, %s1031
      %p1043 = scmp.eq.s32.totalorder %s150, 1
      %p1044 = por %p1042, %p1043
      %p1046 = scmp.ne.s32.totalorder %s1031, %s1045
      %p1047 = scmp.eq.s32.totalorder %s150, 0
      %p1048 = por %p1046, %p1047
      %s1050 = sadd.s32 %s1049, 1
      %p1053 = scmp.eq.s32.totalorder %s144, 1
      %p1054 = scmp.ne.s32.totalorder %s1049, %s1051
      %p1055 = scmp.eq.s32.totalorder %s144, 0
      %p1056 = por %p1054, %p1055
      %p1057 = scmp.ne.s32.totalorder %s1049, %s1051
      %p1058 = scmp.eq.s32.totalorder %s149, 1
      %p1059 = por %p1057, %p1058
      %p1060 = scmp.ne.s32.totalorder %s1051, %s1052
      %p1061 = scmp.eq.s32.totalorder %s149, 0
      %p1062 = por %p1060, %p1061
      %p1063 = scmp.ne.s32.totalorder %s1051, %s1052
      %p1064 = scmp.eq.s32.totalorder %s150, 1
      %p1065 = por %p1063, %p1064
      %p1067 = scmp.ne.s32.totalorder %s1052, %s1066
      %p1068 = scmp.eq.s32.totalorder %s150, 0
      %p1069 = por %p1067, %p1068
      %s1071 = sadd.s32 %s1070, 1
      %p1074 = scmp.eq.s32.totalorder %s144, 1
      %p1075 = scmp.ne.s32.totalorder %s1070, %s1072
      %p1076 = scmp.eq.s32.totalorder %s144, 0
      %p1077 = por %p1075, %p1076
      %p1078 = scmp.ne.s32.totalorder %s1070, %s1072
      %p1079 = scmp.eq.s32.totalorder %s149, 1
      %p1080 = por %p1078, %p1079
      %p1081 = scmp.ne.s32.totalorder %s1072, %s1073
      %p1082 = scmp.eq.s32.totalorder %s149, 0
      %p1083 = por %p1081, %p1082
      %p1084 = scmp.ne.s32.totalorder %s1072, %s1073
      %p1085 = scmp.eq.s32.totalorder %s150, 1
      %p1086 = por %p1084, %p1085
      %p1088 = scmp.ne.s32.totalorder %s1073, %s1087
      %p1089 = scmp.eq.s32.totalorder %s150, 0
      %p1090 = por %p1088, %p1089
      %s1092 = sadd.s32 %s1091, 1
      %p1095 = scmp.eq.s32.totalorder %s144, 1
      %p1096 = scmp.ne.s32.totalorder %s1091, %s1093
      %p1097 = scmp.eq.s32.totalorder %s144, 0
      %p1098 = por %p1096, %p1097
      %p1099 = scmp.ne.s32.totalorder %s1091, %s1093
      %p1100 = scmp.eq.s32.totalorder %s149, 1
      %p1101 = por %p1099, %p1100
      %p1102 = scmp.ne.s32.totalorder %s1093, %s1094
      %p1103 = scmp.eq.s32.totalorder %s149, 0
      %p1104 = por %p1102, %p1103
      %p1105 = scmp.ne.s32.totalorder %s1093, %s1094
      %p1106 = scmp.eq.s32.totalorder %s150, 1
      %p1107 = por %p1105, %p1106
      %p1109 = scmp.ne.s32.totalorder %s1094, %s1108
      %p1110 = scmp.eq.s32.totalorder %s150, 0
      %p1111 = por %p1109, %p1110
      %s1113 = sadd.s32 %s1112, 1
      %p1116 = scmp.eq.s32.totalorder %s144, 1
      %p1117 = scmp.ne.s32.totalorder %s1112, %s1114
      %p1118 = scmp.eq.s32.totalorder %s144, 0
      %p1119 = por %p1117, %p1118
      %p1120 = scmp.ne.s32.totalorder %s1112, %s1114
      %p1121 = scmp.eq.s32.totalorder %s149, 1
      %p1122 = por %p1120, %p1121
      %p1123 = scmp.ne.s32.totalorder %s1114, %s1115
      %p1124 = scmp.eq.s32.totalorder %s149, 0
      %p1125 = por %p1123, %p1124
      %p1126 = scmp.ne.s32.totalorder %s1114, %s1115
      %p1127 = scmp.eq.s32.totalorder %s150, 1
      %p1128 = por %p1126, %p1127
      %p1130 = scmp.ne.s32.totalorder %s1115, %s1129
      %p1131 = scmp.eq.s32.totalorder %s150, 0
      %p1132 = por %p1130, %p1131
      %s1134 = sadd.s32 %s1133, 1
      %p1137 = scmp.eq.s32.totalorder %s144, 1
      %p1138 = scmp.ne.s32.totalorder %s1133, %s1135
      %p1139 = scmp.eq.s32.totalorder %s144, 0
      %p1140 = por %p1138, %p1139
      %p1141 = scmp.ne.s32.totalorder %s1133, %s1135
      %p1142 = scmp.eq.s32.totalorder %s149, 1
      %p1143 = por %p1141, %p1142
      %p1144 = scmp.ne.s32.totalorder %s1135, %s1136
      %p1145 = scmp.eq.s32.totalorder %s149, 0
      %p1146 = por %p1144, %p1145
      %p1147 = scmp.ne.s32.totalorder %s1135, %s1136
      %p1148 = scmp.eq.s32.totalorder %s150, 1
      %p1149 = por %p1147, %p1148
      %p1151 = scmp.ne.s32.totalorder %s1136, %s1150
      %p1152 = scmp.eq.s32.totalorder %s150, 0
      %p1153 = por %p1151, %p1152
      %s1155 = sadd.s32 %s1154, 1
      %p1158 = scmp.eq.s32.totalorder %s144, 1
      %p1159 = scmp.ne.s32.totalorder %s1154, %s1156
      %p1160 = scmp.eq.s32.totalorder %s144, 0
      %p1161 = por %p1159, %p1160
      %p1162 = scmp.ne.s32.totalorder %s1154, %s1156
      %p1163 = scmp.eq.s32.totalorder %s149, 1
      %p1164 = por %p1162, %p1163
      %p1165 = scmp.ne.s32.totalorder %s1156, %s1157
      %p1166 = scmp.eq.s32.totalorder %s149, 0
      %p1167 = por %p1165, %p1166
      %p1168 = scmp.ne.s32.totalorder %s1156, %s1157
      %p1169 = scmp.eq.s32.totalorder %s150, 1
      %p1170 = por %p1168, %p1169
      %p1172 = scmp.ne.s32.totalorder %s1157, %s1171
      %p1173 = scmp.eq.s32.totalorder %s150, 0
      %p1174 = por %p1172, %p1173
      %s1176 = sadd.s32 %s1175, 1
      %p1179 = scmp.eq.s32.totalorder %s144, 1
      %p1180 = scmp.ne.s32.totalorder %s1175, %s1177
      %p1181 = scmp.eq.s32.totalorder %s144, 0
      %p1182 = por %p1180, %p1181
      %p1183 = scmp.ne.s32.totalorder %s1175, %s1177
      %p1184 = scmp.eq.s32.totalorder %s149, 1
      %p1185 = por %p1183, %p1184
      %p1186 = scmp.ne.s32.totalorder %s1177, %s1178
      %p1187 = scmp.eq.s32.totalorder %s149, 0
      %p1188 = por %p1186, %p1187
      %p1189 = scmp.ne.s32.totalorder %s1177, %s1178
      %p1190 = scmp.eq.s32.totalorder %s150, 1
      %p1191 = por %p1189, %p1190
      %p1193 = scmp.ne.s32.totalorder %s1178, %s1192
      %p1194 = scmp.eq.s32.totalorder %s150, 0
      %p1195 = por %p1193, %p1194
      %s1197 = sadd.s32 %s1196, 1
      %p1200 = scmp.eq.s32.totalorder %s144, 1
      %p1201 = scmp.ne.s32.totalorder %s1196, %s1198
      %p1202 = scmp.eq.s32.totalorder %s144, 0
      %p1203 = por %p1201, %p1202
      %p1204 = scmp.ne.s32.totalorder %s1196, %s1198
      %p1205 = scmp.eq.s32.totalorder %s149, 1
      %p1206 = por %p1204, %p1205
      %p1207 = scmp.ne.s32.totalorder %s1198, %s1199
      %p1208 = scmp.eq.s32.totalorder %s149, 0
      %p1209 = por %p1207, %p1208
      %p1210 = scmp.ne.s32.totalorder %s1198, %s1199
      %p1211 = scmp.eq.s32.totalorder %s150, 1
      %p1212 = por %p1210, %p1211
      %p1214 = scmp.ne.s32.totalorder %s1199, %s1213
      %p1215 = scmp.eq.s32.totalorder %s150, 0
      %p1216 = por %p1214, %p1215
      %s1218 = sadd.s32 %s1217, 1
      %p1221 = scmp.eq.s32.totalorder %s144, 1
      %p1222 = scmp.ne.s32.totalorder %s1217, %s1219
      %p1223 = scmp.eq.s32.totalorder %s144, 0
      %p1224 = por %p1222, %p1223
      %p1225 = scmp.ne.s32.totalorder %s1217, %s1219
      %p1226 = scmp.eq.s32.totalorder %s149, 1
      %p1227 = por %p1225, %p1226
      %p1228 = scmp.ne.s32.totalorder %s1219, %s1220
      %p1229 = scmp.eq.s32.totalorder %s149, 0
      %p1230 = por %p1228, %p1229
      %p1231 = scmp.ne.s32.totalorder %s1219, %s1220
      %p1232 = scmp.eq.s32.totalorder %s150, 1
      %p1233 = por %p1231, %p1232
      %p1235 = scmp.ne.s32.totalorder %s1220, %s1234
      %p1236 = scmp.eq.s32.totalorder %s150, 0
      %p1237 = por %p1235, %p1236
      %s1239 = sadd.s32 %s1238, 1
      %p1242 = scmp.eq.s32.totalorder %s144, 1
      %p1243 = scmp.ne.s32.totalorder %s1238, %s1240
      %p1244 = scmp.eq.s32.totalorder %s144, 0
      %p1245 = por %p1243, %p1244
      %p1246 = scmp.ne.s32.totalorder %s1238, %s1240
      %p1247 = scmp.eq.s32.totalorder %s149, 1
      %p1248 = por %p1246, %p1247
      %p1249 = scmp.ne.s32.totalorder %s1240, %s1241
      %p1250 = scmp.eq.s32.totalorder %s149, 0
      %p1251 = por %p1249, %p1250
      %p1252 = scmp.ne.s32.totalorder %s1240, %s1241
      %p1253 = scmp.eq.s32.totalorder %s150, 1
      %p1254 = por %p1252, %p1253
      %p1256 = scmp.ne.s32.totalorder %s1241, %s1255
      %p1257 = scmp.eq.s32.totalorder %s150, 0
      %p1258 = por %p1256, %p1257
      %s1260 = sadd.s32 %s1259, 1
      %p1263 = scmp.eq.s32.totalorder %s144, 1
      %p1264 = scmp.ne.s32.totalorder %s1259, %s1261
      %p1265 = scmp.eq.s32.totalorder %s144, 0
      %p1266 = por %p1264, %p1265
      %p1267 = scmp.ne.s32.totalorder %s1259, %s1261
      %p1268 = scmp.eq.s32.totalorder %s149, 1
      %p1269 = por %p1267, %p1268
      %p1270 = scmp.ne.s32.totalorder %s1261, %s1262
      %p1271 = scmp.eq.s32.totalorder %s149, 0
      %p1272 = por %p1270, %p1271
      %p1273 = scmp.ne.s32.totalorder %s1261, %s1262
      %p1274 = scmp.eq.s32.totalorder %s150, 1
      %p1275 = por %p1273, %p1274
      %p1277 = scmp.ne.s32.totalorder %s1262, %s1276
      %p1278 = scmp.eq.s32.totalorder %s150, 0
      %p1279 = por %p1277, %p1278
      %s1281 = sadd.s32 %s1280, 1
      %p1284 = scmp.eq.s32.totalorder %s144, 1
      %p1285 = scmp.ne.s32.totalorder %s1280, %s1282
      %p1286 = scmp.eq.s32.totalorder %s144, 0
      %p1287 = por %p1285, %p1286
      %p1288 = scmp.ne.s32.totalorder %s1280, %s1282
      %p1289 = scmp.eq.s32.totalorder %s149, 1
      %p1290 = por %p1288, %p1289
      %p1291 = scmp.ne.s32.totalorder %s1282, %s1283
      %p1292 = scmp.eq.s32.totalorder %s149, 0
      %p1293 = por %p1291, %p1292
      %p1294 = scmp.ne.s32.totalorder %s1282, %s1283
      %p1295 = scmp.eq.s32.totalorder %s150, 1
      %p1296 = por %p1294, %p1295
      %p1298 = scmp.ne.s32.totalorder %s1283, %s1297
      %p1299 = scmp.eq.s32.totalorder %s150, 0
      %p1300 = por %p1298, %p1299
      %s1302 = sadd.s32 %s1301, 1
      %p1305 = scmp.eq.s32.totalorder %s144, 1
      %p1306 = scmp.ne.s32.totalorder %s1301, %s1303
      %p1307 = scmp.eq.s32.totalorder %s144, 0
      %p1308 = por %p1306, %p1307
      %p1309 = scmp.ne.s32.totalorder %s1301, %s1303
      %p1310 = scmp.eq.s32.totalorder %s149, 1
      %p1311 = por %p1309, %p1310
      %p1312 = scmp.ne.s32.totalorder %s1303, %s1304
      %p1313 = scmp.eq.s32.totalorder %s149, 0
      %p1314 = por %p1312, %p1313
      %p1315 = scmp.ne.s32.totalorder %s1303, %s1304
      %p1316 = scmp.eq.s32.totalorder %s150, 1
      %p1317 = por %p1315, %p1316
      %p1319 = scmp.ne.s32.totalorder %s1304, %s1318
      %p1320 = scmp.eq.s32.totalorder %s150, 0
      %p1321 = por %p1319, %p1320
      %s1323 = sadd.s32 %s1322, 1
      %p1326 = scmp.eq.s32.totalorder %s144, 1
      %p1327 = scmp.ne.s32.totalorder %s1322, %s1324
      %p1328 = scmp.eq.s32.totalorder %s144, 0
      %p1329 = por %p1327, %p1328
      %p1330 = scmp.ne.s32.totalorder %s1322, %s1324
      %p1331 = scmp.eq.s32.totalorder %s149, 1
      %p1332 = por %p1330, %p1331
      %p1333 = scmp.ne.s32.totalorder %s1324, %s1325
      %p1334 = scmp.eq.s32.totalorder %s149, 0
      %p1335 = por %p1333, %p1334
      %p1336 = scmp.ne.s32.totalorder %s1324, %s1325
      %p1337 = scmp.eq.s32.totalorder %s150, 1
      %p1338 = por %p1336, %p1337
      %p1340 = scmp.ne.s32.totalorder %s1325, %s1339
      %p1341 = scmp.eq.s32.totalorder %s150, 0
      %p1342 = por %p1340, %p1341
      %s1344 = sadd.s32 %s1343, 1
      %p1347 = scmp.eq.s32.totalorder %s144, 1
      %p1348 = scmp.ne.s32.totalorder %s1343, %s1345
      %p1349 = scmp.eq.s32.totalorder %s144, 0
      %p1350 = por %p1348, %p1349
      %p1351 = scmp.ne.s32.totalorder %s1343, %s1345
      %p1352 = scmp.eq.s32.totalorder %s149, 1
      %p1353 = por %p1351, %p1352
      %p1354 = scmp.ne.s32.totalorder %s1345, %s1346
      %p1355 = scmp.eq.s32.totalorder %s149, 0
      %p1356 = por %p1354, %p1355
      %p1357 = scmp.ne.s32.totalorder %s1345, %s1346
      %p1358 = scmp.eq.s32.totalorder %s150, 1
      %p1359 = por %p1357, %p1358
      %p1361 = scmp.ne.s32.totalorder %s1346, %s1360
      %p1362 = scmp.eq.s32.totalorder %s150, 0
      %p1363 = por %p1361, %p1362
      %s1364 = ssub.s32 %s144, %s151
      %p1365 = scmp.eq.s32.totalorder %s1364, 0
      %s1367 = sadd.s32 %s1366, 1
      %s1368 = scalar_select %p1365, %s1366, %s1367
      %p1371 = pneg %p1365
      %p1372 = scmp.eq.s32.totalorder %s144, 1
      %p1373 = por %p1371, %p1372
      %p1374 = scmp.ne.s32.totalorder %s1366, %s1369
      %p1375 = scmp.eq.s32.totalorder %s144, 0
      %p1376 = por %p1374, %p1375
      %p1377 = scmp.ne.s32.totalorder %s1366, %s1369
      %p1378 = scmp.eq.s32.totalorder %s149, 1
      %p1379 = por %p1377, %p1378
      %p1380 = scmp.ne.s32.totalorder %s1369, %s1370
      %p1381 = scmp.eq.s32.totalorder %s149, 0
      %p1382 = por %p1380, %p1381
      %p1383 = scmp.ne.s32.totalorder %s1369, %s1370
      %p1384 = scmp.eq.s32.totalorder %s150, 1
      %p1385 = por %p1383, %p1384
      %p1387 = scmp.ne.s32.totalorder %s1370, %s1386
      %p1388 = scmp.eq.s32.totalorder %s150, 0
      %p1389 = por %p1387, %p1388
      %s1390 = ssub.s32 %s144, %s151
      %p1391 = scmp.eq.s32.totalorder %s1390, 0
      %s1393 = sadd.s32 %s1392, 1
      %s1394 = scalar_select %p1391, %s1392, %s1393
      %p1397 = pneg %p1391
      %p1398 = scmp.eq.s32.totalorder %s144, 1
      %p1399 = por %p1397, %p1398
      %p1400 = scmp.ne.s32.totalorder %s1392, %s1395
      %p1401 = scmp.eq.s32.totalorder %s144, 0
      %p1402 = por %p1400, %p1401
      %p1403 = scmp.ne.s32.totalorder %s1392, %s1395
      %p1404 = scmp.eq.s32.totalorder %s149, 1
      %p1405 = por %p1403, %p1404
      %p1406 = scmp.ne.s32.totalorder %s1395, %s1396
      %p1407 = scmp.eq.s32.totalorder %s149, 0
      %p1408 = por %p1406, %p1407
      %p1409 = scmp.ne.s32.totalorder %s1395, %s1396
      %p1410 = scmp.eq.s32.totalorder %s150, 1
      %p1411 = por %p1409, %p1410
      %p1413 = scmp.ne.s32.totalorder %s1396, %s1412
      %p1414 = scmp.eq.s32.totalorder %s150, 0
      %p1415 = por %p1413, %p1414
      %p1416 = scmp.le.s32.totalorder 1, %s144
      %p1417 = scmp.lt.s32.totalorder %s144, 3
      %p1418 = pnand %p1416, %p1417
      %p1419 = pneg %p1418
      // Predicated region
      $region9: #{_lambda_.1} parent=5 // pred_check
        _
      $region10: #{_lambda_.1} parent=5 // pred_check_branch
        %1421 = sbr.rel (%p1418) target = $region12
      $region11: #{_lambda_.1} parent=5 // pred_region
        %s1422 = ssub.s32 %s144, 1
        // Predicated region
        $region13: #{_lambda_.1} parent=11 // pred_check
          %p1423 = pneg %p243
        $region14: #{_lambda_.1} parent=11 // pred_check_branch
          %1425 = sbr.rel (%p1423) target = $region16
        $region15: #{_lambda_.1} parent=11 // pred_region
          %1427 = vsyncadd [#allocation4], 0
          %s1428 = sshll.u32 %s7, 4
          %s1429 = int_to_ptr.hbm [resolvable:$true] %s1428
          %s1430 = sshll.u32 [#allocation3], 4
          %s1431 = int_to_ptr.vmem [resolvable:$true] %s1430
          %1436 = dma.hbm_to_vmem [thread:$0]  %s1429, 512, %s1431, [#allocation4], 256, 256, 16
        $region16: #{_lambda_.1} parent=11 // pred_fallthru
          _
        // Predicated region
        $region17: #{_lambda_.1} parent=11 // pred_check
          %p1437 = pneg %p264
        $region18: #{_lambda_.1} parent=11 // pred_check_branch
          %1439 = sbr.rel (%p1437) target = $region20
        $region19: #{_lambda_.1} parent=11 // pred_region
          _
        $region20: #{_lambda_.1} parent=11 // pred_fallthru
          _
        // Predicated region
        $region21: #{_lambda_.1} parent=11 // pred_check
          %p1440 = pneg %p285
        $region22: #{_lambda_.1} parent=11 // pred_check_branch
          %1442 = sbr.rel (%p1440) target = $region24
        $region23: #{_lambda_.1} parent=11 // pred_region
          %1444 = vsyncadd [#allocation6], 0
          %s1445 = sshll.u32 %s11, 4
          %s1446 = int_to_ptr.hbm [resolvable:$true] %s1445
          %s1447 = sshll.u32 [#allocation5], 4
          %s1448 = int_to_ptr.vmem [resolvable:$true] %s1447
          %1453 = dma.hbm_to_vmem [thread:$0]  %s1446, 512, %s1448, [#allocation6], 256, 256, 16
        $region24: #{_lambda_.1} parent=11 // pred_fallthru
          _
        // Predicated region
        $region25: #{_lambda_.1} parent=11 // pred_check
          %p1454 = pneg %p306
        $region26: #{_lambda_.1} parent=11 // pred_check_branch
          %1456 = sbr.rel (%p1454) target = $region28
        $region27: #{_lambda_.1} parent=11 // pred_region
          %1458 = vsyncadd [#allocation6], 0
          %s1459 = sshll.u32 %s13, 4
          %s1460 = int_to_ptr.hbm [resolvable:$true] %s1459
          %s1461 = sshll.u32 [#allocation7], 4
          %s1462 = int_to_ptr.vmem [resolvable:$true] %s1461
          %1467 = dma.hbm_to_vmem [thread:$0]  %s1460, 4096, %s1462, [#allocation6], 128, 128, 8
        $region28: #{_lambda_.1} parent=11 // pred_fallthru
          _
        // Predicated region
        $region29: #{_lambda_.1} parent=11 // pred_check
          %p1468 = pneg %p327
        $region30: #{_lambda_.1} parent=11 // pred_check_branch
          %1470 = sbr.rel (%p1468) target = $region32
        $region31: #{_lambda_.1} parent=11 // pred_region
          %1472 = vsyncadd [#allocation9], 0
          %s1473 = sshll.u32 %s15, 4
          %s1474 = int_to_ptr.hbm [resolvable:$true] %s1473
          %s1475 = sshll.u32 [#allocation8], 4
          %s1476 = int_to_ptr.vmem [resolvable:$true] %s1475
          %1481 = dma.hbm_to_vmem [thread:$0]  %s1474, 256, %s1476, [#allocation9], 128, 128, 8
        $region32: #{_lambda_.1} parent=11 // pred_fallthru
          _
        // Predicated region
        $region33: #{_lambda_.1} parent=11 // pred_check
          %p1482 = pneg %p348
        $region34: #{_lambda_.1} parent=11 // pred_check_branch
          %1484 = sbr.rel (%p1482) target = $region36
        $region35: #{_lambda_.1} parent=11 // pred_region
          %1486 = vsyncadd [#allocation9], 0
          %s1487 = sshll.u32 %s17, 4
          %s1488 = int_to_ptr.hbm [resolvable:$true] %s1487
          %s1489 = sshll.u32 [#allocation10], 4
          %s1490 = int_to_ptr.vmem [resolvable:$true] %s1489
          %1495 = dma.hbm_to_vmem [thread:$0]  %s1488, 256, %s1490, [#allocation9], 128, 128, 8
        $region36: #{_lambda_.1} parent=11 // pred_fallthru
          _
        // Predicated region
        $region37: #{_lambda_.1} parent=11 // pred_check
          %p1496 = pneg %p369
        $region38: #{_lambda_.1} parent=11 // pred_check_branch
          %1498 = sbr.rel (%p1496) target = $region40
        $region39: #{_lambda_.1} parent=11 // pred_region
          %1500 = vsyncadd [#allocation12], 0
          %s1501 = sshll.u32 %s19, 4
          %s1502 = int_to_ptr.hbm [resolvable:$true] %s1501
          %s1503 = sshll.u32 [#allocation11], 4
          %s1504 = int_to_ptr.vmem [resolvable:$true] %s1503
          %1509 = dma.hbm_to_vmem [thread:$0]  %s1502, 1024, %s1504, [#allocation12], 128, 128, 8
        $region40: #{_lambda_.1} parent=11 // pred_fallthru
          _
        // Predicated region
        $region41: #{_lambda_.1} parent=11 // pred_check
          %p1510 = pneg %p390
        $region42: #{_lambda_.1} parent=11 // pred_check_branch
          %1512 = sbr.rel (%p1510) target = $region44
        $region43: #{_lambda_.1} parent=11 // pred_region
          %1514 = vsyncadd [#allocation12], 0
          %s1515 = sshll.u32 %s21, 4
          %s1516 = int_to_ptr.hbm [resolvable:$true] %s1515
          %s1517 = sshll.u32 [#allocation13], 4
          %s1518 = int_to_ptr.vmem [resolvable:$true] %s1517
          %1523 = dma.hbm_to_vmem [thread:$0]  %s1516, 1024, %s1518, [#allocation12], 128, 128, 8
        $region44: #{_lambda_.1} parent=11 // pred_fallthru
          _
        // Predicated region
        $region45: #{_lambda_.1} parent=11 // pred_check
          %p1524 = pneg %p411
        $region46: #{_lambda_.1} parent=11 // pred_check_branch
          %1526 = sbr.rel (%p1524) target = $region48
        $region47: #{_lambda_.1} parent=11 // pred_region
          %1528 = vsyncadd [#allocation15], 0
          %s1529 = sshll.u32 %s23, 4
          %s1530 = int_to_ptr.hbm [resolvable:$true] %s1529
          %s1531 = sshll.u32 [#allocation14], 4
          %s1532 = int_to_ptr.vmem [resolvable:$true] %s1531
          %1537 = dma.hbm_to_vmem [thread:$0]  %s1530, 1024, %s1532, [#allocation15], 128, 128, 8
        $region48: #{_lambda_.1} parent=11 // pred_fallthru
          _
        // Predicated region
        $region49: #{_lambda_.1} parent=11 // pred_check
          %p1538 = pneg %p432
        $region50: #{_lambda_.1} parent=11 // pred_check_branch
          %1540 = sbr.rel (%p1538) target = $region52
        $region51: #{_lambda_.1} parent=11 // pred_region
          _
        $region52: #{_lambda_.1} parent=11 // pred_fallthru
          _
        // Predicated region
        $region53: #{_lambda_.1} parent=11 // pred_check
          %p1541 = pneg %p453
        $region54: #{_lambda_.1} parent=11 // pred_check_branch
          %1543 = sbr.rel (%p1541) target = $region56
        $region55: #{_lambda_.1} parent=11 // pred_region
          _
        $region56: #{_lambda_.1} parent=11 // pred_fallthru
          _
        // Predicated region
        $region57: #{_lambda_.1} parent=11 // pred_check
          %p1544 = pneg %p474
        $region58: #{_lambda_.1} parent=11 // pred_check_branch
          %1546 = sbr.rel (%p1544) target = $region60
        $region59: #{_lambda_.1} parent=11 // pred_region
          _
        $region60: #{_lambda_.1} parent=11 // pred_fallthru
          _
        // Predicated region
        $region61: #{_lambda_.1} parent=11 // pred_check
          %p1547 = pneg %p495
        $region62: #{_lambda_.1} parent=11 // pred_check_branch
          %1549 = sbr.rel (%p1547) target = $region64
        $region63: #{_lambda_.1} parent=11 // pred_region
          %1551 = vsyncadd [#allocation15], 0
          %s1552 = sshll.u32 %s31, 4
          %s1553 = int_to_ptr.hbm [resolvable:$true] %s1552
          %s1554 = sshll.u32 [#allocation16], 4
          %s1555 = int_to_ptr.vmem [resolvable:$true] %s1554
          %1560 = dma.hbm_to_vmem [thread:$0]  %s1553, 512, %s1555, [#allocation15], 128, 128, 8
        $region64: #{_lambda_.1} parent=11 // pred_fallthru
          _
        // Predicated region
        $region65: #{_lambda_.1} parent=11 // pred_check
          %p1561 = pneg %p516
        $region66: #{_lambda_.1} parent=11 // pred_check_branch
          %1563 = sbr.rel (%p1561) target = $region68
        $region67: #{_lambda_.1} parent=11 // pred_region
          _
        $region68: #{_lambda_.1} parent=11 // pred_fallthru
          _
        // Predicated region
        $region69: #{_lambda_.1} parent=11 // pred_check
          %p1564 = pneg %p537
        $region70: #{_lambda_.1} parent=11 // pred_check_branch
          %1566 = sbr.rel (%p1564) target = $region72
        $region71: #{_lambda_.1} parent=11 // pred_region
          %1568 = vsyncadd [#allocation18], 0
          %s1569 = sshll.u32 %s35, 4
          %s1570 = int_to_ptr.hbm [resolvable:$true] %s1569
          %s1571 = sshll.u32 [#allocation17], 4
          %s1572 = int_to_ptr.vmem [resolvable:$true] %s1571
          %1577 = dma.hbm_to_vmem [thread:$0]  %s1570, 512, %s1572, [#allocation18], 256, 256, 16
        $region72: #{_lambda_.1} parent=11 // pred_fallthru
          _
        // Predicated region
        $region73: #{_lambda_.1} parent=11 // pred_check
          %p1578 = pneg %p558
        $region74: #{_lambda_.1} parent=11 // pred_check_branch
          %1580 = sbr.rel (%p1578) target = $region76
        $region75: #{_lambda_.1} parent=11 // pred_region
          %1582 = vsyncadd [#allocation18], 0
          %s1583 = sshll.u32 %s37, 4
          %s1584 = int_to_ptr.hbm [resolvable:$true] %s1583
          %s1585 = sshll.u32 [#allocation19], 4
          %s1586 = int_to_ptr.vmem [resolvable:$true] %s1585
          %1591 = dma.hbm_to_vmem [thread:$0]  %s1584, 512, %s1586, [#allocation18], 256, 256, 16
        $region76: #{_lambda_.1} parent=11 // pred_fallthru
          _
        // Predicated region
        $region77: #{_lambda_.1} parent=11 // pred_check
          %p1592 = pneg %p579
        $region78: #{_lambda_.1} parent=11 // pred_check_branch
          %1594 = sbr.rel (%p1592) target = $region80
        $region79: #{_lambda_.1} parent=11 // pred_region
          _
        $region80: #{_lambda_.1} parent=11 // pred_fallthru
          _
        // Predicated region
        $region81: #{_lambda_.1} parent=11 // pred_check
          %p1595 = pneg %p600
        $region82: #{_lambda_.1} parent=11 // pred_check_branch
          %1597 = sbr.rel (%p1595) target = $region84
        $region83: #{_lambda_.1} parent=11 // pred_region
          _
        $region84: #{_lambda_.1} parent=11 // pred_fallthru
          _
        // Predicated region
        $region85: #{_lambda_.1} parent=11 // pred_check
          %p1598 = pneg %p621
        $region86: #{_lambda_.1} parent=11 // pred_check_branch
          %1600 = sbr.rel (%p1598) target = $region88
        $region87: #{_lambda_.1} parent=11 // pred_region
          _
        $region88: #{_lambda_.1} parent=11 // pred_fallthru
          _
        // Predicated region
        $region89: #{_lambda_.1} parent=11 // pred_check
          %p1601 = pneg %p642
        $region90: #{_lambda_.1} parent=11 // pred_check_branch
          %1603 = sbr.rel (%p1601) target = $region92
        $region91: #{_lambda_.1} parent=11 // pred_region
          %1605 = vsyncadd [#allocation21], 0
          %s1607 = sshll.u32 %s45, 4
          %s1608 = int_to_ptr.hbm [resolvable:$true] %s1607
          %s1609 = sshll.u32 [#allocation20], 4
          %s1610 = int_to_ptr.vmem [resolvable:$true] %s1609
          %1612 = dma.hbm_to_vmem [thread:$0]  %s1608, 16, %s1610, [#allocation21]
        $region92: #{_lambda_.1} parent=11 // pred_fallthru
          _
        // Predicated region
        $region93: #{_lambda_.1} parent=11 // pred_check
          %p1613 = pneg %p663
        $region94: #{_lambda_.1} parent=11 // pred_check_branch
          %1615 = sbr.rel (%p1613) target = $region96
        $region95: #{_lambda_.1} parent=11 // pred_region
          %1617 = vsyncadd [#allocation21], 0
          %s1618 = sshll.u32 %s47, 4
          %s1619 = int_to_ptr.hbm [resolvable:$true] %s1618
          %s1620 = sshll.u32 [#allocation22], 4
          %s1621 = int_to_ptr.vmem [resolvable:$true] %s1620
          %1626 = dma.hbm_to_vmem [thread:$0]  %s1619, 3072, %s1621, [#allocation21], 128, 128, 8
        $region96: #{_lambda_.1} parent=11 // pred_fallthru
          _
        // Predicated region
        $region97: #{_lambda_.1} parent=11 // pred_check
          %p1627 = pneg %p684
        $region98: #{_lambda_.1} parent=11 // pred_check_branch
          %1629 = sbr.rel (%p1627) target = $region100
        $region99: #{_lambda_.1} parent=11 // pred_region
          %1631 = vsyncadd [#allocation24], 0
          %s1633 = sshll.u32 %s49, 4
          %s1634 = int_to_ptr.hbm [resolvable:$true] %s1633
          %s1635 = sshll.u32 [#allocation23], 4
          %s1636 = int_to_ptr.vmem [resolvable:$true] %s1635
          %1638 = dma.hbm_to_vmem [thread:$0]  %s1634, 16, %s1636, [#allocation24]
        $region100: #{_lambda_.1} parent=11 // pred_fallthru
          _
        // Predicated region
        $region101: #{_lambda_.1} parent=11 // pred_check
          %p1639 = pneg %p705
        $region102: #{_lambda_.1} parent=11 // pred_check_branch
          %1641 = sbr.rel (%p1639) target = $region104
        $region103: #{_lambda_.1} parent=11 // pred_region
          _
        $region104: #{_lambda_.1} parent=11 // pred_fallthru
          _
        // Predicated region
        $region105: #{_lambda_.1} parent=11 // pred_check
          %p1642 = pneg %p726
        $region106: #{_lambda_.1} parent=11 // pred_check_branch
          %1644 = sbr.rel (%p1642) target = $region108
        $region107: #{_lambda_.1} parent=11 // pred_region
          _
        $region108: #{_lambda_.1} parent=11 // pred_fallthru
          _
        // Predicated region
        $region109: #{_lambda_.1} parent=11 // pred_check
          %p1645 = pneg %p747
        $region110: #{_lambda_.1} parent=11 // pred_check_branch
          %1647 = sbr.rel (%p1645) target = $region112
        $region111: #{_lambda_.1} parent=11 // pred_region
          %1649 = vsyncadd [#allocation24], 0
          %s1650 = sshll.u32 %s55, 4
          %s1651 = int_to_ptr.hbm [resolvable:$true] %s1650
          %s1652 = sshll.u32 [#allocation25], 4
          %s1653 = int_to_ptr.vmem [resolvable:$true] %s1652
          %1658 = dma.hbm_to_vmem [thread:$0]  %s1651, 1024, %s1653, [#allocation24], 128, 128, 8
        $region112: #{_lambda_.1} parent=11 // pred_fallthru
          _
        // Predicated region
        $region113: #{_lambda_.1} parent=11 // pred_check
          %p1659 = pneg %p768
        $region114: #{_lambda_.1} parent=11 // pred_check_branch
          %1661 = sbr.rel (%p1659) target = $region116
        $region115: #{_lambda_.1} parent=11 // pred_region
          %1663 = vsyncadd [#allocation27], 0
          %s1664 = sshll.u32 %s57, 4
          %s1665 = int_to_ptr.hbm [resolvable:$true] %s1664
          %s1666 = sshll.u32 [#allocation26], 4
          %s1667 = int_to_ptr.vmem [resolvable:$true] %s1666
          %1672 = dma.hbm_to_vmem [thread:$0]  %s1665, 1024, %s1667, [#allocation27], 128, 128, 8
        $region116: #{_lambda_.1} parent=11 // pred_fallthru
          _
        // Predicated region
        $region117: #{_lambda_.1} parent=11 // pred_check
          %p1673 = pneg %p789
        $region118: #{_lambda_.1} parent=11 // pred_check_branch
          %1675 = sbr.rel (%p1673) target = $region120
        $region119: #{_lambda_.1} parent=11 // pred_region
          %1677 = vsyncadd [#allocation27], 0
          %s1678 = sshll.u32 %s59, 4
          %s1679 = int_to_ptr.hbm [resolvable:$true] %s1678
          %s1680 = sshll.u32 [#allocation28], 4
          %s1681 = int_to_ptr.vmem [resolvable:$true] %s1680
          %1686 = dma.hbm_to_vmem [thread:$0]  %s1679, 1024, %s1681, [#allocation27], 128, 128, 8
        $region120: #{_lambda_.1} parent=11 // pred_fallthru
          _
        // Predicated region
        $region121: #{_lambda_.1} parent=11 // pred_check
          %p1687 = pneg %p810
        $region122: #{_lambda_.1} parent=11 // pred_check_branch
          %1689 = sbr.rel (%p1687) target = $region124
        $region123: #{_lambda_.1} parent=11 // pred_region
          %1691 = vsyncadd [#allocation30], 0
          %s1692 = sshll.u32 %s61, 4
          %s1693 = int_to_ptr.hbm [resolvable:$true] %s1692
          %s1694 = sshll.u32 [#allocation29], 4
          %s1695 = int_to_ptr.vmem [resolvable:$true] %s1694
          %1700 = dma.hbm_to_vmem [thread:$0]  %s1693, 32, %s1695, [#allocation30], 16, 16, 1
        $region124: #{_lambda_.1} parent=11 // pred_fallthru
          _
        // Predicated region
        $region125: #{_lambda_.1} parent=11 // pred_check
          %p1701 = pneg %p831
        $region126: #{_lambda_.1} parent=11 // pred_check_branch
          %1703 = sbr.rel (%p1701) target = $region128
        $region127: #{_lambda_.1} parent=11 // pred_region
          %1705 = vsyncadd [#allocation30], 0
          %s1706 = sshll.u32 %s63, 4
          %s1707 = int_to_ptr.hbm [resolvable:$true] %s1706
          %s1708 = sshll.u32 [#allocation31], 4
          %s1709 = int_to_ptr.vmem [resolvable:$true] %s1708
          %1714 = dma.hbm_to_vmem [thread:$0]  %s1707, 32, %s1709, [#allocation30], 16, 16, 1
        $region128: #{_lambda_.1} parent=11 // pred_fallthru
          _
        // Predicated region
        $region129: #{_lambda_.1} parent=11 // pred_check
          %p1715 = pneg %p852
        $region130: #{_lambda_.1} parent=11 // pred_check_branch
          %1717 = sbr.rel (%p1715) target = $region132
        $region131: #{_lambda_.1} parent=11 // pred_region
          %1719 = vsyncadd [#allocation33], 0
          %s1720 = sshll.u32 %s65, 4
          %s1721 = int_to_ptr.hbm [resolvable:$true] %s1720
          %s1722 = sshll.u32 [#allocation32], 4
          %s1723 = int_to_ptr.vmem [resolvable:$true] %s1722
          %1728 = dma.hbm_to_vmem [thread:$0]  %s1721, 32, %s1723, [#allocation33], 16, 16, 1
        $region132: #{_lambda_.1} parent=11 // pred_fallthru
          _
        // Predicated region
        $region133: #{_lambda_.1} parent=11 // pred_check
          %p1729 = pneg %p873
        $region134: #{_lambda_.1} parent=11 // pred_check_branch
          %1731 = sbr.rel (%p1729) target = $region136
        $region135: #{_lambda_.1} parent=11 // pred_region
          %1733 = vsyncadd [#allocation33], 0
          %s1734 = sshll.u32 %s67, 4
          %s1735 = int_to_ptr.hbm [resolvable:$true] %s1734
          %s1736 = sshll.u32 [#allocation34], 4
          %s1737 = int_to_ptr.vmem [resolvable:$true] %s1736
          %1742 = dma.hbm_to_vmem [thread:$0]  %s1735, 512, %s1737, [#allocation33], 128, 128, 8
        $region136: #{_lambda_.1} parent=11 // pred_fallthru
          _
        // Predicated region
        $region137: #{_lambda_.1} parent=11 // pred_check
          %p1743 = pneg %p894
        $region138: #{_lambda_.1} parent=11 // pred_check_branch
          %1745 = sbr.rel (%p1743) target = $region140
        $region139: #{_lambda_.1} parent=11 // pred_region
          %1747 = vsyncadd [#allocation36], 0
          %s1749 = sshll.u32 %s69, 4
          %s1750 = int_to_ptr.hbm [resolvable:$true] %s1749
          %s1751 = sshll.u32 [#allocation35], 4
          %s1752 = int_to_ptr.vmem [resolvable:$true] %s1751
          %1754 = dma.hbm_to_vmem [thread:$0]  %s1750, 16, %s1752, [#allocation36]
        $region140: #{_lambda_.1} parent=11 // pred_fallthru
          _
        // Predicated region
        $region141: #{_lambda_.1} parent=11 // pred_check
          %p1755 = pneg %p915
        $region142: #{_lambda_.1} parent=11 // pred_check_branch
          %1757 = sbr.rel (%p1755) target = $region144
        $region143: #{_lambda_.1} parent=11 // pred_region
          %1759 = vsyncadd [#allocation36], 0
          %s1760 = sshll.u32 %s71, 4
          %s1761 = int_to_ptr.hbm [resolvable:$true] %s1760
          %s1762 = sshll.u32 [#allocation37], 4
          %s1763 = int_to_ptr.vmem [resolvable:$true] %s1762
          %1768 = dma.hbm_to_vmem [thread:$0]  %s1761, 512, %s1763, [#allocation36], 256, 256, 16
        $region144: #{_lambda_.1} parent=11 // pred_fallthru
          _
        // Predicated region
        $region145: #{_lambda_.1} parent=11 // pred_check
          %p1769 = pneg %p936
        $region146: #{_lambda_.1} parent=11 // pred_check_branch
          %1771 = sbr.rel (%p1769) target = $region148
        $region147: #{_lambda_.1} parent=11 // pred_region
          %1773 = vsyncadd [#allocation39], 0
          %s1774 = sshll.u32 %s73, 4
          %s1775 = int_to_ptr.hbm [resolvable:$true] %s1774
          %s1776 = sshll.u32 [#allocation38], 4
          %s1777 = int_to_ptr.vmem [resolvable:$true] %s1776
          %1782 = dma.hbm_to_vmem [thread:$0]  %s1775, 512, %s1777, [#allocation39], 256, 256, 16
        $region148: #{_lambda_.1} parent=11 // pred_fallthru
          _
        // Predicated region
        $region149: #{_lambda_.1} parent=11 // pred_check
          %p1783 = pneg %p957
        $region150: #{_lambda_.1} parent=11 // pred_check_branch
          %1785 = sbr.rel (%p1783) target = $region152
        $region151: #{_lambda_.1} parent=11 // pred_region
          _
        $region152: #{_lambda_.1} parent=11 // pred_fallthru
          _
        // Predicated region
        $region153: #{_lambda_.1} parent=11 // pred_check
          %p1786 = pneg %p978
        $region154: #{_lambda_.1} parent=11 // pred_check_branch
          %1788 = sbr.rel (%p1786) target = $region156
        $region155: #{_lambda_.1} parent=11 // pred_region
          _
        $region156: #{_lambda_.1} parent=11 // pred_fallthru
          _
        // Predicated region
        $region157: #{_lambda_.1} parent=11 // pred_check
          %p1789 = pneg %p999
        $region158: #{_lambda_.1} parent=11 // pred_check_branch
          %1791 = sbr.rel (%p1789) target = $region160
        $region159: #{_lambda_.1} parent=11 // pred_region
          _
        $region160: #{_lambda_.1} parent=11 // pred_fallthru
          _
        // Predicated region
        $region161: #{_lambda_.1} parent=11 // pred_check
          %p1792 = pneg %p1020
        $region162: #{_lambda_.1} parent=11 // pred_check_branch
          %1794 = sbr.rel (%p1792) target = $region164
        $region163: #{_lambda_.1} parent=11 // pred_region
          %1796 = vsyncadd [#allocation39], 0
          %s1798 = sshll.u32 %s81, 4
          %s1799 = int_to_ptr.hbm [resolvable:$true] %s1798
          %s1800 = sshll.u32 [#allocation40], 4
          %s1801 = int_to_ptr.vmem [resolvable:$true] %s1800
          %1803 = dma.hbm_to_vmem [thread:$0]  %s1799, 16, %s1801, [#allocation39]
        $region164: #{_lambda_.1} parent=11 // pred_fallthru
          _
        // Predicated region
        $region165: #{_lambda_.1} parent=11 // pred_check
          %p1804 = pneg %p1041
        $region166: #{_lambda_.1} parent=11 // pred_check_branch
          %1806 = sbr.rel (%p1804) target = $region168
        $region167: #{_lambda_.1} parent=11 // pred_region
          %1808 = vsyncadd [#allocation42], 0
          %s1809 = sshll.u32 %s83, 4
          %s1810 = int_to_ptr.hbm [resolvable:$true] %s1809
          %s1811 = sshll.u32 [#allocation41], 4
          %s1812 = int_to_ptr.vmem [resolvable:$true] %s1811
          %1817 = dma.hbm_to_vmem [thread:$0]  %s1810, 3072, %s1812, [#allocation42], 128, 128, 8
        $region168: #{_lambda_.1} parent=11 // pred_fallthru
          _
        // Predicated region
        $region169: #{_lambda_.1} parent=11 // pred_check
          %p1818 = pneg %p1062
        $region170: #{_lambda_.1} parent=11 // pred_check_branch
          %1820 = sbr.rel (%p1818) target = $region172
        $region171: #{_lambda_.1} parent=11 // pred_region
          %1822 = vsyncadd [#allocation42], 0
          %s1824 = sshll.u32 %s85, 4
          %s1825 = int_to_ptr.hbm [resolvable:$true] %s1824
          %s1826 = sshll.u32 [#allocation43], 4
          %s1827 = int_to_ptr.vmem [resolvable:$true] %s1826
          %1829 = dma.hbm_to_vmem [thread:$0]  %s1825, 16, %s1827, [#allocation42]
        $region172: #{_lambda_.1} parent=11 // pred_fallthru
          _
        // Predicated region
        $region173: #{_lambda_.1} parent=11 // pred_check
          %p1830 = pneg %p1083
        $region174: #{_lambda_.1} parent=11 // pred_check_branch
          %1832 = sbr.rel (%p1830) target = $region176
        $region175: #{_lambda_.1} parent=11 // pred_region
          _
        $region176: #{_lambda_.1} parent=11 // pred_fallthru
          _
        // Predicated region
        $region177: #{_lambda_.1} parent=11 // pred_check
          %p1833 = pneg %p1104
        $region178: #{_lambda_.1} parent=11 // pred_check_branch
          %1835 = sbr.rel (%p1833) target = $region180
        $region179: #{_lambda_.1} parent=11 // pred_region
          _
        $region180: #{_lambda_.1} parent=11 // pred_fallthru
          _
        // Predicated region
        $region181: #{_lambda_.1} parent=11 // pred_check
          %p1836 = pneg %p1125
        $region182: #{_lambda_.1} parent=11 // pred_check_branch
          %1838 = sbr.rel (%p1836) target = $region184
        $region183: #{_lambda_.1} parent=11 // pred_region
          %1840 = vsyncadd [#allocation45], 0
          %s1841 = sshll.u32 %s91, 4
          %s1842 = int_to_ptr.hbm [resolvable:$true] %s1841
          %s1843 = sshll.u32 [#allocation44], 4
          %s1844 = int_to_ptr.vmem [resolvable:$true] %s1843
          %1849 = dma.hbm_to_vmem [thread:$0]  %s1842, 512, %s1844, [#allocation45], 128, 128, 8
        $region184: #{_lambda_.1} parent=11 // pred_fallthru
          _
        // Predicated region
        $region185: #{_lambda_.1} parent=11 // pred_check
          %p1850 = pneg %p1146
        $region186: #{_lambda_.1} parent=11 // pred_check_branch
          %1852 = sbr.rel (%p1850) target = $region188
        $region187: #{_lambda_.1} parent=11 // pred_region
          %1854 = vsyncadd [#allocation45], 0
          %s1856 = sshll.u32 %s93, 4
          %s1857 = int_to_ptr.hbm [resolvable:$true] %s1856
          %s1858 = sshll.u32 [#allocation46], 4
          %s1859 = int_to_ptr.vmem [resolvable:$true] %s1858
          %1861 = dma.hbm_to_vmem [thread:$0]  %s1857, 16, %s1859, [#allocation45]
        $region188: #{_lambda_.1} parent=11 // pred_fallthru
          _
        // Predicated region
        $region189: #{_lambda_.1} parent=11 // pred_check
          %p1862 = pneg %p1167
        $region190: #{_lambda_.1} parent=11 // pred_check_branch
          %1864 = sbr.rel (%p1862) target = $region192
        $region191: #{_lambda_.1} parent=11 // pred_region
          %1866 = vsyncadd [#allocation48], 0
          %s1867 = sshll.u32 %s95, 4
          %s1868 = int_to_ptr.hbm [resolvable:$true] %s1867
          %s1869 = sshll.u32 [#allocation47], 4
          %s1870 = int_to_ptr.vmem [resolvable:$true] %s1869
          %1875 = dma.hbm_to_vmem [thread:$0]  %s1868, 1536, %s1870, [#allocation48], 128, 128, 8
        $region192: #{_lambda_.1} parent=11 // pred_fallthru
          _
        // Predicated region
        $region193: #{_lambda_.1} parent=11 // pred_check
          %p1876 = pneg %p1188
        $region194: #{_lambda_.1} parent=11 // pred_check_branch
          %1878 = sbr.rel (%p1876) target = $region196
        $region195: #{_lambda_.1} parent=11 // pred_region
          %1880 = vsyncadd [#allocation48], 0
          %s1882 = sshll.u32 %s97, 4
          %s1883 = int_to_ptr.hbm [resolvable:$true] %s1882
          %s1884 = sshll.u32 [#allocation49], 4
          %s1885 = int_to_ptr.vmem [resolvable:$true] %s1884
          %1887 = dma.hbm_to_vmem [thread:$0]  %s1883, 16, %s1885, [#allocation48]
        $region196: #{_lambda_.1} parent=11 // pred_fallthru
          _
        // Predicated region
        $region197: #{_lambda_.1} parent=11 // pred_check
          %p1888 = pneg %p1209
        $region198: #{_lambda_.1} parent=11 // pred_check_branch
          %1890 = sbr.rel (%p1888) target = $region200
        $region199: #{_lambda_.1} parent=11 // pred_region
          _
        $region200: #{_lambda_.1} parent=11 // pred_fallthru
          _
        // Predicated region
        $region201: #{_lambda_.1} parent=11 // pred_check
          %p1891 = pneg %p1230
        $region202: #{_lambda_.1} parent=11 // pred_check_branch
          %1893 = sbr.rel (%p1891) target = $region204
        $region203: #{_lambda_.1} parent=11 // pred_region
          _
        $region204: #{_lambda_.1} parent=11 // pred_fallthru
          _
        // Predicated region
        $region205: #{_lambda_.1} parent=11 // pred_check
          %p1894 = pneg %p1251
        $region206: #{_lambda_.1} parent=11 // pred_check_branch
          %1896 = sbr.rel (%p1894) target = $region208
        $region207: #{_lambda_.1} parent=11 // pred_region
          %1898 = vsyncadd [#allocation51], 0
          %s1899 = sshll.u32 %s103, 4
          %s1900 = int_to_ptr.hbm [resolvable:$true] %s1899
          %s1901 = sshll.u32 [#allocation50], 4
          %s1902 = int_to_ptr.vmem [resolvable:$true] %s1901
          %1907 = dma.hbm_to_vmem [thread:$0]  %s1900, 3072, %s1902, [#allocation51], 128, 128, 8
        $region208: #{_lambda_.1} parent=11 // pred_fallthru
          _
        // Predicated region
        $region209: #{_lambda_.1} parent=11 // pred_check
          %p1908 = pneg %p1272
        $region210: #{_lambda_.1} parent=11 // pred_check_branch
          %1910 = sbr.rel (%p1908) target = $region212
        $region211: #{_lambda_.1} parent=11 // pred_region
          %1912 = vsyncadd [#allocation51], 0
          %s1914 = sshll.u32 %s105, 4
          %s1915 = int_to_ptr.hbm [resolvable:$true] %s1914
          %s1916 = sshll.u32 [#allocation52], 4
          %s1917 = int_to_ptr.vmem [resolvable:$true] %s1916
          %1919 = dma.hbm_to_vmem [thread:$0]  %s1915, 16, %s1917, [#allocation51]
        $region212: #{_lambda_.1} parent=11 // pred_fallthru
          _
        // Predicated region
        $region213: #{_lambda_.1} parent=11 // pred_check
          %p1920 = pneg %p1293
        $region214: #{_lambda_.1} parent=11 // pred_check_branch
          %1922 = sbr.rel (%p1920) target = $region216
        $region215: #{_lambda_.1} parent=11 // pred_region
          _
        $region216: #{_lambda_.1} parent=11 // pred_fallthru
          _
        // Predicated region
        $region217: #{_lambda_.1} parent=11 // pred_check
          %p1923 = pneg %p1314
        $region218: #{_lambda_.1} parent=11 // pred_check_branch
          %1925 = sbr.rel (%p1923) target = $region220
        $region219: #{_lambda_.1} parent=11 // pred_region
          _
        $region220: #{_lambda_.1} parent=11 // pred_fallthru
          _
        // Predicated region
        $region221: #{_lambda_.1} parent=11 // pred_check
          %p1926 = pneg %p1335
        $region222: #{_lambda_.1} parent=11 // pred_check_branch
          %1928 = sbr.rel (%p1926) target = $region224
        $region223: #{_lambda_.1} parent=11 // pred_region
          %1930 = vsyncadd [#allocation54], 0
          %s1931 = sshll.u32 %s111, 4
          %s1932 = int_to_ptr.hbm [resolvable:$true] %s1931
          %s1933 = sshll.u32 [#allocation53], 4
          %s1934 = int_to_ptr.vmem [resolvable:$true] %s1933
          %1939 = dma.hbm_to_vmem [thread:$0]  %s1932, 1024, %s1934, [#allocation54], 128, 128, 8
        $region224: #{_lambda_.1} parent=11 // pred_fallthru
          _
        // Predicated region
        $region225: #{_lambda_.1} parent=11 // pred_check
          %p1940 = pneg %p1356
        $region226: #{_lambda_.1} parent=11 // pred_check_branch
          %1942 = sbr.rel (%p1940) target = $region228
        $region227: #{_lambda_.1} parent=11 // pred_region
          _
        $region228: #{_lambda_.1} parent=11 // pred_fallthru
          _
      $region12: #{_lambda_.1} parent=5 // pred_fallthru
        _
      %p1943 = scmp.lt.s32.totalorder %s144, 2
      // Predicated region
      $region229: #{_lambda_.1} parent=5 // pred_check
        %p1944 = pneg %p1943
      $region230: #{_lambda_.1} parent=5 // pred_check_branch
        %1946 = sbr.rel (%p1944) target = $region232
      $region231: #{_lambda_.1} parent=5 // pred_region
        // Predicated region
        $region233: #{_lambda_.1} parent=231 // pred_check
          %p1947 = pneg %p164
        $region234: #{_lambda_.1} parent=231 // pred_check_branch
          %1949 = sbr.rel (%p1947) target = $region236
        $region235: #{_lambda_.1} parent=231 // pred_region
          %p1950 = scmp.lt.s32.totalorder %s144, 1
          %s1951 = scalar_select %p1950, %s144, 1
          %s1952 = smul.addr %s1951, 2
          %s1953 = smul.addr %s1952, 8
          %s1954 = scalar_lea.vmem %s1, %s1953
        $region236: #{_lambda_.1} parent=231 // pred_fallthru
          _
        // Predicated region
        $region237: #{_lambda_.1} parent=231 // pred_check
          %p1955 = pneg %p190
        $region238: #{_lambda_.1} parent=231 // pred_check_branch
          %1957 = sbr.rel (%p1955) target = $region240
        $region239: #{_lambda_.1} parent=231 // pred_region
          %p1958 = scmp.lt.s32.totalorder %s144, 1
          %s1959 = scalar_select %p1958, %s144, 1
          %s1960 = smul.addr %s1959, 2
          %s1961 = smul.addr %s1960, 8
          %s1962 = scalar_lea.vmem %s3, %s1961
        $region240: #{_lambda_.1} parent=231 // pred_fallthru
          _
        // Predicated region
        $region241: #{_lambda_.1} parent=231 // pred_check
          %p1963 = pneg %p216
        $region242: #{_lambda_.1} parent=231 // pred_check_branch
          %1965 = sbr.rel (%p1963) target = $region244
        $region243: #{_lambda_.1} parent=231 // pred_region
          %p1966 = scmp.lt.s32.totalorder %s144, 1
          %s1967 = scalar_select %p1966, %s144, 1
          %s1968 = smul.addr %s1967, 2
          %s1969 = smul.addr %s1968, 8
          %s1970 = scalar_lea.vmem %s5, %s1969
        $region244: #{_lambda_.1} parent=231 // pred_fallthru
          _
      $region232: #{_lambda_.1} parent=5 // pred_fallthru
        _
      %p1971 = scmp.le.s32.totalorder 1, %s144
      %p1972 = scmp.lt.s32.totalorder %s144, 3
      %p1973 = pnand %p1971, %p1972
      %p1974 = pneg %p1973
      // Predicated region
      $region245: #{_lambda_.1} parent=5 // pred_check
        _
      $region246: #{_lambda_.1} parent=5 // pred_check_branch
        %1976 = sbr.rel (%p1973) target = $region248
      $region247: #{_lambda_.1} parent=5 // pred_region
        %s1977 = ssub.s32 %s144, 1
        // Predicated region
        $region249: #{_lambda_.1} parent=247 // pred_check
          %p1978 = pneg %p243
        $region250: #{_lambda_.1} parent=247 // pred_check_branch
          %1980 = sbr.rel (%p1978) target = $region252
        $region251: #{_lambda_.1} parent=247 // pred_region
          %1982 = dma.done [#allocation4], 512
        $region252: #{_lambda_.1} parent=247 // pred_fallthru
          _
        // Predicated region
        $region253: #{_lambda_.1} parent=247 // pred_check
          %p1983 = pneg %p285
        $region254: #{_lambda_.1} parent=247 // pred_check_branch
          %1985 = sbr.rel (%p1983) target = $region256
        $region255: #{_lambda_.1} parent=247 // pred_region
          %1987 = dma.done [#allocation6], 512
        $region256: #{_lambda_.1} parent=247 // pred_fallthru
          _
        // Predicated region
        $region257: #{_lambda_.1} parent=247 // pred_check
          %p1988 = pneg %p306
        $region258: #{_lambda_.1} parent=247 // pred_check_branch
          %1990 = sbr.rel (%p1988) target = $region260
        $region259: #{_lambda_.1} parent=247 // pred_region
          %1992 = dma.done [#allocation6], 4096
        $region260: #{_lambda_.1} parent=247 // pred_fallthru
          _
        // Predicated region
        $region261: #{_lambda_.1} parent=247 // pred_check
          %p1993 = pneg %p327
        $region262: #{_lambda_.1} parent=247 // pred_check_branch
          %1995 = sbr.rel (%p1993) target = $region264
        $region263: #{_lambda_.1} parent=247 // pred_region
          %1997 = dma.done [#allocation9], 256
        $region264: #{_lambda_.1} parent=247 // pred_fallthru
          _
        // Predicated region
        $region265: #{_lambda_.1} parent=247 // pred_check
          %p1998 = pneg %p348
        $region266: #{_lambda_.1} parent=247 // pred_check_branch
          %2000 = sbr.rel (%p1998) target = $region268
        $region267: #{_lambda_.1} parent=247 // pred_region
          %2002 = dma.done [#allocation9], 256
        $region268: #{_lambda_.1} parent=247 // pred_fallthru
          _
        // Predicated region
        $region269: #{_lambda_.1} parent=247 // pred_check
          %p2003 = pneg %p369
        $region270: #{_lambda_.1} parent=247 // pred_check_branch
          %2005 = sbr.rel (%p2003) target = $region272
        $region271: #{_lambda_.1} parent=247 // pred_region
          %2007 = dma.done [#allocation12], 1024
        $region272: #{_lambda_.1} parent=247 // pred_fallthru
          _
        // Predicated region
        $region273: #{_lambda_.1} parent=247 // pred_check
          %p2008 = pneg %p390
        $region274: #{_lambda_.1} parent=247 // pred_check_branch
          %2010 = sbr.rel (%p2008) target = $region276
        $region275: #{_lambda_.1} parent=247 // pred_region
          %2012 = dma.done [#allocation12], 1024
        $region276: #{_lambda_.1} parent=247 // pred_fallthru
          _
        // Predicated region
        $region277: #{_lambda_.1} parent=247 // pred_check
          %p2013 = pneg %p411
        $region278: #{_lambda_.1} parent=247 // pred_check_branch
          %2015 = sbr.rel (%p2013) target = $region280
        $region279: #{_lambda_.1} parent=247 // pred_region
          %2017 = dma.done [#allocation15], 1024
        $region280: #{_lambda_.1} parent=247 // pred_fallthru
          _
        // Predicated region
        $region281: #{_lambda_.1} parent=247 // pred_check
          %p2018 = pneg %p495
        $region282: #{_lambda_.1} parent=247 // pred_check_branch
          %2020 = sbr.rel (%p2018) target = $region284
        $region283: #{_lambda_.1} parent=247 // pred_region
          %2022 = dma.done [#allocation15], 512
        $region284: #{_lambda_.1} parent=247 // pred_fallthru
          _
        // Predicated region
        $region285: #{_lambda_.1} parent=247 // pred_check
          %p2023 = pneg %p537
        $region286: #{_lambda_.1} parent=247 // pred_check_branch
          %2025 = sbr.rel (%p2023) target = $region288
        $region287: #{_lambda_.1} parent=247 // pred_region
          %2027 = dma.done [#allocation18], 512
        $region288: #{_lambda_.1} parent=247 // pred_fallthru
          _
        // Predicated region
        $region289: #{_lambda_.1} parent=247 // pred_check
          %p2028 = pneg %p558
        $region290: #{_lambda_.1} parent=247 // pred_check_branch
          %2030 = sbr.rel (%p2028) target = $region292
        $region291: #{_lambda_.1} parent=247 // pred_region
          %2032 = dma.done [#allocation18], 512
        $region292: #{_lambda_.1} parent=247 // pred_fallthru
          _
        // Predicated region
        $region293: #{_lambda_.1} parent=247 // pred_check
          %p2033 = pneg %p642
        $region294: #{_lambda_.1} parent=247 // pred_check_branch
          %2035 = sbr.rel (%p2033) target = $region296
        $region295: #{_lambda_.1} parent=247 // pred_region
          %2037 = dma.done [#allocation21], 16
        $region296: #{_lambda_.1} parent=247 // pred_fallthru
          _
        // Predicated region
        $region297: #{_lambda_.1} parent=247 // pred_check
          %p2038 = pneg %p663
        $region298: #{_lambda_.1} parent=247 // pred_check_branch
          %2040 = sbr.rel (%p2038) target = $region300
        $region299: #{_lambda_.1} parent=247 // pred_region
          %2042 = dma.done [#allocation21], 3072
        $region300: #{_lambda_.1} parent=247 // pred_fallthru
          _
        // Predicated region
        $region301: #{_lambda_.1} parent=247 // pred_check
          %p2043 = pneg %p684
        $region302: #{_lambda_.1} parent=247 // pred_check_branch
          %2045 = sbr.rel (%p2043) target = $region304
        $region303: #{_lambda_.1} parent=247 // pred_region
          %2047 = dma.done [#allocation24], 16
        $region304: #{_lambda_.1} parent=247 // pred_fallthru
          _
        // Predicated region
        $region305: #{_lambda_.1} parent=247 // pred_check
          %p2048 = pneg %p747
        $region306: #{_lambda_.1} parent=247 // pred_check_branch
          %2050 = sbr.rel (%p2048) target = $region308
        $region307: #{_lambda_.1} parent=247 // pred_region
          %2052 = dma.done [#allocation24], 1024
        $region308: #{_lambda_.1} parent=247 // pred_fallthru
          _
        // Predicated region
        $region309: #{_lambda_.1} parent=247 // pred_check
          %p2053 = pneg %p768
        $region310: #{_lambda_.1} parent=247 // pred_check_branch
          %2055 = sbr.rel (%p2053) target = $region312
        $region311: #{_lambda_.1} parent=247 // pred_region
          %2057 = dma.done [#allocation27], 1024
        $region312: #{_lambda_.1} parent=247 // pred_fallthru
          _
        // Predicated region
        $region313: #{_lambda_.1} parent=247 // pred_check
          %p2058 = pneg %p789
        $region314: #{_lambda_.1} parent=247 // pred_check_branch
          %2060 = sbr.rel (%p2058) target = $region316
        $region315: #{_lambda_.1} parent=247 // pred_region
          %2062 = dma.done [#allocation27], 1024
        $region316: #{_lambda_.1} parent=247 // pred_fallthru
          _
        // Predicated region
        $region317: #{_lambda_.1} parent=247 // pred_check
          %p2063 = pneg %p810
        $region318: #{_lambda_.1} parent=247 // pred_check_branch
          %2065 = sbr.rel (%p2063) target = $region320
        $region319: #{_lambda_.1} parent=247 // pred_region
          %2067 = dma.done [#allocation30], 32
        $region320: #{_lambda_.1} parent=247 // pred_fallthru
          _
        // Predicated region
        $region321: #{_lambda_.1} parent=247 // pred_check
          %p2068 = pneg %p831
        $region322: #{_lambda_.1} parent=247 // pred_check_branch
          %2070 = sbr.rel (%p2068) target = $region324
        $region323: #{_lambda_.1} parent=247 // pred_region
          %2072 = dma.done [#allocation30], 32
        $region324: #{_lambda_.1} parent=247 // pred_fallthru
          _
        // Predicated region
        $region325: #{_lambda_.1} parent=247 // pred_check
          %p2073 = pneg %p852
        $region326: #{_lambda_.1} parent=247 // pred_check_branch
          %2075 = sbr.rel (%p2073) target = $region328
        $region327: #{_lambda_.1} parent=247 // pred_region
          %2077 = dma.done [#allocation33], 32
        $region328: #{_lambda_.1} parent=247 // pred_fallthru
          _
        // Predicated region
        $region329: #{_lambda_.1} parent=247 // pred_check
          %p2078 = pneg %p873
        $region330: #{_lambda_.1} parent=247 // pred_check_branch
          %2080 = sbr.rel (%p2078) target = $region332
        $region331: #{_lambda_.1} parent=247 // pred_region
          %2082 = dma.done [#allocation33], 512
        $region332: #{_lambda_.1} parent=247 // pred_fallthru
          _
        // Predicated region
        $region333: #{_lambda_.1} parent=247 // pred_check
          %p2083 = pneg %p894
        $region334: #{_lambda_.1} parent=247 // pred_check_branch
          %2085 = sbr.rel (%p2083) target = $region336
        $region335: #{_lambda_.1} parent=247 // pred_region
          %2087 = dma.done [#allocation36], 16
        $region336: #{_lambda_.1} parent=247 // pred_fallthru
          _
        // Predicated region
        $region337: #{_lambda_.1} parent=247 // pred_check
          %p2088 = pneg %p915
        $region338: #{_lambda_.1} parent=247 // pred_check_branch
          %2090 = sbr.rel (%p2088) target = $region340
        $region339: #{_lambda_.1} parent=247 // pred_region
          %2092 = dma.done [#allocation36], 512
        $region340: #{_lambda_.1} parent=247 // pred_fallthru
          _
        // Predicated region
        $region341: #{_lambda_.1} parent=247 // pred_check
          %p2093 = pneg %p936
        $region342: #{_lambda_.1} parent=247 // pred_check_branch
          %2095 = sbr.rel (%p2093) target = $region344
        $region343: #{_lambda_.1} parent=247 // pred_region
          %2097 = dma.done [#allocation39], 512
        $region344: #{_lambda_.1} parent=247 // pred_fallthru
          _
        // Predicated region
        $region345: #{_lambda_.1} parent=247 // pred_check
          %p2098 = pneg %p1020
        $region346: #{_lambda_.1} parent=247 // pred_check_branch
          %2100 = sbr.rel (%p2098) target = $region348
        $region347: #{_lambda_.1} parent=247 // pred_region
          %2102 = dma.done [#allocation39], 16
        $region348: #{_lambda_.1} parent=247 // pred_fallthru
          _
        // Predicated region
        $region349: #{_lambda_.1} parent=247 // pred_check
          %p2103 = pneg %p1041
        $region350: #{_lambda_.1} parent=247 // pred_check_branch
          %2105 = sbr.rel (%p2103) target = $region352
        $region351: #{_lambda_.1} parent=247 // pred_region
          %2107 = dma.done [#allocation42], 3072
        $region352: #{_lambda_.1} parent=247 // pred_fallthru
          _
        // Predicated region
        $region353: #{_lambda_.1} parent=247 // pred_check
          %p2108 = pneg %p1062
        $region354: #{_lambda_.1} parent=247 // pred_check_branch
          %2110 = sbr.rel (%p2108) target = $region356
        $region355: #{_lambda_.1} parent=247 // pred_region
          %2112 = dma.done [#allocation42], 16
        $region356: #{_lambda_.1} parent=247 // pred_fallthru
          _
        // Predicated region
        $region357: #{_lambda_.1} parent=247 // pred_check
          %p2113 = pneg %p1125
        $region358: #{_lambda_.1} parent=247 // pred_check_branch
          %2115 = sbr.rel (%p2113) target = $region360
        $region359: #{_lambda_.1} parent=247 // pred_region
          %2117 = dma.done [#allocation45], 512
        $region360: #{_lambda_.1} parent=247 // pred_fallthru
          _
        // Predicated region
        $region361: #{_lambda_.1} parent=247 // pred_check
          %p2118 = pneg %p1146
        $region362: #{_lambda_.1} parent=247 // pred_check_branch
          %2120 = sbr.rel (%p2118) target = $region364
        $region363: #{_lambda_.1} parent=247 // pred_region
          %2122 = dma.done [#allocation45], 16
        $region364: #{_lambda_.1} parent=247 // pred_fallthru
          _
        // Predicated region
        $region365: #{_lambda_.1} parent=247 // pred_check
          %p2123 = pneg %p1167
        $region366: #{_lambda_.1} parent=247 // pred_check_branch
          %2125 = sbr.rel (%p2123) target = $region368
        $region367: #{_lambda_.1} parent=247 // pred_region
          %2127 = dma.done [#allocation48], 1536
        $region368: #{_lambda_.1} parent=247 // pred_fallthru
          _
        // Predicated region
        $region369: #{_lambda_.1} parent=247 // pred_check
          %p2128 = pneg %p1188
        $region370: #{_lambda_.1} parent=247 // pred_check_branch
          %2130 = sbr.rel (%p2128) target = $region372
        $region371: #{_lambda_.1} parent=247 // pred_region
          %2132 = dma.done [#allocation48], 16
        $region372: #{_lambda_.1} parent=247 // pred_fallthru
          _
        // Predicated region
        $region373: #{_lambda_.1} parent=247 // pred_check
          %p2133 = pneg %p1251
        $region374: #{_lambda_.1} parent=247 // pred_check_branch
          %2135 = sbr.rel (%p2133) target = $region376
        $region375: #{_lambda_.1} parent=247 // pred_region
          %2137 = dma.done [#allocation51], 3072
        $region376: #{_lambda_.1} parent=247 // pred_fallthru
          _
        // Predicated region
        $region377: #{_lambda_.1} parent=247 // pred_check
          %p2138 = pneg %p1272
        $region378: #{_lambda_.1} parent=247 // pred_check_branch
          %2140 = sbr.rel (%p2138) target = $region380
        $region379: #{_lambda_.1} parent=247 // pred_region
          %2142 = dma.done [#allocation51], 16
        $region380: #{_lambda_.1} parent=247 // pred_fallthru
          _
        // Predicated region
        $region381: #{_lambda_.1} parent=247 // pred_check
          %p2143 = pneg %p1335
        $region382: #{_lambda_.1} parent=247 // pred_check_branch
          %2145 = sbr.rel (%p2143) target = $region384
        $region383: #{_lambda_.1} parent=247 // pred_region
          %2147 = dma.done [#allocation54], 1024
        $region384: #{_lambda_.1} parent=247 // pred_fallthru
          _
        %p2148 = scmp.lt.s32.totalorder %s149, 1
        %s2149 = scalar_select %p2148, %s149, 1
        %s2150 = smul.addr %s2149, 2
        %s2151 = smul.addr %s2150, 8
        %s2152 = scalar_lea.vmem %s1, %s2151
        %p2153 = pneg %p170
        %p2154 = pneg %p167
        %p2155 = scmp.lt.s32.totalorder %s149, 1
        %s2156 = scalar_select %p2155, %s149, 1
        %s2157 = smul.addr %s2156, 2
        %s2158 = smul.addr %s2157, 8
        %s2159 = scalar_lea.vmem %s3, %s2158
        %p2160 = pneg %p196
        %p2161 = pneg %p193
        %p2162 = scmp.lt.s32.totalorder %s149, 1
        %s2163 = scalar_select %p2162, %s149, 1
        %s2164 = smul.addr %s2163, 2
        %s2165 = smul.addr %s2164, 8
        %s2166 = scalar_lea.vmem %s5, %s2165
        %p2167 = pneg %p222
        %p2168 = pneg %p219
        %p2169 = pneg %p243
        %p2170 = pneg %p240
        %p2171 = pneg %p264
        %p2172 = pneg %p261
        %p2173 = pneg %p285
        %p2174 = pneg %p282
        %p2175 = pneg %p306
        %p2176 = pneg %p303
        %p2177 = pneg %p327
        %p2178 = pneg %p324
        %p2179 = pneg %p348
        %p2180 = pneg %p345
        %p2181 = pneg %p369
        %p2182 = pneg %p366
        %p2183 = pneg %p390
        %p2184 = pneg %p387
        %p2185 = pneg %p411
        %p2186 = pneg %p408
        %p2187 = pneg %p432
        %p2188 = pneg %p429
        %p2189 = pneg %p453
        %p2190 = pneg %p450
        %p2191 = pneg %p474
        %p2192 = pneg %p471
        %p2193 = pneg %p495
        %p2194 = pneg %p492
        %p2195 = pneg %p516
        %p2196 = pneg %p513
        %p2197 = pneg %p537
        %p2198 = pneg %p534
        %p2199 = pneg %p558
        %p2200 = pneg %p555
        %p2201 = pneg %p579
        %p2202 = pneg %p576
        %p2203 = pneg %p600
        %p2204 = pneg %p597
        %p2205 = pneg %p621
        %p2206 = pneg %p618
        %p2207 = pneg %p642
        %p2208 = pneg %p639
        %p2209 = pneg %p663
        %p2210 = pneg %p660
        %p2211 = pneg %p684
        %p2212 = pneg %p681
        %p2213 = pneg %p705
        %p2214 = pneg %p702
        %p2215 = pneg %p726
        %p2216 = pneg %p723
        %p2217 = pneg %p747
        %p2218 = pneg %p744
        %p2219 = pneg %p768
        %p2220 = pneg %p765
        %p2221 = pneg %p789
        %p2222 = pneg %p786
        %p2223 = pneg %p810
        %p2224 = pneg %p807
        %p2225 = pneg %p831
        %p2226 = pneg %p828
        %p2227 = pneg %p852
        %p2228 = pneg %p849
        %p2229 = pneg %p873
        %p2230 = pneg %p870
        %p2231 = pneg %p894
        %p2232 = pneg %p891
        %p2233 = pneg %p915
        %p2234 = pneg %p912
        %p2235 = pneg %p936
        %p2236 = pneg %p933
        %p2237 = pneg %p957
        %p2238 = pneg %p954
        %p2239 = pneg %p978
        %p2240 = pneg %p975
        %p2241 = pneg %p999
        %p2242 = pneg %p996
        %p2243 = pneg %p1020
        %p2244 = pneg %p1017
        %p2245 = pneg %p1041
        %p2246 = pneg %p1038
        %p2247 = pneg %p1062
        %p2248 = pneg %p1059
        %p2249 = pneg %p1083
        %p2250 = pneg %p1080
        %p2251 = pneg %p1104
        %p2252 = pneg %p1101
        %p2253 = pneg %p1125
        %p2254 = pneg %p1122
        %p2255 = pneg %p1146
        %p2256 = pneg %p1143
        %p2257 = pneg %p1167
        %p2258 = pneg %p1164
        %p2259 = pneg %p1188
        %p2260 = pneg %p1185
        %p2261 = pneg %p1209
        %p2262 = pneg %p1206
        %p2263 = pneg %p1230
        %p2264 = pneg %p1227
        %p2265 = pneg %p1251
        %p2266 = pneg %p1248
        %p2267 = pneg %p1272
        %p2268 = pneg %p1269
        %p2269 = pneg %p1293
        %p2270 = pneg %p1290
        %p2271 = pneg %p1314
        %p2272 = pneg %p1311
        %p2273 = pneg %p1335
        %p2274 = pneg %p1332
        %p2275 = pneg %p1356
        %p2276 = pneg %p1353
        %p2277 = pneg %p1382
        %p2278 = pneg %p1379
        %p2279 = scmp.lt.s32.totalorder %s149, 1
        %s2280 = scalar_select %p2279, %s149, 1
        %s2281 = smul.addr %s2280, 2
        %s2282 = smul.addr %s2281, 8
        %s2283 = scalar_lea.vmem %s115, %s2282
        %p2284 = pneg %p1408
        %p2285 = pneg %p1405
        %p2286 = scmp.lt.s32.totalorder %s149, 1
        %s2287 = scalar_select %p2286, %s149, 1
        %s2288 = smul.addr %s2287, 2
        %s2289 = smul.addr %s2288, 8
        %s2290 = scalar_lea.vmem %s117, %s2289
        %p2291 = scmp.lt.s32.totalorder %s149, 1
        %s2292 = scalar_select %p2291, %s149, 1
        %s2293 = smul.addr %s2292, 2
        %s2294 = smul.addr %s2293, 8
        %s2295 = scalar_lea.vmem %s1, %s2294
        %p2296 = scmp.lt.s32.totalorder %s149, 1
        %s2297 = scalar_select %p2296, %s149, 1
        %s2298 = smul.addr %s2297, 2
        %s2299 = smul.addr %s2298, 8
        %s2300 = scalar_lea.vmem %s3, %s2299
        %p2301 = scmp.lt.s32.totalorder %s149, 1
        %s2302 = scalar_select %p2301, %s149, 1
        %s2303 = smul.addr %s2302, 2
        %s2304 = smul.addr %s2303, 8
        %s2305 = scalar_lea.vmem %s5, %s2304
        %p2306 = scmp.lt.s32.totalorder %s149, 1
        %s2307 = scalar_select %p2306, %s149, 1
        %s2308 = smul.addr %s2307, 2
        %s2309 = smul.addr %s2308, 8
        %s2310 = scalar_lea.vmem %s115, %s2309
        %p2311 = scmp.lt.s32.totalorder %s149, 1
        %s2312 = scalar_select %p2311, %s149, 1
        %s2313 = smul.addr %s2312, 2
        %s2314 = smul.addr %s2313, 8
        %s2315 = scalar_lea.vmem %s117, %s2314
        %v2316 = vld [vmem:[%s2295] sm:$0xff]
        %v2317 = vld [vmem:[%s2295 + $0x8] sm:$0xff]
        %v2318 = vld [vmem:[%s2300] sm:$0xff]
        %v2319 = vld [vmem:[%s2300 + $0x8] sm:$0xff]
        %v2320 = vld [vmem:[%s2305] sm:$0xff]
        %v2321 = vld [vmem:[%s2305 + $0x8] sm:$0xff]
        %v2322 = vld [vmem:[#allocation3] sm:$0xff]
        %v2323 = vld [vmem:[#allocation3 + $0x8] sm:$0xff]
        %v2324 = vld [vmem:[#allocation3 + $0x10] sm:$0xff]
        %v2325 = vld [vmem:[#allocation3 + $0x18] sm:$0xff]
        %v2326 = vld [vmem:[%s9] sm:$0xff]
        %v2327 = vld [vmem:[%s9 + $0x8] sm:$0xff]
        %v2328 = vld [vmem:[%s9 + $0x10] sm:$0xff]
        %v2329 = vld [vmem:[%s9 + $0x18] sm:$0xff]
        %v2330 = vld [vmem:[%s9 + $0x20] sm:$0xff]
        %v2331 = vld [vmem:[%s9 + $0x28] sm:$0xff]
        %v2332 = vld [vmem:[%s9 + $0x30] sm:$0xff]
        %v2333 = vld [vmem:[%s9 + $0x38] sm:$0xff]
        %v2334 = vld [vmem:[%s9 + $0x40] sm:$0xff]
        %v2335 = vld [vmem:[%s9 + $0x48] sm:$0xff]
        %v2336 = vld [vmem:[%s9 + $0x50] sm:$0xff]
        %v2337 = vld [vmem:[%s9 + $0x58] sm:$0xff]
        %v2338 = vld [vmem:[%s9 + $0x60] sm:$0xff]
        %v2339 = vld [vmem:[%s9 + $0x68] sm:$0xff]
        %v2340 = vld [vmem:[%s9 + $0x70] sm:$0xff]
        %v2341 = vld [vmem:[%s9 + $0x78] sm:$0xff]
        %v2342 = vld [vmem:[%s9 + $0x80] sm:$0xff]
        %v2343 = vld [vmem:[%s9 + $0x88] sm:$0xff]
        %v2344 = vld [vmem:[%s9 + $0x90] sm:$0xff]
        %v2345 = vld [vmem:[%s9 + $0x98] sm:$0xff]
        %v2346 = vld [vmem:[%s9 + $0xa0] sm:$0xff]
        %v2347 = vld [vmem:[%s9 + $0xa8] sm:$0xff]
        %v2348 = vld [vmem:[%s9 + $0xb0] sm:$0xff]
        %v2349 = vld [vmem:[%s9 + $0xb8] sm:$0xff]
        %v2350 = vld [vmem:[%s9 + $0xc0] sm:$0xff]
        %v2351 = vld [vmem:[%s9 + $0xc8] sm:$0xff]
        %v2352 = vld [vmem:[%s9 + $0xd0] sm:$0xff]
        %v2353 = vld [vmem:[%s9 + $0xd8] sm:$0xff]
        %v2354 = vld [vmem:[%s9 + $0xe0] sm:$0xff]
        %v2355 = vld [vmem:[%s9 + $0xe8] sm:$0xff]
        %v2356 = vld [vmem:[%s9 + $0xf0] sm:$0xff]
        %v2357 = vld [vmem:[%s9 + $0xf8] sm:$0xff]
        %v2358 = vld [vmem:[#allocation5] sm:$0xff]
        %v2359 = vld [vmem:[#allocation5 + $0x8] sm:$0xff]
        %v2360 = vld [vmem:[#allocation5 + $0x10] sm:$0xff]
        %v2361 = vld [vmem:[#allocation5 + $0x18] sm:$0xff]
        %v2362 = vld [vmem:[#allocation7] sm:$0xff]
        %v2363 = vld [vmem:[#allocation7 + $0x8] sm:$0xff]
        %v2364 = vld [vmem:[#allocation7 + $0x10] sm:$0xff]
        %v2365 = vld [vmem:[#allocation7 + $0x18] sm:$0xff]
        %v2366 = vld [vmem:[#allocation7 + $0x20] sm:$0xff]
        %v2367 = vld [vmem:[#allocation7 + $0x28] sm:$0xff]
        %v2368 = vld [vmem:[#allocation7 + $0x30] sm:$0xff]
        %v2369 = vld [vmem:[#allocation7 + $0x38] sm:$0xff]
        %v2370 = vld [vmem:[#allocation7 + $0x40] sm:$0xff]
        %v2371 = vld [vmem:[#allocation7 + $0x48] sm:$0xff]
        %v2372 = vld [vmem:[#allocation7 + $0x50] sm:$0xff]
        %v2373 = vld [vmem:[#allocation7 + $0x58] sm:$0xff]
        %v2374 = vld [vmem:[#allocation7 + $0x60] sm:$0xff]
        %v2375 = vld [vmem:[#allocation7 + $0x68] sm:$0xff]
        %v2376 = vld [vmem:[#allocation7 + $0x70] sm:$0xff]
        %v2377 = vld [vmem:[#allocation7 + $0x78] sm:$0xff]
        %v2378 = vld [vmem:[#allocation7 + $0x80] sm:$0xff]
        %v2379 = vld [vmem:[#allocation7 + $0x88] sm:$0xff]
        %v2380 = vld [vmem:[#allocation7 + $0x90] sm:$0xff]
        %v2381 = vld [vmem:[#allocation7 + $0x98] sm:$0xff]
        %v2382 = vld [vmem:[#allocation7 + $0xa0] sm:$0xff]
        %v2383 = vld [vmem:[#allocation7 + $0xa8] sm:$0xff]
        %v2384 = vld [vmem:[#allocation7 + $0xb0] sm:$0xff]
        %v2385 = vld [vmem:[#allocation7 + $0xb8] sm:$0xff]
        %v2386 = vld [vmem:[#allocation7 + $0xc0] sm:$0xff]
        %v2387 = vld [vmem:[#allocation7 + $0xc8] sm:$0xff]
        %v2388 = vld [vmem:[#allocation7 + $0xd0] sm:$0xff]
        %v2389 = vld [vmem:[#allocation7 + $0xd8] sm:$0xff]
        %v2390 = vld [vmem:[#allocation7 + $0xe0] sm:$0xff]
        %v2391 = vld [vmem:[#allocation7 + $0xe8] sm:$0xff]
        %v2392 = vld [vmem:[#allocation7 + $0xf0] sm:$0xff]
        %v2393 = vld [vmem:[#allocation7 + $0xf8] sm:$0xff]
        %v2394 = vld [vmem:[#allocation8] sm:$0xff]
        %v2395 = vld [vmem:[#allocation8 + $0x8] sm:$0xff]
        %v2396 = vld [vmem:[#allocation10] sm:$0xff]
        %v2397 = vld [vmem:[#allocation10 + $0x8] sm:$0xff]
        %2399 = vset.pattern.permute.xlu0 0
        %2400 = vperm.xlu0 %2399, %v2318
        %v2401 = vpop.permute.xlu0 %2400
        %2404 = vset.pattern.permute.xlu0 0
        %2405 = vperm.xlu0 %2404, %v2319
        %v2406 = vpop.permute.xlu0 %2405
        %v2408 = vmul.f32 %v2316, %v2401
        %v2409 = vmul.f32 %v2317, %v2406
        %v2410 = vld [vmem:[#allocation17] sm:$0xff]
        %v2411 = vld [vmem:[#allocation17 + $0x8] sm:$0xff]
        %v2412 = vld [vmem:[#allocation17 + $0x10] sm:$0xff]
        %v2413 = vld [vmem:[#allocation17 + $0x18] sm:$0xff]
        %v2414 = vld [vmem:[#allocation19] sm:$0xff]
        %v2415 = vld [vmem:[#allocation19 + $0x8] sm:$0xff]
        %v2416 = vld [vmem:[#allocation19 + $0x10] sm:$0xff]
        %v2417 = vld [vmem:[#allocation19 + $0x18] sm:$0xff]
        %v2418 = vld [vmem:[%s33] sm:$0x1]
        %v2419 = vld [vmem:[#allocation11] sm:$0xff]
        %v2420 = vld [vmem:[#allocation11 + $0x8] sm:$0xff]
        %v2421 = vld [vmem:[#allocation11 + $0x10] sm:$0xff]
        %v2422 = vld [vmem:[#allocation11 + $0x18] sm:$0xff]
        %v2423 = vld [vmem:[%s25] sm:$0x1]
        %v2425 = vperm.slane %v2423, 0
        %vm2427 = vcmask 261120
        %v2429 = vsel %vm2427, %v2408, 0
        %v2432 = vsel %vm2427, %v2409, 0
        %2434 = vmatpush.msra.mxu0 0.0
        %2435 = vmatpush.msra.mxu0 0.0
        %2436 = vmatpush.msra.mxu0 0.0
        %2437 = vmatpush.msra.mxu0 0.0
        %2438 = vmatpush.msra.mxu0 0.0
        %2439 = vmatpush.msra.mxu0 0.0
        %2440 = vmatpush.msra.mxu0 0.0
        %2441 = vmatpush.msra.mxu0 0.0
        %2442 = vmatpush.msra.mxu0 0.0
        %2443 = vmatpush.msra.mxu0 0.0
        %2444 = vmatpush.msra.mxu0 0.0
        %2445 = vmatpush.msra.mxu0 0.0
        %2446 = vmatpush.msra.mxu0 %v2422
        %2447 = vmatpush.msra.mxu0 %v2421
        %2448 = vmatpush.msra.mxu0 %v2420
        %2449 = vmatpush.msra.mxu0 %v2419
        %2450 = vmatmul.f32.gmra.mxu0 %v2429
        %v2451 = vpop.f32.mrf.mxu0
        %v2452 = vadd.f32 %v2425, %v2451
        %2453 = vmatmul.f32.gmra.mxu0 %v2432
        %v2454 = vpop.f32.mrf.mxu0
        %v2455 = vadd.f32 %v2425, %v2454
        %2456 = vdwg.mxu0
        %v2457 = vld [vmem:[#allocation13] sm:$0xff]
        %v2458 = vld [vmem:[#allocation13 + $0x8] sm:$0xff]
        %v2459 = vld [vmem:[#allocation13 + $0x10] sm:$0xff]
        %v2460 = vld [vmem:[#allocation13 + $0x18] sm:$0xff]
        %v2461 = vld [vmem:[%s27] sm:$0x1]
        %v2463 = vperm.slane %v2461, 0
        %2465 = vmatpush.msra.mxu0 0.0
        %2466 = vmatpush.msra.mxu0 0.0
        %2467 = vmatpush.msra.mxu0 0.0
        %2468 = vmatpush.msra.mxu0 0.0
        %2469 = vmatpush.msra.mxu0 0.0
        %2470 = vmatpush.msra.mxu0 0.0
        %2471 = vmatpush.msra.mxu0 0.0
        %2472 = vmatpush.msra.mxu0 0.0
        %2473 = vmatpush.msra.mxu0 0.0
        %2474 = vmatpush.msra.mxu0 0.0
        %2475 = vmatpush.msra.mxu0 0.0
        %2476 = vmatpush.msra.mxu0 0.0
        %2477 = vmatpush.msra.mxu0 %v2460
        %2478 = vmatpush.msra.mxu0 %v2459
        %2479 = vmatpush.msra.mxu0 %v2458
        %2480 = vmatpush.msra.mxu0 %v2457
        %2481 = vmatmul.f32.gmra.mxu0 %v2429
        %v2482 = vpop.f32.mrf.mxu0
        %v2483 = vadd.f32 %v2463, %v2482
        %2484 = vmatmul.f32.gmra.mxu0 %v2432
        %v2485 = vpop.f32.mrf.mxu0
        %v2486 = vadd.f32 %v2463, %v2485
        %2487 = vdwg.mxu0
        %v2488 = vld [vmem:[#allocation14] sm:$0xff]
        %v2489 = vld [vmem:[#allocation14 + $0x8] sm:$0xff]
        %v2490 = vld [vmem:[#allocation14 + $0x10] sm:$0xff]
        %v2491 = vld [vmem:[#allocation14 + $0x18] sm:$0xff]
        %v2492 = vld [vmem:[%s29] sm:$0x1]
        %v2494 = vperm.slane %v2492, 0
        %2496 = vmatpush.msra.mxu0 0.0
        %2497 = vmatpush.msra.mxu0 0.0
        %2498 = vmatpush.msra.mxu0 0.0
        %2499 = vmatpush.msra.mxu0 0.0
        %2500 = vmatpush.msra.mxu0 0.0
        %2501 = vmatpush.msra.mxu0 0.0
        %2502 = vmatpush.msra.mxu0 0.0
        %2503 = vmatpush.msra.mxu0 0.0
        %2504 = vmatpush.msra.mxu0 0.0
        %2505 = vmatpush.msra.mxu0 0.0
        %2506 = vmatpush.msra.mxu0 0.0
        %2507 = vmatpush.msra.mxu0 0.0
        %2508 = vmatpush.msra.mxu0 %v2491
        %2509 = vmatpush.msra.mxu0 %v2490
        %2510 = vmatpush.msra.mxu0 %v2489
        %2511 = vmatpush.msra.mxu0 %v2488
        %2512 = vmatmul.f32.gmra.mxu0 %v2429
        %v2513 = vpop.f32.mrf.mxu0
        %v2514 = vadd.f32 %v2494, %v2513
        %2515 = vmatmul.f32.gmra.mxu0 %v2432
        %v2516 = vpop.f32.mrf.mxu0
        %v2517 = vadd.f32 %v2494, %v2516
        %2518 = vdwg.mxu0
        %vm2519 = vcmask 130048
        %v2521 = vsel %vm2519, %v2452, 0
        %v2524 = vsel %vm2519, %v2455, 0
        %v2527 = vsel %vm2519, %v2483, 0
        %v2530 = vsel %vm2519, %v2486, 0
        %2532 = vmatpush.xpose.msra.mxu0 0.0
        %2533 = vmatpush.xpose.msra.mxu0 0.0
        %2534 = vmatpush.xpose.msra.mxu0 0.0
        %2535 = vmatpush.xpose.msra.mxu0 0.0
        %2536 = vmatpush.xpose.msra.mxu0 0.0
        %2537 = vmatpush.xpose.msra.mxu0 0.0
        %2538 = vmatpush.xpose.msra.mxu0 0.0
        %2539 = vmatpush.xpose.msra.mxu0 0.0
        %2540 = vmatpush.xpose.msra.mxu0 0.0
        %2541 = vmatpush.xpose.msra.mxu0 0.0
        %2542 = vmatpush.xpose.msra.mxu0 0.0
        %2543 = vmatpush.xpose.msra.mxu0 0.0
        %2544 = vmatpush.xpose.msra.mxu0 0.0
        %2545 = vmatpush.xpose.msra.mxu0 0.0
        %2546 = vmatpush.xpose.msra.mxu0 %v2530
        %2547 = vmatpush.xpose.msra.mxu0 %v2527
        %2548 = vmatmul.f32.gmra.mxu0 %v2521
        %v2549 = vpop.f32.mrf.mxu0
        %v2550 = vadd.f32 0.0, %v2549
        %2551 = vmatmul.f32.gmra.mxu0 %v2524
        %v2552 = vpop.f32.mrf.mxu0
        %v2553 = vadd.f32 0.0, %v2552
        %2554 = vdwg.mxu0
        %v2555 = vmul.f32 %v2550, 0.25
        %v2556 = vmul.f32 %v2553, 0.25
        %2557 = vmatpush.msra.mxu0 0.0
        %2558 = vmatpush.msra.mxu0 0.0
        %2559 = vmatpush.msra.mxu0 0.0
        %2560 = vmatpush.msra.mxu0 0.0
        %2561 = vmatpush.msra.mxu0 0.0
        %2562 = vmatpush.msra.mxu0 0.0
        %2563 = vmatpush.msra.mxu0 0.0
        %2564 = vmatpush.msra.mxu0 0.0
        %2565 = vmatpush.msra.mxu0 0.0
        %2566 = vmatpush.msra.mxu0 0.0
        %2567 = vmatpush.msra.mxu0 0.0
        %2568 = vmatpush.msra.mxu0 0.0
        %2569 = vmatpush.msra.mxu0 0.0
        %2570 = vmatpush.msra.mxu0 0.0
        %2571 = vmatpush.msra.mxu0 %v2324
        %2572 = vmatpush.msra.mxu0 %v2322
        %2573 = vmatmul.f32.gmra.mxu0 %v2521
        %v2574 = vpop.f32.mrf.mxu0
        %v2575 = vadd.f32 0.0, %v2574
        %2576 = vmatmul.f32.gmra.mxu0 %v2524
        %v2577 = vpop.f32.mrf.mxu0
        %v2578 = vadd.f32 0.0, %v2577
        %2579 = vdwg.mxu0
        %2580 = vmatpush.msra.mxu0 0.0
        %2581 = vmatpush.msra.mxu0 0.0
        %2582 = vmatpush.msra.mxu0 0.0
        %2583 = vmatpush.msra.mxu0 0.0
        %2584 = vmatpush.msra.mxu0 0.0
        %2585 = vmatpush.msra.mxu0 0.0
        %2586 = vmatpush.msra.mxu0 0.0
        %2587 = vmatpush.msra.mxu0 0.0
        %2588 = vmatpush.msra.mxu0 0.0
        %2589 = vmatpush.msra.mxu0 0.0
        %2590 = vmatpush.msra.mxu0 0.0
        %2591 = vmatpush.msra.mxu0 0.0
        %2592 = vmatpush.msra.mxu0 0.0
        %2593 = vmatpush.msra.mxu0 0.0
        %2594 = vmatpush.msra.mxu0 %v2325
        %2595 = vmatpush.msra.mxu0 %v2323
        %2596 = vmatmul.f32.gmra.mxu0 %v2521
        %v2597 = vpop.f32.mrf.mxu0
        %v2598 = vadd.f32 0.0, %v2597
        %2599 = vmatmul.f32.gmra.mxu0 %v2524
        %v2600 = vpop.f32.mrf.mxu0
        %v2601 = vadd.f32 0.0, %v2600
        %2602 = vdwg.mxu0
        %v2603 = vmul.f32 %v2575, %v2410
        %v2604 = vmul.f32 %v2598, %v2411
        %v2605 = vmul.f32 %v2578, %v2412
        %v2606 = vmul.f32 %v2601, %v2413
        %2607 = vmatpush.msra.mxu0 %v2341
        %2608 = vmatpush.msra.mxu0 %v2340
        %2609 = vmatpush.msra.mxu0 %v2339
        %2610 = vmatpush.msra.mxu0 %v2338
        %2611 = vmatpush.msra.mxu0 %v2337
        %2612 = vmatpush.msra.mxu0 %v2336
        %2613 = vmatpush.msra.mxu0 %v2335
        %2614 = vmatpush.msra.mxu0 %v2334
        %2615 = vmatpush.msra.mxu0 %v2333
        %2616 = vmatpush.msra.mxu0 %v2332
        %2617 = vmatpush.msra.mxu0 %v2331
        %2618 = vmatpush.msra.mxu0 %v2330
        %2619 = vmatpush.msra.mxu0 %v2329
        %2620 = vmatpush.msra.mxu0 %v2328
        %2621 = vmatpush.msra.mxu0 %v2327
        %2622 = vmatpush.msra.mxu0 %v2326
        %2623 = vmatmul.f32.gmra.mxu0 %v2603
        %v2624 = vpop.f32.mrf.mxu0
        %v2625 = vadd.f32 0.0, %v2624
        %2626 = vmatmul.f32.gmra.mxu0 %v2605
        %v2627 = vpop.f32.mrf.mxu0
        %v2628 = vadd.f32 0.0, %v2627
        %2629 = vdwg.mxu0
        %2630 = vmatpush.msra.mxu0 %v2357
        %2631 = vmatpush.msra.mxu0 %v2356
        %2632 = vmatpush.msra.mxu0 %v2355
        %2633 = vmatpush.msra.mxu0 %v2354
        %2634 = vmatpush.msra.mxu0 %v2353
        %2635 = vmatpush.msra.mxu0 %v2352
        %2636 = vmatpush.msra.mxu0 %v2351
        %2637 = vmatpush.msra.mxu0 %v2350
        %2638 = vmatpush.msra.mxu0 %v2349
        %2639 = vmatpush.msra.mxu0 %v2348
        %2640 = vmatpush.msra.mxu0 %v2347
        %2641 = vmatpush.msra.mxu0 %v2346
        %2642 = vmatpush.msra.mxu0 %v2345
        %2643 = vmatpush.msra.mxu0 %v2344
        %2644 = vmatpush.msra.mxu0 %v2343
        %2645 = vmatpush.msra.mxu0 %v2342
        %2646 = vmatmul.f32.gmra.mxu0 %v2604
        %v2647 = vpop.f32.mrf.mxu0
        %v2648 = vadd.f32 %v2625, %v2647
        %2649 = vmatmul.f32.gmra.mxu0 %v2606
        %v2650 = vpop.f32.mrf.mxu0
        %v2651 = vadd.f32 %v2628, %v2650
        %2652 = vdwg.mxu0
        %v2653 = vmul.f32 %v2648, 0.25
        %v2654 = vmul.f32 %v2651, 0.25
        %v2655 = vadd.f32 %v2555, %v2653
        %v2656 = vadd.f32 %v2556, %v2654
        %vm2657 = vcmp.lt.f32.partialorder %v2320, 0.5
        %vm2658 = vcmp.lt.f32.partialorder %v2321, 0.5
        %v2659 = vsel %vm2657, -10000.0, %v2655
        %v2660 = vsel %vm2658, -10000.0, %v2656
        %v2661 = vsel %vm2519, %v2659, -inf
        %2662 = vmax.xlane.f32.xlu0 %v2661
        %v2663 = vpop.xlane.xlu0 %2662
        %v2664 = vsel %vm2519, %v2660, -inf
        %2665 = vmax.xlane.f32.xlu0 %v2664
        %v2666 = vpop.xlane.xlu0 %2665
        %v2667 = vsub.f32 %v2659, %v2663
        %v2668 = vsub.f32 %v2660, %v2666
        %v2669 = vmul.f32 %v2667, 1.442695
        %v2670 = vpow.pop %v2669
        %v2671 = vmul.f32 %v2668, 1.442695
        %v2672 = vpow.pop %v2671
        %v2673 = vsel %vm2519, %v2670, 0.0
        %2674 = vadd.xlane.f32.xlu0 %v2673
        %v2675 = vpop.xlane.xlu0 %2674
        %v2676 = vsel %vm2519, %v2672, 0.0
        %2677 = vadd.xlane.f32.xlu0 %v2676
        %v2678 = vpop.xlane.xlu0 %2677
        %v2679 = vrcp.pop %v2675
        %v2680 = vmul.f32 %v2675, %v2679
        %v2681 = vsub.f32 1.0, %v2680
        %v2682 = vmul.f32 %v2679, %v2681
        %v2683 = vadd.f32 %v2679, %v2682
        %vm2684 = vweird.f32 %v2675
        %vm2685 = vweird.f32 %v2679
        %vm2686 = vmor %vm2684, %vm2685
        %v2687 = vsel %vm2686, %v2679, %v2683
        %v2688 = vand.u32 2147483647, %v2675
        %vm2689 = vcmp.eq.f32.partialorder %v2688, 8.507059e+37
        %v2690 = vand.u32 %v2675, 2147483648
        %v2691 = vor.u32 1.1754944e-38, %v2690
        %v2692 = vsel %vm2689, %v2691, %v2687
        %v2693 = vmul.f32 %v2670, %v2692
        %v2694 = vrcp.pop %v2678
        %v2695 = vmul.f32 %v2678, %v2694
        %v2696 = vsub.f32 1.0, %v2695
        %v2697 = vmul.f32 %v2694, %v2696
        %v2698 = vadd.f32 %v2694, %v2697
        %vm2699 = vweird.f32 %v2678
        %vm2700 = vweird.f32 %v2694
        %vm2701 = vmor %vm2699, %vm2700
        %v2702 = vsel %vm2701, %v2694, %v2698
        %v2703 = vand.u32 2147483647, %v2678
        %vm2704 = vcmp.eq.f32.partialorder %v2703, 8.507059e+37
        %v2705 = vand.u32 %v2678, 2147483648
        %v2706 = vor.u32 1.1754944e-38, %v2705
        %v2707 = vsel %vm2704, %v2706, %v2702
        %v2708 = vmul.f32 %v2672, %v2707
        %v2710 = vsel %vm2519, %v2693, 0
        %v2713 = vsel %vm2519, %v2708, 0
        %2715 = vmatpush.msra.mxu0 0.0
        %2716 = vmatpush.msra.mxu0 0.0
        %2717 = vmatpush.msra.mxu0 0.0
        %2718 = vmatpush.msra.mxu0 0.0
        %2719 = vmatpush.msra.mxu0 0.0
        %2720 = vmatpush.msra.mxu0 0.0
        %2721 = vmatpush.msra.mxu0 0.0
        %2722 = vmatpush.msra.mxu0 0.0
        %2723 = vmatpush.msra.mxu0 0.0
        %2724 = vmatpush.msra.mxu0 0.0
        %2725 = vmatpush.msra.mxu0 0.0
        %2726 = vmatpush.msra.mxu0 0.0
        %2727 = vmatpush.msra.mxu0 0.0
        %2728 = vmatpush.msra.mxu0 0.0
        %2729 = vmatpush.msra.mxu0 %v2360
        %2730 = vmatpush.msra.mxu0 %v2358
        %2731 = vmatmul.f32.gmra.mxu0 %v2710
        %v2732 = vpop.f32.mrf.mxu0
        %v2733 = vadd.f32 0.0, %v2732
        %2734 = vmatmul.f32.gmra.mxu0 %v2713
        %v2735 = vpop.f32.mrf.mxu0
        %v2736 = vadd.f32 0.0, %v2735
        %2737 = vdwg.mxu0
        %2738 = vmatpush.msra.mxu0 0.0
        %2739 = vmatpush.msra.mxu0 0.0
        %2740 = vmatpush.msra.mxu0 0.0
        %2741 = vmatpush.msra.mxu0 0.0
        %2742 = vmatpush.msra.mxu0 0.0
        %2743 = vmatpush.msra.mxu0 0.0
        %2744 = vmatpush.msra.mxu0 0.0
        %2745 = vmatpush.msra.mxu0 0.0
        %2746 = vmatpush.msra.mxu0 0.0
        %2747 = vmatpush.msra.mxu0 0.0
        %2748 = vmatpush.msra.mxu0 0.0
        %2749 = vmatpush.msra.mxu0 0.0
        %2750 = vmatpush.msra.mxu0 0.0
        %2751 = vmatpush.msra.mxu0 0.0
        %2752 = vmatpush.msra.mxu0 %v2361
        %2753 = vmatpush.msra.mxu0 %v2359
        %2754 = vmatmul.f32.gmra.mxu0 %v2710
        %v2755 = vpop.f32.mrf.mxu0
        %v2756 = vadd.f32 0.0, %v2755
        %2757 = vmatmul.f32.gmra.mxu0 %v2713
        %v2758 = vpop.f32.mrf.mxu0
        %v2759 = vadd.f32 0.0, %v2758
        %2760 = vdwg.mxu0
        %v2761 = vmul.f32 %v2733, %v2414
        %v2762 = vmul.f32 %v2756, %v2415
        %v2763 = vmul.f32 %v2736, %v2416
        %v2764 = vmul.f32 %v2759, %v2417
        %2765 = vmatpush.msra.mxu0 %v2377
        %2766 = vmatpush.msra.mxu0 %v2376
        %2767 = vmatpush.msra.mxu0 %v2375
        %2768 = vmatpush.msra.mxu0 %v2374
        %2769 = vmatpush.msra.mxu0 %v2373
        %2770 = vmatpush.msra.mxu0 %v2372
        %2771 = vmatpush.msra.mxu0 %v2371
        %2772 = vmatpush.msra.mxu0 %v2370
        %2773 = vmatpush.msra.mxu0 %v2369
        %2774 = vmatpush.msra.mxu0 %v2368
        %2775 = vmatpush.msra.mxu0 %v2367
        %2776 = vmatpush.msra.mxu0 %v2366
        %2777 = vmatpush.msra.mxu0 %v2365
        %2778 = vmatpush.msra.mxu0 %v2364
        %2779 = vmatpush.msra.mxu0 %v2363
        %2780 = vmatpush.msra.mxu0 %v2362
        %2781 = vmatmul.f32.gmra.mxu0 %v2761
        %v2782 = vpop.f32.mrf.mxu0
        %v2783 = vadd.f32 0.0, %v2782
        %2784 = vmatmul.f32.gmra.mxu0 %v2763
        %v2785 = vpop.f32.mrf.mxu0
        %v2786 = vadd.f32 0.0, %v2785
        %2787 = vdwg.mxu0
        %2788 = vmatpush.msra.mxu0 %v2393
        %2789 = vmatpush.msra.mxu0 %v2392
        %2790 = vmatpush.msra.mxu0 %v2391
        %2791 = vmatpush.msra.mxu0 %v2390
        %2792 = vmatpush.msra.mxu0 %v2389
        %2793 = vmatpush.msra.mxu0 %v2388
        %2794 = vmatpush.msra.mxu0 %v2387
        %2795 = vmatpush.msra.mxu0 %v2386
        %2796 = vmatpush.msra.mxu0 %v2385
        %2797 = vmatpush.msra.mxu0 %v2384
        %2798 = vmatpush.msra.mxu0 %v2383
        %2799 = vmatpush.msra.mxu0 %v2382
        %2800 = vmatpush.msra.mxu0 %v2381
        %2801 = vmatpush.msra.mxu0 %v2380
        %2802 = vmatpush.msra.mxu0 %v2379
        %2803 = vmatpush.msra.mxu0 %v2378
        %2804 = vmatmul.f32.gmra.mxu0 %v2762
        %v2805 = vpop.f32.mrf.mxu0
        %v2806 = vadd.f32 %v2783, %v2805
        %2807 = vmatmul.f32.gmra.mxu0 %v2764
        %v2808 = vpop.f32.mrf.mxu0
        %v2809 = vadd.f32 %v2786, %v2808
        %2810 = vdwg.mxu0
        %2811 = vmatpush.msra.mxu0 0.0
        %2812 = vmatpush.msra.mxu0 0.0
        %2813 = vmatpush.msra.mxu0 0.0
        %2814 = vmatpush.msra.mxu0 0.0
        %2815 = vmatpush.msra.mxu0 0.0
        %2816 = vmatpush.msra.mxu0 0.0
        %2817 = vmatpush.msra.mxu0 0.0
        %2818 = vmatpush.msra.mxu0 0.0
        %2819 = vmatpush.msra.mxu0 0.0
        %2820 = vmatpush.msra.mxu0 0.0
        %2821 = vmatpush.msra.mxu0 0.0
        %2822 = vmatpush.msra.mxu0 0.0
        %2823 = vmatpush.msra.mxu0 0.0
        %2824 = vmatpush.msra.mxu0 0.0
        %2825 = vmatpush.msra.mxu0 %v2517
        %2826 = vmatpush.msra.mxu0 %v2514
        %2827 = vmatmul.f32.gmra.mxu0 %v2710
        %v2828 = vpop.f32.mrf.mxu0
        %v2829 = vadd.f32 %v2806, %v2828
        %2830 = vmatmul.f32.gmra.mxu0 %v2713
        %v2831 = vpop.f32.mrf.mxu0
        %v2832 = vadd.f32 %v2809, %v2831
        %2833 = vdwg.mxu0
        %v2834 = vld [vmem:[#allocation16] sm:$0xff]
        %v2835 = vld [vmem:[#allocation16 + $0x8] sm:$0xff]
        %v2837 = vsel %vm2519, %v2829, 0
        %v2840 = vsel %vm2519, %v2832, 0
        %2842 = vmatpush.msra.mxu0 0.0
        %2843 = vmatpush.msra.mxu0 0.0
        %2844 = vmatpush.msra.mxu0 0.0
        %2845 = vmatpush.msra.mxu0 0.0
        %2846 = vmatpush.msra.mxu0 0.0
        %2847 = vmatpush.msra.mxu0 0.0
        %2848 = vmatpush.msra.mxu0 0.0
        %2849 = vmatpush.msra.mxu0 0.0
        %2850 = vmatpush.msra.mxu0 0.0
        %2851 = vmatpush.msra.mxu0 0.0
        %2852 = vmatpush.msra.mxu0 0.0
        %2853 = vmatpush.msra.mxu0 0.0
        %2854 = vmatpush.msra.mxu0 0.0
        %2855 = vmatpush.msra.mxu0 0.0
        %2856 = vmatpush.msra.mxu0 %v2835
        %2857 = vmatpush.msra.mxu0 %v2834
        %2858 = vmatmul.f32.gmra.mxu0 %v2837
        %v2859 = vpop.f32.mrf.mxu0
        %v2860 = vadd.f32 0.0, %v2859
        %2861 = vmatmul.f32.gmra.mxu0 %v2840
        %v2862 = vpop.f32.mrf.mxu0
        %v2863 = vadd.f32 0.0, %v2862
        %2864 = vdwg.mxu0
        %v2866 = vperm.slane %v2418, 0
        %v2868 = vadd.f32 %v2866, %v2860
        %v2869 = vadd.f32 %v2866, %v2863
        %s2870 = scalar_lea.vmem [#allocation11], 32
        %v2871 = vld [vmem:[%s2870] sm:$0xff]
        %v2872 = vld [vmem:[%s2870 + $0x8] sm:$0xff]
        %v2873 = vld [vmem:[%s2870 + $0x10] sm:$0xff]
        %v2874 = vld [vmem:[%s2870 + $0x18] sm:$0xff]
        %s2875 = scalar_lea.vmem %s25, 1
        %v2876 = vld [vmem:[%s2875] sm:$0x1]
        %v2878 = vperm.slane %v2876, 0
        %2880 = vmatpush.msra.mxu0 0.0
        %2881 = vmatpush.msra.mxu0 0.0
        %2882 = vmatpush.msra.mxu0 0.0
        %2883 = vmatpush.msra.mxu0 0.0
        %2884 = vmatpush.msra.mxu0 0.0
        %2885 = vmatpush.msra.mxu0 0.0
        %2886 = vmatpush.msra.mxu0 0.0
        %2887 = vmatpush.msra.mxu0 0.0
        %2888 = vmatpush.msra.mxu0 0.0
        %2889 = vmatpush.msra.mxu0 0.0
        %2890 = vmatpush.msra.mxu0 0.0
        %2891 = vmatpush.msra.mxu0 0.0
        %2892 = vmatpush.msra.mxu0 %v2874
        %2893 = vmatpush.msra.mxu0 %v2873
        %2894 = vmatpush.msra.mxu0 %v2872
        %2895 = vmatpush.msra.mxu0 %v2871
        %2896 = vmatmul.f32.gmra.mxu0 %v2429
        %v2897 = vpop.f32.mrf.mxu0
        %v2898 = vadd.f32 %v2878, %v2897
        %2899 = vmatmul.f32.gmra.mxu0 %v2432
        %v2900 = vpop.f32.mrf.mxu0
        %v2901 = vadd.f32 %v2878, %v2900
        %2902 = vdwg.mxu0
        %s2903 = scalar_lea.vmem [#allocation13], 32
        %v2904 = vld [vmem:[%s2903] sm:$0xff]
        %v2905 = vld [vmem:[%s2903 + $0x8] sm:$0xff]
        %v2906 = vld [vmem:[%s2903 + $0x10] sm:$0xff]
        %v2907 = vld [vmem:[%s2903 + $0x18] sm:$0xff]
        %s2908 = scalar_lea.vmem %s27, 1
        %v2909 = vld [vmem:[%s2908] sm:$0x1]
        %v2911 = vperm.slane %v2909, 0
        %2913 = vmatpush.msra.mxu0 0.0
        %2914 = vmatpush.msra.mxu0 0.0
        %2915 = vmatpush.msra.mxu0 0.0
        %2916 = vmatpush.msra.mxu0 0.0
        %2917 = vmatpush.msra.mxu0 0.0
        %2918 = vmatpush.msra.mxu0 0.0
        %2919 = vmatpush.msra.mxu0 0.0
        %2920 = vmatpush.msra.mxu0 0.0
        %2921 = vmatpush.msra.mxu0 0.0
        %2922 = vmatpush.msra.mxu0 0.0
        %2923 = vmatpush.msra.mxu0 0.0
        %2924 = vmatpush.msra.mxu0 0.0
        %2925 = vmatpush.msra.mxu0 %v2907
        %2926 = vmatpush.msra.mxu0 %v2906
        %2927 = vmatpush.msra.mxu0 %v2905
        %2928 = vmatpush.msra.mxu0 %v2904
        %2929 = vmatmul.f32.gmra.mxu0 %v2429
        %v2930 = vpop.f32.mrf.mxu0
        %v2931 = vadd.f32 %v2911, %v2930
        %2932 = vmatmul.f32.gmra.mxu0 %v2432
        %v2933 = vpop.f32.mrf.mxu0
        %v2934 = vadd.f32 %v2911, %v2933
        %2935 = vdwg.mxu0
        %s2936 = scalar_lea.vmem [#allocation14], 32
        %v2937 = vld [vmem:[%s2936] sm:$0xff]
        %v2938 = vld [vmem:[%s2936 + $0x8] sm:$0xff]
        %v2939 = vld [vmem:[%s2936 + $0x10] sm:$0xff]
        %v2940 = vld [vmem:[%s2936 + $0x18] sm:$0xff]
        %s2941 = scalar_lea.vmem %s29, 1
        %v2942 = vld [vmem:[%s2941] sm:$0x1]
        %v2944 = vperm.slane %v2942, 0
        %2946 = vmatpush.msra.mxu0 0.0
        %2947 = vmatpush.msra.mxu0 0.0
        %2948 = vmatpush.msra.mxu0 0.0
        %2949 = vmatpush.msra.mxu0 0.0
        %2950 = vmatpush.msra.mxu0 0.0
        %2951 = vmatpush.msra.mxu0 0.0
        %2952 = vmatpush.msra.mxu0 0.0
        %2953 = vmatpush.msra.mxu0 0.0
        %2954 = vmatpush.msra.mxu0 0.0
        %2955 = vmatpush.msra.mxu0 0.0
        %2956 = vmatpush.msra.mxu0 0.0
        %2957 = vmatpush.msra.mxu0 0.0
        %2958 = vmatpush.msra.mxu0 %v2940
        %2959 = vmatpush.msra.mxu0 %v2939
        %2960 = vmatpush.msra.mxu0 %v2938
        %2961 = vmatpush.msra.mxu0 %v2937
        %2962 = vmatmul.f32.gmra.mxu0 %v2429
        %v2963 = vpop.f32.mrf.mxu0
        %v2964 = vadd.f32 %v2944, %v2963
        %2965 = vmatmul.f32.gmra.mxu0 %v2432
        %v2966 = vpop.f32.mrf.mxu0
        %v2967 = vadd.f32 %v2944, %v2966
        %2968 = vdwg.mxu0
        %v2970 = vsel %vm2519, %v2898, 0
        %v2973 = vsel %vm2519, %v2901, 0
        %v2976 = vsel %vm2519, %v2931, 0
        %v2979 = vsel %vm2519, %v2934, 0
        %2981 = vmatpush.xpose.msra.mxu0 0.0
        %2982 = vmatpush.xpose.msra.mxu0 0.0
        %2983 = vmatpush.xpose.msra.mxu0 0.0
        %2984 = vmatpush.xpose.msra.mxu0 0.0
        %2985 = vmatpush.xpose.msra.mxu0 0.0
        %2986 = vmatpush.xpose.msra.mxu0 0.0
        %2987 = vmatpush.xpose.msra.mxu0 0.0
        %2988 = vmatpush.xpose.msra.mxu0 0.0
        %2989 = vmatpush.xpose.msra.mxu0 0.0
        %2990 = vmatpush.xpose.msra.mxu0 0.0
        %2991 = vmatpush.xpose.msra.mxu0 0.0
        %2992 = vmatpush.xpose.msra.mxu0 0.0
        %2993 = vmatpush.xpose.msra.mxu0 0.0
        %2994 = vmatpush.xpose.msra.mxu0 0.0
        %2995 = vmatpush.xpose.msra.mxu0 %v2979
        %2996 = vmatpush.xpose.msra.mxu0 %v2976
        %2997 = vmatmul.f32.gmra.mxu0 %v2970
        %v2998 = vpop.f32.mrf.mxu0
        %v2999 = vadd.f32 0.0, %v2998
        %3000 = vmatmul.f32.gmra.mxu0 %v2973
        %v3001 = vpop.f32.mrf.mxu0
        %v3002 = vadd.f32 0.0, %v3001
        %3003 = vdwg.mxu0
        %v3004 = vmul.f32 %v2999, 0.25
        %v3005 = vmul.f32 %v3002, 0.25
        %3006 = vmatpush.msra.mxu0 0.0
        %3007 = vmatpush.msra.mxu0 0.0
        %3008 = vmatpush.msra.mxu0 0.0
        %3009 = vmatpush.msra.mxu0 0.0
        %3010 = vmatpush.msra.mxu0 0.0
        %3011 = vmatpush.msra.mxu0 0.0
        %3012 = vmatpush.msra.mxu0 0.0
        %3013 = vmatpush.msra.mxu0 0.0
        %3014 = vmatpush.msra.mxu0 0.0
        %3015 = vmatpush.msra.mxu0 0.0
        %3016 = vmatpush.msra.mxu0 0.0
        %3017 = vmatpush.msra.mxu0 0.0
        %3018 = vmatpush.msra.mxu0 0.0
        %3019 = vmatpush.msra.mxu0 0.0
        %3020 = vmatpush.msra.mxu0 %v2324
        %3021 = vmatpush.msra.mxu0 %v2322
        %3022 = vmatmul.f32.gmra.mxu0 %v2970
        %v3023 = vpop.f32.mrf.mxu0
        %v3024 = vadd.f32 0.0, %v3023
        %3025 = vmatmul.f32.gmra.mxu0 %v2973
        %v3026 = vpop.f32.mrf.mxu0
        %v3027 = vadd.f32 0.0, %v3026
        %3028 = vdwg.mxu0
        %3029 = vmatpush.msra.mxu0 0.0
        %3030 = vmatpush.msra.mxu0 0.0
        %3031 = vmatpush.msra.mxu0 0.0
        %3032 = vmatpush.msra.mxu0 0.0
        %3033 = vmatpush.msra.mxu0 0.0
        %3034 = vmatpush.msra.mxu0 0.0
        %3035 = vmatpush.msra.mxu0 0.0
        %3036 = vmatpush.msra.mxu0 0.0
        %3037 = vmatpush.msra.mxu0 0.0
        %3038 = vmatpush.msra.mxu0 0.0
        %3039 = vmatpush.msra.mxu0 0.0
        %3040 = vmatpush.msra.mxu0 0.0
        %3041 = vmatpush.msra.mxu0 0.0
        %3042 = vmatpush.msra.mxu0 0.0
        %3043 = vmatpush.msra.mxu0 %v2325
        %3044 = vmatpush.msra.mxu0 %v2323
        %3045 = vmatmul.f32.gmra.mxu0 %v2970
        %v3046 = vpop.f32.mrf.mxu0
        %v3047 = vadd.f32 0.0, %v3046
        %3048 = vmatmul.f32.gmra.mxu0 %v2973
        %v3049 = vpop.f32.mrf.mxu0
        %v3050 = vadd.f32 0.0, %v3049
        %3051 = vdwg.mxu0
        %v3052 = vmul.f32 %v3024, %v2410
        %v3053 = vmul.f32 %v3047, %v2411
        %v3054 = vmul.f32 %v3027, %v2412
        %v3055 = vmul.f32 %v3050, %v2413
        %3056 = vmatpush.msra.mxu0 %v2341
        %3057 = vmatpush.msra.mxu0 %v2340
        %3058 = vmatpush.msra.mxu0 %v2339
        %3059 = vmatpush.msra.mxu0 %v2338
        %3060 = vmatpush.msra.mxu0 %v2337
        %3061 = vmatpush.msra.mxu0 %v2336
        %3062 = vmatpush.msra.mxu0 %v2335
        %3063 = vmatpush.msra.mxu0 %v2334
        %3064 = vmatpush.msra.mxu0 %v2333
        %3065 = vmatpush.msra.mxu0 %v2332
        %3066 = vmatpush.msra.mxu0 %v2331
        %3067 = vmatpush.msra.mxu0 %v2330
        %3068 = vmatpush.msra.mxu0 %v2329
        %3069 = vmatpush.msra.mxu0 %v2328
        %3070 = vmatpush.msra.mxu0 %v2327
        %3071 = vmatpush.msra.mxu0 %v2326
        %3072 = vmatmul.f32.gmra.mxu0 %v3052
        %v3073 = vpop.f32.mrf.mxu0
        %v3074 = vadd.f32 0.0, %v3073
        %3075 = vmatmul.f32.gmra.mxu0 %v3054
        %v3076 = vpop.f32.mrf.mxu0
        %v3077 = vadd.f32 0.0, %v3076
        %3078 = vdwg.mxu0
        %3079 = vmatpush.msra.mxu0 %v2357
        %3080 = vmatpush.msra.mxu0 %v2356
        %3081 = vmatpush.msra.mxu0 %v2355
        %3082 = vmatpush.msra.mxu0 %v2354
        %3083 = vmatpush.msra.mxu0 %v2353
        %3084 = vmatpush.msra.mxu0 %v2352
        %3085 = vmatpush.msra.mxu0 %v2351
        %3086 = vmatpush.msra.mxu0 %v2350
        %3087 = vmatpush.msra.mxu0 %v2349
        %3088 = vmatpush.msra.mxu0 %v2348
        %3089 = vmatpush.msra.mxu0 %v2347
        %3090 = vmatpush.msra.mxu0 %v2346
        %3091 = vmatpush.msra.mxu0 %v2345
        %3092 = vmatpush.msra.mxu0 %v2344
        %3093 = vmatpush.msra.mxu0 %v2343
        %3094 = vmatpush.msra.mxu0 %v2342
        %3095 = vmatmul.f32.gmra.mxu0 %v3053
        %v3096 = vpop.f32.mrf.mxu0
        %v3097 = vadd.f32 %v3074, %v3096
        %3098 = vmatmul.f32.gmra.mxu0 %v3055
        %v3099 = vpop.f32.mrf.mxu0
        %v3100 = vadd.f32 %v3077, %v3099
        %3101 = vdwg.mxu0
        %v3102 = vmul.f32 %v3097, 0.25
        %v3103 = vmul.f32 %v3100, 0.25
        %v3104 = vadd.f32 %v3004, %v3102
        %v3105 = vadd.f32 %v3005, %v3103
        %v3106 = vsel %vm2657, -10000.0, %v3104
        %v3107 = vsel %vm2658, -10000.0, %v3105
        %v3108 = vsel %vm2519, %v3106, -inf
        %3109 = vmax.xlane.f32.xlu0 %v3108
        %v3110 = vpop.xlane.xlu0 %3109
        %v3111 = vsel %vm2519, %v3107, -inf
        %3112 = vmax.xlane.f32.xlu0 %v3111
        %v3113 = vpop.xlane.xlu0 %3112
        %v3114 = vsub.f32 %v3106, %v3110
        %v3115 = vsub.f32 %v3107, %v3113
        %v3116 = vmul.f32 %v3114, 1.442695
        %v3117 = vpow.pop %v3116
        %v3118 = vmul.f32 %v3115, 1.442695
        %v3119 = vpow.pop %v3118
        %v3120 = vsel %vm2519, %v3117, 0.0
        %3121 = vadd.xlane.f32.xlu0 %v3120
        %v3122 = vpop.xlane.xlu0 %3121
        %v3123 = vsel %vm2519, %v3119, 0.0
        %3124 = vadd.xlane.f32.xlu0 %v3123
        %v3125 = vpop.xlane.xlu0 %3124
        %v3126 = vrcp.pop %v3122
        %v3127 = vmul.f32 %v3122, %v3126
        %v3128 = vsub.f32 1.0, %v3127
        %v3129 = vmul.f32 %v3126, %v3128
        %v3130 = vadd.f32 %v3126, %v3129
        %vm3131 = vweird.f32 %v3122
        %vm3132 = vweird.f32 %v3126
        %vm3133 = vmor %vm3131, %vm3132
        %v3134 = vsel %vm3133, %v3126, %v3130
        %v3135 = vand.u32 2147483647, %v3122
        %vm3136 = vcmp.eq.f32.partialorder %v3135, 8.507059e+37
        %v3137 = vand.u32 %v3122, 2147483648
        %v3138 = vor.u32 1.1754944e-38, %v3137
        %v3139 = vsel %vm3136, %v3138, %v3134
        %v3140 = vmul.f32 %v3117, %v3139
        %v3141 = vrcp.pop %v3125
        %v3142 = vmul.f32 %v3125, %v3141
        %v3143 = vsub.f32 1.0, %v3142
        %v3144 = vmul.f32 %v3141, %v3143
        %v3145 = vadd.f32 %v3141, %v3144
        %vm3146 = vweird.f32 %v3125
        %vm3147 = vweird.f32 %v3141
        %vm3148 = vmor %vm3146, %vm3147
        %v3149 = vsel %vm3148, %v3141, %v3145
        %v3150 = vand.u32 2147483647, %v3125
        %vm3151 = vcmp.eq.f32.partialorder %v3150, 8.507059e+37
        %v3152 = vand.u32 %v3125, 2147483648
        %v3153 = vor.u32 1.1754944e-38, %v3152
        %v3154 = vsel %vm3151, %v3153, %v3149
        %v3155 = vmul.f32 %v3119, %v3154
        %v3157 = vsel %vm2519, %v3140, 0
        %v3160 = vsel %vm2519, %v3155, 0
        %3162 = vmatpush.msra.mxu0 0.0
        %3163 = vmatpush.msra.mxu0 0.0
        %3164 = vmatpush.msra.mxu0 0.0
        %3165 = vmatpush.msra.mxu0 0.0
        %3166 = vmatpush.msra.mxu0 0.0
        %3167 = vmatpush.msra.mxu0 0.0
        %3168 = vmatpush.msra.mxu0 0.0
        %3169 = vmatpush.msra.mxu0 0.0
        %3170 = vmatpush.msra.mxu0 0.0
        %3171 = vmatpush.msra.mxu0 0.0
        %3172 = vmatpush.msra.mxu0 0.0
        %3173 = vmatpush.msra.mxu0 0.0
        %3174 = vmatpush.msra.mxu0 0.0
        %3175 = vmatpush.msra.mxu0 0.0
        %3176 = vmatpush.msra.mxu0 %v2360
        %3177 = vmatpush.msra.mxu0 %v2358
        %3178 = vmatmul.f32.gmra.mxu0 %v3157
        %v3179 = vpop.f32.mrf.mxu0
        %v3180 = vadd.f32 0.0, %v3179
        %3181 = vmatmul.f32.gmra.mxu0 %v3160
        %v3182 = vpop.f32.mrf.mxu0
        %v3183 = vadd.f32 0.0, %v3182
        %3184 = vdwg.mxu0
        %3185 = vmatpush.msra.mxu0 0.0
        %3186 = vmatpush.msra.mxu0 0.0
        %3187 = vmatpush.msra.mxu0 0.0
        %3188 = vmatpush.msra.mxu0 0.0
        %3189 = vmatpush.msra.mxu0 0.0
        %3190 = vmatpush.msra.mxu0 0.0
        %3191 = vmatpush.msra.mxu0 0.0
        %3192 = vmatpush.msra.mxu0 0.0
        %3193 = vmatpush.msra.mxu0 0.0
        %3194 = vmatpush.msra.mxu0 0.0
        %3195 = vmatpush.msra.mxu0 0.0
        %3196 = vmatpush.msra.mxu0 0.0
        %3197 = vmatpush.msra.mxu0 0.0
        %3198 = vmatpush.msra.mxu0 0.0
        %3199 = vmatpush.msra.mxu0 %v2361
        %3200 = vmatpush.msra.mxu0 %v2359
        %3201 = vmatmul.f32.gmra.mxu0 %v3157
        %v3202 = vpop.f32.mrf.mxu0
        %v3203 = vadd.f32 0.0, %v3202
        %3204 = vmatmul.f32.gmra.mxu0 %v3160
        %v3205 = vpop.f32.mrf.mxu0
        %v3206 = vadd.f32 0.0, %v3205
        %3207 = vdwg.mxu0
        %v3208 = vmul.f32 %v3180, %v2414
        %v3209 = vmul.f32 %v3203, %v2415
        %v3210 = vmul.f32 %v3183, %v2416
        %v3211 = vmul.f32 %v3206, %v2417
        %3212 = vmatpush.msra.mxu0 %v2377
        %3213 = vmatpush.msra.mxu0 %v2376
        %3214 = vmatpush.msra.mxu0 %v2375
        %3215 = vmatpush.msra.mxu0 %v2374
        %3216 = vmatpush.msra.mxu0 %v2373
        %3217 = vmatpush.msra.mxu0 %v2372
        %3218 = vmatpush.msra.mxu0 %v2371
        %3219 = vmatpush.msra.mxu0 %v2370
        %3220 = vmatpush.msra.mxu0 %v2369
        %3221 = vmatpush.msra.mxu0 %v2368
        %3222 = vmatpush.msra.mxu0 %v2367
        %3223 = vmatpush.msra.mxu0 %v2366
        %3224 = vmatpush.msra.mxu0 %v2365
        %3225 = vmatpush.msra.mxu0 %v2364
        %3226 = vmatpush.msra.mxu0 %v2363
        %3227 = vmatpush.msra.mxu0 %v2362
        %3228 = vmatmul.f32.gmra.mxu0 %v3208
        %v3229 = vpop.f32.mrf.mxu0
        %v3230 = vadd.f32 0.0, %v3229
        %3231 = vmatmul.f32.gmra.mxu0 %v3210
        %v3232 = vpop.f32.mrf.mxu0
        %v3233 = vadd.f32 0.0, %v3232
        %3234 = vdwg.mxu0
        %3235 = vmatpush.msra.mxu0 %v2393
        %3236 = vmatpush.msra.mxu0 %v2392
        %3237 = vmatpush.msra.mxu0 %v2391
        %3238 = vmatpush.msra.mxu0 %v2390
        %3239 = vmatpush.msra.mxu0 %v2389
        %3240 = vmatpush.msra.mxu0 %v2388
        %3241 = vmatpush.msra.mxu0 %v2387
        %3242 = vmatpush.msra.mxu0 %v2386
        %3243 = vmatpush.msra.mxu0 %v2385
        %3244 = vmatpush.msra.mxu0 %v2384
        %3245 = vmatpush.msra.mxu0 %v2383
        %3246 = vmatpush.msra.mxu0 %v2382
        %3247 = vmatpush.msra.mxu0 %v2381
        %3248 = vmatpush.msra.mxu0 %v2380
        %3249 = vmatpush.msra.mxu0 %v2379
        %3250 = vmatpush.msra.mxu0 %v2378
        %3251 = vmatmul.f32.gmra.mxu0 %v3209
        %v3252 = vpop.f32.mrf.mxu0
        %v3253 = vadd.f32 %v3230, %v3252
        %3254 = vmatmul.f32.gmra.mxu0 %v3211
        %v3255 = vpop.f32.mrf.mxu0
        %v3256 = vadd.f32 %v3233, %v3255
        %3257 = vdwg.mxu0
        %3258 = vmatpush.msra.mxu0 0.0
        %3259 = vmatpush.msra.mxu0 0.0
        %3260 = vmatpush.msra.mxu0 0.0
        %3261 = vmatpush.msra.mxu0 0.0
        %3262 = vmatpush.msra.mxu0 0.0
        %3263 = vmatpush.msra.mxu0 0.0
        %3264 = vmatpush.msra.mxu0 0.0
        %3265 = vmatpush.msra.mxu0 0.0
        %3266 = vmatpush.msra.mxu0 0.0
        %3267 = vmatpush.msra.mxu0 0.0
        %3268 = vmatpush.msra.mxu0 0.0
        %3269 = vmatpush.msra.mxu0 0.0
        %3270 = vmatpush.msra.mxu0 0.0
        %3271 = vmatpush.msra.mxu0 0.0
        %3272 = vmatpush.msra.mxu0 %v2967
        %3273 = vmatpush.msra.mxu0 %v2964
        %3274 = vmatmul.f32.gmra.mxu0 %v3157
        %v3275 = vpop.f32.mrf.mxu0
        %v3276 = vadd.f32 %v3253, %v3275
        %3277 = vmatmul.f32.gmra.mxu0 %v3160
        %v3278 = vpop.f32.mrf.mxu0
        %v3279 = vadd.f32 %v3256, %v3278
        %3280 = vdwg.mxu0
        %s3281 = scalar_lea.vmem [#allocation16], 16
        %v3282 = vld [vmem:[%s3281] sm:$0xff]
        %v3283 = vld [vmem:[%s3281 + $0x8] sm:$0xff]
        %v3285 = vsel %vm2519, %v3276, 0
        %v3288 = vsel %vm2519, %v3279, 0
        %3290 = vmatpush.msra.mxu0 0.0
        %3291 = vmatpush.msra.mxu0 0.0
        %3292 = vmatpush.msra.mxu0 0.0
        %3293 = vmatpush.msra.mxu0 0.0
        %3294 = vmatpush.msra.mxu0 0.0
        %3295 = vmatpush.msra.mxu0 0.0
        %3296 = vmatpush.msra.mxu0 0.0
        %3297 = vmatpush.msra.mxu0 0.0
        %3298 = vmatpush.msra.mxu0 0.0
        %3299 = vmatpush.msra.mxu0 0.0
        %3300 = vmatpush.msra.mxu0 0.0
        %3301 = vmatpush.msra.mxu0 0.0
        %3302 = vmatpush.msra.mxu0 0.0
        %3303 = vmatpush.msra.mxu0 0.0
        %3304 = vmatpush.msra.mxu0 %v3283
        %3305 = vmatpush.msra.mxu0 %v3282
        %3306 = vmatmul.f32.gmra.mxu0 %v3285
        %v3307 = vpop.f32.mrf.mxu0
        %v3308 = vadd.f32 0.0, %v3307
        %3309 = vmatmul.f32.gmra.mxu0 %v3288
        %v3310 = vpop.f32.mrf.mxu0
        %v3311 = vadd.f32 0.0, %v3310
        %3312 = vdwg.mxu0
        %v3313 = vadd.f32 %v2868, %v3308
        %v3314 = vadd.f32 %v2869, %v3311
        %v3315 = vadd.f32 %v2408, %v3313
        %v3316 = vadd.f32 %v2409, %v3314
        %v3317 = vld [vmem:[%s39] sm:$0x1]
        %v3318 = vld [vmem:[%s41] sm:$0x1]
        %v3319 = vsel %vm2427, %v3315, 0.0
        %3320 = vadd.xlane.f32.xlu0 %v3319
        %v3321 = vpop.xlane.xlu0 %3320
        %v3322 = vsel %vm2427, %v3316, 0.0
        %3323 = vadd.xlane.f32.xlu0 %v3322
        %v3324 = vpop.xlane.xlu0 %3323
        %v3325 = vrcp.pop 32.0
        %v3326 = vmul.f32 32.0, %v3325
        %v3327 = vsub.f32 1.0, %v3326
        %v3328 = vmul.f32 %v3325, %v3327
        %v3329 = vadd.f32 %v3325, %v3328
        %vm3330 = vweird.f32 %v3325
        %v3331 = vsel %vm3330, %v3325, %v3329
        %v3332 = vmul.f32 %v3321, %v3331
        %v3333 = vmul.f32 %v3324, %v3331
        %v3334 = vsub.f32 %v3315, %v3332
        %v3335 = vsub.f32 %v3316, %v3333
        %v3336 = vmul.f32 %v3334, %v3334
        %v3337 = vmul.f32 %v3335, %v3335
        %v3338 = vsel %vm2427, %v3336, 0.0
        %3339 = vadd.xlane.f32.xlu0 %v3338
        %v3340 = vpop.xlane.xlu0 %3339
        %v3341 = vsel %vm2427, %v3337, 0.0
        %3342 = vadd.xlane.f32.xlu0 %v3341
        %v3343 = vpop.xlane.xlu0 %3342
        %v3344 = vmul.f32 %v3340, %v3331
        %v3345 = vmul.f32 %v3343, %v3331
        %v3346 = vadd.f32 %v3344, 0.0001
        %v3347 = vadd.f32 %v3345, 0.0001
        %v3348 = vrsqrt.pop %v3346
        %v3349 = vmul.f32 %v3348, %v3346
        %v3350 = vmul.f32 %v3349, %v3348
        %v3351 = vmul.f32 0.5, %v3350
        %v3352 = vsub.f32 1.5, %v3351
        %v3353 = vmul.f32 %v3348, %v3352
        %vm3354 = vweird.f32 %v3346
        %vm3355 = vweird.f32 %v3348
        %vm3356 = vmor %vm3354, %vm3355
        %v3357 = vsel %vm3356, %v3348, %v3353
        %v3358 = vrsqrt.pop %v3347
        %v3359 = vmul.f32 %v3358, %v3347
        %v3360 = vmul.f32 %v3359, %v3358
        %v3361 = vmul.f32 0.5, %v3360
        %v3362 = vsub.f32 1.5, %v3361
        %v3363 = vmul.f32 %v3358, %v3362
        %vm3364 = vweird.f32 %v3347
        %vm3365 = vweird.f32 %v3358
        %vm3366 = vmor %vm3364, %vm3365
        %v3367 = vsel %vm3366, %v3358, %v3363
        %v3368 = vmul.f32 %v3334, %v3357
        %v3369 = vmul.f32 %v3335, %v3367
        %v3371 = vperm.slane %v3317, 0
        %v3373 = vmul.f32 %v3368, %v3371
        %v3374 = vmul.f32 %v3369, %v3371
        %v3376 = vperm.slane %v3318, 0
        %v3378 = vadd.f32 %v3373, %v3376
        %v3379 = vadd.f32 %v3374, %v3376
        %v3380 = vmul.f32 %v3378, %v2401
        %v3381 = vmul.f32 %v3379, %v2406
        %v3382 = vld [vmem:[#allocation20] sm:$0x1]
        %v3383 = vld [vmem:[%s43] sm:$0xff]
        %v3384 = vld [vmem:[%s43 + $0x8] sm:$0xff]
        %v3385 = vld [vmem:[%s43 + $0x10] sm:$0xff]
        %v3386 = vld [vmem:[%s43 + $0x18] sm:$0xff]
        %v3388 = vsel %vm2427, %v3380, 0
        %v3391 = vsel %vm2427, %v3381, 0
        %3393 = vmatpush.msra.mxu0 0.0
        %3394 = vmatpush.msra.mxu0 0.0
        %3395 = vmatpush.msra.mxu0 0.0
        %3396 = vmatpush.msra.mxu0 0.0
        %3397 = vmatpush.msra.mxu0 0.0
        %3398 = vmatpush.msra.mxu0 0.0
        %3399 = vmatpush.msra.mxu0 0.0
        %3400 = vmatpush.msra.mxu0 0.0
        %3401 = vmatpush.msra.mxu0 0.0
        %3402 = vmatpush.msra.mxu0 0.0
        %3403 = vmatpush.msra.mxu0 0.0
        %3404 = vmatpush.msra.mxu0 0.0
        %3405 = vmatpush.msra.mxu0 %v3386
        %3406 = vmatpush.msra.mxu0 %v3385
        %3407 = vmatpush.msra.mxu0 %v3384
        %3408 = vmatpush.msra.mxu0 %v3383
        %3409 = vmatmul.f32.gmra.mxu0 %v3388
        %v3410 = vpop.f32.mrf.mxu0
        %v3411 = vadd.f32 0.0, %v3410
        %3412 = vmatmul.f32.gmra.mxu0 %v3391
        %v3413 = vpop.f32.mrf.mxu0
        %v3414 = vadd.f32 0.0, %v3413
        %3415 = vdwg.mxu0
        %s3416 = scalar_lea.vmem %s43, 32
        %v3417 = vld [vmem:[%s3416] sm:$0xff]
        %v3418 = vld [vmem:[%s3416 + $0x8] sm:$0xff]
        %v3419 = vld [vmem:[%s3416 + $0x10] sm:$0xff]
        %v3420 = vld [vmem:[%s3416 + $0x18] sm:$0xff]
        %s3421 = scalar_lea.vmem %s43, 64
        %v3422 = vld [vmem:[%s3421] sm:$0xff]
        %v3423 = vld [vmem:[%s3421 + $0x8] sm:$0xff]
        %v3424 = vld [vmem:[%s3421 + $0x10] sm:$0xff]
        %v3425 = vld [vmem:[%s3421 + $0x18] sm:$0xff]
        %3426 = vmatpush.msra.mxu0 0.0
        %3427 = vmatpush.msra.mxu0 0.0
        %3428 = vmatpush.msra.mxu0 0.0
        %3429 = vmatpush.msra.mxu0 0.0
        %3430 = vmatpush.msra.mxu0 0.0
        %3431 = vmatpush.msra.mxu0 0.0
        %3432 = vmatpush.msra.mxu0 0.0
        %3433 = vmatpush.msra.mxu0 0.0
        %3434 = vmatpush.msra.mxu0 0.0
        %3435 = vmatpush.msra.mxu0 0.0
        %3436 = vmatpush.msra.mxu0 0.0
        %3437 = vmatpush.msra.mxu0 0.0
        %3438 = vmatpush.msra.mxu0 %v3425
        %3439 = vmatpush.msra.mxu0 %v3424
        %3440 = vmatpush.msra.mxu0 %v3423
        %3441 = vmatpush.msra.mxu0 %v3422
        %3442 = vmatmul.f32.gmra.mxu0 %v3388
        %v3443 = vpop.f32.mrf.mxu0
        %v3444 = vadd.f32 0.0, %v3443
        %3445 = vmatmul.f32.gmra.mxu0 %v3391
        %v3446 = vpop.f32.mrf.mxu0
        %v3447 = vadd.f32 0.0, %v3446
        %3448 = vdwg.mxu0
        %v3450 = vsel %vm2519, %v2394, 0
        %v3453 = vsel %vm2519, %v2395, 0
        %3455 = vmatpush.msra.mxu0 0.0
        %3456 = vmatpush.msra.mxu0 0.0
        %3457 = vmatpush.msra.mxu0 0.0
        %3458 = vmatpush.msra.mxu0 0.0
        %3459 = vmatpush.msra.mxu0 0.0
        %3460 = vmatpush.msra.mxu0 0.0
        %3461 = vmatpush.msra.mxu0 0.0
        %3462 = vmatpush.msra.mxu0 0.0
        %3463 = vmatpush.msra.mxu0 0.0
        %3464 = vmatpush.msra.mxu0 0.0
        %3465 = vmatpush.msra.mxu0 0.0
        %3466 = vmatpush.msra.mxu0 0.0
        %3467 = vmatpush.msra.mxu0 0.0
        %3468 = vmatpush.msra.mxu0 0.0
        %3469 = vmatpush.msra.mxu0 %v3414
        %3470 = vmatpush.msra.mxu0 %v3411
        %3471 = vmatmul.f32.gmra.mxu0 %v3450
        %v3472 = vpop.f32.mrf.mxu0
        %v3473 = vadd.f32 0.0, %v3472
        %3474 = vmatmul.f32.gmra.mxu0 %v3453
        %v3475 = vpop.f32.mrf.mxu0
        %v3476 = vadd.f32 0.0, %v3475
        %3477 = vdwg.mxu0
        %3478 = vmatpush.msra.mxu0 0.0
        %3479 = vmatpush.msra.mxu0 0.0
        %3480 = vmatpush.msra.mxu0 0.0
        %3481 = vmatpush.msra.mxu0 0.0
        %3482 = vmatpush.msra.mxu0 0.0
        %3483 = vmatpush.msra.mxu0 0.0
        %3484 = vmatpush.msra.mxu0 0.0
        %3485 = vmatpush.msra.mxu0 0.0
        %3486 = vmatpush.msra.mxu0 0.0
        %3487 = vmatpush.msra.mxu0 0.0
        %3488 = vmatpush.msra.mxu0 0.0
        %3489 = vmatpush.msra.mxu0 0.0
        %3490 = vmatpush.msra.mxu0 %v3420
        %3491 = vmatpush.msra.mxu0 %v3419
        %3492 = vmatpush.msra.mxu0 %v3418
        %3493 = vmatpush.msra.mxu0 %v3417
        %3494 = vmatmul.f32.gmra.mxu0 %v3388
        %v3495 = vpop.f32.mrf.mxu0
        %v3496 = vadd.f32 %v3473, %v3495
        %3497 = vmatmul.f32.gmra.mxu0 %v3391
        %v3498 = vpop.f32.mrf.mxu0
        %v3499 = vadd.f32 %v3476, %v3498
        %3500 = vdwg.mxu0
        %v3502 = vsel %vm2519, %v2396, 0
        %v3505 = vsel %vm2519, %v2397, 0
        %3507 = vmatpush.msra.mxu0 0.0
        %3508 = vmatpush.msra.mxu0 0.0
        %3509 = vmatpush.msra.mxu0 0.0
        %3510 = vmatpush.msra.mxu0 0.0
        %3511 = vmatpush.msra.mxu0 0.0
        %3512 = vmatpush.msra.mxu0 0.0
        %3513 = vmatpush.msra.mxu0 0.0
        %3514 = vmatpush.msra.mxu0 0.0
        %3515 = vmatpush.msra.mxu0 0.0
        %3516 = vmatpush.msra.mxu0 0.0
        %3517 = vmatpush.msra.mxu0 0.0
        %3518 = vmatpush.msra.mxu0 0.0
        %3519 = vmatpush.msra.mxu0 0.0
        %3520 = vmatpush.msra.mxu0 0.0
        %3521 = vmatpush.msra.mxu0 %v3447
        %3522 = vmatpush.msra.mxu0 %v3444
        %3523 = vmatmul.f32.gmra.mxu0 %v3502
        %v3524 = vpop.f32.mrf.mxu0
        %v3525 = vadd.f32 0.0, %v3524
        %3526 = vmatmul.f32.gmra.mxu0 %v3505
        %v3527 = vpop.f32.mrf.mxu0
        %v3528 = vadd.f32 0.0, %v3527
        %3529 = vdwg.mxu0
        %v3530 = vadd.f32 %v3496, %v3525
        %v3531 = vadd.f32 %v3499, %v3528
        %v3533 = vperm.slane %v3382, 0
        %v3535 = vadd.f32 %v3530, %v3533
        %v3536 = vadd.f32 %v3531, %v3533
        %v3537 = vmax.f32 %v3535, 0.0
        %v3538 = vmax.f32 %v3536, 0.0
        %v3539 = vmul.f32 %v3537, %v2401
        %v3540 = vmul.f32 %v3538, %v2406
        %v3541 = vld [vmem:[#allocation23] sm:$0x1]
        %v3542 = vld [vmem:[#allocation22] sm:$0xff]
        %v3543 = vld [vmem:[#allocation22 + $0x8] sm:$0xff]
        %v3544 = vld [vmem:[#allocation22 + $0x10] sm:$0xff]
        %v3545 = vld [vmem:[#allocation22 + $0x18] sm:$0xff]
        %v3546 = vld [vmem:[#allocation22 + $0x20] sm:$0xff]
        %v3547 = vld [vmem:[#allocation22 + $0x28] sm:$0xff]
        %v3548 = vld [vmem:[#allocation22 + $0x30] sm:$0xff]
        %v3549 = vld [vmem:[#allocation22 + $0x38] sm:$0xff]
        %vm3550 = vcmask 523264
        %v3552 = vsel %vm3550, %v3539, 0
        %v3555 = vsel %vm3550, %v3540, 0
        %3557 = vmatpush.msra.mxu0 0.0
        %3558 = vmatpush.msra.mxu0 0.0
        %3559 = vmatpush.msra.mxu0 0.0
        %3560 = vmatpush.msra.mxu0 0.0
        %3561 = vmatpush.msra.mxu0 0.0
        %3562 = vmatpush.msra.mxu0 0.0
        %3563 = vmatpush.msra.mxu0 0.0
        %3564 = vmatpush.msra.mxu0 0.0
        %3565 = vmatpush.msra.mxu0 %v3549
        %3566 = vmatpush.msra.mxu0 %v3548
        %3567 = vmatpush.msra.mxu0 %v3547
        %3568 = vmatpush.msra.mxu0 %v3546
        %3569 = vmatpush.msra.mxu0 %v3545
        %3570 = vmatpush.msra.mxu0 %v3544
        %3571 = vmatpush.msra.mxu0 %v3543
        %3572 = vmatpush.msra.mxu0 %v3542
        %3573 = vmatmul.f32.gmra.mxu0 %v3552
        %v3574 = vpop.f32.mrf.mxu0
        %v3575 = vadd.f32 0.0, %v3574
        %3576 = vmatmul.f32.gmra.mxu0 %v3555
        %v3577 = vpop.f32.mrf.mxu0
        %v3578 = vadd.f32 0.0, %v3577
        %3579 = vdwg.mxu0
        %s3580 = scalar_lea.vmem [#allocation22], 64
        %v3581 = vld [vmem:[%s3580] sm:$0xff]
        %v3582 = vld [vmem:[%s3580 + $0x8] sm:$0xff]
        %v3583 = vld [vmem:[%s3580 + $0x10] sm:$0xff]
        %v3584 = vld [vmem:[%s3580 + $0x18] sm:$0xff]
        %v3585 = vld [vmem:[%s3580 + $0x20] sm:$0xff]
        %v3586 = vld [vmem:[%s3580 + $0x28] sm:$0xff]
        %v3587 = vld [vmem:[%s3580 + $0x30] sm:$0xff]
        %v3588 = vld [vmem:[%s3580 + $0x38] sm:$0xff]
        %s3589 = scalar_lea.vmem [#allocation22], 128
        %v3590 = vld [vmem:[%s3589] sm:$0xff]
        %v3591 = vld [vmem:[%s3589 + $0x8] sm:$0xff]
        %v3592 = vld [vmem:[%s3589 + $0x10] sm:$0xff]
        %v3593 = vld [vmem:[%s3589 + $0x18] sm:$0xff]
        %v3594 = vld [vmem:[%s3589 + $0x20] sm:$0xff]
        %v3595 = vld [vmem:[%s3589 + $0x28] sm:$0xff]
        %v3596 = vld [vmem:[%s3589 + $0x30] sm:$0xff]
        %v3597 = vld [vmem:[%s3589 + $0x38] sm:$0xff]
        %3598 = vmatpush.msra.mxu0 0.0
        %3599 = vmatpush.msra.mxu0 0.0
        %3600 = vmatpush.msra.mxu0 0.0
        %3601 = vmatpush.msra.mxu0 0.0
        %3602 = vmatpush.msra.mxu0 0.0
        %3603 = vmatpush.msra.mxu0 0.0
        %3604 = vmatpush.msra.mxu0 0.0
        %3605 = vmatpush.msra.mxu0 0.0
        %3606 = vmatpush.msra.mxu0 %v3597
        %3607 = vmatpush.msra.mxu0 %v3596
        %3608 = vmatpush.msra.mxu0 %v3595
        %3609 = vmatpush.msra.mxu0 %v3594
        %3610 = vmatpush.msra.mxu0 %v3593
        %3611 = vmatpush.msra.mxu0 %v3592
        %3612 = vmatpush.msra.mxu0 %v3591
        %3613 = vmatpush.msra.mxu0 %v3590
        %3614 = vmatmul.f32.gmra.mxu0 %v3552
        %v3615 = vpop.f32.mrf.mxu0
        %v3616 = vadd.f32 0.0, %v3615
        %3617 = vmatmul.f32.gmra.mxu0 %v3555
        %v3618 = vpop.f32.mrf.mxu0
        %v3619 = vadd.f32 0.0, %v3618
        %3620 = vdwg.mxu0
        %3621 = vmatpush.msra.mxu0 0.0
        %3622 = vmatpush.msra.mxu0 0.0
        %3623 = vmatpush.msra.mxu0 0.0
        %3624 = vmatpush.msra.mxu0 0.0
        %3625 = vmatpush.msra.mxu0 0.0
        %3626 = vmatpush.msra.mxu0 0.0
        %3627 = vmatpush.msra.mxu0 0.0
        %3628 = vmatpush.msra.mxu0 0.0
        %3629 = vmatpush.msra.mxu0 0.0
        %3630 = vmatpush.msra.mxu0 0.0
        %3631 = vmatpush.msra.mxu0 0.0
        %3632 = vmatpush.msra.mxu0 0.0
        %3633 = vmatpush.msra.mxu0 0.0
        %3634 = vmatpush.msra.mxu0 0.0
        %3635 = vmatpush.msra.mxu0 %v3578
        %3636 = vmatpush.msra.mxu0 %v3575
        %3637 = vmatmul.f32.gmra.mxu0 %v3450
        %v3638 = vpop.f32.mrf.mxu0
        %v3639 = vadd.f32 0.0, %v3638
        %3640 = vmatmul.f32.gmra.mxu0 %v3453
        %v3641 = vpop.f32.mrf.mxu0
        %v3642 = vadd.f32 0.0, %v3641
        %3643 = vdwg.mxu0
        %3644 = vmatpush.msra.mxu0 0.0
        %3645 = vmatpush.msra.mxu0 0.0
        %3646 = vmatpush.msra.mxu0 0.0
        %3647 = vmatpush.msra.mxu0 0.0
        %3648 = vmatpush.msra.mxu0 0.0
        %3649 = vmatpush.msra.mxu0 0.0
        %3650 = vmatpush.msra.mxu0 0.0
        %3651 = vmatpush.msra.mxu0 0.0
        %3652 = vmatpush.msra.mxu0 %v3588
        %3653 = vmatpush.msra.mxu0 %v3587
        %3654 = vmatpush.msra.mxu0 %v3586
        %3655 = vmatpush.msra.mxu0 %v3585
        %3656 = vmatpush.msra.mxu0 %v3584
        %3657 = vmatpush.msra.mxu0 %v3583
        %3658 = vmatpush.msra.mxu0 %v3582
        %3659 = vmatpush.msra.mxu0 %v3581
        %3660 = vmatmul.f32.gmra.mxu0 %v3552
        %v3661 = vpop.f32.mrf.mxu0
        %v3662 = vadd.f32 %v3639, %v3661
        %3663 = vmatmul.f32.gmra.mxu0 %v3555
        %v3664 = vpop.f32.mrf.mxu0
        %v3665 = vadd.f32 %v3642, %v3664
        %3666 = vdwg.mxu0
        %3667 = vmatpush.msra.mxu0 0.0
        %3668 = vmatpush.msra.mxu0 0.0
        %3669 = vmatpush.msra.mxu0 0.0
        %3670 = vmatpush.msra.mxu0 0.0
        %3671 = vmatpush.msra.mxu0 0.0
        %3672 = vmatpush.msra.mxu0 0.0
        %3673 = vmatpush.msra.mxu0 0.0
        %3674 = vmatpush.msra.mxu0 0.0
        %3675 = vmatpush.msra.mxu0 0.0
        %3676 = vmatpush.msra.mxu0 0.0
        %3677 = vmatpush.msra.mxu0 0.0
        %3678 = vmatpush.msra.mxu0 0.0
        %3679 = vmatpush.msra.mxu0 0.0
        %3680 = vmatpush.msra.mxu0 0.0
        %3681 = vmatpush.msra.mxu0 %v3619
        %3682 = vmatpush.msra.mxu0 %v3616
        %3683 = vmatmul.f32.gmra.mxu0 %v3502
        %v3684 = vpop.f32.mrf.mxu0
        %v3685 = vadd.f32 0.0, %v3684
        %3686 = vmatmul.f32.gmra.mxu0 %v3505
        %v3687 = vpop.f32.mrf.mxu0
        %v3688 = vadd.f32 0.0, %v3687
        %3689 = vdwg.mxu0
        %v3690 = vadd.f32 %v3662, %v3685
        %v3691 = vadd.f32 %v3665, %v3688
        %v3693 = vperm.slane %v3541, 0
        %v3695 = vadd.f32 %v3690, %v3693
        %v3696 = vadd.f32 %v3691, %v3693
        %v3697 = vmul.f32 %v3695, %v2401
        %v3698 = vmul.f32 %v3696, %v2406
        %v3699 = vadd.f32 %v3378, %v3697
        %v3700 = vadd.f32 %v3379, %v3698
        %v3701 = vld [vmem:[%s51] sm:$0x1]
        %v3702 = vld [vmem:[%s53] sm:$0x1]
        %v3703 = vsel %vm2427, %v3699, 0.0
        %3704 = vadd.xlane.f32.xlu0 %v3703
        %v3705 = vpop.xlane.xlu0 %3704
        %v3706 = vsel %vm2427, %v3700, 0.0
        %3707 = vadd.xlane.f32.xlu0 %v3706
        %v3708 = vpop.xlane.xlu0 %3707
        %v3709 = vmul.f32 %v3705, %v3331
        %v3710 = vmul.f32 %v3708, %v3331
        %v3711 = vsub.f32 %v3699, %v3709
        %v3712 = vsub.f32 %v3700, %v3710
        %v3713 = vmul.f32 %v3711, %v3711
        %v3714 = vmul.f32 %v3712, %v3712
        %v3715 = vsel %vm2427, %v3713, 0.0
        %3716 = vadd.xlane.f32.xlu0 %v3715
        %v3717 = vpop.xlane.xlu0 %3716
        %v3718 = vsel %vm2427, %v3714, 0.0
        %3719 = vadd.xlane.f32.xlu0 %v3718
        %v3720 = vpop.xlane.xlu0 %3719
        %v3721 = vmul.f32 %v3717, %v3331
        %v3722 = vmul.f32 %v3720, %v3331
        %v3723 = vadd.f32 %v3721, 0.0001
        %v3724 = vadd.f32 %v3722, 0.0001
        %v3725 = vrsqrt.pop %v3723
        %v3726 = vmul.f32 %v3725, %v3723
        %v3727 = vmul.f32 %v3726, %v3725
        %v3728 = vmul.f32 0.5, %v3727
        %v3729 = vsub.f32 1.5, %v3728
        %v3730 = vmul.f32 %v3725, %v3729
        %vm3731 = vweird.f32 %v3723
        %vm3732 = vweird.f32 %v3725
        %vm3733 = vmor %vm3731, %vm3732
        %v3734 = vsel %vm3733, %v3725, %v3730
        %v3735 = vrsqrt.pop %v3724
        %v3736 = vmul.f32 %v3735, %v3724
        %v3737 = vmul.f32 %v3736, %v3735
        %v3738 = vmul.f32 0.5, %v3737
        %v3739 = vsub.f32 1.5, %v3738
        %v3740 = vmul.f32 %v3735, %v3739
        %vm3741 = vweird.f32 %v3724
        %vm3742 = vweird.f32 %v3735
        %vm3743 = vmor %vm3741, %vm3742
        %v3744 = vsel %vm3743, %v3735, %v3740
        %v3745 = vmul.f32 %v3711, %v3734
        %v3746 = vmul.f32 %v3712, %v3744
        %v3748 = vperm.slane %v3701, 0
        %v3750 = vmul.f32 %v3745, %v3748
        %v3751 = vmul.f32 %v3746, %v3748
        %v3753 = vperm.slane %v3702, 0
        %v3755 = vadd.f32 %v3750, %v3753
        %v3756 = vadd.f32 %v3751, %v3753
        %v3757 = vmul.f32 %v3755, %v2401
        %v3758 = vmul.f32 %v3756, %v2406
        %v3759 = vld [vmem:[#allocation37] sm:$0xff]
        %v3760 = vld [vmem:[#allocation37 + $0x8] sm:$0xff]
        %v3761 = vld [vmem:[#allocation37 + $0x10] sm:$0xff]
        %v3762 = vld [vmem:[#allocation37 + $0x18] sm:$0xff]
        %v3763 = vld [vmem:[#allocation38] sm:$0xff]
        %v3764 = vld [vmem:[#allocation38 + $0x8] sm:$0xff]
        %v3765 = vld [vmem:[#allocation38 + $0x10] sm:$0xff]
        %v3766 = vld [vmem:[#allocation38 + $0x18] sm:$0xff]
        %v3767 = vld [vmem:[#allocation35] sm:$0x1]
        %v3768 = vld [vmem:[#allocation25] sm:$0xff]
        %v3769 = vld [vmem:[#allocation25 + $0x8] sm:$0xff]
        %v3770 = vld [vmem:[#allocation25 + $0x10] sm:$0xff]
        %v3771 = vld [vmem:[#allocation25 + $0x18] sm:$0xff]
        %v3772 = vld [vmem:[#allocation29] sm:$0x1]
        %v3774 = vperm.slane %v3772, 0
        %v3777 = vsel %vm2427, %v3757, 0
        %v3780 = vsel %vm2427, %v3758, 0
        %3782 = vmatpush.msra.mxu0 0.0
        %3783 = vmatpush.msra.mxu0 0.0
        %3784 = vmatpush.msra.mxu0 0.0
        %3785 = vmatpush.msra.mxu0 0.0
        %3786 = vmatpush.msra.mxu0 0.0
        %3787 = vmatpush.msra.mxu0 0.0
        %3788 = vmatpush.msra.mxu0 0.0
        %3789 = vmatpush.msra.mxu0 0.0
        %3790 = vmatpush.msra.mxu0 0.0
        %3791 = vmatpush.msra.mxu0 0.0
        %3792 = vmatpush.msra.mxu0 0.0
        %3793 = vmatpush.msra.mxu0 0.0
        %3794 = vmatpush.msra.mxu0 %v3771
        %3795 = vmatpush.msra.mxu0 %v3770
        %3796 = vmatpush.msra.mxu0 %v3769
        %3797 = vmatpush.msra.mxu0 %v3768
        %3798 = vmatmul.f32.gmra.mxu0 %v3777
        %v3799 = vpop.f32.mrf.mxu0
        %v3800 = vadd.f32 %v3774, %v3799
        %3801 = vmatmul.f32.gmra.mxu0 %v3780
        %v3802 = vpop.f32.mrf.mxu0
        %v3803 = vadd.f32 %v3774, %v3802
        %3804 = vdwg.mxu0
        %v3805 = vld [vmem:[#allocation26] sm:$0xff]
        %v3806 = vld [vmem:[#allocation26 + $0x8] sm:$0xff]
        %v3807 = vld [vmem:[#allocation26 + $0x10] sm:$0xff]
        %v3808 = vld [vmem:[#allocation26 + $0x18] sm:$0xff]
        %v3809 = vld [vmem:[#allocation31] sm:$0x1]
        %v3811 = vperm.slane %v3809, 0
        %3813 = vmatpush.msra.mxu0 0.0
        %3814 = vmatpush.msra.mxu0 0.0
        %3815 = vmatpush.msra.mxu0 0.0
        %3816 = vmatpush.msra.mxu0 0.0
        %3817 = vmatpush.msra.mxu0 0.0
        %3818 = vmatpush.msra.mxu0 0.0
        %3819 = vmatpush.msra.mxu0 0.0
        %3820 = vmatpush.msra.mxu0 0.0
        %3821 = vmatpush.msra.mxu0 0.0
        %3822 = vmatpush.msra.mxu0 0.0
        %3823 = vmatpush.msra.mxu0 0.0
        %3824 = vmatpush.msra.mxu0 0.0
        %3825 = vmatpush.msra.mxu0 %v3808
        %3826 = vmatpush.msra.mxu0 %v3807
        %3827 = vmatpush.msra.mxu0 %v3806
        %3828 = vmatpush.msra.mxu0 %v3805
        %3829 = vmatmul.f32.gmra.mxu0 %v3777
        %v3830 = vpop.f32.mrf.mxu0
        %v3831 = vadd.f32 %v3811, %v3830
        %3832 = vmatmul.f32.gmra.mxu0 %v3780
        %v3833 = vpop.f32.mrf.mxu0
        %v3834 = vadd.f32 %v3811, %v3833
        %3835 = vdwg.mxu0
        %v3836 = vld [vmem:[#allocation28] sm:$0xff]
        %v3837 = vld [vmem:[#allocation28 + $0x8] sm:$0xff]
        %v3838 = vld [vmem:[#allocation28 + $0x10] sm:$0xff]
        %v3839 = vld [vmem:[#allocation28 + $0x18] sm:$0xff]
        %v3840 = vld [vmem:[#allocation32] sm:$0x1]
        %v3842 = vperm.slane %v3840, 0
        %3844 = vmatpush.msra.mxu0 0.0
        %3845 = vmatpush.msra.mxu0 0.0
        %3846 = vmatpush.msra.mxu0 0.0
        %3847 = vmatpush.msra.mxu0 0.0
        %3848 = vmatpush.msra.mxu0 0.0
        %3849 = vmatpush.msra.mxu0 0.0
        %3850 = vmatpush.msra.mxu0 0.0
        %3851 = vmatpush.msra.mxu0 0.0
        %3852 = vmatpush.msra.mxu0 0.0
        %3853 = vmatpush.msra.mxu0 0.0
        %3854 = vmatpush.msra.mxu0 0.0
        %3855 = vmatpush.msra.mxu0 0.0
        %3856 = vmatpush.msra.mxu0 %v3839
        %3857 = vmatpush.msra.mxu0 %v3838
        %3858 = vmatpush.msra.mxu0 %v3837
        %3859 = vmatpush.msra.mxu0 %v3836
        %3860 = vmatmul.f32.gmra.mxu0 %v3777
        %v3861 = vpop.f32.mrf.mxu0
        %v3862 = vadd.f32 %v3842, %v3861
        %3863 = vmatmul.f32.gmra.mxu0 %v3780
        %v3864 = vpop.f32.mrf.mxu0
        %v3865 = vadd.f32 %v3842, %v3864
        %3866 = vdwg.mxu0
        %v3868 = vsel %vm2519, %v3800, 0
        %v3871 = vsel %vm2519, %v3803, 0
        %v3874 = vsel %vm2519, %v3831, 0
        %v3877 = vsel %vm2519, %v3834, 0
        %3879 = vmatpush.xpose.msra.mxu0 0.0
        %3880 = vmatpush.xpose.msra.mxu0 0.0
        %3881 = vmatpush.xpose.msra.mxu0 0.0
        %3882 = vmatpush.xpose.msra.mxu0 0.0
        %3883 = vmatpush.xpose.msra.mxu0 0.0
        %3884 = vmatpush.xpose.msra.mxu0 0.0
        %3885 = vmatpush.xpose.msra.mxu0 0.0
        %3886 = vmatpush.xpose.msra.mxu0 0.0
        %3887 = vmatpush.xpose.msra.mxu0 0.0
        %3888 = vmatpush.xpose.msra.mxu0 0.0
        %3889 = vmatpush.xpose.msra.mxu0 0.0
        %3890 = vmatpush.xpose.msra.mxu0 0.0
        %3891 = vmatpush.xpose.msra.mxu0 0.0
        %3892 = vmatpush.xpose.msra.mxu0 0.0
        %3893 = vmatpush.xpose.msra.mxu0 %v3877
        %3894 = vmatpush.xpose.msra.mxu0 %v3874
        %3895 = vmatmul.f32.gmra.mxu0 %v3868
        %v3896 = vpop.f32.mrf.mxu0
        %v3897 = vadd.f32 0.0, %v3896
        %3898 = vmatmul.f32.gmra.mxu0 %v3871
        %v3899 = vpop.f32.mrf.mxu0
        %v3900 = vadd.f32 0.0, %v3899
        %3901 = vdwg.mxu0
        %v3902 = vmul.f32 %v3897, 0.25
        %v3903 = vmul.f32 %v3900, 0.25
        %3904 = vmatpush.msra.mxu0 0.0
        %3905 = vmatpush.msra.mxu0 0.0
        %3906 = vmatpush.msra.mxu0 0.0
        %3907 = vmatpush.msra.mxu0 0.0
        %3908 = vmatpush.msra.mxu0 0.0
        %3909 = vmatpush.msra.mxu0 0.0
        %3910 = vmatpush.msra.mxu0 0.0
        %3911 = vmatpush.msra.mxu0 0.0
        %3912 = vmatpush.msra.mxu0 0.0
        %3913 = vmatpush.msra.mxu0 0.0
        %3914 = vmatpush.msra.mxu0 0.0
        %3915 = vmatpush.msra.mxu0 0.0
        %3916 = vmatpush.msra.mxu0 0.0
        %3917 = vmatpush.msra.mxu0 0.0
        %3918 = vmatpush.msra.mxu0 %v2324
        %3919 = vmatpush.msra.mxu0 %v2322
        %3920 = vmatmul.f32.gmra.mxu0 %v3868
        %v3921 = vpop.f32.mrf.mxu0
        %v3922 = vadd.f32 0.0, %v3921
        %3923 = vmatmul.f32.gmra.mxu0 %v3871
        %v3924 = vpop.f32.mrf.mxu0
        %v3925 = vadd.f32 0.0, %v3924
        %3926 = vdwg.mxu0
        %3927 = vmatpush.msra.mxu0 0.0
        %3928 = vmatpush.msra.mxu0 0.0
        %3929 = vmatpush.msra.mxu0 0.0
        %3930 = vmatpush.msra.mxu0 0.0
        %3931 = vmatpush.msra.mxu0 0.0
        %3932 = vmatpush.msra.mxu0 0.0
        %3933 = vmatpush.msra.mxu0 0.0
        %3934 = vmatpush.msra.mxu0 0.0
        %3935 = vmatpush.msra.mxu0 0.0
        %3936 = vmatpush.msra.mxu0 0.0
        %3937 = vmatpush.msra.mxu0 0.0
        %3938 = vmatpush.msra.mxu0 0.0
        %3939 = vmatpush.msra.mxu0 0.0
        %3940 = vmatpush.msra.mxu0 0.0
        %3941 = vmatpush.msra.mxu0 %v2325
        %3942 = vmatpush.msra.mxu0 %v2323
        %3943 = vmatmul.f32.gmra.mxu0 %v3868
        %v3944 = vpop.f32.mrf.mxu0
        %v3945 = vadd.f32 0.0, %v3944
        %3946 = vmatmul.f32.gmra.mxu0 %v3871
        %v3947 = vpop.f32.mrf.mxu0
        %v3948 = vadd.f32 0.0, %v3947
        %3949 = vdwg.mxu0
        %v3950 = vmul.f32 %v3922, %v3759
        %v3951 = vmul.f32 %v3945, %v3760
        %v3952 = vmul.f32 %v3925, %v3761
        %v3953 = vmul.f32 %v3948, %v3762
        %3954 = vmatpush.msra.mxu0 %v2341
        %3955 = vmatpush.msra.mxu0 %v2340
        %3956 = vmatpush.msra.mxu0 %v2339
        %3957 = vmatpush.msra.mxu0 %v2338
        %3958 = vmatpush.msra.mxu0 %v2337
        %3959 = vmatpush.msra.mxu0 %v2336
        %3960 = vmatpush.msra.mxu0 %v2335
        %3961 = vmatpush.msra.mxu0 %v2334
        %3962 = vmatpush.msra.mxu0 %v2333
        %3963 = vmatpush.msra.mxu0 %v2332
        %3964 = vmatpush.msra.mxu0 %v2331
        %3965 = vmatpush.msra.mxu0 %v2330
        %3966 = vmatpush.msra.mxu0 %v2329
        %3967 = vmatpush.msra.mxu0 %v2328
        %3968 = vmatpush.msra.mxu0 %v2327
        %3969 = vmatpush.msra.mxu0 %v2326
        %3970 = vmatmul.f32.gmra.mxu0 %v3950
        %v3971 = vpop.f32.mrf.mxu0
        %v3972 = vadd.f32 0.0, %v3971
        %3973 = vmatmul.f32.gmra.mxu0 %v3952
        %v3974 = vpop.f32.mrf.mxu0
        %v3975 = vadd.f32 0.0, %v3974
        %3976 = vdwg.mxu0
        %3977 = vmatpush.msra.mxu0 %v2357
        %3978 = vmatpush.msra.mxu0 %v2356
        %3979 = vmatpush.msra.mxu0 %v2355
        %3980 = vmatpush.msra.mxu0 %v2354
        %3981 = vmatpush.msra.mxu0 %v2353
        %3982 = vmatpush.msra.mxu0 %v2352
        %3983 = vmatpush.msra.mxu0 %v2351
        %3984 = vmatpush.msra.mxu0 %v2350
        %3985 = vmatpush.msra.mxu0 %v2349
        %3986 = vmatpush.msra.mxu0 %v2348
        %3987 = vmatpush.msra.mxu0 %v2347
        %3988 = vmatpush.msra.mxu0 %v2346
        %3989 = vmatpush.msra.mxu0 %v2345
        %3990 = vmatpush.msra.mxu0 %v2344
        %3991 = vmatpush.msra.mxu0 %v2343
        %3992 = vmatpush.msra.mxu0 %v2342
        %3993 = vmatmul.f32.gmra.mxu0 %v3951
        %v3994 = vpop.f32.mrf.mxu0
        %v3995 = vadd.f32 %v3972, %v3994
        %3996 = vmatmul.f32.gmra.mxu0 %v3953
        %v3997 = vpop.f32.mrf.mxu0
        %v3998 = vadd.f32 %v3975, %v3997
        %3999 = vdwg.mxu0
        %v4000 = vmul.f32 %v3995, 0.25
        %v4001 = vmul.f32 %v3998, 0.25
        %v4002 = vadd.f32 %v3902, %v4000
        %v4003 = vadd.f32 %v3903, %v4001
        %v4004 = vsel %vm2657, -10000.0, %v4002
        %v4005 = vsel %vm2658, -10000.0, %v4003
        %v4006 = vsel %vm2519, %v4004, -inf
        %4007 = vmax.xlane.f32.xlu0 %v4006
        %v4008 = vpop.xlane.xlu0 %4007
        %v4009 = vsel %vm2519, %v4005, -inf
        %4010 = vmax.xlane.f32.xlu0 %v4009
        %v4011 = vpop.xlane.xlu0 %4010
        %v4012 = vsub.f32 %v4004, %v4008
        %v4013 = vsub.f32 %v4005, %v4011
        %v4014 = vmul.f32 %v4012, 1.442695
        %v4015 = vpow.pop %v4014
        %v4016 = vmul.f32 %v4013, 1.442695
        %v4017 = vpow.pop %v4016
        %v4018 = vsel %vm2519, %v4015, 0.0
        %4019 = vadd.xlane.f32.xlu0 %v4018
        %v4020 = vpop.xlane.xlu0 %4019
        %v4021 = vsel %vm2519, %v4017, 0.0
        %4022 = vadd.xlane.f32.xlu0 %v4021
        %v4023 = vpop.xlane.xlu0 %4022
        %v4024 = vrcp.pop %v4020
        %v4025 = vmul.f32 %v4020, %v4024
        %v4026 = vsub.f32 1.0, %v4025
        %v4027 = vmul.f32 %v4024, %v4026
        %v4028 = vadd.f32 %v4024, %v4027
        %vm4029 = vweird.f32 %v4020
        %vm4030 = vweird.f32 %v4024
        %vm4031 = vmor %vm4029, %vm4030
        %v4032 = vsel %vm4031, %v4024, %v4028
        %v4033 = vand.u32 2147483647, %v4020
        %vm4034 = vcmp.eq.f32.partialorder %v4033, 8.507059e+37
        %v4035 = vand.u32 %v4020, 2147483648
        %v4036 = vor.u32 1.1754944e-38, %v4035
        %v4037 = vsel %vm4034, %v4036, %v4032
        %v4038 = vmul.f32 %v4015, %v4037
        %v4039 = vrcp.pop %v4023
        %v4040 = vmul.f32 %v4023, %v4039
        %v4041 = vsub.f32 1.0, %v4040
        %v4042 = vmul.f32 %v4039, %v4041
        %v4043 = vadd.f32 %v4039, %v4042
        %vm4044 = vweird.f32 %v4023
        %vm4045 = vweird.f32 %v4039
        %vm4046 = vmor %vm4044, %vm4045
        %v4047 = vsel %vm4046, %v4039, %v4043
        %v4048 = vand.u32 2147483647, %v4023
        %vm4049 = vcmp.eq.f32.partialorder %v4048, 8.507059e+37
        %v4050 = vand.u32 %v4023, 2147483648
        %v4051 = vor.u32 1.1754944e-38, %v4050
        %v4052 = vsel %vm4049, %v4051, %v4047
        %v4053 = vmul.f32 %v4017, %v4052
        %v4055 = vsel %vm2519, %v4038, 0
        %v4058 = vsel %vm2519, %v4053, 0
        %4060 = vmatpush.msra.mxu0 0.0
        %4061 = vmatpush.msra.mxu0 0.0
        %4062 = vmatpush.msra.mxu0 0.0
        %4063 = vmatpush.msra.mxu0 0.0
        %4064 = vmatpush.msra.mxu0 0.0
        %4065 = vmatpush.msra.mxu0 0.0
        %4066 = vmatpush.msra.mxu0 0.0
        %4067 = vmatpush.msra.mxu0 0.0
        %4068 = vmatpush.msra.mxu0 0.0
        %4069 = vmatpush.msra.mxu0 0.0
        %4070 = vmatpush.msra.mxu0 0.0
        %4071 = vmatpush.msra.mxu0 0.0
        %4072 = vmatpush.msra.mxu0 0.0
        %4073 = vmatpush.msra.mxu0 0.0
        %4074 = vmatpush.msra.mxu0 %v2360
        %4075 = vmatpush.msra.mxu0 %v2358
        %4076 = vmatmul.f32.gmra.mxu0 %v4055
        %v4077 = vpop.f32.mrf.mxu0
        %v4078 = vadd.f32 0.0, %v4077
        %4079 = vmatmul.f32.gmra.mxu0 %v4058
        %v4080 = vpop.f32.mrf.mxu0
        %v4081 = vadd.f32 0.0, %v4080
        %4082 = vdwg.mxu0
        %4083 = vmatpush.msra.mxu0 0.0
        %4084 = vmatpush.msra.mxu0 0.0
        %4085 = vmatpush.msra.mxu0 0.0
        %4086 = vmatpush.msra.mxu0 0.0
        %4087 = vmatpush.msra.mxu0 0.0
        %4088 = vmatpush.msra.mxu0 0.0
        %4089 = vmatpush.msra.mxu0 0.0
        %4090 = vmatpush.msra.mxu0 0.0
        %4091 = vmatpush.msra.mxu0 0.0
        %4092 = vmatpush.msra.mxu0 0.0
        %4093 = vmatpush.msra.mxu0 0.0
        %4094 = vmatpush.msra.mxu0 0.0
        %4095 = vmatpush.msra.mxu0 0.0
        %4096 = vmatpush.msra.mxu0 0.0
        %4097 = vmatpush.msra.mxu0 %v2361
        %4098 = vmatpush.msra.mxu0 %v2359
        %4099 = vmatmul.f32.gmra.mxu0 %v4055
        %v4100 = vpop.f32.mrf.mxu0
        %v4101 = vadd.f32 0.0, %v4100
        %4102 = vmatmul.f32.gmra.mxu0 %v4058
        %v4103 = vpop.f32.mrf.mxu0
        %v4104 = vadd.f32 0.0, %v4103
        %4105 = vdwg.mxu0
        %v4106 = vmul.f32 %v4078, %v3763
        %v4107 = vmul.f32 %v4101, %v3764
        %v4108 = vmul.f32 %v4081, %v3765
        %v4109 = vmul.f32 %v4104, %v3766
        %4110 = vmatpush.msra.mxu0 %v2377
        %4111 = vmatpush.msra.mxu0 %v2376
        %4112 = vmatpush.msra.mxu0 %v2375
        %4113 = vmatpush.msra.mxu0 %v2374
        %4114 = vmatpush.msra.mxu0 %v2373
        %4115 = vmatpush.msra.mxu0 %v2372
        %4116 = vmatpush.msra.mxu0 %v2371
        %4117 = vmatpush.msra.mxu0 %v2370
        %4118 = vmatpush.msra.mxu0 %v2369
        %4119 = vmatpush.msra.mxu0 %v2368
        %4120 = vmatpush.msra.mxu0 %v2367
        %4121 = vmatpush.msra.mxu0 %v2366
        %4122 = vmatpush.msra.mxu0 %v2365
        %4123 = vmatpush.msra.mxu0 %v2364
        %4124 = vmatpush.msra.mxu0 %v2363
        %4125 = vmatpush.msra.mxu0 %v2362
        %4126 = vmatmul.f32.gmra.mxu0 %v4106
        %v4127 = vpop.f32.mrf.mxu0
        %v4128 = vadd.f32 0.0, %v4127
        %4129 = vmatmul.f32.gmra.mxu0 %v4108
        %v4130 = vpop.f32.mrf.mxu0
        %v4131 = vadd.f32 0.0, %v4130
        %4132 = vdwg.mxu0
        %4133 = vmatpush.msra.mxu0 %v2393
        %4134 = vmatpush.msra.mxu0 %v2392
        %4135 = vmatpush.msra.mxu0 %v2391
        %4136 = vmatpush.msra.mxu0 %v2390
        %4137 = vmatpush.msra.mxu0 %v2389
        %4138 = vmatpush.msra.mxu0 %v2388
        %4139 = vmatpush.msra.mxu0 %v2387
        %4140 = vmatpush.msra.mxu0 %v2386
        %4141 = vmatpush.msra.mxu0 %v2385
        %4142 = vmatpush.msra.mxu0 %v2384
        %4143 = vmatpush.msra.mxu0 %v2383
        %4144 = vmatpush.msra.mxu0 %v2382
        %4145 = vmatpush.msra.mxu0 %v2381
        %4146 = vmatpush.msra.mxu0 %v2380
        %4147 = vmatpush.msra.mxu0 %v2379
        %4148 = vmatpush.msra.mxu0 %v2378
        %4149 = vmatmul.f32.gmra.mxu0 %v4107
        %v4150 = vpop.f32.mrf.mxu0
        %v4151 = vadd.f32 %v4128, %v4150
        %4152 = vmatmul.f32.gmra.mxu0 %v4109
        %v4153 = vpop.f32.mrf.mxu0
        %v4154 = vadd.f32 %v4131, %v4153
        %4155 = vdwg.mxu0
        %4156 = vmatpush.msra.mxu0 0.0
        %4157 = vmatpush.msra.mxu0 0.0
        %4158 = vmatpush.msra.mxu0 0.0
        %4159 = vmatpush.msra.mxu0 0.0
        %4160 = vmatpush.msra.mxu0 0.0
        %4161 = vmatpush.msra.mxu0 0.0
        %4162 = vmatpush.msra.mxu0 0.0
        %4163 = vmatpush.msra.mxu0 0.0
        %4164 = vmatpush.msra.mxu0 0.0
        %4165 = vmatpush.msra.mxu0 0.0
        %4166 = vmatpush.msra.mxu0 0.0
        %4167 = vmatpush.msra.mxu0 0.0
        %4168 = vmatpush.msra.mxu0 0.0
        %4169 = vmatpush.msra.mxu0 0.0
        %4170 = vmatpush.msra.mxu0 %v3865
        %4171 = vmatpush.msra.mxu0 %v3862
        %4172 = vmatmul.f32.gmra.mxu0 %v4055
        %v4173 = vpop.f32.mrf.mxu0
        %v4174 = vadd.f32 %v4151, %v4173
        %4175 = vmatmul.f32.gmra.mxu0 %v4058
        %v4176 = vpop.f32.mrf.mxu0
        %v4177 = vadd.f32 %v4154, %v4176
        %4178 = vdwg.mxu0
        %v4179 = vld [vmem:[#allocation34] sm:$0xff]
        %v4180 = vld [vmem:[#allocation34 + $0x8] sm:$0xff]
        %v4182 = vsel %vm2519, %v4174, 0
        %v4185 = vsel %vm2519, %v4177, 0
        %4187 = vmatpush.msra.mxu0 0.0
        %4188 = vmatpush.msra.mxu0 0.0
        %4189 = vmatpush.msra.mxu0 0.0
        %4190 = vmatpush.msra.mxu0 0.0
        %4191 = vmatpush.msra.mxu0 0.0
        %4192 = vmatpush.msra.mxu0 0.0
        %4193 = vmatpush.msra.mxu0 0.0
        %4194 = vmatpush.msra.mxu0 0.0
        %4195 = vmatpush.msra.mxu0 0.0
        %4196 = vmatpush.msra.mxu0 0.0
        %4197 = vmatpush.msra.mxu0 0.0
        %4198 = vmatpush.msra.mxu0 0.0
        %4199 = vmatpush.msra.mxu0 0.0
        %4200 = vmatpush.msra.mxu0 0.0
        %4201 = vmatpush.msra.mxu0 %v4180
        %4202 = vmatpush.msra.mxu0 %v4179
        %4203 = vmatmul.f32.gmra.mxu0 %v4182
        %v4204 = vpop.f32.mrf.mxu0
        %v4205 = vadd.f32 0.0, %v4204
        %4206 = vmatmul.f32.gmra.mxu0 %v4185
        %v4207 = vpop.f32.mrf.mxu0
        %v4208 = vadd.f32 0.0, %v4207
        %4209 = vdwg.mxu0
        %v4211 = vperm.slane %v3767, 0
        %v4213 = vadd.f32 %v4211, %v4205
        %v4214 = vadd.f32 %v4211, %v4208
        %s4215 = scalar_lea.vmem [#allocation25], 32
        %v4216 = vld [vmem:[%s4215] sm:$0xff]
        %v4217 = vld [vmem:[%s4215 + $0x8] sm:$0xff]
        %v4218 = vld [vmem:[%s4215 + $0x10] sm:$0xff]
        %v4219 = vld [vmem:[%s4215 + $0x18] sm:$0xff]
        %s4220 = scalar_lea.vmem [#allocation29], 1
        %v4221 = vld [vmem:[%s4220] sm:$0x1]
        %v4223 = vperm.slane %v4221, 0
        %4225 = vmatpush.msra.mxu0 0.0
        %4226 = vmatpush.msra.mxu0 0.0
        %4227 = vmatpush.msra.mxu0 0.0
        %4228 = vmatpush.msra.mxu0 0.0
        %4229 = vmatpush.msra.mxu0 0.0
        %4230 = vmatpush.msra.mxu0 0.0
        %4231 = vmatpush.msra.mxu0 0.0
        %4232 = vmatpush.msra.mxu0 0.0
        %4233 = vmatpush.msra.mxu0 0.0
        %4234 = vmatpush.msra.mxu0 0.0
        %4235 = vmatpush.msra.mxu0 0.0
        %4236 = vmatpush.msra.mxu0 0.0
        %4237 = vmatpush.msra.mxu0 %v4219
        %4238 = vmatpush.msra.mxu0 %v4218
        %4239 = vmatpush.msra.mxu0 %v4217
        %4240 = vmatpush.msra.mxu0 %v4216
        %4241 = vmatmul.f32.gmra.mxu0 %v3777
        %v4242 = vpop.f32.mrf.mxu0
        %v4243 = vadd.f32 %v4223, %v4242
        %4244 = vmatmul.f32.gmra.mxu0 %v3780
        %v4245 = vpop.f32.mrf.mxu0
        %v4246 = vadd.f32 %v4223, %v4245
        %4247 = vdwg.mxu0
        %s4248 = scalar_lea.vmem [#allocation26], 32
        %v4249 = vld [vmem:[%s4248] sm:$0xff]
        %v4250 = vld [vmem:[%s4248 + $0x8] sm:$0xff]
        %v4251 = vld [vmem:[%s4248 + $0x10] sm:$0xff]
        %v4252 = vld [vmem:[%s4248 + $0x18] sm:$0xff]
        %s4253 = scalar_lea.vmem [#allocation31], 1
        %v4254 = vld [vmem:[%s4253] sm:$0x1]
        %v4256 = vperm.slane %v4254, 0
        %4258 = vmatpush.msra.mxu0 0.0
        %4259 = vmatpush.msra.mxu0 0.0
        %4260 = vmatpush.msra.mxu0 0.0
        %4261 = vmatpush.msra.mxu0 0.0
        %4262 = vmatpush.msra.mxu0 0.0
        %4263 = vmatpush.msra.mxu0 0.0
        %4264 = vmatpush.msra.mxu0 0.0
        %4265 = vmatpush.msra.mxu0 0.0
        %4266 = vmatpush.msra.mxu0 0.0
        %4267 = vmatpush.msra.mxu0 0.0
        %4268 = vmatpush.msra.mxu0 0.0
        %4269 = vmatpush.msra.mxu0 0.0
        %4270 = vmatpush.msra.mxu0 %v4252
        %4271 = vmatpush.msra.mxu0 %v4251
        %4272 = vmatpush.msra.mxu0 %v4250
        %4273 = vmatpush.msra.mxu0 %v4249
        %4274 = vmatmul.f32.gmra.mxu0 %v3777
        %v4275 = vpop.f32.mrf.mxu0
        %v4276 = vadd.f32 %v4256, %v4275
        %4277 = vmatmul.f32.gmra.mxu0 %v3780
        %v4278 = vpop.f32.mrf.mxu0
        %v4279 = vadd.f32 %v4256, %v4278
        %4280 = vdwg.mxu0
        %s4281 = scalar_lea.vmem [#allocation28], 32
        %v4282 = vld [vmem:[%s4281] sm:$0xff]
        %v4283 = vld [vmem:[%s4281 + $0x8] sm:$0xff]
        %v4284 = vld [vmem:[%s4281 + $0x10] sm:$0xff]
        %v4285 = vld [vmem:[%s4281 + $0x18] sm:$0xff]
        %s4286 = scalar_lea.vmem [#allocation32], 1
        %v4287 = vld [vmem:[%s4286] sm:$0x1]
        %v4289 = vperm.slane %v4287, 0
        %4291 = vmatpush.msra.mxu0 0.0
        %4292 = vmatpush.msra.mxu0 0.0
        %4293 = vmatpush.msra.mxu0 0.0
        %4294 = vmatpush.msra.mxu0 0.0
        %4295 = vmatpush.msra.mxu0 0.0
        %4296 = vmatpush.msra.mxu0 0.0
        %4297 = vmatpush.msra.mxu0 0.0
        %4298 = vmatpush.msra.mxu0 0.0
        %4299 = vmatpush.msra.mxu0 0.0
        %4300 = vmatpush.msra.mxu0 0.0
        %4301 = vmatpush.msra.mxu0 0.0
        %4302 = vmatpush.msra.mxu0 0.0
        %4303 = vmatpush.msra.mxu0 %v4285
        %4304 = vmatpush.msra.mxu0 %v4284
        %4305 = vmatpush.msra.mxu0 %v4283
        %4306 = vmatpush.msra.mxu0 %v4282
        %4307 = vmatmul.f32.gmra.mxu0 %v3777
        %v4308 = vpop.f32.mrf.mxu0
        %v4309 = vadd.f32 %v4289, %v4308
        %4310 = vmatmul.f32.gmra.mxu0 %v3780
        %v4311 = vpop.f32.mrf.mxu0
        %v4312 = vadd.f32 %v4289, %v4311
        %4313 = vdwg.mxu0
        %v4315 = vsel %vm2519, %v4243, 0
        %v4318 = vsel %vm2519, %v4246, 0
        %v4321 = vsel %vm2519, %v4276, 0
        %v4324 = vsel %vm2519, %v4279, 0
        %4326 = vmatpush.xpose.msra.mxu0 0.0
        %4327 = vmatpush.xpose.msra.mxu0 0.0
        %4328 = vmatpush.xpose.msra.mxu0 0.0
        %4329 = vmatpush.xpose.msra.mxu0 0.0
        %4330 = vmatpush.xpose.msra.mxu0 0.0
        %4331 = vmatpush.xpose.msra.mxu0 0.0
        %4332 = vmatpush.xpose.msra.mxu0 0.0
        %4333 = vmatpush.xpose.msra.mxu0 0.0
        %4334 = vmatpush.xpose.msra.mxu0 0.0
        %4335 = vmatpush.xpose.msra.mxu0 0.0
        %4336 = vmatpush.xpose.msra.mxu0 0.0
        %4337 = vmatpush.xpose.msra.mxu0 0.0
        %4338 = vmatpush.xpose.msra.mxu0 0.0
        %4339 = vmatpush.xpose.msra.mxu0 0.0
        %4340 = vmatpush.xpose.msra.mxu0 %v4324
        %4341 = vmatpush.xpose.msra.mxu0 %v4321
        %4342 = vmatmul.f32.gmra.mxu0 %v4315
        %v4343 = vpop.f32.mrf.mxu0
        %v4344 = vadd.f32 0.0, %v4343
        %4345 = vmatmul.f32.gmra.mxu0 %v4318
        %v4346 = vpop.f32.mrf.mxu0
        %v4347 = vadd.f32 0.0, %v4346
        %4348 = vdwg.mxu0
        %v4349 = vmul.f32 %v4344, 0.25
        %v4350 = vmul.f32 %v4347, 0.25
        %4351 = vmatpush.msra.mxu0 0.0
        %4352 = vmatpush.msra.mxu0 0.0
        %4353 = vmatpush.msra.mxu0 0.0
        %4354 = vmatpush.msra.mxu0 0.0
        %4355 = vmatpush.msra.mxu0 0.0
        %4356 = vmatpush.msra.mxu0 0.0
        %4357 = vmatpush.msra.mxu0 0.0
        %4358 = vmatpush.msra.mxu0 0.0
        %4359 = vmatpush.msra.mxu0 0.0
        %4360 = vmatpush.msra.mxu0 0.0
        %4361 = vmatpush.msra.mxu0 0.0
        %4362 = vmatpush.msra.mxu0 0.0
        %4363 = vmatpush.msra.mxu0 0.0
        %4364 = vmatpush.msra.mxu0 0.0
        %4365 = vmatpush.msra.mxu0 %v2324
        %4366 = vmatpush.msra.mxu0 %v2322
        %4367 = vmatmul.f32.gmra.mxu0 %v4315
        %v4368 = vpop.f32.mrf.mxu0
        %v4369 = vadd.f32 0.0, %v4368
        %4370 = vmatmul.f32.gmra.mxu0 %v4318
        %v4371 = vpop.f32.mrf.mxu0
        %v4372 = vadd.f32 0.0, %v4371
        %4373 = vdwg.mxu0
        %4374 = vmatpush.msra.mxu0 0.0
        %4375 = vmatpush.msra.mxu0 0.0
        %4376 = vmatpush.msra.mxu0 0.0
        %4377 = vmatpush.msra.mxu0 0.0
        %4378 = vmatpush.msra.mxu0 0.0
        %4379 = vmatpush.msra.mxu0 0.0
        %4380 = vmatpush.msra.mxu0 0.0
        %4381 = vmatpush.msra.mxu0 0.0
        %4382 = vmatpush.msra.mxu0 0.0
        %4383 = vmatpush.msra.mxu0 0.0
        %4384 = vmatpush.msra.mxu0 0.0
        %4385 = vmatpush.msra.mxu0 0.0
        %4386 = vmatpush.msra.mxu0 0.0
        %4387 = vmatpush.msra.mxu0 0.0
        %4388 = vmatpush.msra.mxu0 %v2325
        %4389 = vmatpush.msra.mxu0 %v2323
        %4390 = vmatmul.f32.gmra.mxu0 %v4315
        %v4391 = vpop.f32.mrf.mxu0
        %v4392 = vadd.f32 0.0, %v4391
        %4393 = vmatmul.f32.gmra.mxu0 %v4318
        %v4394 = vpop.f32.mrf.mxu0
        %v4395 = vadd.f32 0.0, %v4394
        %4396 = vdwg.mxu0
        %v4397 = vmul.f32 %v4369, %v3759
        %v4398 = vmul.f32 %v4392, %v3760
        %v4399 = vmul.f32 %v4372, %v3761
        %v4400 = vmul.f32 %v4395, %v3762
        %4401 = vmatpush.msra.mxu0 %v2341
        %4402 = vmatpush.msra.mxu0 %v2340
        %4403 = vmatpush.msra.mxu0 %v2339
        %4404 = vmatpush.msra.mxu0 %v2338
        %4405 = vmatpush.msra.mxu0 %v2337
        %4406 = vmatpush.msra.mxu0 %v2336
        %4407 = vmatpush.msra.mxu0 %v2335
        %4408 = vmatpush.msra.mxu0 %v2334
        %4409 = vmatpush.msra.mxu0 %v2333
        %4410 = vmatpush.msra.mxu0 %v2332
        %4411 = vmatpush.msra.mxu0 %v2331
        %4412 = vmatpush.msra.mxu0 %v2330
        %4413 = vmatpush.msra.mxu0 %v2329
        %4414 = vmatpush.msra.mxu0 %v2328
        %4415 = vmatpush.msra.mxu0 %v2327
        %4416 = vmatpush.msra.mxu0 %v2326
        %4417 = vmatmul.f32.gmra.mxu0 %v4397
        %v4418 = vpop.f32.mrf.mxu0
        %v4419 = vadd.f32 0.0, %v4418
        %4420 = vmatmul.f32.gmra.mxu0 %v4399
        %v4421 = vpop.f32.mrf.mxu0
        %v4422 = vadd.f32 0.0, %v4421
        %4423 = vdwg.mxu0
        %4424 = vmatpush.msra.mxu0 %v2357
        %4425 = vmatpush.msra.mxu0 %v2356
        %4426 = vmatpush.msra.mxu0 %v2355
        %4427 = vmatpush.msra.mxu0 %v2354
        %4428 = vmatpush.msra.mxu0 %v2353
        %4429 = vmatpush.msra.mxu0 %v2352
        %4430 = vmatpush.msra.mxu0 %v2351
        %4431 = vmatpush.msra.mxu0 %v2350
        %4432 = vmatpush.msra.mxu0 %v2349
        %4433 = vmatpush.msra.mxu0 %v2348
        %4434 = vmatpush.msra.mxu0 %v2347
        %4435 = vmatpush.msra.mxu0 %v2346
        %4436 = vmatpush.msra.mxu0 %v2345
        %4437 = vmatpush.msra.mxu0 %v2344
        %4438 = vmatpush.msra.mxu0 %v2343
        %4439 = vmatpush.msra.mxu0 %v2342
        %4440 = vmatmul.f32.gmra.mxu0 %v4398
        %v4441 = vpop.f32.mrf.mxu0
        %v4442 = vadd.f32 %v4419, %v4441
        %4443 = vmatmul.f32.gmra.mxu0 %v4400
        %v4444 = vpop.f32.mrf.mxu0
        %v4445 = vadd.f32 %v4422, %v4444
        %4446 = vdwg.mxu0
        %v4447 = vmul.f32 %v4442, 0.25
        %v4448 = vmul.f32 %v4445, 0.25
        %v4449 = vadd.f32 %v4349, %v4447
        %v4450 = vadd.f32 %v4350, %v4448
        %v4451 = vsel %vm2657, -10000.0, %v4449
        %v4452 = vsel %vm2658, -10000.0, %v4450
        %v4453 = vsel %vm2519, %v4451, -inf
        %4454 = vmax.xlane.f32.xlu0 %v4453
        %v4455 = vpop.xlane.xlu0 %4454
        %v4456 = vsel %vm2519, %v4452, -inf
        %4457 = vmax.xlane.f32.xlu0 %v4456
        %v4458 = vpop.xlane.xlu0 %4457
        %v4459 = vsub.f32 %v4451, %v4455
        %v4460 = vsub.f32 %v4452, %v4458
        %v4461 = vmul.f32 %v4459, 1.442695
        %v4462 = vpow.pop %v4461
        %v4463 = vmul.f32 %v4460, 1.442695
        %v4464 = vpow.pop %v4463
        %v4465 = vsel %vm2519, %v4462, 0.0
        %4466 = vadd.xlane.f32.xlu0 %v4465
        %v4467 = vpop.xlane.xlu0 %4466
        %v4468 = vsel %vm2519, %v4464, 0.0
        %4469 = vadd.xlane.f32.xlu0 %v4468
        %v4470 = vpop.xlane.xlu0 %4469
        %v4471 = vrcp.pop %v4467
        %v4472 = vmul.f32 %v4467, %v4471
        %v4473 = vsub.f32 1.0, %v4472
        %v4474 = vmul.f32 %v4471, %v4473
        %v4475 = vadd.f32 %v4471, %v4474
        %vm4476 = vweird.f32 %v4467
        %vm4477 = vweird.f32 %v4471
        %vm4478 = vmor %vm4476, %vm4477
        %v4479 = vsel %vm4478, %v4471, %v4475
        %v4480 = vand.u32 2147483647, %v4467
        %vm4481 = vcmp.eq.f32.partialorder %v4480, 8.507059e+37
        %v4482 = vand.u32 %v4467, 2147483648
        %v4483 = vor.u32 1.1754944e-38, %v4482
        %v4484 = vsel %vm4481, %v4483, %v4479
        %v4485 = vmul.f32 %v4462, %v4484
        %v4486 = vrcp.pop %v4470
        %v4487 = vmul.f32 %v4470, %v4486
        %v4488 = vsub.f32 1.0, %v4487
        %v4489 = vmul.f32 %v4486, %v4488
        %v4490 = vadd.f32 %v4486, %v4489
        %vm4491 = vweird.f32 %v4470
        %vm4492 = vweird.f32 %v4486
        %vm4493 = vmor %vm4491, %vm4492
        %v4494 = vsel %vm4493, %v4486, %v4490
        %v4495 = vand.u32 2147483647, %v4470
        %vm4496 = vcmp.eq.f32.partialorder %v4495, 8.507059e+37
        %v4497 = vand.u32 %v4470, 2147483648
        %v4498 = vor.u32 1.1754944e-38, %v4497
        %v4499 = vsel %vm4496, %v4498, %v4494
        %v4500 = vmul.f32 %v4464, %v4499
        %v4502 = vsel %vm2519, %v4485, 0
        %v4505 = vsel %vm2519, %v4500, 0
        %4507 = vmatpush.msra.mxu0 0.0
        %4508 = vmatpush.msra.mxu0 0.0
        %4509 = vmatpush.msra.mxu0 0.0
        %4510 = vmatpush.msra.mxu0 0.0
        %4511 = vmatpush.msra.mxu0 0.0
        %4512 = vmatpush.msra.mxu0 0.0
        %4513 = vmatpush.msra.mxu0 0.0
        %4514 = vmatpush.msra.mxu0 0.0
        %4515 = vmatpush.msra.mxu0 0.0
        %4516 = vmatpush.msra.mxu0 0.0
        %4517 = vmatpush.msra.mxu0 0.0
        %4518 = vmatpush.msra.mxu0 0.0
        %4519 = vmatpush.msra.mxu0 0.0
        %4520 = vmatpush.msra.mxu0 0.0
        %4521 = vmatpush.msra.mxu0 %v2360
        %4522 = vmatpush.msra.mxu0 %v2358
        %4523 = vmatmul.f32.gmra.mxu0 %v4502
        %v4524 = vpop.f32.mrf.mxu0
        %v4525 = vadd.f32 0.0, %v4524
        %4526 = vmatmul.f32.gmra.mxu0 %v4505
        %v4527 = vpop.f32.mrf.mxu0
        %v4528 = vadd.f32 0.0, %v4527
        %4529 = vdwg.mxu0
        %4530 = vmatpush.msra.mxu0 0.0
        %4531 = vmatpush.msra.mxu0 0.0
        %4532 = vmatpush.msra.mxu0 0.0
        %4533 = vmatpush.msra.mxu0 0.0
        %4534 = vmatpush.msra.mxu0 0.0
        %4535 = vmatpush.msra.mxu0 0.0
        %4536 = vmatpush.msra.mxu0 0.0
        %4537 = vmatpush.msra.mxu0 0.0
        %4538 = vmatpush.msra.mxu0 0.0
        %4539 = vmatpush.msra.mxu0 0.0
        %4540 = vmatpush.msra.mxu0 0.0
        %4541 = vmatpush.msra.mxu0 0.0
        %4542 = vmatpush.msra.mxu0 0.0
        %4543 = vmatpush.msra.mxu0 0.0
        %4544 = vmatpush.msra.mxu0 %v2361
        %4545 = vmatpush.msra.mxu0 %v2359
        %4546 = vmatmul.f32.gmra.mxu0 %v4502
        %v4547 = vpop.f32.mrf.mxu0
        %v4548 = vadd.f32 0.0, %v4547
        %4549 = vmatmul.f32.gmra.mxu0 %v4505
        %v4550 = vpop.f32.mrf.mxu0
        %v4551 = vadd.f32 0.0, %v4550
        %4552 = vdwg.mxu0
        %v4553 = vmul.f32 %v4525, %v3763
        %v4554 = vmul.f32 %v4548, %v3764
        %v4555 = vmul.f32 %v4528, %v3765
        %v4556 = vmul.f32 %v4551, %v3766
        %4557 = vmatpush.msra.mxu0 %v2377
        %4558 = vmatpush.msra.mxu0 %v2376
        %4559 = vmatpush.msra.mxu0 %v2375
        %4560 = vmatpush.msra.mxu0 %v2374
        %4561 = vmatpush.msra.mxu0 %v2373
        %4562 = vmatpush.msra.mxu0 %v2372
        %4563 = vmatpush.msra.mxu0 %v2371
        %4564 = vmatpush.msra.mxu0 %v2370
        %4565 = vmatpush.msra.mxu0 %v2369
        %4566 = vmatpush.msra.mxu0 %v2368
        %4567 = vmatpush.msra.mxu0 %v2367
        %4568 = vmatpush.msra.mxu0 %v2366
        %4569 = vmatpush.msra.mxu0 %v2365
        %4570 = vmatpush.msra.mxu0 %v2364
        %4571 = vmatpush.msra.mxu0 %v2363
        %4572 = vmatpush.msra.mxu0 %v2362
        %4573 = vmatmul.f32.gmra.mxu0 %v4553
        %v4574 = vpop.f32.mrf.mxu0
        %v4575 = vadd.f32 0.0, %v4574
        %4576 = vmatmul.f32.gmra.mxu0 %v4555
        %v4577 = vpop.f32.mrf.mxu0
        %v4578 = vadd.f32 0.0, %v4577
        %4579 = vdwg.mxu0
        %4580 = vmatpush.msra.mxu0 %v2393
        %4581 = vmatpush.msra.mxu0 %v2392
        %4582 = vmatpush.msra.mxu0 %v2391
        %4583 = vmatpush.msra.mxu0 %v2390
        %4584 = vmatpush.msra.mxu0 %v2389
        %4585 = vmatpush.msra.mxu0 %v2388
        %4586 = vmatpush.msra.mxu0 %v2387
        %4587 = vmatpush.msra.mxu0 %v2386
        %4588 = vmatpush.msra.mxu0 %v2385
        %4589 = vmatpush.msra.mxu0 %v2384
        %4590 = vmatpush.msra.mxu0 %v2383
        %4591 = vmatpush.msra.mxu0 %v2382
        %4592 = vmatpush.msra.mxu0 %v2381
        %4593 = vmatpush.msra.mxu0 %v2380
        %4594 = vmatpush.msra.mxu0 %v2379
        %4595 = vmatpush.msra.mxu0 %v2378
        %4596 = vmatmul.f32.gmra.mxu0 %v4554
        %v4597 = vpop.f32.mrf.mxu0
        %v4598 = vadd.f32 %v4575, %v4597
        %4599 = vmatmul.f32.gmra.mxu0 %v4556
        %v4600 = vpop.f32.mrf.mxu0
        %v4601 = vadd.f32 %v4578, %v4600
        %4602 = vdwg.mxu0
        %4603 = vmatpush.msra.mxu0 0.0
        %4604 = vmatpush.msra.mxu0 0.0
        %4605 = vmatpush.msra.mxu0 0.0
        %4606 = vmatpush.msra.mxu0 0.0
        %4607 = vmatpush.msra.mxu0 0.0
        %4608 = vmatpush.msra.mxu0 0.0
        %4609 = vmatpush.msra.mxu0 0.0
        %4610 = vmatpush.msra.mxu0 0.0
        %4611 = vmatpush.msra.mxu0 0.0
        %4612 = vmatpush.msra.mxu0 0.0
        %4613 = vmatpush.msra.mxu0 0.0
        %4614 = vmatpush.msra.mxu0 0.0
        %4615 = vmatpush.msra.mxu0 0.0
        %4616 = vmatpush.msra.mxu0 0.0
        %4617 = vmatpush.msra.mxu0 %v4312
        %4618 = vmatpush.msra.mxu0 %v4309
        %4619 = vmatmul.f32.gmra.mxu0 %v4502
        %v4620 = vpop.f32.mrf.mxu0
        %v4621 = vadd.f32 %v4598, %v4620
        %4622 = vmatmul.f32.gmra.mxu0 %v4505
        %v4623 = vpop.f32.mrf.mxu0
        %v4624 = vadd.f32 %v4601, %v4623
        %4625 = vdwg.mxu0
        %s4626 = scalar_lea.vmem [#allocation34], 16
        %v4627 = vld [vmem:[%s4626] sm:$0xff]
        %v4628 = vld [vmem:[%s4626 + $0x8] sm:$0xff]
        %v4630 = vsel %vm2519, %v4621, 0
        %v4633 = vsel %vm2519, %v4624, 0
        %4635 = vmatpush.msra.mxu0 0.0
        %4636 = vmatpush.msra.mxu0 0.0
        %4637 = vmatpush.msra.mxu0 0.0
        %4638 = vmatpush.msra.mxu0 0.0
        %4639 = vmatpush.msra.mxu0 0.0
        %4640 = vmatpush.msra.mxu0 0.0
        %4641 = vmatpush.msra.mxu0 0.0
        %4642 = vmatpush.msra.mxu0 0.0
        %4643 = vmatpush.msra.mxu0 0.0
        %4644 = vmatpush.msra.mxu0 0.0
        %4645 = vmatpush.msra.mxu0 0.0
        %4646 = vmatpush.msra.mxu0 0.0
        %4647 = vmatpush.msra.mxu0 0.0
        %4648 = vmatpush.msra.mxu0 0.0
        %4649 = vmatpush.msra.mxu0 %v4628
        %4650 = vmatpush.msra.mxu0 %v4627
        %4651 = vmatmul.f32.gmra.mxu0 %v4630
        %v4652 = vpop.f32.mrf.mxu0
        %v4653 = vadd.f32 0.0, %v4652
        %4654 = vmatmul.f32.gmra.mxu0 %v4633
        %v4655 = vpop.f32.mrf.mxu0
        %v4656 = vadd.f32 0.0, %v4655
        %4657 = vdwg.mxu0
        %v4658 = vadd.f32 %v4213, %v4653
        %v4659 = vadd.f32 %v4214, %v4656
        %v4660 = vadd.f32 %v3757, %v4658
        %v4661 = vadd.f32 %v3758, %v4659
        %v4662 = vld [vmem:[%s75] sm:$0x1]
        %v4663 = vld [vmem:[%s77] sm:$0x1]
        %v4664 = vsel %vm2427, %v4660, 0.0
        %4665 = vadd.xlane.f32.xlu0 %v4664
        %v4666 = vpop.xlane.xlu0 %4665
        %v4667 = vsel %vm2427, %v4661, 0.0
        %4668 = vadd.xlane.f32.xlu0 %v4667
        %v4669 = vpop.xlane.xlu0 %4668
        %v4670 = vmul.f32 %v4666, %v3331
        %v4671 = vmul.f32 %v4669, %v3331
        %v4672 = vsub.f32 %v4660, %v4670
        %v4673 = vsub.f32 %v4661, %v4671
        %v4674 = vmul.f32 %v4672, %v4672
        %v4675 = vmul.f32 %v4673, %v4673
        %v4676 = vsel %vm2427, %v4674, 0.0
        %4677 = vadd.xlane.f32.xlu0 %v4676
        %v4678 = vpop.xlane.xlu0 %4677
        %v4679 = vsel %vm2427, %v4675, 0.0
        %4680 = vadd.xlane.f32.xlu0 %v4679
        %v4681 = vpop.xlane.xlu0 %4680
        %v4682 = vmul.f32 %v4678, %v3331
        %v4683 = vmul.f32 %v4681, %v3331
        %v4684 = vadd.f32 %v4682, 0.0001
        %v4685 = vadd.f32 %v4683, 0.0001
        %v4686 = vrsqrt.pop %v4684
        %v4687 = vmul.f32 %v4686, %v4684
        %v4688 = vmul.f32 %v4687, %v4686
        %v4689 = vmul.f32 0.5, %v4688
        %v4690 = vsub.f32 1.5, %v4689
        %v4691 = vmul.f32 %v4686, %v4690
        %vm4692 = vweird.f32 %v4684
        %vm4693 = vweird.f32 %v4686
        %vm4694 = vmor %vm4692, %vm4693
        %v4695 = vsel %vm4694, %v4686, %v4691
        %v4696 = vrsqrt.pop %v4685
        %v4697 = vmul.f32 %v4696, %v4685
        %v4698 = vmul.f32 %v4697, %v4696
        %v4699 = vmul.f32 0.5, %v4698
        %v4700 = vsub.f32 1.5, %v4699
        %v4701 = vmul.f32 %v4696, %v4700
        %vm4702 = vweird.f32 %v4685
        %vm4703 = vweird.f32 %v4696
        %vm4704 = vmor %vm4702, %vm4703
        %v4705 = vsel %vm4704, %v4696, %v4701
        %v4706 = vmul.f32 %v4672, %v4695
        %v4707 = vmul.f32 %v4673, %v4705
        %v4709 = vperm.slane %v4662, 0
        %v4711 = vmul.f32 %v4706, %v4709
        %v4712 = vmul.f32 %v4707, %v4709
        %v4714 = vperm.slane %v4663, 0
        %v4716 = vadd.f32 %v4711, %v4714
        %v4717 = vadd.f32 %v4712, %v4714
        %v4718 = vmul.f32 %v4716, %v2401
        %v4719 = vmul.f32 %v4717, %v2406
        %v4720 = vld [vmem:[#allocation40] sm:$0x1]
        %v4721 = vld [vmem:[%s79] sm:$0xff]
        %v4722 = vld [vmem:[%s79 + $0x8] sm:$0xff]
        %v4723 = vld [vmem:[%s79 + $0x10] sm:$0xff]
        %v4724 = vld [vmem:[%s79 + $0x18] sm:$0xff]
        %v4726 = vsel %vm2427, %v4718, 0
        %v4729 = vsel %vm2427, %v4719, 0
        %4731 = vmatpush.msra.mxu0 0.0
        %4732 = vmatpush.msra.mxu0 0.0
        %4733 = vmatpush.msra.mxu0 0.0
        %4734 = vmatpush.msra.mxu0 0.0
        %4735 = vmatpush.msra.mxu0 0.0
        %4736 = vmatpush.msra.mxu0 0.0
        %4737 = vmatpush.msra.mxu0 0.0
        %4738 = vmatpush.msra.mxu0 0.0
        %4739 = vmatpush.msra.mxu0 0.0
        %4740 = vmatpush.msra.mxu0 0.0
        %4741 = vmatpush.msra.mxu0 0.0
        %4742 = vmatpush.msra.mxu0 0.0
        %4743 = vmatpush.msra.mxu0 %v4724
        %4744 = vmatpush.msra.mxu0 %v4723
        %4745 = vmatpush.msra.mxu0 %v4722
        %4746 = vmatpush.msra.mxu0 %v4721
        %4747 = vmatmul.f32.gmra.mxu0 %v4726
        %v4748 = vpop.f32.mrf.mxu0
        %v4749 = vadd.f32 0.0, %v4748
        %4750 = vmatmul.f32.gmra.mxu0 %v4729
        %v4751 = vpop.f32.mrf.mxu0
        %v4752 = vadd.f32 0.0, %v4751
        %4753 = vdwg.mxu0
        %s4754 = scalar_lea.vmem %s79, 32
        %v4755 = vld [vmem:[%s4754] sm:$0xff]
        %v4756 = vld [vmem:[%s4754 + $0x8] sm:$0xff]
        %v4757 = vld [vmem:[%s4754 + $0x10] sm:$0xff]
        %v4758 = vld [vmem:[%s4754 + $0x18] sm:$0xff]
        %s4759 = scalar_lea.vmem %s79, 64
        %v4760 = vld [vmem:[%s4759] sm:$0xff]
        %v4761 = vld [vmem:[%s4759 + $0x8] sm:$0xff]
        %v4762 = vld [vmem:[%s4759 + $0x10] sm:$0xff]
        %v4763 = vld [vmem:[%s4759 + $0x18] sm:$0xff]
        %4764 = vmatpush.msra.mxu0 0.0
        %4765 = vmatpush.msra.mxu0 0.0
        %4766 = vmatpush.msra.mxu0 0.0
        %4767 = vmatpush.msra.mxu0 0.0
        %4768 = vmatpush.msra.mxu0 0.0
        %4769 = vmatpush.msra.mxu0 0.0
        %4770 = vmatpush.msra.mxu0 0.0
        %4771 = vmatpush.msra.mxu0 0.0
        %4772 = vmatpush.msra.mxu0 0.0
        %4773 = vmatpush.msra.mxu0 0.0
        %4774 = vmatpush.msra.mxu0 0.0
        %4775 = vmatpush.msra.mxu0 0.0
        %4776 = vmatpush.msra.mxu0 %v4763
        %4777 = vmatpush.msra.mxu0 %v4762
        %4778 = vmatpush.msra.mxu0 %v4761
        %4779 = vmatpush.msra.mxu0 %v4760
        %4780 = vmatmul.f32.gmra.mxu0 %v4726
        %v4781 = vpop.f32.mrf.mxu0
        %v4782 = vadd.f32 0.0, %v4781
        %4783 = vmatmul.f32.gmra.mxu0 %v4729
        %v4784 = vpop.f32.mrf.mxu0
        %v4785 = vadd.f32 0.0, %v4784
        %4786 = vdwg.mxu0
        %4787 = vmatpush.msra.mxu0 0.0
        %4788 = vmatpush.msra.mxu0 0.0
        %4789 = vmatpush.msra.mxu0 0.0
        %4790 = vmatpush.msra.mxu0 0.0
        %4791 = vmatpush.msra.mxu0 0.0
        %4792 = vmatpush.msra.mxu0 0.0
        %4793 = vmatpush.msra.mxu0 0.0
        %4794 = vmatpush.msra.mxu0 0.0
        %4795 = vmatpush.msra.mxu0 0.0
        %4796 = vmatpush.msra.mxu0 0.0
        %4797 = vmatpush.msra.mxu0 0.0
        %4798 = vmatpush.msra.mxu0 0.0
        %4799 = vmatpush.msra.mxu0 0.0
        %4800 = vmatpush.msra.mxu0 0.0
        %4801 = vmatpush.msra.mxu0 %v4752
        %4802 = vmatpush.msra.mxu0 %v4749
        %4803 = vmatmul.f32.gmra.mxu0 %v3450
        %v4804 = vpop.f32.mrf.mxu0
        %v4805 = vadd.f32 0.0, %v4804
        %4806 = vmatmul.f32.gmra.mxu0 %v3453
        %v4807 = vpop.f32.mrf.mxu0
        %v4808 = vadd.f32 0.0, %v4807
        %4809 = vdwg.mxu0
        %4810 = vmatpush.msra.mxu0 0.0
        %4811 = vmatpush.msra.mxu0 0.0
        %4812 = vmatpush.msra.mxu0 0.0
        %4813 = vmatpush.msra.mxu0 0.0
        %4814 = vmatpush.msra.mxu0 0.0
        %4815 = vmatpush.msra.mxu0 0.0
        %4816 = vmatpush.msra.mxu0 0.0
        %4817 = vmatpush.msra.mxu0 0.0
        %4818 = vmatpush.msra.mxu0 0.0
        %4819 = vmatpush.msra.mxu0 0.0
        %4820 = vmatpush.msra.mxu0 0.0
        %4821 = vmatpush.msra.mxu0 0.0
        %4822 = vmatpush.msra.mxu0 %v4758
        %4823 = vmatpush.msra.mxu0 %v4757
        %4824 = vmatpush.msra.mxu0 %v4756
        %4825 = vmatpush.msra.mxu0 %v4755
        %4826 = vmatmul.f32.gmra.mxu0 %v4726
        %v4827 = vpop.f32.mrf.mxu0
        %v4828 = vadd.f32 %v4805, %v4827
        %4829 = vmatmul.f32.gmra.mxu0 %v4729
        %v4830 = vpop.f32.mrf.mxu0
        %v4831 = vadd.f32 %v4808, %v4830
        %4832 = vdwg.mxu0
        %4833 = vmatpush.msra.mxu0 0.0
        %4834 = vmatpush.msra.mxu0 0.0
        %4835 = vmatpush.msra.mxu0 0.0
        %4836 = vmatpush.msra.mxu0 0.0
        %4837 = vmatpush.msra.mxu0 0.0
        %4838 = vmatpush.msra.mxu0 0.0
        %4839 = vmatpush.msra.mxu0 0.0
        %4840 = vmatpush.msra.mxu0 0.0
        %4841 = vmatpush.msra.mxu0 0.0
        %4842 = vmatpush.msra.mxu0 0.0
        %4843 = vmatpush.msra.mxu0 0.0
        %4844 = vmatpush.msra.mxu0 0.0
        %4845 = vmatpush.msra.mxu0 0.0
        %4846 = vmatpush.msra.mxu0 0.0
        %4847 = vmatpush.msra.mxu0 %v4785
        %4848 = vmatpush.msra.mxu0 %v4782
        %4849 = vmatmul.f32.gmra.mxu0 %v3502
        %v4850 = vpop.f32.mrf.mxu0
        %v4851 = vadd.f32 0.0, %v4850
        %4852 = vmatmul.f32.gmra.mxu0 %v3505
        %v4853 = vpop.f32.mrf.mxu0
        %v4854 = vadd.f32 0.0, %v4853
        %4855 = vdwg.mxu0
        %v4856 = vadd.f32 %v4828, %v4851
        %v4857 = vadd.f32 %v4831, %v4854
        %v4859 = vperm.slane %v4720, 0
        %v4861 = vadd.f32 %v4856, %v4859
        %v4862 = vadd.f32 %v4857, %v4859
        %v4863 = vmax.f32 %v4861, 0.0
        %v4864 = vmax.f32 %v4862, 0.0
        %v4865 = vmul.f32 %v4863, %v2401
        %v4866 = vmul.f32 %v4864, %v2406
        %v4867 = vld [vmem:[#allocation43] sm:$0x1]
        %v4868 = vld [vmem:[#allocation41] sm:$0xff]
        %v4869 = vld [vmem:[#allocation41 + $0x8] sm:$0xff]
        %v4870 = vld [vmem:[#allocation41 + $0x10] sm:$0xff]
        %v4871 = vld [vmem:[#allocation41 + $0x18] sm:$0xff]
        %v4872 = vld [vmem:[#allocation41 + $0x20] sm:$0xff]
        %v4873 = vld [vmem:[#allocation41 + $0x28] sm:$0xff]
        %v4874 = vld [vmem:[#allocation41 + $0x30] sm:$0xff]
        %v4875 = vld [vmem:[#allocation41 + $0x38] sm:$0xff]
        %v4877 = vsel %vm3550, %v4865, 0
        %v4880 = vsel %vm3550, %v4866, 0
        %4882 = vmatpush.msra.mxu0 0.0
        %4883 = vmatpush.msra.mxu0 0.0
        %4884 = vmatpush.msra.mxu0 0.0
        %4885 = vmatpush.msra.mxu0 0.0
        %4886 = vmatpush.msra.mxu0 0.0
        %4887 = vmatpush.msra.mxu0 0.0
        %4888 = vmatpush.msra.mxu0 0.0
        %4889 = vmatpush.msra.mxu0 0.0
        %4890 = vmatpush.msra.mxu0 %v4875
        %4891 = vmatpush.msra.mxu0 %v4874
        %4892 = vmatpush.msra.mxu0 %v4873
        %4893 = vmatpush.msra.mxu0 %v4872
        %4894 = vmatpush.msra.mxu0 %v4871
        %4895 = vmatpush.msra.mxu0 %v4870
        %4896 = vmatpush.msra.mxu0 %v4869
        %4897 = vmatpush.msra.mxu0 %v4868
        %4898 = vmatmul.f32.gmra.mxu0 %v4877
        %v4899 = vpop.f32.mrf.mxu0
        %v4900 = vadd.f32 0.0, %v4899
        %4901 = vmatmul.f32.gmra.mxu0 %v4880
        %v4902 = vpop.f32.mrf.mxu0
        %v4903 = vadd.f32 0.0, %v4902
        %4904 = vdwg.mxu0
        %s4905 = scalar_lea.vmem [#allocation41], 64
        %v4906 = vld [vmem:[%s4905] sm:$0xff]
        %v4907 = vld [vmem:[%s4905 + $0x8] sm:$0xff]
        %v4908 = vld [vmem:[%s4905 + $0x10] sm:$0xff]
        %v4909 = vld [vmem:[%s4905 + $0x18] sm:$0xff]
        %v4910 = vld [vmem:[%s4905 + $0x20] sm:$0xff]
        %v4911 = vld [vmem:[%s4905 + $0x28] sm:$0xff]
        %v4912 = vld [vmem:[%s4905 + $0x30] sm:$0xff]
        %v4913 = vld [vmem:[%s4905 + $0x38] sm:$0xff]
        %s4914 = scalar_lea.vmem [#allocation41], 128
        %v4915 = vld [vmem:[%s4914] sm:$0xff]
        %v4916 = vld [vmem:[%s4914 + $0x8] sm:$0xff]
        %v4917 = vld [vmem:[%s4914 + $0x10] sm:$0xff]
        %v4918 = vld [vmem:[%s4914 + $0x18] sm:$0xff]
        %v4919 = vld [vmem:[%s4914 + $0x20] sm:$0xff]
        %v4920 = vld [vmem:[%s4914 + $0x28] sm:$0xff]
        %v4921 = vld [vmem:[%s4914 + $0x30] sm:$0xff]
        %v4922 = vld [vmem:[%s4914 + $0x38] sm:$0xff]
        %4923 = vmatpush.msra.mxu0 0.0
        %4924 = vmatpush.msra.mxu0 0.0
        %4925 = vmatpush.msra.mxu0 0.0
        %4926 = vmatpush.msra.mxu0 0.0
        %4927 = vmatpush.msra.mxu0 0.0
        %4928 = vmatpush.msra.mxu0 0.0
        %4929 = vmatpush.msra.mxu0 0.0
        %4930 = vmatpush.msra.mxu0 0.0
        %4931 = vmatpush.msra.mxu0 %v4922
        %4932 = vmatpush.msra.mxu0 %v4921
        %4933 = vmatpush.msra.mxu0 %v4920
        %4934 = vmatpush.msra.mxu0 %v4919
        %4935 = vmatpush.msra.mxu0 %v4918
        %4936 = vmatpush.msra.mxu0 %v4917
        %4937 = vmatpush.msra.mxu0 %v4916
        %4938 = vmatpush.msra.mxu0 %v4915
        %4939 = vmatmul.f32.gmra.mxu0 %v4877
        %v4940 = vpop.f32.mrf.mxu0
        %v4941 = vadd.f32 0.0, %v4940
        %4942 = vmatmul.f32.gmra.mxu0 %v4880
        %v4943 = vpop.f32.mrf.mxu0
        %v4944 = vadd.f32 0.0, %v4943
        %4945 = vdwg.mxu0
        %4946 = vmatpush.msra.mxu0 0.0
        %4947 = vmatpush.msra.mxu0 0.0
        %4948 = vmatpush.msra.mxu0 0.0
        %4949 = vmatpush.msra.mxu0 0.0
        %4950 = vmatpush.msra.mxu0 0.0
        %4951 = vmatpush.msra.mxu0 0.0
        %4952 = vmatpush.msra.mxu0 0.0
        %4953 = vmatpush.msra.mxu0 0.0
        %4954 = vmatpush.msra.mxu0 0.0
        %4955 = vmatpush.msra.mxu0 0.0
        %4956 = vmatpush.msra.mxu0 0.0
        %4957 = vmatpush.msra.mxu0 0.0
        %4958 = vmatpush.msra.mxu0 0.0
        %4959 = vmatpush.msra.mxu0 0.0
        %4960 = vmatpush.msra.mxu0 %v4903
        %4961 = vmatpush.msra.mxu0 %v4900
        %4962 = vmatmul.f32.gmra.mxu0 %v3450
        %v4963 = vpop.f32.mrf.mxu0
        %v4964 = vadd.f32 0.0, %v4963
        %4965 = vmatmul.f32.gmra.mxu0 %v3453
        %v4966 = vpop.f32.mrf.mxu0
        %v4967 = vadd.f32 0.0, %v4966
        %4968 = vdwg.mxu0
        %4969 = vmatpush.msra.mxu0 0.0
        %4970 = vmatpush.msra.mxu0 0.0
        %4971 = vmatpush.msra.mxu0 0.0
        %4972 = vmatpush.msra.mxu0 0.0
        %4973 = vmatpush.msra.mxu0 0.0
        %4974 = vmatpush.msra.mxu0 0.0
        %4975 = vmatpush.msra.mxu0 0.0
        %4976 = vmatpush.msra.mxu0 0.0
        %4977 = vmatpush.msra.mxu0 %v4913
        %4978 = vmatpush.msra.mxu0 %v4912
        %4979 = vmatpush.msra.mxu0 %v4911
        %4980 = vmatpush.msra.mxu0 %v4910
        %4981 = vmatpush.msra.mxu0 %v4909
        %4982 = vmatpush.msra.mxu0 %v4908
        %4983 = vmatpush.msra.mxu0 %v4907
        %4984 = vmatpush.msra.mxu0 %v4906
        %4985 = vmatmul.f32.gmra.mxu0 %v4877
        %v4986 = vpop.f32.mrf.mxu0
        %v4987 = vadd.f32 %v4964, %v4986
        %4988 = vmatmul.f32.gmra.mxu0 %v4880
        %v4989 = vpop.f32.mrf.mxu0
        %v4990 = vadd.f32 %v4967, %v4989
        %4991 = vdwg.mxu0
        %4992 = vmatpush.msra.mxu0 0.0
        %4993 = vmatpush.msra.mxu0 0.0
        %4994 = vmatpush.msra.mxu0 0.0
        %4995 = vmatpush.msra.mxu0 0.0
        %4996 = vmatpush.msra.mxu0 0.0
        %4997 = vmatpush.msra.mxu0 0.0
        %4998 = vmatpush.msra.mxu0 0.0
        %4999 = vmatpush.msra.mxu0 0.0
        %5000 = vmatpush.msra.mxu0 0.0
        %5001 = vmatpush.msra.mxu0 0.0
        %5002 = vmatpush.msra.mxu0 0.0
        %5003 = vmatpush.msra.mxu0 0.0
        %5004 = vmatpush.msra.mxu0 0.0
        %5005 = vmatpush.msra.mxu0 0.0
        %5006 = vmatpush.msra.mxu0 %v4944
        %5007 = vmatpush.msra.mxu0 %v4941
        %5008 = vmatmul.f32.gmra.mxu0 %v3502
        %v5009 = vpop.f32.mrf.mxu0
        %v5010 = vadd.f32 0.0, %v5009
        %5011 = vmatmul.f32.gmra.mxu0 %v3505
        %v5012 = vpop.f32.mrf.mxu0
        %v5013 = vadd.f32 0.0, %v5012
        %5014 = vdwg.mxu0
        %v5015 = vadd.f32 %v4987, %v5010
        %v5016 = vadd.f32 %v4990, %v5013
        %v5018 = vperm.slane %v4867, 0
        %v5020 = vadd.f32 %v5015, %v5018
        %v5021 = vadd.f32 %v5016, %v5018
        %v5022 = vmul.f32 %v5020, %v2401
        %v5023 = vmul.f32 %v5021, %v2406
        %v5024 = vadd.f32 %v4716, %v5022
        %v5025 = vadd.f32 %v4717, %v5023
        %v5026 = vld [vmem:[%s87] sm:$0x1]
        %v5027 = vld [vmem:[%s89] sm:$0x1]
        %v5028 = vsel %vm2427, %v5024, 0.0
        %5029 = vadd.xlane.f32.xlu0 %v5028
        %v5030 = vpop.xlane.xlu0 %5029
        %v5031 = vsel %vm2427, %v5025, 0.0
        %5032 = vadd.xlane.f32.xlu0 %v5031
        %v5033 = vpop.xlane.xlu0 %5032
        %v5034 = vmul.f32 %v5030, %v3331
        %v5035 = vmul.f32 %v5033, %v3331
        %v5036 = vsub.f32 %v5024, %v5034
        %v5037 = vsub.f32 %v5025, %v5035
        %v5038 = vmul.f32 %v5036, %v5036
        %v5039 = vmul.f32 %v5037, %v5037
        %v5040 = vsel %vm2427, %v5038, 0.0
        %5041 = vadd.xlane.f32.xlu0 %v5040
        %v5042 = vpop.xlane.xlu0 %5041
        %v5043 = vsel %vm2427, %v5039, 0.0
        %5044 = vadd.xlane.f32.xlu0 %v5043
        %v5045 = vpop.xlane.xlu0 %5044
        %v5046 = vmul.f32 %v5042, %v3331
        %v5047 = vmul.f32 %v5045, %v3331
        %v5048 = vadd.f32 %v5046, 0.0001
        %v5049 = vadd.f32 %v5047, 0.0001
        %v5050 = vrsqrt.pop %v5048
        %v5051 = vmul.f32 %v5050, %v5048
        %v5052 = vmul.f32 %v5051, %v5050
        %v5053 = vmul.f32 0.5, %v5052
        %v5054 = vsub.f32 1.5, %v5053
        %v5055 = vmul.f32 %v5050, %v5054
        %vm5056 = vweird.f32 %v5048
        %vm5057 = vweird.f32 %v5050
        %vm5058 = vmor %vm5056, %vm5057
        %v5059 = vsel %vm5058, %v5050, %v5055
        %v5060 = vrsqrt.pop %v5049
        %v5061 = vmul.f32 %v5060, %v5049
        %v5062 = vmul.f32 %v5061, %v5060
        %v5063 = vmul.f32 0.5, %v5062
        %v5064 = vsub.f32 1.5, %v5063
        %v5065 = vmul.f32 %v5060, %v5064
        %vm5066 = vweird.f32 %v5049
        %vm5067 = vweird.f32 %v5060
        %vm5068 = vmor %vm5066, %vm5067
        %v5069 = vsel %vm5068, %v5060, %v5065
        %v5070 = vmul.f32 %v5036, %v5059
        %v5071 = vmul.f32 %v5037, %v5069
        %v5073 = vperm.slane %v5026, 0
        %v5075 = vmul.f32 %v5070, %v5073
        %v5076 = vmul.f32 %v5071, %v5073
        %v5078 = vperm.slane %v5027, 0
        %v5080 = vadd.f32 %v5075, %v5078
        %v5081 = vadd.f32 %v5076, %v5078
        %v5082 = vmul.f32 %v5080, %v2401
        %v5083 = vmul.f32 %v5081, %v2406
        %v5084 = vld [vmem:[#allocation44] sm:$0xff]
        %v5085 = vld [vmem:[#allocation44 + $0x8] sm:$0xff]
        %v5086 = vld [vmem:[#allocation44 + $0x10] sm:$0xff]
        %v5087 = vld [vmem:[#allocation44 + $0x18] sm:$0xff]
        %v5088 = vld [vmem:[#allocation46] sm:$0x1]
        %v5090 = vperm.slane %v5088, 0
        %v5093 = vsel %vm2427, %v5082, 0
        %v5096 = vsel %vm2427, %v5083, 0
        %5098 = vmatpush.msra.mxu0 0.0
        %5099 = vmatpush.msra.mxu0 0.0
        %5100 = vmatpush.msra.mxu0 0.0
        %5101 = vmatpush.msra.mxu0 0.0
        %5102 = vmatpush.msra.mxu0 0.0
        %5103 = vmatpush.msra.mxu0 0.0
        %5104 = vmatpush.msra.mxu0 0.0
        %5105 = vmatpush.msra.mxu0 0.0
        %5106 = vmatpush.msra.mxu0 0.0
        %5107 = vmatpush.msra.mxu0 0.0
        %5108 = vmatpush.msra.mxu0 0.0
        %5109 = vmatpush.msra.mxu0 0.0
        %5110 = vmatpush.msra.mxu0 %v5087
        %5111 = vmatpush.msra.mxu0 %v5086
        %5112 = vmatpush.msra.mxu0 %v5085
        %5113 = vmatpush.msra.mxu0 %v5084
        %5114 = vmatmul.f32.gmra.mxu0 %v5093
        %v5115 = vpop.f32.mrf.mxu0
        %v5116 = vadd.f32 %v5090, %v5115
        %5117 = vmatmul.f32.gmra.mxu0 %v5096
        %v5118 = vpop.f32.mrf.mxu0
        %v5119 = vadd.f32 %v5090, %v5118
        %5120 = vdwg.mxu0
        %v5121 = vmul.f32 %v5116, %v2401
        %v5122 = vmul.f32 %v5119, %v2406
        %5123 = vst.msk [vmem:[%s2310] sm:$0xff] %vm2427, %v5121
        %5124 = vst.msk [vmem:[%s2310 + $0x8] sm:$0xff] %vm2427, %v5122
        %v5125 = vld [vmem:[#allocation49] sm:$0x1]
        %v5126 = vld [vmem:[#allocation47] sm:$0xff]
        %v5127 = vld [vmem:[#allocation47 + $0x8] sm:$0xff]
        %v5128 = vld [vmem:[#allocation47 + $0x10] sm:$0xff]
        %v5129 = vld [vmem:[#allocation47 + $0x18] sm:$0xff]
        %5130 = vmatpush.msra.mxu0 0.0
        %5131 = vmatpush.msra.mxu0 0.0
        %5132 = vmatpush.msra.mxu0 0.0
        %5133 = vmatpush.msra.mxu0 0.0
        %5134 = vmatpush.msra.mxu0 0.0
        %5135 = vmatpush.msra.mxu0 0.0
        %5136 = vmatpush.msra.mxu0 0.0
        %5137 = vmatpush.msra.mxu0 0.0
        %5138 = vmatpush.msra.mxu0 0.0
        %5139 = vmatpush.msra.mxu0 0.0
        %5140 = vmatpush.msra.mxu0 0.0
        %5141 = vmatpush.msra.mxu0 0.0
        %5142 = vmatpush.msra.mxu0 %v5129
        %5143 = vmatpush.msra.mxu0 %v5128
        %5144 = vmatpush.msra.mxu0 %v5127
        %5145 = vmatpush.msra.mxu0 %v5126
        %5146 = vmatmul.f32.gmra.mxu0 %v5093
        %v5147 = vpop.f32.mrf.mxu0
        %v5148 = vadd.f32 0.0, %v5147
        %5149 = vmatmul.f32.gmra.mxu0 %v5096
        %v5150 = vpop.f32.mrf.mxu0
        %v5151 = vadd.f32 0.0, %v5150
        %5152 = vdwg.mxu0
        %s5153 = scalar_lea.vmem [#allocation47], 32
        %v5154 = vld [vmem:[%s5153] sm:$0xff]
        %v5155 = vld [vmem:[%s5153 + $0x8] sm:$0xff]
        %v5156 = vld [vmem:[%s5153 + $0x10] sm:$0xff]
        %v5157 = vld [vmem:[%s5153 + $0x18] sm:$0xff]
        %s5158 = scalar_lea.vmem [#allocation47], 64
        %v5159 = vld [vmem:[%s5158] sm:$0xff]
        %v5160 = vld [vmem:[%s5158 + $0x8] sm:$0xff]
        %v5161 = vld [vmem:[%s5158 + $0x10] sm:$0xff]
        %v5162 = vld [vmem:[%s5158 + $0x18] sm:$0xff]
        %5163 = vmatpush.msra.mxu0 0.0
        %5164 = vmatpush.msra.mxu0 0.0
        %5165 = vmatpush.msra.mxu0 0.0
        %5166 = vmatpush.msra.mxu0 0.0
        %5167 = vmatpush.msra.mxu0 0.0
        %5168 = vmatpush.msra.mxu0 0.0
        %5169 = vmatpush.msra.mxu0 0.0
        %5170 = vmatpush.msra.mxu0 0.0
        %5171 = vmatpush.msra.mxu0 0.0
        %5172 = vmatpush.msra.mxu0 0.0
        %5173 = vmatpush.msra.mxu0 0.0
        %5174 = vmatpush.msra.mxu0 0.0
        %5175 = vmatpush.msra.mxu0 %v5162
        %5176 = vmatpush.msra.mxu0 %v5161
        %5177 = vmatpush.msra.mxu0 %v5160
        %5178 = vmatpush.msra.mxu0 %v5159
        %5179 = vmatmul.f32.gmra.mxu0 %v5093
        %v5180 = vpop.f32.mrf.mxu0
        %v5181 = vadd.f32 0.0, %v5180
        %5182 = vmatmul.f32.gmra.mxu0 %v5096
        %v5183 = vpop.f32.mrf.mxu0
        %v5184 = vadd.f32 0.0, %v5183
        %5185 = vdwg.mxu0
        %5186 = vmatpush.msra.mxu0 0.0
        %5187 = vmatpush.msra.mxu0 0.0
        %5188 = vmatpush.msra.mxu0 0.0
        %5189 = vmatpush.msra.mxu0 0.0
        %5190 = vmatpush.msra.mxu0 0.0
        %5191 = vmatpush.msra.mxu0 0.0
        %5192 = vmatpush.msra.mxu0 0.0
        %5193 = vmatpush.msra.mxu0 0.0
        %5194 = vmatpush.msra.mxu0 0.0
        %5195 = vmatpush.msra.mxu0 0.0
        %5196 = vmatpush.msra.mxu0 0.0
        %5197 = vmatpush.msra.mxu0 0.0
        %5198 = vmatpush.msra.mxu0 0.0
        %5199 = vmatpush.msra.mxu0 0.0
        %5200 = vmatpush.msra.mxu0 %v5151
        %5201 = vmatpush.msra.mxu0 %v5148
        %5202 = vmatmul.f32.gmra.mxu0 %v3450
        %v5203 = vpop.f32.mrf.mxu0
        %v5204 = vadd.f32 0.0, %v5203
        %5205 = vmatmul.f32.gmra.mxu0 %v3453
        %v5206 = vpop.f32.mrf.mxu0
        %v5207 = vadd.f32 0.0, %v5206
        %5208 = vdwg.mxu0
        %5209 = vmatpush.msra.mxu0 0.0
        %5210 = vmatpush.msra.mxu0 0.0
        %5211 = vmatpush.msra.mxu0 0.0
        %5212 = vmatpush.msra.mxu0 0.0
        %5213 = vmatpush.msra.mxu0 0.0
        %5214 = vmatpush.msra.mxu0 0.0
        %5215 = vmatpush.msra.mxu0 0.0
        %5216 = vmatpush.msra.mxu0 0.0
        %5217 = vmatpush.msra.mxu0 0.0
        %5218 = vmatpush.msra.mxu0 0.0
        %5219 = vmatpush.msra.mxu0 0.0
        %5220 = vmatpush.msra.mxu0 0.0
        %5221 = vmatpush.msra.mxu0 %v5157
        %5222 = vmatpush.msra.mxu0 %v5156
        %5223 = vmatpush.msra.mxu0 %v5155
        %5224 = vmatpush.msra.mxu0 %v5154
        %5225 = vmatmul.f32.gmra.mxu0 %v5093
        %v5226 = vpop.f32.mrf.mxu0
        %v5227 = vadd.f32 %v5204, %v5226
        %5228 = vmatmul.f32.gmra.mxu0 %v5096
        %v5229 = vpop.f32.mrf.mxu0
        %v5230 = vadd.f32 %v5207, %v5229
        %5231 = vdwg.mxu0
        %5232 = vmatpush.msra.mxu0 0.0
        %5233 = vmatpush.msra.mxu0 0.0
        %5234 = vmatpush.msra.mxu0 0.0
        %5235 = vmatpush.msra.mxu0 0.0
        %5236 = vmatpush.msra.mxu0 0.0
        %5237 = vmatpush.msra.mxu0 0.0
        %5238 = vmatpush.msra.mxu0 0.0
        %5239 = vmatpush.msra.mxu0 0.0
        %5240 = vmatpush.msra.mxu0 0.0
        %5241 = vmatpush.msra.mxu0 0.0
        %5242 = vmatpush.msra.mxu0 0.0
        %5243 = vmatpush.msra.mxu0 0.0
        %5244 = vmatpush.msra.mxu0 0.0
        %5245 = vmatpush.msra.mxu0 0.0
        %5246 = vmatpush.msra.mxu0 %v5184
        %5247 = vmatpush.msra.mxu0 %v5181
        %5248 = vmatmul.f32.gmra.mxu0 %v3502
        %v5249 = vpop.f32.mrf.mxu0
        %v5250 = vadd.f32 0.0, %v5249
        %5251 = vmatmul.f32.gmra.mxu0 %v3505
        %v5252 = vpop.f32.mrf.mxu0
        %v5253 = vadd.f32 0.0, %v5252
        %5254 = vdwg.mxu0
        %v5255 = vadd.f32 %v5227, %v5250
        %v5256 = vadd.f32 %v5230, %v5253
        %v5258 = vperm.slane %v5125, 0
        %v5260 = vadd.f32 %v5255, %v5258
        %v5261 = vadd.f32 %v5256, %v5258
        %v5262 = vmax.f32 %v5260, 0.0
        %v5263 = vmax.f32 %v5261, 0.0
        %v5264 = vld [vmem:[%s99] sm:$0x1]
        %v5265 = vld [vmem:[%s101] sm:$0x1]
        %v5266 = vsel %vm3550, %v5262, 0.0
        %5267 = vadd.xlane.f32.xlu0 %v5266
        %v5268 = vpop.xlane.xlu0 %5267
        %v5269 = vsel %vm3550, %v5263, 0.0
        %5270 = vadd.xlane.f32.xlu0 %v5269
        %v5271 = vpop.xlane.xlu0 %5270
        %v5272 = vrcp.pop 64.0
        %v5273 = vmul.f32 64.0, %v5272
        %v5274 = vsub.f32 1.0, %v5273
        %v5275 = vmul.f32 %v5272, %v5274
        %v5276 = vadd.f32 %v5272, %v5275
        %vm5277 = vweird.f32 %v5272
        %v5278 = vsel %vm5277, %v5272, %v5276
        %v5279 = vmul.f32 %v5268, %v5278
        %v5280 = vmul.f32 %v5271, %v5278
        %v5281 = vsub.f32 %v5262, %v5279
        %v5282 = vsub.f32 %v5263, %v5280
        %v5283 = vmul.f32 %v5281, %v5281
        %v5284 = vmul.f32 %v5282, %v5282
        %v5285 = vsel %vm3550, %v5283, 0.0
        %5286 = vadd.xlane.f32.xlu0 %v5285
        %v5287 = vpop.xlane.xlu0 %5286
        %v5288 = vsel %vm3550, %v5284, 0.0
        %5289 = vadd.xlane.f32.xlu0 %v5288
        %v5290 = vpop.xlane.xlu0 %5289
        %v5291 = vmul.f32 %v5287, %v5278
        %v5292 = vmul.f32 %v5290, %v5278
        %v5293 = vadd.f32 %v5291, 0.0001
        %v5294 = vadd.f32 %v5292, 0.0001
        %v5295 = vrsqrt.pop %v5293
        %v5296 = vmul.f32 %v5295, %v5293
        %v5297 = vmul.f32 %v5296, %v5295
        %v5298 = vmul.f32 0.5, %v5297
        %v5299 = vsub.f32 1.5, %v5298
        %v5300 = vmul.f32 %v5295, %v5299
        %vm5301 = vweird.f32 %v5293
        %vm5302 = vweird.f32 %v5295
        %vm5303 = vmor %vm5301, %vm5302
        %v5304 = vsel %vm5303, %v5295, %v5300
        %v5305 = vrsqrt.pop %v5294
        %v5306 = vmul.f32 %v5305, %v5294
        %v5307 = vmul.f32 %v5306, %v5305
        %v5308 = vmul.f32 0.5, %v5307
        %v5309 = vsub.f32 1.5, %v5308
        %v5310 = vmul.f32 %v5305, %v5309
        %vm5311 = vweird.f32 %v5294
        %vm5312 = vweird.f32 %v5305
        %vm5313 = vmor %vm5311, %vm5312
        %v5314 = vsel %vm5313, %v5305, %v5310
        %v5315 = vmul.f32 %v5281, %v5304
        %v5316 = vmul.f32 %v5282, %v5314
        %v5318 = vperm.slane %v5264, 0
        %v5320 = vmul.f32 %v5315, %v5318
        %v5321 = vmul.f32 %v5316, %v5318
        %v5323 = vperm.slane %v5265, 0
        %v5325 = vadd.f32 %v5320, %v5323
        %v5326 = vadd.f32 %v5321, %v5323
        %v5327 = vmul.f32 %v5325, %v2401
        %v5328 = vmul.f32 %v5326, %v2406
        %v5329 = vld [vmem:[#allocation52] sm:$0x1]
        %v5330 = vld [vmem:[#allocation50] sm:$0xff]
        %v5331 = vld [vmem:[#allocation50 + $0x8] sm:$0xff]
        %v5332 = vld [vmem:[#allocation50 + $0x10] sm:$0xff]
        %v5333 = vld [vmem:[#allocation50 + $0x18] sm:$0xff]
        %v5334 = vld [vmem:[#allocation50 + $0x20] sm:$0xff]
        %v5335 = vld [vmem:[#allocation50 + $0x28] sm:$0xff]
        %v5336 = vld [vmem:[#allocation50 + $0x30] sm:$0xff]
        %v5337 = vld [vmem:[#allocation50 + $0x38] sm:$0xff]
        %v5339 = vsel %vm3550, %v5327, 0
        %v5342 = vsel %vm3550, %v5328, 0
        %5344 = vmatpush.msra.mxu0 0.0
        %5345 = vmatpush.msra.mxu0 0.0
        %5346 = vmatpush.msra.mxu0 0.0
        %5347 = vmatpush.msra.mxu0 0.0
        %5348 = vmatpush.msra.mxu0 0.0
        %5349 = vmatpush.msra.mxu0 0.0
        %5350 = vmatpush.msra.mxu0 0.0
        %5351 = vmatpush.msra.mxu0 0.0
        %5352 = vmatpush.msra.mxu0 %v5337
        %5353 = vmatpush.msra.mxu0 %v5336
        %5354 = vmatpush.msra.mxu0 %v5335
        %5355 = vmatpush.msra.mxu0 %v5334
        %5356 = vmatpush.msra.mxu0 %v5333
        %5357 = vmatpush.msra.mxu0 %v5332
        %5358 = vmatpush.msra.mxu0 %v5331
        %5359 = vmatpush.msra.mxu0 %v5330
        %5360 = vmatmul.f32.gmra.mxu0 %v5339
        %v5361 = vpop.f32.mrf.mxu0
        %v5362 = vadd.f32 0.0, %v5361
        %5363 = vmatmul.f32.gmra.mxu0 %v5342
        %v5364 = vpop.f32.mrf.mxu0
        %v5365 = vadd.f32 0.0, %v5364
        %5366 = vdwg.mxu0
        %s5367 = scalar_lea.vmem [#allocation50], 64
        %v5368 = vld [vmem:[%s5367] sm:$0xff]
        %v5369 = vld [vmem:[%s5367 + $0x8] sm:$0xff]
        %v5370 = vld [vmem:[%s5367 + $0x10] sm:$0xff]
        %v5371 = vld [vmem:[%s5367 + $0x18] sm:$0xff]
        %v5372 = vld [vmem:[%s5367 + $0x20] sm:$0xff]
        %v5373 = vld [vmem:[%s5367 + $0x28] sm:$0xff]
        %v5374 = vld [vmem:[%s5367 + $0x30] sm:$0xff]
        %v5375 = vld [vmem:[%s5367 + $0x38] sm:$0xff]
        %s5376 = scalar_lea.vmem [#allocation50], 128
        %v5377 = vld [vmem:[%s5376] sm:$0xff]
        %v5378 = vld [vmem:[%s5376 + $0x8] sm:$0xff]
        %v5379 = vld [vmem:[%s5376 + $0x10] sm:$0xff]
        %v5380 = vld [vmem:[%s5376 + $0x18] sm:$0xff]
        %v5381 = vld [vmem:[%s5376 + $0x20] sm:$0xff]
        %v5382 = vld [vmem:[%s5376 + $0x28] sm:$0xff]
        %v5383 = vld [vmem:[%s5376 + $0x30] sm:$0xff]
        %v5384 = vld [vmem:[%s5376 + $0x38] sm:$0xff]
        %5385 = vmatpush.msra.mxu0 0.0
        %5386 = vmatpush.msra.mxu0 0.0
        %5387 = vmatpush.msra.mxu0 0.0
        %5388 = vmatpush.msra.mxu0 0.0
        %5389 = vmatpush.msra.mxu0 0.0
        %5390 = vmatpush.msra.mxu0 0.0
        %5391 = vmatpush.msra.mxu0 0.0
        %5392 = vmatpush.msra.mxu0 0.0
        %5393 = vmatpush.msra.mxu0 %v5384
        %5394 = vmatpush.msra.mxu0 %v5383
        %5395 = vmatpush.msra.mxu0 %v5382
        %5396 = vmatpush.msra.mxu0 %v5381
        %5397 = vmatpush.msra.mxu0 %v5380
        %5398 = vmatpush.msra.mxu0 %v5379
        %5399 = vmatpush.msra.mxu0 %v5378
        %5400 = vmatpush.msra.mxu0 %v5377
        %5401 = vmatmul.f32.gmra.mxu0 %v5339
        %v5402 = vpop.f32.mrf.mxu0
        %v5403 = vadd.f32 0.0, %v5402
        %5404 = vmatmul.f32.gmra.mxu0 %v5342
        %v5405 = vpop.f32.mrf.mxu0
        %v5406 = vadd.f32 0.0, %v5405
        %5407 = vdwg.mxu0
        %5408 = vmatpush.msra.mxu0 0.0
        %5409 = vmatpush.msra.mxu0 0.0
        %5410 = vmatpush.msra.mxu0 0.0
        %5411 = vmatpush.msra.mxu0 0.0
        %5412 = vmatpush.msra.mxu0 0.0
        %5413 = vmatpush.msra.mxu0 0.0
        %5414 = vmatpush.msra.mxu0 0.0
        %5415 = vmatpush.msra.mxu0 0.0
        %5416 = vmatpush.msra.mxu0 0.0
        %5417 = vmatpush.msra.mxu0 0.0
        %5418 = vmatpush.msra.mxu0 0.0
        %5419 = vmatpush.msra.mxu0 0.0
        %5420 = vmatpush.msra.mxu0 0.0
        %5421 = vmatpush.msra.mxu0 0.0
        %5422 = vmatpush.msra.mxu0 %v5365
        %5423 = vmatpush.msra.mxu0 %v5362
        %5424 = vmatmul.f32.gmra.mxu0 %v3450
        %v5425 = vpop.f32.mrf.mxu0
        %v5426 = vadd.f32 0.0, %v5425
        %5427 = vmatmul.f32.gmra.mxu0 %v3453
        %v5428 = vpop.f32.mrf.mxu0
        %v5429 = vadd.f32 0.0, %v5428
        %5430 = vdwg.mxu0
        %5431 = vmatpush.msra.mxu0 0.0
        %5432 = vmatpush.msra.mxu0 0.0
        %5433 = vmatpush.msra.mxu0 0.0
        %5434 = vmatpush.msra.mxu0 0.0
        %5435 = vmatpush.msra.mxu0 0.0
        %5436 = vmatpush.msra.mxu0 0.0
        %5437 = vmatpush.msra.mxu0 0.0
        %5438 = vmatpush.msra.mxu0 0.0
        %5439 = vmatpush.msra.mxu0 %v5375
        %5440 = vmatpush.msra.mxu0 %v5374
        %5441 = vmatpush.msra.mxu0 %v5373
        %5442 = vmatpush.msra.mxu0 %v5372
        %5443 = vmatpush.msra.mxu0 %v5371
        %5444 = vmatpush.msra.mxu0 %v5370
        %5445 = vmatpush.msra.mxu0 %v5369
        %5446 = vmatpush.msra.mxu0 %v5368
        %5447 = vmatmul.f32.gmra.mxu0 %v5339
        %v5448 = vpop.f32.mrf.mxu0
        %v5449 = vadd.f32 %v5426, %v5448
        %5450 = vmatmul.f32.gmra.mxu0 %v5342
        %v5451 = vpop.f32.mrf.mxu0
        %v5452 = vadd.f32 %v5429, %v5451
        %5453 = vdwg.mxu0
        %5454 = vmatpush.msra.mxu0 0.0
        %5455 = vmatpush.msra.mxu0 0.0
        %5456 = vmatpush.msra.mxu0 0.0
        %5457 = vmatpush.msra.mxu0 0.0
        %5458 = vmatpush.msra.mxu0 0.0
        %5459 = vmatpush.msra.mxu0 0.0
        %5460 = vmatpush.msra.mxu0 0.0
        %5461 = vmatpush.msra.mxu0 0.0
        %5462 = vmatpush.msra.mxu0 0.0
        %5463 = vmatpush.msra.mxu0 0.0
        %5464 = vmatpush.msra.mxu0 0.0
        %5465 = vmatpush.msra.mxu0 0.0
        %5466 = vmatpush.msra.mxu0 0.0
        %5467 = vmatpush.msra.mxu0 0.0
        %5468 = vmatpush.msra.mxu0 %v5406
        %5469 = vmatpush.msra.mxu0 %v5403
        %5470 = vmatmul.f32.gmra.mxu0 %v3502
        %v5471 = vpop.f32.mrf.mxu0
        %v5472 = vadd.f32 0.0, %v5471
        %5473 = vmatmul.f32.gmra.mxu0 %v3505
        %v5474 = vpop.f32.mrf.mxu0
        %v5475 = vadd.f32 0.0, %v5474
        %5476 = vdwg.mxu0
        %v5477 = vadd.f32 %v5449, %v5472
        %v5478 = vadd.f32 %v5452, %v5475
        %v5480 = vperm.slane %v5329, 0
        %v5482 = vadd.f32 %v5477, %v5480
        %v5483 = vadd.f32 %v5478, %v5480
        %v5484 = vmax.f32 %v5482, 0.0
        %v5485 = vmax.f32 %v5483, 0.0
        %v5486 = vld [vmem:[%s107] sm:$0x1]
        %v5487 = vld [vmem:[%s109] sm:$0x1]
        %v5488 = vsel %vm3550, %v5484, 0.0
        %5489 = vadd.xlane.f32.xlu0 %v5488
        %v5490 = vpop.xlane.xlu0 %5489
        %v5491 = vsel %vm3550, %v5485, 0.0
        %5492 = vadd.xlane.f32.xlu0 %v5491
        %v5493 = vpop.xlane.xlu0 %5492
        %v5494 = vmul.f32 %v5490, %v5278
        %v5495 = vmul.f32 %v5493, %v5278
        %v5496 = vsub.f32 %v5484, %v5494
        %v5497 = vsub.f32 %v5485, %v5495
        %v5498 = vmul.f32 %v5496, %v5496
        %v5499 = vmul.f32 %v5497, %v5497
        %v5500 = vsel %vm3550, %v5498, 0.0
        %5501 = vadd.xlane.f32.xlu0 %v5500
        %v5502 = vpop.xlane.xlu0 %5501
        %v5503 = vsel %vm3550, %v5499, 0.0
        %5504 = vadd.xlane.f32.xlu0 %v5503
        %v5505 = vpop.xlane.xlu0 %5504
        %v5506 = vmul.f32 %v5502, %v5278
        %v5507 = vmul.f32 %v5505, %v5278
        %v5508 = vadd.f32 %v5506, 0.0001
        %v5509 = vadd.f32 %v5507, 0.0001
        %v5510 = vrsqrt.pop %v5508
        %v5511 = vmul.f32 %v5510, %v5508
        %v5512 = vmul.f32 %v5511, %v5510
        %v5513 = vmul.f32 0.5, %v5512
        %v5514 = vsub.f32 1.5, %v5513
        %v5515 = vmul.f32 %v5510, %v5514
        %vm5516 = vweird.f32 %v5508
        %vm5517 = vweird.f32 %v5510
        %vm5518 = vmor %vm5516, %vm5517
        %v5519 = vsel %vm5518, %v5510, %v5515
        %v5520 = vrsqrt.pop %v5509
        %v5521 = vmul.f32 %v5520, %v5509
        %v5522 = vmul.f32 %v5521, %v5520
        %v5523 = vmul.f32 0.5, %v5522
        %v5524 = vsub.f32 1.5, %v5523
        %v5525 = vmul.f32 %v5520, %v5524
        %vm5526 = vweird.f32 %v5509
        %vm5527 = vweird.f32 %v5520
        %vm5528 = vmor %vm5526, %vm5527
        %v5529 = vsel %vm5528, %v5520, %v5525
        %v5530 = vmul.f32 %v5496, %v5519
        %v5531 = vmul.f32 %v5497, %v5529
        %v5533 = vperm.slane %v5486, 0
        %v5535 = vmul.f32 %v5530, %v5533
        %v5536 = vmul.f32 %v5531, %v5533
        %v5538 = vperm.slane %v5487, 0
        %v5540 = vadd.f32 %v5535, %v5538
        %v5541 = vadd.f32 %v5536, %v5538
        %v5542 = vmul.f32 %v5540, %v2401
        %v5543 = vmul.f32 %v5541, %v2406
        %v5544 = vld [vmem:[#allocation53] sm:$0xff]
        %v5545 = vld [vmem:[#allocation53 + $0x8] sm:$0xff]
        %v5546 = vld [vmem:[#allocation53 + $0x10] sm:$0xff]
        %v5547 = vld [vmem:[#allocation53 + $0x18] sm:$0xff]
        %v5548 = vld [vmem:[#allocation53 + $0x20] sm:$0xff]
        %v5549 = vld [vmem:[#allocation53 + $0x28] sm:$0xff]
        %v5550 = vld [vmem:[#allocation53 + $0x30] sm:$0xff]
        %v5551 = vld [vmem:[#allocation53 + $0x38] sm:$0xff]
        %v5552 = vld [vmem:[#allocation2] sm:$0x1]
        %v5554 = vperm.slane %v5552, 0
        %v5557 = vsel %vm3550, %v5542, 0
        %v5560 = vsel %vm3550, %v5543, 0
        %5562 = vmatpush.msra.mxu0 0.0
        %5563 = vmatpush.msra.mxu0 0.0
        %5564 = vmatpush.msra.mxu0 0.0
        %5565 = vmatpush.msra.mxu0 0.0
        %5566 = vmatpush.msra.mxu0 0.0
        %5567 = vmatpush.msra.mxu0 0.0
        %5568 = vmatpush.msra.mxu0 0.0
        %5569 = vmatpush.msra.mxu0 0.0
        %5570 = vmatpush.msra.mxu0 %v5551
        %5571 = vmatpush.msra.mxu0 %v5550
        %5572 = vmatpush.msra.mxu0 %v5549
        %5573 = vmatpush.msra.mxu0 %v5548
        %5574 = vmatpush.msra.mxu0 %v5547
        %5575 = vmatpush.msra.mxu0 %v5546
        %5576 = vmatpush.msra.mxu0 %v5545
        %5577 = vmatpush.msra.mxu0 %v5544
        %5578 = vmatmul.f32.gmra.mxu0 %v5557
        %v5579 = vpop.f32.mrf.mxu0
        %v5580 = vadd.f32 %v5554, %v5579
        %5581 = vmatmul.f32.gmra.mxu0 %v5560
        %v5582 = vpop.f32.mrf.mxu0
        %v5583 = vadd.f32 %v5554, %v5582
        %5584 = vdwg.mxu0
        %v5585 = vmul.f32 %v5580, %v2318
        %v5586 = vmul.f32 %v5583, %v2319
        %vm5587 = vcmask 7168
        %5588 = vst.msk [vmem:[%s2315] sm:$0xff] %vm5587, %v5585
        %5589 = vst.msk [vmem:[%s2315 + $0x8] sm:$0xff] %vm5587, %v5586
        %p5590 = scmp.lt.s32.totalorder %s149, 1
        %s5591 = scalar_select %p5590, %s149, 1
        %s5592 = smul.addr %s5591, 2
        %s5593 = smul.addr %s5592, 8
        %s5594 = scalar_lea.vmem %s115, %s5593
        %p5595 = scmp.lt.s32.totalorder %s149, 1
        %s5596 = scalar_select %p5595, %s149, 1
        %s5597 = smul.addr %s5596, 2
        %s5598 = smul.addr %s5597, 8
        %s5599 = scalar_lea.vmem %s117, %s5598
        // Predicated region
        $region385: #{_lambda_.1} parent=247 // pred_check
          %p5600 = pneg %p1379
        $region386: #{_lambda_.1} parent=247 // pred_check_branch
          %5602 = sbr.rel (%p5600) target = $region388
        $region387: #{_lambda_.1} parent=247 // pred_region
          _
        $region388: #{_lambda_.1} parent=247 // pred_fallthru
          _
        // Predicated region
        $region389: #{_lambda_.1} parent=247 // pred_check
          %p5603 = pneg %p1405
        $region390: #{_lambda_.1} parent=247 // pred_check_branch
          %5605 = sbr.rel (%p5603) target = $region392
        $region391: #{_lambda_.1} parent=247 // pred_region
          _
        $region392: #{_lambda_.1} parent=247 // pred_fallthru
          _
      $region248: #{_lambda_.1} parent=5 // pred_fallthru
        _
      %p5606 = scmp.le.s32.totalorder 2, %s144
      // Predicated region
      $region393: #{_lambda_.1} parent=5 // pred_check
        %p5607 = pneg %p5606
      $region394: #{_lambda_.1} parent=5 // pred_check_branch
        %5609 = sbr.rel (%p5607) target = $region396
      $region395: #{_lambda_.1} parent=5 // pred_region
        %s5610 = ssub.s32 %s144, 2
        // Predicated region
        $region397: #{_lambda_.1} parent=395 // pred_check
          %p5611 = pneg %p1385
        $region398: #{_lambda_.1} parent=395 // pred_check_branch
          %5613 = sbr.rel (%p5611) target = $region400
        $region399: #{_lambda_.1} parent=395 // pred_region
          %p5614 = scmp.lt.s32.totalorder %s150, 1
          %s5615 = scalar_select %p5614, %s150, 1
          %s5616 = smul.addr %s5615, 2
          %s5617 = smul.addr %s5616, 8
          %s5618 = scalar_lea.vmem %s115, %s5617
        $region400: #{_lambda_.1} parent=395 // pred_fallthru
          _
        // Predicated region
        $region401: #{_lambda_.1} parent=395 // pred_check
          %p5619 = pneg %p1411
        $region402: #{_lambda_.1} parent=395 // pred_check_branch
          %5621 = sbr.rel (%p5619) target = $region404
        $region403: #{_lambda_.1} parent=395 // pred_region
          %p5622 = scmp.lt.s32.totalorder %s150, 1
          %s5623 = scalar_select %p5622, %s150, 1
          %s5624 = smul.addr %s5623, 2
          %s5625 = smul.addr %s5624, 8
          %s5626 = scalar_lea.vmem %s117, %s5625
        $region404: #{_lambda_.1} parent=395 // pred_fallthru
          _
      $region396: #{_lambda_.1} parent=5 // pred_fallthru
        _
    $region6: #{_lambda_.1} parent=1 // loop_footer
      %s148 = sadd.s32 1, %s144
    $region7: #{_lambda_.1} parent=1 // loop_footer_branch
      %143 = sbr.rel target = $region3
    $region8: #{_lambda_.1} parent=1 // loop_exit
      _
    %5627 = vsyncpa [#allocation4], 1
    %s5628 = scalar_lea.sflag [#allocation4], 1
    %5629 = vsyncpa %s5628, 1
    %5630 = vsyncpa [#allocation6], 1
    %5631 = vsyncpa [#allocation9], 1
    %5632 = vsyncpa [#allocation12], 1
    %5633 = vsyncpa [#allocation15], 1
    %5634 = vsyncpa [#allocation18], 1
    %5635 = vsyncpa [#allocation21], 1
    %5636 = vsyncpa [#allocation24], 1
    %5637 = vsyncpa [#allocation27], 1
    %5638 = vsyncpa [#allocation30], 1
    %5639 = vsyncpa [#allocation33], 1
    %5640 = vsyncpa [#allocation36], 1
    %5641 = vsyncpa [#allocation39], 1
    %5642 = vsyncpa [#allocation42], 1
    %5643 = vsyncpa [#allocation45], 1
    %5644 = vsyncpa [#allocation48], 1
    %5645 = vsyncpa [#allocation51], 1
    %5646 = vsyncpa [#allocation54], 1

</llo_original>
